<compile_context>
chip_gen: v7x
topology: tpu7x:2x2x1
jax: 0.10.0
libtpu: 0.0.40
codegen_flags: <defaults>
</compile_context>

<pallas_src>
import math

import jax
import jax.numpy as jnp
from jax.experimental import pallas as pl
from jax.experimental.pallas import tpu as pltpu

HIDDEN = 768        # ViLT hidden size
MID = 1000          # linear1 out / LayerNorm dim (real)
OUT = 3896          # linear2 out (real number of classes)
MID_PAD = 1024      # 8 * 128  -> clean MXU contraction / vregs
OUT_PAD = 4096      # 32 * 128 -> lane-dense output stores, divisible by TN
TN = 1024           # output tile width -> grid of 4 steps over OUT_PAD
LN_EPS = 1e-5
_INV_SQRT2 = 1.0 / math.sqrt(2.0)


def _head_kernel(cls_ref, wp_ref, bp_ref, w1_ref, b1_ref,
                 gamma_ref, beta_ref, w2q_ref, w2s_ref, b2_ref,
                 out_ref, g_ref):
    """Grid step j computes the (B, TN) slab j of the padded logits.

    The pooler/linear1/LayerNorm/GELU prologue runs ONCE (step 0); its bf16
    activations persist in the VMEM scratch `g_ref` across steps, so the OUT
    grid axis carries state and is marked "arbitrary" (sequential on one TC).
    """
    @pl.when(pl.program_id(0) == 0)
    def _prologue():
        # ---- ViLT pooler: tanh(cls @ Wp + bp) --------------------------------
        cls = cls_ref[...]                                             # (B, 768) f32
        pooled = jnp.tanh(
            jnp.dot(cls.astype(jnp.bfloat16), wp_ref[...],
                    preferred_element_type=jnp.float32) + bp_ref[...]
        )                                                              # (B, 768) f32

        # ---- Linear(768 -> 1000), padded to 1024 (pad cols of w1/b1 are 0) ---
        h = jnp.dot(pooled.astype(jnp.bfloat16), w1_ref[...],
                    preferred_element_type=jnp.float32) + b1_ref[...]  # (B, 1024)

        # ---- LayerNorm over the real MID=1000 lanes ---------------------------
        # Pad lanes of h are exactly 0 (w1/b1 pad columns are zero), so plain
        # sums over all 1024 lanes divided by MID are the exact statistics.
        mu = jnp.sum(h, axis=-1, keepdims=True) * (1.0 / MID)
        ex2 = jnp.sum(h * h, axis=-1, keepdims=True) * (1.0 / MID)
        var = ex2 - mu * mu
        hn = (h - mu) * jax.lax.rsqrt(var + LN_EPS)
        hn = hn * gamma_ref[...] + beta_ref[...]        # gamma/beta pads are 0

        # ---- GELU (exact erf, matches torch.nn.GELU default); GELU(0) = 0 ----
        g = 0.5 * hn * (1.0 + jax.lax.erf(hn * _INV_SQRT2))            # (B, 1024)

        # ---- Dropout(p=0.5): eval mode => identity ----------------------------
        g_ref[...] = g.astype(jnp.bfloat16)

    # ---- Linear(1000 -> 3896): this step's (1024, TN) int8 slab of w2 --------
    # int8 values are exact in bf16; the per-output-channel dequant scale is
    # applied to the f32 accumulator (it commutes out of the contraction).
    acc = jnp.dot(g_ref[...], w2q_ref[...].astype(jnp.bfloat16),
                  preferred_element_type=jnp.float32)                  # (B, TN) f32
    out_ref[...] = (acc * w2s_ref[...] + b2_ref[...]).astype(out_ref.dtype)


def classification_head(cls_hidden, params):
    """cls_hidden: (B, 768) float32 CLS hidden state from the ViLT encoder."""
    B = cls_hidden.shape[0]
    # TODO(synk): if B grows beyond a handful of rows, add a second (batch) grid
    # axis with tm=128/256 blocks; at B=2 a single batch block is optimal.
    grid = (OUT_PAD // TN,)              # 4 steps

    resident = lambda j: (0, 0)          # constant index_map -> stays in VMEM
    tiled = lambda j: (0, j)             # streamed over the OUT dimension

    out_padded = pl.pallas_call(
        _head_kernel,
        out_shape=jax.ShapeDtypeStruct((B, OUT_PAD), jnp.float32),
        grid_spec=pltpu.PrefetchScalarGridSpec(
            num_scalar_prefetch=0,
            grid=grid,
            in_specs=[
                pl.BlockSpec((B, HIDDEN), resident),         # cls        f32
                pl.BlockSpec((HIDDEN, HIDDEN), resident),    # wp         bf16
                pl.BlockSpec((1, HIDDEN), resident),         # bp         f32
                pl.BlockSpec((HIDDEN, MID_PAD), resident),   # w1 (pad)   bf16
                pl.BlockSpec((1, MID_PAD), resident),        # b1 (pad)   f32
                pl.BlockSpec((1, MID_PAD), resident),        # gamma      f32
                pl.BlockSpec((1, MID_PAD), resident),        # beta       f32
                pl.BlockSpec((MID_PAD, TN), tiled),          # w2 (pad)   int8
                pl.BlockSpec((1, TN), tiled),                # w2 scale   f32
                pl.BlockSpec((1, TN), tiled),                # b2 (pad)   f32
            ],
            out_specs=pl.BlockSpec((B, TN), tiled),
            scratch_shapes=[pltpu.VMEM((B, MID_PAD), jnp.bfloat16)],   # g
        ),
        compiler_params=pltpu.CompilerParams(
            # The OUT axis carries the hoisted-prologue state -> must be sequential.
            dimension_semantics=("arbitrary",),
            vmem_limit_bytes=24 * 1024 * 1024,
        ),
    )(
        cls_hidden,
        params["wp"], params["bp"],
        params["w1"], params["b1"],
        params["gamma"], params["beta"],
        params["w2_q"], params["w2_scale"], params["b2"],
    )
    return out_padded[:, :OUT]


def init_params(key):
    """Deterministic synthetic parameters (PyTorch nn.Linear-style uniform init).

    Weight matrices are stored (in_features, out_features), zero-padded to
    MXU/lane-friendly sizes. wp/w1 are bf16; w2 is per-output-channel symmetric
    int8 with f32 scales; biases / LN params stay fp32 as (1, features) rows.
    """
    ks = jax.random.split(key, 6)

    def linear(kw, kb, fan_in, fan_out):
        bound = 1.0 / math.sqrt(fan_in)
        w = jax.random.uniform(kw, (fan_in, fan_out), jnp.float32, -bound, bound)
        b = jax.random.uniform(kb, (1, fan_out), jnp.float32, -bound, bound)
        return w, b

    wp, bp = linear(ks[0], ks[1], HIDDEN, HIDDEN)   # ViLT pooler dense
    w1, b1 = linear(ks[2], ks[3], HIDDEN, MID)      # Linear(768, 1000)
    w2, b2 = linear(ks[4], ks[5], MID, OUT)         # Linear(1000, 3896)
    gamma = jnp.ones((1, MID), jnp.float32)         # LayerNorm weight
    beta = jnp.zeros((1, MID), jnp.float32)         # LayerNorm bias

    # Per-output-channel symmetric int8 quantization of w2 (the dominant stream).
    amax = jnp.max(jnp.abs(w2), axis=0, keepdims=True)              # (1, OUT)
    w2_scale = jnp.where(amax > 0, amax / 127.0, 1.0)               # (1, OUT) f32
    w2_q = jnp.clip(jnp.round(w2 / w2_scale), -127, 127).astype(jnp.int8)

    def pad2(x, rows, cols):
        return jnp.pad(x, ((0, rows - x.shape[0]), (0, cols - x.shape[1])))

    return {
        "wp": wp.astype(jnp.bfloat16),
        "bp": bp,
        "w1": pad2(w1, HIDDEN, MID_PAD).astype(jnp.bfloat16),
        "b1": pad2(b1, 1, MID_PAD),
        "gamma": pad2(gamma, 1, MID_PAD),
        "beta": pad2(beta, 1, MID_PAD),
        "w2_q": pad2(w2_q, MID_PAD, OUT_PAD),         # int8, pad rows/cols = 0
        "w2_scale": pad2(w2_scale, 1, OUT_PAD),       # f32, pad cols = 0 (harmless)
        "b2": pad2(b2, 1, OUT_PAD),
    }


def reference_head(cls_hidden, params):
    """Pure-JAX reference on the UNPADDED logical shapes (mirrors the kernel's
    bf16 / int8 weight quantization so the comparison is tight)."""
    wp = params["wp"].astype(jnp.float32)
    bp = params["bp"]
    w1 = params["w1"][:, :MID].astype(jnp.float32)
    b1 = params["b1"][:, :MID]
    gamma = params["gamma"][:, :MID]
    beta = params["beta"][:, :MID]
    w2q = params["w2_q"][:MID, :OUT].astype(jnp.float32)   # exact int values
    w2s = params["w2_scale"][:, :OUT]
    b2 = params["b2"][:, :OUT]

    def bdot(x, w):
        return jnp.dot(x.astype(jnp.bfloat16), w.astype(jnp.bfloat16),
                       preferred_element_type=jnp.float32)

    pooled = jnp.tanh(bdot(cls_hidden, wp) + bp)
    h = bdot(pooled, w1) + b1
    mu = jnp.mean(h, axis=-1, keepdims=True)
    var = jnp.mean((h - mu) ** 2, axis=-1, keepdims=True)
    hn = (h - mu) / jnp.sqrt(var + LN_EPS)
    hn = hn * gamma + beta
    g = 0.5 * hn * (1.0 + jax.lax.erf(hn * _INV_SQRT2))
    return bdot(g, w2q) * w2s + b2


if __name__ == "__main__":
    key = jax.random.PRNGKey(0)
    k_params, k_hidden = jax.random.split(key)

    B, SEQ = 2, 8
    params = init_params(k_params)

    # Synthetic ViLT encoder output: (B, SEQ, 768). The pooler (and thus the
    # classification head) only consumes the CLS token hidden state.
    hidden_states = jax.random.normal(k_hidden, (B, SEQ, HIDDEN), jnp.float32)
    cls_hidden = hidden_states[:, 0, :]                     # (B, 768)  — glue

    out = classification_head(cls_hidden, params)
    out = jax.block_until_ready(out)

    ref = reference_head(cls_hidden, params)
    assert out.shape == (B, OUT), out.shape
    assert jnp.allclose(out, ref, atol=3e-3, rtol=3e-3), "mismatch vs JAX reference"

    print("KERNEL_OK")
</pallas_src>

<mosaic_0001>
module attributes {stable_mosaic.version = 11 : i64} {
  func.func @_head_kernel(%arg0: i32, %arg1: memref<2x768xf32, #tpu.memory_space<vmem>>, %arg2: memref<768x768xbf16, #tpu.memory_space<vmem>>, %arg3: memref<1x768xf32, #tpu.memory_space<vmem>>, %arg4: memref<768x1024xbf16, #tpu.memory_space<vmem>>, %arg5: memref<1x1024xf32, #tpu.memory_space<vmem>>, %arg6: memref<1x1024xf32, #tpu.memory_space<vmem>>, %arg7: memref<1x1024xf32, #tpu.memory_space<vmem>>, %arg8: memref<1024x1024xi8, #tpu.memory_space<vmem>>, %arg9: memref<1x1024xf32, #tpu.memory_space<vmem>>, %arg10: memref<1x1024xf32, #tpu.memory_space<vmem>>, %arg11: memref<2x1024xf32, #tpu.memory_space<vmem>>, %arg12: memref<2x1024xbf16, #tpu.memory_space<vmem>>) attributes {dimension_semantics = [#tpu.dimension_semantics<arbitrary>], iteration_bounds = array<i64: 4>, scalar_prefetch = 0 : i64, scratch_operands = 1 : i64, tpu.core_type = #tpu.core_type<tc>, window_params = [{pipeline_mode = #tpu.pipeline_mode<synchronous>, transform_indices = @transform_0, window_bounds = array<i64: 2, 768>}, {pipeline_mode = #tpu.pipeline_mode<synchronous>, transform_indices = @transform_1, window_bounds = array<i64: 768, 768>}, {pipeline_mode = #tpu.pipeline_mode<synchronous>, transform_indices = @transform_2, window_bounds = array<i64: 1, 768>}, {pipeline_mode = #tpu.pipeline_mode<synchronous>, transform_indices = @transform_3, window_bounds = array<i64: 768, 1024>}, {pipeline_mode = #tpu.pipeline_mode<synchronous>, transform_indices = @transform_4, window_bounds = array<i64: 1, 1024>}, {pipeline_mode = #tpu.pipeline_mode<synchronous>, transform_indices = @transform_5, window_bounds = array<i64: 1, 1024>}, {pipeline_mode = #tpu.pipeline_mode<synchronous>, transform_indices = @transform_6, window_bounds = array<i64: 1, 1024>}, {transform_indices = @transform_7, window_bounds = array<i64: 1024, 1024>}, {transform_indices = @transform_8, window_bounds = array<i64: 1, 1024>}, {transform_indices = @transform_9, window_bounds = array<i64: 1, 1024>}, {transform_indices = @transform_10, window_bounds = array<i64: 2, 1024>}]} {
    %c0_i32 = arith.constant 0 : i32
    %0 = arith.cmpi eq, %arg0, %c0_i32 : i32
    %1 = arith.extui %0 : i1 to i32
    %c0_i32_0 = arith.constant 0 : i32
    %2 = arith.cmpi ne, %1, %c0_i32_0 : i32
    scf.if %2 {
      %c0_10 = arith.constant 0 : index
      %c0_11 = arith.constant 0 : index
      %14 = vector.load %arg1[%c0_10, %c0_11] : memref<2x768xf32, #tpu.memory_space<vmem>>, vector<2x768xf32>
      %15 = arith.truncf %14 : vector<2x768xf32> to vector<2x768xbf16>
      %c0_12 = arith.constant 0 : index
      %c0_13 = arith.constant 0 : index
      %16 = vector.load %arg2[%c0_12, %c0_13] : memref<768x768xbf16, #tpu.memory_space<vmem>>, vector<768x768xbf16>
      %cst_14 = arith.constant dense<0.000000e+00> : vector<2x768xf32>
      %17 = tpu.matmul %15, %16, %cst_14 {dimension_numbers = #tpu.dot_dimension_numbers<[1], [0], [0], [1], [0, 0, 1, 1], [], []>} : vector<2x768xbf16>, vector<768x768xbf16>, vector<2x768xf32> -> vector<2x768xf32>
      %c0_15 = arith.constant 0 : index
      %c0_16 = arith.constant 0 : index
      %18 = vector.load %arg3[%c0_15, %c0_16] : memref<1x768xf32, #tpu.memory_space<vmem>>, vector<1x768xf32>
      %19 = vector.broadcast %18 : vector<1x768xf32> to vector<2x768xf32>
      %20 = arith.addf %17, %19 : vector<2x768xf32>
      %21 = math.tanh %20 : vector<2x768xf32>
      %22 = arith.truncf %21 : vector<2x768xf32> to vector<2x768xbf16>
      %c0_17 = arith.constant 0 : index
      %c0_18 = arith.constant 0 : index
      %23 = vector.load %arg4[%c0_17, %c0_18] : memref<768x1024xbf16, #tpu.memory_space<vmem>>, vector<768x1024xbf16>
      %cst_19 = arith.constant dense<0.000000e+00> : vector<2x1024xf32>
      %24 = tpu.matmul %22, %23, %cst_19 {dimension_numbers = #tpu.dot_dimension_numbers<[1], [0], [0], [1], [0, 0, 1, 1], [], []>} : vector<2x768xbf16>, vector<768x1024xbf16>, vector<2x1024xf32> -> vector<2x1024xf32>
      %c0_20 = arith.constant 0 : index
      %c0_21 = arith.constant 0 : index
      %25 = vector.load %arg5[%c0_20, %c0_21] : memref<1x1024xf32, #tpu.memory_space<vmem>>, vector<1x1024xf32>
      %26 = vector.broadcast %25 : vector<1x1024xf32> to vector<2x1024xf32>
      %27 = arith.addf %24, %26 : vector<2x1024xf32>
      %cst_22 = arith.constant dense<0.000000e+00> : vector<2xf32>
      %28 = vector.multi_reduction <add>, %27, %cst_22 [1] : vector<2x1024xf32> to vector<2xf32>
      %29 = vector.shape_cast %28 : vector<2xf32> to vector<2x1xf32>
      %cst_23 = arith.constant 1.000000e-03 : f32
      %30 = vector.broadcast %cst_23 : f32 to vector<2x1xf32>
      %31 = arith.mulf %29, %30 : vector<2x1xf32>
      %32 = arith.mulf %27, %27 : vector<2x1024xf32>
      %cst_24 = arith.constant dense<0.000000e+00> : vector<2xf32>
      %33 = vector.multi_reduction <add>, %32, %cst_24 [1] : vector<2x1024xf32> to vector<2xf32>
      %34 = vector.shape_cast %33 : vector<2xf32> to vector<2x1xf32>
      %cst_25 = arith.constant 1.000000e-03 : f32
      %35 = vector.broadcast %cst_25 : f32 to vector<2x1xf32>
      %36 = arith.mulf %34, %35 : vector<2x1xf32>
      %37 = arith.mulf %31, %31 : vector<2x1xf32>
      %38 = arith.subf %36, %37 : vector<2x1xf32>
      %39 = vector.broadcast %31 : vector<2x1xf32> to vector<2x1024xf32>
      %40 = arith.subf %27, %39 : vector<2x1024xf32>
      %cst_26 = arith.constant 9.99999974E-6 : f32
      %41 = vector.broadcast %cst_26 : f32 to vector<2x1xf32>
      %42 = arith.addf %38, %41 : vector<2x1xf32>
      %43 = math.rsqrt %42 : vector<2x1xf32>
      %44 = vector.broadcast %43 : vector<2x1xf32> to vector<2x1024xf32>
      %45 = arith.mulf %40, %44 : vector<2x1024xf32>
      %c0_27 = arith.constant 0 : index
      %c0_28 = arith.constant 0 : index
      %46 = vector.load %arg6[%c0_27, %c0_28] : memref<1x1024xf32, #tpu.memory_space<vmem>>, vector<1x1024xf32>
      %47 = vector.broadcast %46 : vector<1x1024xf32> to vector<2x1024xf32>
      %48 = arith.mulf %45, %47 : vector<2x1024xf32>
      %c0_29 = arith.constant 0 : index
      %c0_30 = arith.constant 0 : index
      %49 = vector.load %arg7[%c0_29, %c0_30] : memref<1x1024xf32, #tpu.memory_space<vmem>>, vector<1x1024xf32>
      %50 = vector.broadcast %49 : vector<1x1024xf32> to vector<2x1024xf32>
      %51 = arith.addf %48, %50 : vector<2x1024xf32>
      %cst_31 = arith.constant 5.000000e-01 : f32
      %52 = vector.broadcast %cst_31 : f32 to vector<2x1024xf32>
      %53 = arith.mulf %52, %51 : vector<2x1024xf32>
      %cst_32 = arith.constant 0.707106769 : f32
      %54 = vector.broadcast %cst_32 : f32 to vector<2x1024xf32>
      %55 = arith.mulf %51, %54 : vector<2x1024xf32>
      %56 = math.erf %55 : vector<2x1024xf32>
      %cst_33 = arith.constant 1.000000e+00 : f32
      %57 = vector.broadcast %cst_33 : f32 to vector<2x1024xf32>
      %58 = arith.addf %57, %56 : vector<2x1024xf32>
      %59 = arith.mulf %53, %58 : vector<2x1024xf32>
      %60 = arith.truncf %59 : vector<2x1024xf32> to vector<2x1024xbf16>
      %c0_34 = arith.constant 0 : index
      %c0_35 = arith.constant 0 : index
      %61 = vector.load %arg12[%c0_34, %c0_35] : memref<2x1024xbf16, #tpu.memory_space<vmem>>, vector<2x1024xbf16>
      tpu.vector_store %arg12[%c0_34, %c0_35], %60 {strides = array<i32>} : memref<2x1024xbf16, #tpu.memory_space<vmem>>, vector<2x1024xbf16>,
    } else {
    }
    %c0 = arith.constant 0 : index
    %c0_1 = arith.constant 0 : index
    %3 = vector.load %arg12[%c0, %c0_1] : memref<2x1024xbf16, #tpu.memory_space<vmem>>, vector<2x1024xbf16>
    %c0_2 = arith.constant 0 : index
    %c0_3 = arith.constant 0 : index
    %4 = vector.load %arg8[%c0_2, %c0_3] : memref<1024x1024xi8, #tpu.memory_space<vmem>>, vector<1024x1024xi8>
    %5 = arith.sitofp %4 : vector<1024x1024xi8> to vector<1024x1024xbf16>
    %cst = arith.constant dense<0.000000e+00> : vector<2x1024xf32>
    %6 = tpu.matmul %3, %5, %cst {dimension_numbers = #tpu.dot_dimension_numbers<[1], [0], [0], [1], [0, 0, 1, 1], [], []>} : vector<2x1024xbf16>, vector<1024x1024xbf16>, vector<2x1024xf32> -> vector<2x1024xf32>
    %c0_4 = arith.constant 0 : index
    %c0_5 = arith.constant 0 : index
    %7 = vector.load %arg9[%c0_4, %c0_5] : memref<1x1024xf32, #tpu.memory_space<vmem>>, vector<1x1024xf32>
    %8 = vector.broadcast %7 : vector<1x1024xf32> to vector<2x1024xf32>
    %9 = arith.mulf %6, %8 : vector<2x1024xf32>
    %c0_6 = arith.constant 0 : index
    %c0_7 = arith.constant 0 : index
    %10 = vector.load %arg10[%c0_6, %c0_7] : memref<1x1024xf32, #tpu.memory_space<vmem>>, vector<1x1024xf32>
    %11 = vector.broadcast %10 : vector<1x1024xf32> to vector<2x1024xf32>
    %12 = arith.addf %9, %11 : vector<2x1024xf32>
    %c0_8 = arith.constant 0 : index
    %c0_9 = arith.constant 0 : index
    %13 = vector.load %arg11[%c0_8, %c0_9] : memref<2x1024xf32, #tpu.memory_space<vmem>>, vector<2x1024xf32>
    tpu.vector_store %arg11[%c0_8, %c0_9], %12 {strides = array<i32>} : memref<2x1024xf32, #tpu.memory_space<vmem>>, vector<2x1024xf32>,
    return
  }
  func.func @transform_0(%arg0: i32) -> (i32, i32) {
    %c0_i32 = arith.constant 0 : i32
    %c0_i32_0 = arith.constant 0 : i32
    %c0_i32_1 = arith.constant 0 : i32
    return %c0_i32, %c0_i32_0 : i32, i32
  }
  func.func @transform_1(%arg0: i32) -> (i32, i32) {
    %c0_i32 = arith.constant 0 : i32
    %c0_i32_0 = arith.constant 0 : i32
    %c0_i32_1 = arith.constant 0 : i32
    return %c0_i32, %c0_i32_0 : i32, i32
  }
  func.func @transform_2(%arg0: i32) -> (i32, i32) {
    %c0_i32 = arith.constant 0 : i32
    %c0_i32_0 = arith.constant 0 : i32
    %c0_i32_1 = arith.constant 0 : i32
    return %c0_i32, %c0_i32_0 : i32, i32
  }
  func.func @transform_3(%arg0: i32) -> (i32, i32) {
    %c0_i32 = arith.constant 0 : i32
    %c0_i32_0 = arith.constant 0 : i32
    %c0_i32_1 = arith.constant 0 : i32
    return %c0_i32, %c0_i32_0 : i32, i32
  }
  func.func @transform_4(%arg0: i32) -> (i32, i32) {
    %c0_i32 = arith.constant 0 : i32
    %c0_i32_0 = arith.constant 0 : i32
    %c0_i32_1 = arith.constant 0 : i32
    return %c0_i32, %c0_i32_0 : i32, i32
  }
  func.func @transform_5(%arg0: i32) -> (i32, i32) {
    %c0_i32 = arith.constant 0 : i32
    %c0_i32_0 = arith.constant 0 : i32
    %c0_i32_1 = arith.constant 0 : i32
    return %c0_i32, %c0_i32_0 : i32, i32
  }
  func.func @transform_6(%arg0: i32) -> (i32, i32) {
    %c0_i32 = arith.constant 0 : i32
    %c0_i32_0 = arith.constant 0 : i32
    %c0_i32_1 = arith.constant 0 : i32
    return %c0_i32, %c0_i32_0 : i32, i32
  }
  func.func @transform_7(%arg0: i32) -> (i32, i32) {
    %c0_i32 = arith.constant 0 : i32
    %c0_i32_0 = arith.constant 0 : i32
    return %c0_i32, %arg0 : i32, i32
  }
  func.func @transform_8(%arg0: i32) -> (i32, i32) {
    %c0_i32 = arith.constant 0 : i32
    %c0_i32_0 = arith.constant 0 : i32
    return %c0_i32, %arg0 : i32, i32
  }
  func.func @transform_9(%arg0: i32) -> (i32, i32) {
    %c0_i32 = arith.constant 0 : i32
    %c0_i32_0 = arith.constant 0 : i32
    return %c0_i32, %arg0 : i32, i32
  }
  func.func @transform_10(%arg0: i32) -> (i32, i32) {
    %c0_i32 = arith.constant 0 : i32
    %c0_i32_0 = arith.constant 0 : i32
    return %c0_i32, %arg0 : i32, i32
  }
}

</mosaic_0001>

<llo_original>
// kernel: tpu_custom_call.1
$region0: #{tpu_custom_call.1}
  #allocation0 [shape = 'u32[]', space=smem, size = 0x4, offset = 0x4, fixed_abs, tag = 'smem constant byte address 0x4 - core index']
  #allocation1 [shape = 'u32[144,128]{1,0:T(1,128)}', space=vmem, size = 0x12000, scoped, tag = 'internal scratch']
  #allocation2 [shape = 'bf16[2,1024]{1,0:T(2,128)(2,1)}', space=vmem, size = 0x1000, scoped, tag = 'scratch operand']
  %s0 = inlined_call_operand.hbm [shape: f32[2,768], index: 0, kind: input, shape index: {}]
  %s1 = inlined_call_operand.hbm [shape: bf16[768,768], index: 1, kind: input, shape index: {}]
  %s2 = inlined_call_operand.hbm [shape: f32[1,768], index: 2, kind: input, shape index: {}]
  %s3 = inlined_call_operand.hbm [shape: bf16[768,1024], index: 3, kind: input, shape index: {}]
  %s4 = inlined_call_operand.hbm [shape: f32[1,1024], index: 4, kind: input, shape index: {}]
  %s5 = inlined_call_operand.hbm [shape: f32[1,1024], index: 5, kind: input, shape index: {}]
  %s6 = inlined_call_operand.hbm [shape: f32[1,1024], index: 6, kind: input, shape index: {}]
  %s7 = inlined_call_operand.hbm [shape: s8[1024,4096], index: 7, kind: input, shape index: {}]
  %s8 = inlined_call_operand.hbm [shape: f32[1,4096], index: 8, kind: input, shape index: {}]
  %s9 = inlined_call_operand.hbm [shape: f32[1,4096], index: 9, kind: input, shape index: {}]
  %s10 = inlined_call_operand.hbm [shape: f32[2,4096], index: 10, kind: output, shape index: {}]
  %s11 = sld [smem:[#allocation0]]
  $region117: #{tpu_custom_call.1} parent=0
    _
  %s13 = ssub.s32 1, %s11
  %s14 = scalar_select 0, %s13, %s11
  $region1: #{tpu_custom_call.1} parent=0
    #allocation3 [shape = 'u8[6144]{0}', space=vmem, size = 0x1800, scoped, tag = 'input window, operand 0, single buffered']
    #allocation4 [shape = 's32[2]{0}', space=sflag, size = 0x8, scoped, tag = 'scoped memory for tpu_custom_call.1']
    #allocation5 [shape = 's32[2]{0}', space=sflag, size = 0x8, scoped, tag = 'scoped memory for tpu_custom_call.1']
    #allocation6 [shape = 'u8[1179648]{0}', space=vmem, size = 0x120000, scoped, tag = 'input window, operand 1, single buffered']
    #allocation7 [shape = 's32[1]{0}', space=sflag, size = 0x4, scoped, tag = 'scoped memory for tpu_custom_call.1']
    #allocation8 [shape = 'u8[3072]{0}', space=vmem, size = 0xc00, scoped, tag = 'input window, operand 2, single buffered']
    #allocation9 [shape = 'u8[1572864]{0}', space=vmem, size = 0x180000, scoped, tag = 'input window, operand 3, single buffered']
    #allocation10 [shape = 's32[1]{0}', space=sflag, size = 0x4, scoped, tag = 'scoped memory for tpu_custom_call.1']
    #allocation11 [shape = 'u8[4096]{0}', space=vmem, size = 0x1000, scoped, tag = 'input window, operand 4, single buffered']
    #allocation12 [shape = 'u8[4096]{0}', space=vmem, size = 0x1000, scoped, tag = 'input window, operand 5, single buffered']
    #allocation13 [shape = 's32[1]{0}', space=sflag, size = 0x4, scoped, tag = 'scoped memory for tpu_custom_call.1']
    #allocation14 [shape = 'u8[4096]{0}', space=vmem, size = 0x1000, scoped, tag = 'input window, operand 6, single buffered']
    #allocation15 [shape = 'u8[2097152]{0}', space=vmem, size = 0x200000, scoped, tag = 'input window, operand 7']
    #allocation16 [shape = 's32[2]{0}', space=sflag, size = 0x8, scoped, tag = 'scoped memory for tpu_custom_call.1']
    #allocation17 [shape = 'u8[8192]{0}', space=vmem, size = 0x2000, scoped, tag = 'input window, operand 8']
    #allocation18 [shape = 'u8[8192]{0}', space=vmem, size = 0x2000, scoped, tag = 'input window, operand 9']
    #allocation19 [shape = 's32[2]{0}', space=sflag, size = 0x8, scoped, tag = 'scoped memory for tpu_custom_call.1']
    #allocation20 [shape = 'u8[16384]{0}', space=vmem, size = 0x4000, scoped, tag = 'output window, operand 0']
    %15 = vsyncpa [#allocation4], 0
    %16 = vsyncpa [#allocation7], 0
    %17 = vsyncpa [#allocation10], 0
    %18 = vsyncpa [#allocation13], 0
    %19 = vsyncpa [#allocation16], 0
    %s20 = scalar_lea.sflag [#allocation16], 1
    %21 = vsyncpa %s20, 0
    %22 = vsyncpa [#allocation19], 0
    %s23 = scalar_lea.sflag [#allocation19], 1
    %24 = vsyncpa %s23, 0
    %25 = vsyncpa [#allocation5], 0
    %s26 = scalar_lea.sflag [#allocation5], 1
    %27 = vsyncpa %s26, 0
    loop: start=0, step=1, limit=6
    $region2: #{tpu_custom_call.1} parent=1 // loop_pre_header
      _
    $region3: #{tpu_custom_call.1} parent=1 // loop_header
      %s29 = sphi 0, %s33
      %p30 = scmp.ge.s32.totalorder %s29, 6
      %s37 = sphi 0, %s37
      %s39 = sphi 0, %s37
      %s40 = sphi 0, %s39
      %s54 = sphi 0, %s40
      %s58 = sphi 0, %s58
      %s60 = sphi 0, %s58
      %s61 = sphi 0, %s60
      %s75 = sphi 0, %s61
      %s79 = sphi 0, %s79
      %s81 = sphi 0, %s79
      %s82 = sphi 0, %s81
      %s96 = sphi 0, %s82
      %s100 = sphi 0, %s100
      %s102 = sphi 0, %s100
      %s103 = sphi 0, %s102
      %s117 = sphi 0, %s103
      %s121 = sphi 0, %s121
      %s123 = sphi 0, %s121
      %s124 = sphi 0, %s123
      %s138 = sphi 0, %s124
      %s142 = sphi 0, %s142
      %s144 = sphi 0, %s142
      %s145 = sphi 0, %s144
      %s159 = sphi 0, %s145
      %s163 = sphi 0, %s163
      %s165 = sphi 0, %s163
      %s166 = sphi 0, %s165
      %s180 = sphi 0, %s166
      %s186 = sphi 0, %s188
      %s189 = sphi 0, %s186
      %s190 = sphi 0, %s189
      %s206 = sphi 0, %s190
      %s212 = sphi 0, %s214
      %s215 = sphi 0, %s212
      %s216 = sphi 0, %s215
      %s232 = sphi 0, %s216
      %s238 = sphi 0, %s240
      %s241 = sphi 0, %s238
      %s242 = sphi 0, %s241
      %s258 = sphi 0, %s242
      %s264 = sphi 0, %s266
      %s267 = sphi 0, %s264
      %s268 = sphi 0, %s267
      %s284 = sphi 0, %s268
    $region4: #{tpu_custom_call.1} parent=1 // loop_header_branch
      %32 = sbr.rel (%p30) target = $region8
    $region5: #{tpu_custom_call.1} parent=1 // loop_body
      %s34 = ssub.s32 %s29, 1
      %s35 = ssub.s32 %s29, 2
      %s36 = sadd.s32 %s29, 1
      %s38 = sadd.s32 %s37, 1
      %p41 = scmp.eq.s32.totalorder %s29, 3
      %p42 = scmp.ne.s32.totalorder %s37, %s39
      %p43 = scmp.eq.s32.totalorder %s29, 0
      %p44 = por %p42, %p43
      %p45 = scmp.ne.s32.totalorder %s37, %s39
      %p46 = scmp.eq.s32.totalorder %s34, 3
      %p47 = por %p45, %p46
      %p48 = scmp.ne.s32.totalorder %s39, %s40
      %p49 = scmp.eq.s32.totalorder %s34, 0
      %p50 = por %p48, %p49
      %p51 = scmp.ne.s32.totalorder %s39, %s40
      %p52 = scmp.eq.s32.totalorder %s35, 3
      %p53 = por %p51, %p52
      %p55 = scmp.ne.s32.totalorder %s40, %s54
      %p56 = scmp.eq.s32.totalorder %s35, 0
      %p57 = por %p55, %p56
      %s59 = sadd.s32 %s58, 1
      %p62 = scmp.eq.s32.totalorder %s29, 3
      %p63 = scmp.ne.s32.totalorder %s58, %s60
      %p64 = scmp.eq.s32.totalorder %s29, 0
      %p65 = por %p63, %p64
      %p66 = scmp.ne.s32.totalorder %s58, %s60
      %p67 = scmp.eq.s32.totalorder %s34, 3
      %p68 = por %p66, %p67
      %p69 = scmp.ne.s32.totalorder %s60, %s61
      %p70 = scmp.eq.s32.totalorder %s34, 0
      %p71 = por %p69, %p70
      %p72 = scmp.ne.s32.totalorder %s60, %s61
      %p73 = scmp.eq.s32.totalorder %s35, 3
      %p74 = por %p72, %p73
      %p76 = scmp.ne.s32.totalorder %s61, %s75
      %p77 = scmp.eq.s32.totalorder %s35, 0
      %p78 = por %p76, %p77
      %s80 = sadd.s32 %s79, 1
      %p83 = scmp.eq.s32.totalorder %s29, 3
      %p84 = scmp.ne.s32.totalorder %s79, %s81
      %p85 = scmp.eq.s32.totalorder %s29, 0
      %p86 = por %p84, %p85
      %p87 = scmp.ne.s32.totalorder %s79, %s81
      %p88 = scmp.eq.s32.totalorder %s34, 3
      %p89 = por %p87, %p88
      %p90 = scmp.ne.s32.totalorder %s81, %s82
      %p91 = scmp.eq.s32.totalorder %s34, 0
      %p92 = por %p90, %p91
      %p93 = scmp.ne.s32.totalorder %s81, %s82
      %p94 = scmp.eq.s32.totalorder %s35, 3
      %p95 = por %p93, %p94
      %p97 = scmp.ne.s32.totalorder %s82, %s96
      %p98 = scmp.eq.s32.totalorder %s35, 0
      %p99 = por %p97, %p98
      %s101 = sadd.s32 %s100, 1
      %p104 = scmp.eq.s32.totalorder %s29, 3
      %p105 = scmp.ne.s32.totalorder %s100, %s102
      %p106 = scmp.eq.s32.totalorder %s29, 0
      %p107 = por %p105, %p106
      %p108 = scmp.ne.s32.totalorder %s100, %s102
      %p109 = scmp.eq.s32.totalorder %s34, 3
      %p110 = por %p108, %p109
      %p111 = scmp.ne.s32.totalorder %s102, %s103
      %p112 = scmp.eq.s32.totalorder %s34, 0
      %p113 = por %p111, %p112
      %p114 = scmp.ne.s32.totalorder %s102, %s103
      %p115 = scmp.eq.s32.totalorder %s35, 3
      %p116 = por %p114, %p115
      %p118 = scmp.ne.s32.totalorder %s103, %s117
      %p119 = scmp.eq.s32.totalorder %s35, 0
      %p120 = por %p118, %p119
      %s122 = sadd.s32 %s121, 1
      %p125 = scmp.eq.s32.totalorder %s29, 3
      %p126 = scmp.ne.s32.totalorder %s121, %s123
      %p127 = scmp.eq.s32.totalorder %s29, 0
      %p128 = por %p126, %p127
      %p129 = scmp.ne.s32.totalorder %s121, %s123
      %p130 = scmp.eq.s32.totalorder %s34, 3
      %p131 = por %p129, %p130
      %p132 = scmp.ne.s32.totalorder %s123, %s124
      %p133 = scmp.eq.s32.totalorder %s34, 0
      %p134 = por %p132, %p133
      %p135 = scmp.ne.s32.totalorder %s123, %s124
      %p136 = scmp.eq.s32.totalorder %s35, 3
      %p137 = por %p135, %p136
      %p139 = scmp.ne.s32.totalorder %s124, %s138
      %p140 = scmp.eq.s32.totalorder %s35, 0
      %p141 = por %p139, %p140
      %s143 = sadd.s32 %s142, 1
      %p146 = scmp.eq.s32.totalorder %s29, 3
      %p147 = scmp.ne.s32.totalorder %s142, %s144
      %p148 = scmp.eq.s32.totalorder %s29, 0
      %p149 = por %p147, %p148
      %p150 = scmp.ne.s32.totalorder %s142, %s144
      %p151 = scmp.eq.s32.totalorder %s34, 3
      %p152 = por %p150, %p151
      %p153 = scmp.ne.s32.totalorder %s144, %s145
      %p154 = scmp.eq.s32.totalorder %s34, 0
      %p155 = por %p153, %p154
      %p156 = scmp.ne.s32.totalorder %s144, %s145
      %p157 = scmp.eq.s32.totalorder %s35, 3
      %p158 = por %p156, %p157
      %p160 = scmp.ne.s32.totalorder %s145, %s159
      %p161 = scmp.eq.s32.totalorder %s35, 0
      %p162 = por %p160, %p161
      %s164 = sadd.s32 %s163, 1
      %p167 = scmp.eq.s32.totalorder %s29, 3
      %p168 = scmp.ne.s32.totalorder %s163, %s165
      %p169 = scmp.eq.s32.totalorder %s29, 0
      %p170 = por %p168, %p169
      %p171 = scmp.ne.s32.totalorder %s163, %s165
      %p172 = scmp.eq.s32.totalorder %s34, 3
      %p173 = por %p171, %p172
      %p174 = scmp.ne.s32.totalorder %s165, %s166
      %p175 = scmp.eq.s32.totalorder %s34, 0
      %p176 = por %p174, %p175
      %p177 = scmp.ne.s32.totalorder %s165, %s166
      %p178 = scmp.eq.s32.totalorder %s35, 3
      %p179 = por %p177, %p178
      %p181 = scmp.ne.s32.totalorder %s166, %s180
      %p182 = scmp.eq.s32.totalorder %s35, 0
      %p183 = por %p181, %p182
      %s184 = ssub.s32 %s29, %s36
      %p185 = scmp.eq.s32.totalorder %s184, 0
      %s187 = sadd.s32 %s186, 1
      %s188 = scalar_select %p185, %s186, %s187
      %p191 = pneg %p185
      %p192 = scmp.eq.s32.totalorder %s29, 3
      %p193 = por %p191, %p192
      %p194 = scmp.ne.s32.totalorder %s186, %s189
      %p195 = scmp.eq.s32.totalorder %s29, 0
      %p196 = por %p194, %p195
      %p197 = scmp.ne.s32.totalorder %s186, %s189
      %p198 = scmp.eq.s32.totalorder %s34, 3
      %p199 = por %p197, %p198
      %p200 = scmp.ne.s32.totalorder %s189, %s190
      %p201 = scmp.eq.s32.totalorder %s34, 0
      %p202 = por %p200, %p201
      %p203 = scmp.ne.s32.totalorder %s189, %s190
      %p204 = scmp.eq.s32.totalorder %s35, 3
      %p205 = por %p203, %p204
      %p207 = scmp.ne.s32.totalorder %s190, %s206
      %p208 = scmp.eq.s32.totalorder %s35, 0
      %p209 = por %p207, %p208
      %s210 = ssub.s32 %s29, %s36
      %p211 = scmp.eq.s32.totalorder %s210, 0
      %s213 = sadd.s32 %s212, 1
      %s214 = scalar_select %p211, %s212, %s213
      %p217 = pneg %p211
      %p218 = scmp.eq.s32.totalorder %s29, 3
      %p219 = por %p217, %p218
      %p220 = scmp.ne.s32.totalorder %s212, %s215
      %p221 = scmp.eq.s32.totalorder %s29, 0
      %p222 = por %p220, %p221
      %p223 = scmp.ne.s32.totalorder %s212, %s215
      %p224 = scmp.eq.s32.totalorder %s34, 3
      %p225 = por %p223, %p224
      %p226 = scmp.ne.s32.totalorder %s215, %s216
      %p227 = scmp.eq.s32.totalorder %s34, 0
      %p228 = por %p226, %p227
      %p229 = scmp.ne.s32.totalorder %s215, %s216
      %p230 = scmp.eq.s32.totalorder %s35, 3
      %p231 = por %p229, %p230
      %p233 = scmp.ne.s32.totalorder %s216, %s232
      %p234 = scmp.eq.s32.totalorder %s35, 0
      %p235 = por %p233, %p234
      %s236 = ssub.s32 %s29, %s36
      %p237 = scmp.eq.s32.totalorder %s236, 0
      %s239 = sadd.s32 %s238, 1
      %s240 = scalar_select %p237, %s238, %s239
      %p243 = pneg %p237
      %p244 = scmp.eq.s32.totalorder %s29, 3
      %p245 = por %p243, %p244
      %p246 = scmp.ne.s32.totalorder %s238, %s241
      %p247 = scmp.eq.s32.totalorder %s29, 0
      %p248 = por %p246, %p247
      %p249 = scmp.ne.s32.totalorder %s238, %s241
      %p250 = scmp.eq.s32.totalorder %s34, 3
      %p251 = por %p249, %p250
      %p252 = scmp.ne.s32.totalorder %s241, %s242
      %p253 = scmp.eq.s32.totalorder %s34, 0
      %p254 = por %p252, %p253
      %p255 = scmp.ne.s32.totalorder %s241, %s242
      %p256 = scmp.eq.s32.totalorder %s35, 3
      %p257 = por %p255, %p256
      %p259 = scmp.ne.s32.totalorder %s242, %s258
      %p260 = scmp.eq.s32.totalorder %s35, 0
      %p261 = por %p259, %p260
      %s262 = ssub.s32 %s29, %s36
      %p263 = scmp.eq.s32.totalorder %s262, 0
      %s265 = sadd.s32 %s264, 1
      %s266 = scalar_select %p263, %s264, %s265
      %p269 = pneg %p263
      %p270 = scmp.eq.s32.totalorder %s29, 3
      %p271 = por %p269, %p270
      %p272 = scmp.ne.s32.totalorder %s264, %s267
      %p273 = scmp.eq.s32.totalorder %s29, 0
      %p274 = por %p272, %p273
      %p275 = scmp.ne.s32.totalorder %s264, %s267
      %p276 = scmp.eq.s32.totalorder %s34, 3
      %p277 = por %p275, %p276
      %p278 = scmp.ne.s32.totalorder %s267, %s268
      %p279 = scmp.eq.s32.totalorder %s34, 0
      %p280 = por %p278, %p279
      %p281 = scmp.ne.s32.totalorder %s267, %s268
      %p282 = scmp.eq.s32.totalorder %s35, 3
      %p283 = por %p281, %p282
      %p285 = scmp.ne.s32.totalorder %s268, %s284
      %p286 = scmp.eq.s32.totalorder %s35, 0
      %p287 = por %p285, %p286
      %p288 = scmp.le.s32.totalorder 1, %s29
      %p289 = scmp.lt.s32.totalorder %s29, 5
      %p290 = pnand %p288, %p289
      %p291 = pneg %p290
      // Predicated region
      $region9: #{tpu_custom_call.1} parent=5 // pred_check
        _
      $region10: #{tpu_custom_call.1} parent=5 // pred_check_branch
        %293 = sbr.rel (%p290) target = $region12
      $region11: #{tpu_custom_call.1} parent=5 // pred_region
        %s294 = ssub.s32 %s29, 1
        // Predicated region
        $region13: #{tpu_custom_call.1} parent=11 // pred_check
          %p295 = pneg %p50
        $region14: #{tpu_custom_call.1} parent=11 // pred_check_branch
          %297 = sbr.rel (%p295) target = $region16
        $region15: #{tpu_custom_call.1} parent=11 // pred_region
          %s299 = ssub.s32 192, 192
          %300 = vsyncadd [#allocation4], %s299
          %s302 = sshll.u32 [#allocation3], 4
          %s303 = int_to_ptr.vmem [resolvable:$true] %s302
          %305 = dma.hbm_to_vmem [thread:$0]  %s0, 192, %s303, [#allocation4]
        $region16: #{tpu_custom_call.1} parent=11 // pred_fallthru
          _
        // Predicated region
        $region17: #{tpu_custom_call.1} parent=11 // pred_check
          %p306 = pneg %p71
        $region18: #{tpu_custom_call.1} parent=11 // pred_check_branch
          %308 = sbr.rel (%p306) target = $region20
        $region19: #{tpu_custom_call.1} parent=11 // pred_region
          %s310 = ssub.s32 36864, 36864
          %311 = vsyncadd [#allocation7], %s310
          %s312 = sshll.u32 [#allocation6], 4
          %s313 = int_to_ptr.vmem [resolvable:$true] %s312
          %318 = dma.hbm_to_vmem [thread:$0]  %s1, 36864, %s313, [#allocation7], 384, 384, 24
        $region20: #{tpu_custom_call.1} parent=11 // pred_fallthru
          _
        // Predicated region
        $region21: #{tpu_custom_call.1} parent=11 // pred_check
          %p319 = pneg %p92
        $region22: #{tpu_custom_call.1} parent=11 // pred_check_branch
          %321 = sbr.rel (%p319) target = $region24
        $region23: #{tpu_custom_call.1} parent=11 // pred_region
          %s323 = ssub.s32 96, 96
          %324 = vsyncadd [#allocation7], %s323
          %s326 = sshll.u32 [#allocation8], 4
          %s327 = int_to_ptr.vmem [resolvable:$true] %s326
          %329 = dma.hbm_to_vmem [thread:$0]  %s2, 96, %s327, [#allocation7]
        $region24: #{tpu_custom_call.1} parent=11 // pred_fallthru
          _
        // Predicated region
        $region25: #{tpu_custom_call.1} parent=11 // pred_check
          %p330 = pneg %p113
        $region26: #{tpu_custom_call.1} parent=11 // pred_check_branch
          %332 = sbr.rel (%p330) target = $region28
        $region27: #{tpu_custom_call.1} parent=11 // pred_region
          %s334 = ssub.s32 49152, 49152
          %335 = vsyncadd [#allocation10], %s334
          %s336 = sshll.u32 [#allocation9], 4
          %s337 = int_to_ptr.vmem [resolvable:$true] %s336
          %342 = dma.hbm_to_vmem [thread:$0]  %s3, 49152, %s337, [#allocation10], 512, 512, 32
        $region28: #{tpu_custom_call.1} parent=11 // pred_fallthru
          _
        // Predicated region
        $region29: #{tpu_custom_call.1} parent=11 // pred_check
          %p343 = pneg %p134
        $region30: #{tpu_custom_call.1} parent=11 // pred_check_branch
          %345 = sbr.rel (%p343) target = $region32
        $region31: #{tpu_custom_call.1} parent=11 // pred_region
          %s347 = ssub.s32 128, 128
          %348 = vsyncadd [#allocation10], %s347
          %s350 = sshll.u32 [#allocation11], 4
          %s351 = int_to_ptr.vmem [resolvable:$true] %s350
          %353 = dma.hbm_to_vmem [thread:$0]  %s4, 128, %s351, [#allocation10]
        $region32: #{tpu_custom_call.1} parent=11 // pred_fallthru
          _
        // Predicated region
        $region33: #{tpu_custom_call.1} parent=11 // pred_check
          %p354 = pneg %p155
        $region34: #{tpu_custom_call.1} parent=11 // pred_check_branch
          %356 = sbr.rel (%p354) target = $region36
        $region35: #{tpu_custom_call.1} parent=11 // pred_region
          %s358 = ssub.s32 128, 128
          %359 = vsyncadd [#allocation13], %s358
          %s361 = sshll.u32 [#allocation12], 4
          %s362 = int_to_ptr.vmem [resolvable:$true] %s361
          %364 = dma.hbm_to_vmem [thread:$0]  %s5, 128, %s362, [#allocation13]
        $region36: #{tpu_custom_call.1} parent=11 // pred_fallthru
          _
        // Predicated region
        $region37: #{tpu_custom_call.1} parent=11 // pred_check
          %p365 = pneg %p176
        $region38: #{tpu_custom_call.1} parent=11 // pred_check_branch
          %367 = sbr.rel (%p365) target = $region40
        $region39: #{tpu_custom_call.1} parent=11 // pred_region
          %s369 = ssub.s32 128, 128
          %370 = vsyncadd [#allocation13], %s369
          %s372 = sshll.u32 [#allocation14], 4
          %s373 = int_to_ptr.vmem [resolvable:$true] %s372
          %375 = dma.hbm_to_vmem [thread:$0]  %s6, 128, %s373, [#allocation13]
        $region40: #{tpu_custom_call.1} parent=11 // pred_fallthru
          _
      $region12: #{tpu_custom_call.1} parent=5 // pred_fallthru
        _
      %p376 = scmp.lt.s32.totalorder %s29, 4
      // Predicated region
      $region41: #{tpu_custom_call.1} parent=5 // pred_check
        %p377 = pneg %p376
      $region42: #{tpu_custom_call.1} parent=5 // pred_check_branch
        %379 = sbr.rel (%p377) target = $region44
      $region43: #{tpu_custom_call.1} parent=5 // pred_region
        // Predicated region
        $region45: #{tpu_custom_call.1} parent=43 // pred_check
          %p380 = pneg %p196
        $region46: #{tpu_custom_call.1} parent=43 // pred_check_branch
          %382 = sbr.rel (%p380) target = $region48
        $region47: #{tpu_custom_call.1} parent=43 // pred_region
          %s383 = sand.u32 %s29, 1
          %s384 = scalar_lea.sflag [#allocation16], %s383
          %s385 = sand.u32 %s186, 1
          %s386 = smul.addr %s385, 2048
          %s387 = scalar_lea.vmem [#allocation15], %s386
          %s388 = smul.u32 8, %s29
          %s390 = ssub.s32 32768, 32768
          %391 = vsyncadd %s384, %s390
          %s392 = smul.addr %s388, 128
          %s393 = scalar_lea.hbm %s7, %s392
          %s394 = sshll.u32 %s387, 4
          %s395 = int_to_ptr.vmem [resolvable:$true] %s394
          %400 = dma.hbm_to_vmem [thread:$0]  %s393, 32768, %s395, %s384, 4096, 1024, 64
        $region48: #{tpu_custom_call.1} parent=43 // pred_fallthru
          _
        // Predicated region
        $region49: #{tpu_custom_call.1} parent=43 // pred_check
          %p401 = pneg %p222
        $region50: #{tpu_custom_call.1} parent=43 // pred_check_branch
          %403 = sbr.rel (%p401) target = $region52
        $region51: #{tpu_custom_call.1} parent=43 // pred_region
          %s404 = sand.u32 %s29, 1
          %s405 = scalar_lea.sflag [#allocation16], %s404
          %s406 = sand.u32 %s212, 1
          %s407 = smul.addr %s406, 8
          %s408 = scalar_lea.vmem [#allocation17], %s407
          %s409 = smul.u32 8, %s29
          %s411 = ssub.s32 128, 128
          %412 = vsyncadd %s405, %s411
          %s413 = smul.addr %s409, 16
          %s414 = scalar_lea.hbm %s8, %s413
          %s416 = sshll.u32 %s408, 4
          %s417 = int_to_ptr.vmem [resolvable:$true] %s416
          %419 = dma.hbm_to_vmem [thread:$0]  %s414, 128, %s417, %s405
        $region52: #{tpu_custom_call.1} parent=43 // pred_fallthru
          _
        // Predicated region
        $region53: #{tpu_custom_call.1} parent=43 // pred_check
          %p420 = pneg %p248
        $region54: #{tpu_custom_call.1} parent=43 // pred_check_branch
          %422 = sbr.rel (%p420) target = $region56
        $region55: #{tpu_custom_call.1} parent=43 // pred_region
          %s423 = sand.u32 %s238, 1
          %s424 = scalar_lea.sflag [#allocation19], %s423
          %s425 = sand.u32 %s238, 1
          %s426 = smul.addr %s425, 8
          %s427 = scalar_lea.vmem [#allocation18], %s426
          %s428 = smul.u32 8, %s29
          %s430 = ssub.s32 128, 128
          %431 = vsyncadd %s424, %s430
          %s432 = smul.addr %s428, 16
          %s433 = scalar_lea.hbm %s9, %s432
          %s435 = sshll.u32 %s427, 4
          %s436 = int_to_ptr.vmem [resolvable:$true] %s435
          %438 = dma.hbm_to_vmem [thread:$0]  %s433, 128, %s436, %s424
        $region56: #{tpu_custom_call.1} parent=43 // pred_fallthru
          _
      $region44: #{tpu_custom_call.1} parent=5 // pred_fallthru
        _
      %p439 = scmp.le.s32.totalorder 1, %s29
      %p440 = scmp.lt.s32.totalorder %s29, 5
      %p441 = pnand %p439, %p440
      %p442 = pneg %p441
      // Predicated region
      $region57: #{tpu_custom_call.1} parent=5 // pred_check
        _
      $region58: #{tpu_custom_call.1} parent=5 // pred_check_branch
        %444 = sbr.rel (%p441) target = $region60
      $region59: #{tpu_custom_call.1} parent=5 // pred_region
        %s445 = ssub.s32 %s29, 1
        // Predicated region
        $region61: #{tpu_custom_call.1} parent=59 // pred_check
          %p446 = pneg %p50
        $region62: #{tpu_custom_call.1} parent=59 // pred_check_branch
          %448 = sbr.rel (%p446) target = $region64
        $region63: #{tpu_custom_call.1} parent=59 // pred_region
          %449 = dma.done [#allocation4], 192
        $region64: #{tpu_custom_call.1} parent=59 // pred_fallthru
          _
        // Predicated region
        $region65: #{tpu_custom_call.1} parent=59 // pred_check
          %p450 = pneg %p71
        $region66: #{tpu_custom_call.1} parent=59 // pred_check_branch
          %452 = sbr.rel (%p450) target = $region68
        $region67: #{tpu_custom_call.1} parent=59 // pred_region
          %453 = dma.done [#allocation7], 36864
        $region68: #{tpu_custom_call.1} parent=59 // pred_fallthru
          _
        // Predicated region
        $region69: #{tpu_custom_call.1} parent=59 // pred_check
          %p454 = pneg %p92
        $region70: #{tpu_custom_call.1} parent=59 // pred_check_branch
          %456 = sbr.rel (%p454) target = $region72
        $region71: #{tpu_custom_call.1} parent=59 // pred_region
          %457 = dma.done [#allocation7], 96
        $region72: #{tpu_custom_call.1} parent=59 // pred_fallthru
          _
        // Predicated region
        $region73: #{tpu_custom_call.1} parent=59 // pred_check
          %p458 = pneg %p113
        $region74: #{tpu_custom_call.1} parent=59 // pred_check_branch
          %460 = sbr.rel (%p458) target = $region76
        $region75: #{tpu_custom_call.1} parent=59 // pred_region
          %461 = dma.done [#allocation10], 49152
        $region76: #{tpu_custom_call.1} parent=59 // pred_fallthru
          _
        // Predicated region
        $region77: #{tpu_custom_call.1} parent=59 // pred_check
          %p462 = pneg %p134
        $region78: #{tpu_custom_call.1} parent=59 // pred_check_branch
          %464 = sbr.rel (%p462) target = $region80
        $region79: #{tpu_custom_call.1} parent=59 // pred_region
          %465 = dma.done [#allocation10], 128
        $region80: #{tpu_custom_call.1} parent=59 // pred_fallthru
          _
        // Predicated region
        $region81: #{tpu_custom_call.1} parent=59 // pred_check
          %p466 = pneg %p155
        $region82: #{tpu_custom_call.1} parent=59 // pred_check_branch
          %468 = sbr.rel (%p466) target = $region84
        $region83: #{tpu_custom_call.1} parent=59 // pred_region
          %469 = dma.done [#allocation13], 128
        $region84: #{tpu_custom_call.1} parent=59 // pred_fallthru
          _
        // Predicated region
        $region85: #{tpu_custom_call.1} parent=59 // pred_check
          %p470 = pneg %p176
        $region86: #{tpu_custom_call.1} parent=59 // pred_check_branch
          %472 = sbr.rel (%p470) target = $region88
        $region87: #{tpu_custom_call.1} parent=59 // pred_region
          %473 = dma.done [#allocation13], 128
        $region88: #{tpu_custom_call.1} parent=59 // pred_fallthru
          _
        %s474 = sand.u32 %s34, 1
        %s475 = scalar_lea.sflag [#allocation16], %s474
        %s476 = sand.u32 %s189, 1
        %s477 = smul.addr %s476, 2048
        %s478 = scalar_lea.vmem [#allocation15], %s477
        // Predicated region
        $region89: #{tpu_custom_call.1} parent=59 // pred_check
          %p479 = pneg %p202
        $region90: #{tpu_custom_call.1} parent=59 // pred_check_branch
          %481 = sbr.rel (%p479) target = $region92
        $region91: #{tpu_custom_call.1} parent=59 // pred_region
          %482 = dma.done %s475, 32768
        $region92: #{tpu_custom_call.1} parent=59 // pred_fallthru
          _
        %s483 = sand.u32 %s34, 1
        %s484 = scalar_lea.sflag [#allocation16], %s483
        %s485 = sand.u32 %s215, 1
        %s486 = smul.addr %s485, 8
        %s487 = scalar_lea.vmem [#allocation17], %s486
        // Predicated region
        $region93: #{tpu_custom_call.1} parent=59 // pred_check
          %p488 = pneg %p228
        $region94: #{tpu_custom_call.1} parent=59 // pred_check_branch
          %490 = sbr.rel (%p488) target = $region96
        $region95: #{tpu_custom_call.1} parent=59 // pred_region
          %491 = dma.done %s484, 128
        $region96: #{tpu_custom_call.1} parent=59 // pred_fallthru
          _
        %s492 = sand.u32 %s241, 1
        %s493 = scalar_lea.sflag [#allocation19], %s492
        %s494 = sand.u32 %s241, 1
        %s495 = smul.addr %s494, 8
        %s496 = scalar_lea.vmem [#allocation18], %s495
        // Predicated region
        $region97: #{tpu_custom_call.1} parent=59 // pred_check
          %p497 = pneg %p254
        $region98: #{tpu_custom_call.1} parent=59 // pred_check_branch
          %499 = sbr.rel (%p497) target = $region100
        $region99: #{tpu_custom_call.1} parent=59 // pred_region
          %500 = dma.done %s493, 128
        $region100: #{tpu_custom_call.1} parent=59 // pred_fallthru
          _
        %p501 = pneg %p50
        %p502 = pneg %p47
        %p503 = pneg %p71
        %p504 = pneg %p68
        %p505 = pneg %p92
        %p506 = pneg %p89
        %p507 = pneg %p113
        %p508 = pneg %p110
        %p509 = pneg %p134
        %p510 = pneg %p131
        %p511 = pneg %p155
        %p512 = pneg %p152
        %p513 = pneg %p176
        %p514 = pneg %p173
        %s515 = sand.u32 %s34, 1
        %s516 = scalar_lea.sflag [#allocation16], %s515
        %s517 = sand.u32 %s189, 1
        %s518 = smul.addr %s517, 2048
        %s519 = scalar_lea.vmem [#allocation15], %s518
        %p520 = pneg %p202
        %p521 = pneg %p199
        %s522 = sand.u32 %s34, 1
        %s523 = scalar_lea.sflag [#allocation16], %s522
        %s524 = sand.u32 %s215, 1
        %s525 = smul.addr %s524, 8
        %s526 = scalar_lea.vmem [#allocation17], %s525
        %p527 = pneg %p228
        %p528 = pneg %p225
        %s529 = sand.u32 %s241, 1
        %s530 = scalar_lea.sflag [#allocation19], %s529
        %s531 = sand.u32 %s241, 1
        %s532 = smul.addr %s531, 8
        %s533 = scalar_lea.vmem [#allocation18], %s532
        %p534 = pneg %p254
        %p535 = pneg %p251
        %p536 = pneg %p280
        %p537 = pneg %p277
        %s538 = sand.u32 %s267, 1
        %s539 = scalar_lea.sflag [#allocation5], %s538
        %s540 = sand.u32 %s267, 1
        %s541 = smul.addr %s540, 16
        %s542 = scalar_lea.vmem [#allocation20], %s541
        %s543 = smul.u32 8, %s34
        %s544 = smul.u32 8, %s34
        %s545 = smul.u32 8, %s34
        %s546 = smul.u32 8, %s34
        %p547 = scmp.eq.s32.totalorder %s34, 0
        // Predicated region
        $region101: #{tpu_custom_call.1} parent=59 // pred_check
          %p548 = pneg %p547
        $region102: #{tpu_custom_call.1} parent=59 // pred_check_branch
          %550 = sbr.rel (%p548) target = $region104
        $region103: #{tpu_custom_call.1} parent=59 // pred_region
          %v551 = vld [vmem:[#allocation3] sm:$0xff]
          %v552 = vld [vmem:[#allocation3 + $0x8] sm:$0xf]
          %v555 = vcombine.high %v551, %v551
          %v557 = vunpack.c.l.s4 1983009808
          %v558 = vunpack.c.0.s8 %v557
          %v559 = vlaneseq
          %v560 = vshrl.u32 %v559, 7
          %v561 = vsub.s32 %v558, %v560
          %v562 = vrot.slane %v551, %v561
          %v564 = vunpack.c.l.s4 1983009808
          %v565 = vunpack.c.0.s8 %v564
          %v566 = vlaneseq
          %v567 = vshrl.u32 %v566, 7
          %v568 = vsub.s32 %v565, %v567
          %v569 = vrot.slane %v555, %v568
          %v570 = vcombine.high %v562, %v562
          %v571 = vcombine.high %v569, %v569
          %v573 = vunpack.c.l.s4 1983009808
          %v574 = vunpack.c.0.s8 %v573
          %v575 = vlaneseq
          %v576 = vshrl.u32 %v575, 7
          %v577 = vsub.s32 %v574, %v576
          %v578 = vrot.slane %v552, %v577
          %v579 = vcombine.high %v578, %v578
          %v586 = vpack.c.bf16 %v562, %v562
          %v587 = vpack.c.bf16 %v570, %v570
          %v588 = vpack.c.bf16 %v569, %v569
          %v589 = vpack.c.bf16 %v571, %v571
          %v590 = vpack.c.bf16 %v578, %v578
          %v591 = vpack.c.bf16 %v579, %v579
          %v592 = vld [vmem:[#allocation6] sm:$0xff]
          %v593 = vld [vmem:[#allocation6 + $0x8] sm:$0xff]
          %v594 = vld [vmem:[#allocation6 + $0x10] sm:$0xff]
          %v595 = vld [vmem:[#allocation6 + $0x18] sm:$0xff]
          %v596 = vld [vmem:[#allocation6 + $0x20] sm:$0xff]
          %v597 = vld [vmem:[#allocation6 + $0x28] sm:$0xff]
          %v598 = vld [vmem:[#allocation6 + $0x30] sm:$0xff]
          %v599 = vld [vmem:[#allocation6 + $0x38] sm:$0xff]
          %v600 = vld [vmem:[#allocation6 + $0x40] sm:$0xff]
          %v601 = vld [vmem:[#allocation6 + $0x48] sm:$0xff]
          %v602 = vld [vmem:[#allocation6 + $0x50] sm:$0xff]
          %v603 = vld [vmem:[#allocation6 + $0x58] sm:$0xff]
          %v604 = vld [vmem:[#allocation6 + $0x60] sm:$0xff]
          %v605 = vld [vmem:[#allocation6 + $0x68] sm:$0xff]
          %v606 = vld [vmem:[#allocation6 + $0x70] sm:$0xff]
          %v607 = vld [vmem:[#allocation6 + $0x78] sm:$0xff]
          %v608 = vld [vmem:[#allocation6 + $0x80] sm:$0xff]
          %v609 = vld [vmem:[#allocation6 + $0x88] sm:$0xff]
          %v610 = vld [vmem:[#allocation6 + $0x90] sm:$0xff]
          %v611 = vld [vmem:[#allocation6 + $0x98] sm:$0xff]
          %v612 = vld [vmem:[#allocation6 + $0xa0] sm:$0xff]
          %v613 = vld [vmem:[#allocation6 + $0xa8] sm:$0xff]
          %v614 = vld [vmem:[#allocation6 + $0xb0] sm:$0xff]
          %v615 = vld [vmem:[#allocation6 + $0xb8] sm:$0xff]
          %v616 = vld [vmem:[#allocation6 + $0xc0] sm:$0xff]
          %v617 = vld [vmem:[#allocation6 + $0xc8] sm:$0xff]
          %v618 = vld [vmem:[#allocation6 + $0xd0] sm:$0xff]
          %v619 = vld [vmem:[#allocation6 + $0xd8] sm:$0xff]
          %v620 = vld [vmem:[#allocation6 + $0xe0] sm:$0xff]
          %v621 = vld [vmem:[#allocation6 + $0xe8] sm:$0xff]
          %v622 = vld [vmem:[#allocation6 + $0xf0] sm:$0xff]
          %v623 = vld [vmem:[#allocation6 + $0xf8] sm:$0xff]
          %v624 = vld [vmem:[#allocation6 + $0x100] sm:$0xff]
          %v625 = vld [vmem:[#allocation6 + $0x108] sm:$0xff]
          %v626 = vld [vmem:[#allocation6 + $0x110] sm:$0xff]
          %v627 = vld [vmem:[#allocation6 + $0x118] sm:$0xff]
          %v628 = vld [vmem:[#allocation6 + $0x120] sm:$0xff]
          %v629 = vld [vmem:[#allocation6 + $0x128] sm:$0xff]
          %v630 = vld [vmem:[#allocation6 + $0x130] sm:$0xff]
          %v631 = vld [vmem:[#allocation6 + $0x138] sm:$0xff]
          %v632 = vld [vmem:[#allocation6 + $0x140] sm:$0xff]
          %v633 = vld [vmem:[#allocation6 + $0x148] sm:$0xff]
          %v634 = vld [vmem:[#allocation6 + $0x150] sm:$0xff]
          %v635 = vld [vmem:[#allocation6 + $0x158] sm:$0xff]
          %v636 = vld [vmem:[#allocation6 + $0x160] sm:$0xff]
          %v637 = vld [vmem:[#allocation6 + $0x168] sm:$0xff]
          %v638 = vld [vmem:[#allocation6 + $0x170] sm:$0xff]
          %v639 = vld [vmem:[#allocation6 + $0x178] sm:$0xff]
          %v640 = vld [vmem:[#allocation6 + $0x180] sm:$0xff]
          %v641 = vld [vmem:[#allocation6 + $0x188] sm:$0xff]
          %v642 = vld [vmem:[#allocation6 + $0x190] sm:$0xff]
          %v643 = vld [vmem:[#allocation6 + $0x198] sm:$0xff]
          %v644 = vld [vmem:[#allocation6 + $0x1a0] sm:$0xff]
          %v645 = vld [vmem:[#allocation6 + $0x1a8] sm:$0xff]
          %v646 = vld [vmem:[#allocation6 + $0x1b0] sm:$0xff]
          %v647 = vld [vmem:[#allocation6 + $0x1b8] sm:$0xff]
          %v648 = vld [vmem:[#allocation6 + $0x1c0] sm:$0xff]
          %v649 = vld [vmem:[#allocation6 + $0x1c8] sm:$0xff]
          %v650 = vld [vmem:[#allocation6 + $0x1d0] sm:$0xff]
          %v651 = vld [vmem:[#allocation6 + $0x1d8] sm:$0xff]
          %v652 = vld [vmem:[#allocation6 + $0x1e0] sm:$0xff]
          %v653 = vld [vmem:[#allocation6 + $0x1e8] sm:$0xff]
          %v654 = vld [vmem:[#allocation6 + $0x1f0] sm:$0xff]
          %v655 = vld [vmem:[#allocation6 + $0x1f8] sm:$0xff]
          %v656 = vld [vmem:[#allocation6 + $0x200] sm:$0xff]
          %v657 = vld [vmem:[#allocation6 + $0x208] sm:$0xff]
          %v658 = vld [vmem:[#allocation6 + $0x210] sm:$0xff]
          %v659 = vld [vmem:[#allocation6 + $0x218] sm:$0xff]
          %v660 = vld [vmem:[#allocation6 + $0x220] sm:$0xff]
          %v661 = vld [vmem:[#allocation6 + $0x228] sm:$0xff]
          %v662 = vld [vmem:[#allocation6 + $0x230] sm:$0xff]
          %v663 = vld [vmem:[#allocation6 + $0x238] sm:$0xff]
          %v664 = vld [vmem:[#allocation6 + $0x240] sm:$0xff]
          %v665 = vld [vmem:[#allocation6 + $0x248] sm:$0xff]
          %v666 = vld [vmem:[#allocation6 + $0x250] sm:$0xff]
          %v667 = vld [vmem:[#allocation6 + $0x258] sm:$0xff]
          %v668 = vld [vmem:[#allocation6 + $0x260] sm:$0xff]
          %v669 = vld [vmem:[#allocation6 + $0x268] sm:$0xff]
          %v670 = vld [vmem:[#allocation6 + $0x270] sm:$0xff]
          %v671 = vld [vmem:[#allocation6 + $0x278] sm:$0xff]
          %v672 = vld [vmem:[#allocation6 + $0x280] sm:$0xff]
          %v673 = vld [vmem:[#allocation6 + $0x288] sm:$0xff]
          %v674 = vld [vmem:[#allocation6 + $0x290] sm:$0xff]
          %v675 = vld [vmem:[#allocation6 + $0x298] sm:$0xff]
          %v676 = vld [vmem:[#allocation6 + $0x2a0] sm:$0xff]
          %v677 = vld [vmem:[#allocation6 + $0x2a8] sm:$0xff]
          %v678 = vld [vmem:[#allocation6 + $0x2b0] sm:$0xff]
          %v679 = vld [vmem:[#allocation6 + $0x2b8] sm:$0xff]
          %v680 = vld [vmem:[#allocation6 + $0x2c0] sm:$0xff]
          %v681 = vld [vmem:[#allocation6 + $0x2c8] sm:$0xff]
          %v682 = vld [vmem:[#allocation6 + $0x2d0] sm:$0xff]
          %v683 = vld [vmem:[#allocation6 + $0x2d8] sm:$0xff]
          %v684 = vld [vmem:[#allocation6 + $0x2e0] sm:$0xff]
          %v685 = vld [vmem:[#allocation6 + $0x2e8] sm:$0xff]
          %v686 = vld [vmem:[#allocation6 + $0x2f0] sm:$0xff]
          %v687 = vld [vmem:[#allocation6 + $0x2f8] sm:$0xff]
          %v688 = vld [vmem:[#allocation6 + $0x300] sm:$0xff]
          %v689 = vld [vmem:[#allocation6 + $0x308] sm:$0xff]
          %v690 = vld [vmem:[#allocation6 + $0x310] sm:$0xff]
          %v691 = vld [vmem:[#allocation6 + $0x318] sm:$0xff]
          %v692 = vld [vmem:[#allocation6 + $0x320] sm:$0xff]
          %v693 = vld [vmem:[#allocation6 + $0x328] sm:$0xff]
          %v694 = vld [vmem:[#allocation6 + $0x330] sm:$0xff]
          %v695 = vld [vmem:[#allocation6 + $0x338] sm:$0xff]
          %v696 = vld [vmem:[#allocation6 + $0x340] sm:$0xff]
          %v697 = vld [vmem:[#allocation6 + $0x348] sm:$0xff]
          %v698 = vld [vmem:[#allocation6 + $0x350] sm:$0xff]
          %v699 = vld [vmem:[#allocation6 + $0x358] sm:$0xff]
          %v700 = vld [vmem:[#allocation6 + $0x360] sm:$0xff]
          %v701 = vld [vmem:[#allocation6 + $0x368] sm:$0xff]
          %v702 = vld [vmem:[#allocation6 + $0x370] sm:$0xff]
          %v703 = vld [vmem:[#allocation6 + $0x378] sm:$0xff]
          %v704 = vld [vmem:[#allocation6 + $0x380] sm:$0xff]
          %v705 = vld [vmem:[#allocation6 + $0x388] sm:$0xff]
          %v706 = vld [vmem:[#allocation6 + $0x390] sm:$0xff]
          %v707 = vld [vmem:[#allocation6 + $0x398] sm:$0xff]
          %v708 = vld [vmem:[#allocation6 + $0x3a0] sm:$0xff]
          %v709 = vld [vmem:[#allocation6 + $0x3a8] sm:$0xff]
          %v710 = vld [vmem:[#allocation6 + $0x3b0] sm:$0xff]
          %v711 = vld [vmem:[#allocation6 + $0x3b8] sm:$0xff]
          %v712 = vld [vmem:[#allocation6 + $0x3c0] sm:$0xff]
          %v713 = vld [vmem:[#allocation6 + $0x3c8] sm:$0xff]
          %v714 = vld [vmem:[#allocation6 + $0x3d0] sm:$0xff]
          %v715 = vld [vmem:[#allocation6 + $0x3d8] sm:$0xff]
          %v716 = vld [vmem:[#allocation6 + $0x3e0] sm:$0xff]
          %v717 = vld [vmem:[#allocation6 + $0x3e8] sm:$0xff]
          %v718 = vld [vmem:[#allocation6 + $0x3f0] sm:$0xff]
          %v719 = vld [vmem:[#allocation6 + $0x3f8] sm:$0xff]
          %v720 = vld [vmem:[#allocation6 + $0x400] sm:$0xff]
          %v721 = vld [vmem:[#allocation6 + $0x408] sm:$0xff]
          %v722 = vld [vmem:[#allocation6 + $0x410] sm:$0xff]
          %v723 = vld [vmem:[#allocation6 + $0x418] sm:$0xff]
          %v724 = vld [vmem:[#allocation6 + $0x420] sm:$0xff]
          %v725 = vld [vmem:[#allocation6 + $0x428] sm:$0xff]
          %v726 = vld [vmem:[#allocation6 + $0x430] sm:$0xff]
          %v727 = vld [vmem:[#allocation6 + $0x438] sm:$0xff]
          %v728 = vld [vmem:[#allocation6 + $0x440] sm:$0xff]
          %v729 = vld [vmem:[#allocation6 + $0x448] sm:$0xff]
          %v730 = vld [vmem:[#allocation6 + $0x450] sm:$0xff]
          %v731 = vld [vmem:[#allocation6 + $0x458] sm:$0xff]
          %v732 = vld [vmem:[#allocation6 + $0x460] sm:$0xff]
          %v733 = vld [vmem:[#allocation6 + $0x468] sm:$0xff]
          %v734 = vld [vmem:[#allocation6 + $0x470] sm:$0xff]
          %v735 = vld [vmem:[#allocation6 + $0x478] sm:$0xff]
          %v736 = vld [vmem:[#allocation6 + $0x480] sm:$0xff]
          %v737 = vld [vmem:[#allocation6 + $0x488] sm:$0xff]
          %v738 = vld [vmem:[#allocation6 + $0x490] sm:$0xff]
          %v739 = vld [vmem:[#allocation6 + $0x498] sm:$0xff]
          %v740 = vld [vmem:[#allocation6 + $0x4a0] sm:$0xff]
          %v741 = vld [vmem:[#allocation6 + $0x4a8] sm:$0xff]
          %v742 = vld [vmem:[#allocation6 + $0x4b0] sm:$0xff]
          %v743 = vld [vmem:[#allocation6 + $0x4b8] sm:$0xff]
          %v744 = vld [vmem:[#allocation6 + $0x4c0] sm:$0xff]
          %v745 = vld [vmem:[#allocation6 + $0x4c8] sm:$0xff]
          %v746 = vld [vmem:[#allocation6 + $0x4d0] sm:$0xff]
          %v747 = vld [vmem:[#allocation6 + $0x4d8] sm:$0xff]
          %v748 = vld [vmem:[#allocation6 + $0x4e0] sm:$0xff]
          %v749 = vld [vmem:[#allocation6 + $0x4e8] sm:$0xff]
          %v750 = vld [vmem:[#allocation6 + $0x4f0] sm:$0xff]
          %v751 = vld [vmem:[#allocation6 + $0x4f8] sm:$0xff]
          %v752 = vld [vmem:[#allocation6 + $0x500] sm:$0xff]
          %v753 = vld [vmem:[#allocation6 + $0x508] sm:$0xff]
          %v754 = vld [vmem:[#allocation6 + $0x510] sm:$0xff]
          %v755 = vld [vmem:[#allocation6 + $0x518] sm:$0xff]
          %v756 = vld [vmem:[#allocation6 + $0x520] sm:$0xff]
          %v757 = vld [vmem:[#allocation6 + $0x528] sm:$0xff]
          %v758 = vld [vmem:[#allocation6 + $0x530] sm:$0xff]
          %v759 = vld [vmem:[#allocation6 + $0x538] sm:$0xff]
          %v760 = vld [vmem:[#allocation6 + $0x540] sm:$0xff]
          %v761 = vld [vmem:[#allocation6 + $0x548] sm:$0xff]
          %v762 = vld [vmem:[#allocation6 + $0x550] sm:$0xff]
          %v763 = vld [vmem:[#allocation6 + $0x558] sm:$0xff]
          %v764 = vld [vmem:[#allocation6 + $0x560] sm:$0xff]
          %v765 = vld [vmem:[#allocation6 + $0x568] sm:$0xff]
          %v766 = vld [vmem:[#allocation6 + $0x570] sm:$0xff]
          %v767 = vld [vmem:[#allocation6 + $0x578] sm:$0xff]
          %v768 = vld [vmem:[#allocation6 + $0x580] sm:$0xff]
          %v769 = vld [vmem:[#allocation6 + $0x588] sm:$0xff]
          %v770 = vld [vmem:[#allocation6 + $0x590] sm:$0xff]
          %v771 = vld [vmem:[#allocation6 + $0x598] sm:$0xff]
          %v772 = vld [vmem:[#allocation6 + $0x5a0] sm:$0xff]
          %v773 = vld [vmem:[#allocation6 + $0x5a8] sm:$0xff]
          %v774 = vld [vmem:[#allocation6 + $0x5b0] sm:$0xff]
          %v775 = vld [vmem:[#allocation6 + $0x5b8] sm:$0xff]
          %v776 = vld [vmem:[#allocation6 + $0x5c0] sm:$0xff]
          %v777 = vld [vmem:[#allocation6 + $0x5c8] sm:$0xff]
          %v778 = vld [vmem:[#allocation6 + $0x5d0] sm:$0xff]
          %v779 = vld [vmem:[#allocation6 + $0x5d8] sm:$0xff]
          %v780 = vld [vmem:[#allocation6 + $0x5e0] sm:$0xff]
          %v781 = vld [vmem:[#allocation6 + $0x5e8] sm:$0xff]
          %v782 = vld [vmem:[#allocation6 + $0x5f0] sm:$0xff]
          %v783 = vld [vmem:[#allocation6 + $0x5f8] sm:$0xff]
          %v784 = vld [vmem:[#allocation6 + $0x600] sm:$0xff]
          %v785 = vld [vmem:[#allocation6 + $0x608] sm:$0xff]
          %v786 = vld [vmem:[#allocation6 + $0x610] sm:$0xff]
          %v787 = vld [vmem:[#allocation6 + $0x618] sm:$0xff]
          %v788 = vld [vmem:[#allocation6 + $0x620] sm:$0xff]
          %v789 = vld [vmem:[#allocation6 + $0x628] sm:$0xff]
          %v790 = vld [vmem:[#allocation6 + $0x630] sm:$0xff]
          %v791 = vld [vmem:[#allocation6 + $0x638] sm:$0xff]
          %v792 = vld [vmem:[#allocation6 + $0x640] sm:$0xff]
          %v793 = vld [vmem:[#allocation6 + $0x648] sm:$0xff]
          %v794 = vld [vmem:[#allocation6 + $0x650] sm:$0xff]
          %v795 = vld [vmem:[#allocation6 + $0x658] sm:$0xff]
          %v796 = vld [vmem:[#allocation6 + $0x660] sm:$0xff]
          %v797 = vld [vmem:[#allocation6 + $0x668] sm:$0xff]
          %v798 = vld [vmem:[#allocation6 + $0x670] sm:$0xff]
          %v799 = vld [vmem:[#allocation6 + $0x678] sm:$0xff]
          %v800 = vld [vmem:[#allocation6 + $0x680] sm:$0xff]
          %v801 = vld [vmem:[#allocation6 + $0x688] sm:$0xff]
          %v802 = vld [vmem:[#allocation6 + $0x690] sm:$0xff]
          %v803 = vld [vmem:[#allocation6 + $0x698] sm:$0xff]
          %v804 = vld [vmem:[#allocation6 + $0x6a0] sm:$0xff]
          %v805 = vld [vmem:[#allocation6 + $0x6a8] sm:$0xff]
          %v806 = vld [vmem:[#allocation6 + $0x6b0] sm:$0xff]
          %v807 = vld [vmem:[#allocation6 + $0x6b8] sm:$0xff]
          %v808 = vld [vmem:[#allocation6 + $0x6c0] sm:$0xff]
          %v809 = vld [vmem:[#allocation6 + $0x6c8] sm:$0xff]
          %v810 = vld [vmem:[#allocation6 + $0x6d0] sm:$0xff]
          %v811 = vld [vmem:[#allocation6 + $0x6d8] sm:$0xff]
          %v812 = vld [vmem:[#allocation6 + $0x6e0] sm:$0xff]
          %v813 = vld [vmem:[#allocation6 + $0x6e8] sm:$0xff]
          %v814 = vld [vmem:[#allocation6 + $0x6f0] sm:$0xff]
          %v815 = vld [vmem:[#allocation6 + $0x6f8] sm:$0xff]
          %v816 = vld [vmem:[#allocation6 + $0x700] sm:$0xff]
          %v817 = vld [vmem:[#allocation6 + $0x708] sm:$0xff]
          %v818 = vld [vmem:[#allocation6 + $0x710] sm:$0xff]
          %v819 = vld [vmem:[#allocation6 + $0x718] sm:$0xff]
          %v820 = vld [vmem:[#allocation6 + $0x720] sm:$0xff]
          %v821 = vld [vmem:[#allocation6 + $0x728] sm:$0xff]
          %v822 = vld [vmem:[#allocation6 + $0x730] sm:$0xff]
          %v823 = vld [vmem:[#allocation6 + $0x738] sm:$0xff]
          %v824 = vld [vmem:[#allocation6 + $0x740] sm:$0xff]
          %v825 = vld [vmem:[#allocation6 + $0x748] sm:$0xff]
          %v826 = vld [vmem:[#allocation6 + $0x750] sm:$0xff]
          %v827 = vld [vmem:[#allocation6 + $0x758] sm:$0xff]
          %v828 = vld [vmem:[#allocation6 + $0x760] sm:$0xff]
          %v829 = vld [vmem:[#allocation6 + $0x768] sm:$0xff]
          %v830 = vld [vmem:[#allocation6 + $0x770] sm:$0xff]
          %v831 = vld [vmem:[#allocation6 + $0x778] sm:$0xff]
          %v832 = vld [vmem:[#allocation6 + $0x780] sm:$0xff]
          %v833 = vld [vmem:[#allocation6 + $0x788] sm:$0xff]
          %v834 = vld [vmem:[#allocation6 + $0x790] sm:$0xff]
          %v835 = vld [vmem:[#allocation6 + $0x798] sm:$0xff]
          %v836 = vld [vmem:[#allocation6 + $0x7a0] sm:$0xff]
          %v837 = vld [vmem:[#allocation6 + $0x7a8] sm:$0xff]
          %v838 = vld [vmem:[#allocation6 + $0x7b0] sm:$0xff]
          %v839 = vld [vmem:[#allocation6 + $0x7b8] sm:$0xff]
          %v840 = vld [vmem:[#allocation6 + $0x7c0] sm:$0xff]
          %v841 = vld [vmem:[#allocation6 + $0x7c8] sm:$0xff]
          %v842 = vld [vmem:[#allocation6 + $0x7d0] sm:$0xff]
          %v843 = vld [vmem:[#allocation6 + $0x7d8] sm:$0xff]
          %v844 = vld [vmem:[#allocation6 + $0x7e0] sm:$0xff]
          %v845 = vld [vmem:[#allocation6 + $0x7e8] sm:$0xff]
          %v846 = vld [vmem:[#allocation6 + $0x7f0] sm:$0xff]
          %v847 = vld [vmem:[#allocation6 + $0x7f8] sm:$0xff]
          %v848 = vld [vmem:[#allocation6 + $0x800] sm:$0xff]
          %v849 = vld [vmem:[#allocation6 + $0x808] sm:$0xff]
          %v850 = vld [vmem:[#allocation6 + $0x810] sm:$0xff]
          %v851 = vld [vmem:[#allocation6 + $0x818] sm:$0xff]
          %v852 = vld [vmem:[#allocation6 + $0x820] sm:$0xff]
          %v853 = vld [vmem:[#allocation6 + $0x828] sm:$0xff]
          %v854 = vld [vmem:[#allocation6 + $0x830] sm:$0xff]
          %v855 = vld [vmem:[#allocation6 + $0x838] sm:$0xff]
          %v856 = vld [vmem:[#allocation6 + $0x840] sm:$0xff]
          %v857 = vld [vmem:[#allocation6 + $0x848] sm:$0xff]
          %v858 = vld [vmem:[#allocation6 + $0x850] sm:$0xff]
          %v859 = vld [vmem:[#allocation6 + $0x858] sm:$0xff]
          %v860 = vld [vmem:[#allocation6 + $0x860] sm:$0xff]
          %v861 = vld [vmem:[#allocation6 + $0x868] sm:$0xff]
          %v862 = vld [vmem:[#allocation6 + $0x870] sm:$0xff]
          %v863 = vld [vmem:[#allocation6 + $0x878] sm:$0xff]
          %v864 = vld [vmem:[#allocation6 + $0x880] sm:$0xff]
          %v865 = vld [vmem:[#allocation6 + $0x888] sm:$0xff]
          %v866 = vld [vmem:[#allocation6 + $0x890] sm:$0xff]
          %v867 = vld [vmem:[#allocation6 + $0x898] sm:$0xff]
          %v868 = vld [vmem:[#allocation6 + $0x8a0] sm:$0xff]
          %v869 = vld [vmem:[#allocation6 + $0x8a8] sm:$0xff]
          %v870 = vld [vmem:[#allocation6 + $0x8b0] sm:$0xff]
          %v871 = vld [vmem:[#allocation6 + $0x8b8] sm:$0xff]
          %v872 = vld [vmem:[#allocation6 + $0x8c0] sm:$0xff]
          %v873 = vld [vmem:[#allocation6 + $0x8c8] sm:$0xff]
          %v874 = vld [vmem:[#allocation6 + $0x8d0] sm:$0xff]
          %v875 = vld [vmem:[#allocation6 + $0x8d8] sm:$0xff]
          %v876 = vld [vmem:[#allocation6 + $0x8e0] sm:$0xff]
          %v877 = vld [vmem:[#allocation6 + $0x8e8] sm:$0xff]
          %v878 = vld [vmem:[#allocation6 + $0x8f0] sm:$0xff]
          %v879 = vld [vmem:[#allocation6 + $0x8f8] sm:$0xff]
          %v880 = vld [vmem:[#allocation8] sm:$0x3f]
          %v882 = vlaneseq
          %v883 = vshrl.u32 %v882, 7
          %v884 = vsub.s32 0, %v883
          %v885 = vrot.slane %v880, %v884
          %v886 = vlaneseq
          %v887 = vshrl.u32 %v886, 7
          %v888 = vsub.s32 1, %v887
          %v889 = vrot.slane %v880, %v888
          %v890 = vlaneseq
          %v891 = vshrl.u32 %v890, 7
          %v892 = vsub.s32 2, %v891
          %v893 = vrot.slane %v880, %v892
          %v894 = vlaneseq
          %v895 = vshrl.u32 %v894, 7
          %v896 = vsub.s32 3, %v895
          %v897 = vrot.slane %v880, %v896
          %v898 = vlaneseq
          %v899 = vshrl.u32 %v898, 7
          %v900 = vsub.s32 4, %v899
          %v901 = vrot.slane %v880, %v900
          %v902 = vlaneseq
          %v903 = vshrl.u32 %v902, 7
          %v904 = vsub.s32 5, %v903
          %v905 = vrot.slane %v880, %v904
          %v1200 = vunpack.c.l.b16 %v592
          %v1201 = vunpack.c.h.b16 %v592
          %v1202 = vunpack.c.l.b16 %v593
          %v1203 = vunpack.c.h.b16 %v593
          %v1204 = vunpack.c.l.b16 %v594
          %v1205 = vunpack.c.h.b16 %v594
          %v1206 = vunpack.c.l.b16 %v595
          %v1207 = vunpack.c.h.b16 %v595
          %v1208 = vunpack.c.l.b16 %v596
          %v1209 = vunpack.c.h.b16 %v596
          %v1210 = vunpack.c.l.b16 %v597
          %v1211 = vunpack.c.h.b16 %v597
          %v1212 = vunpack.c.l.b16 %v598
          %v1213 = vunpack.c.h.b16 %v598
          %v1214 = vunpack.c.l.b16 %v599
          %v1215 = vunpack.c.h.b16 %v599
          %v1216 = vunpack.c.l.b16 %v600
          %v1217 = vunpack.c.h.b16 %v600
          %v1218 = vunpack.c.l.b16 %v601
          %v1219 = vunpack.c.h.b16 %v601
          %v1220 = vunpack.c.l.b16 %v602
          %v1221 = vunpack.c.h.b16 %v602
          %v1222 = vunpack.c.l.b16 %v603
          %v1223 = vunpack.c.h.b16 %v603
          %v1224 = vunpack.c.l.b16 %v604
          %v1225 = vunpack.c.h.b16 %v604
          %v1226 = vunpack.c.l.b16 %v605
          %v1227 = vunpack.c.h.b16 %v605
          %v1228 = vunpack.c.l.b16 %v606
          %v1229 = vunpack.c.h.b16 %v606
          %v1230 = vunpack.c.l.b16 %v607
          %v1231 = vunpack.c.h.b16 %v607
          %v1232 = vunpack.c.l.b16 %v608
          %v1233 = vunpack.c.h.b16 %v608
          %v1234 = vunpack.c.l.b16 %v609
          %v1235 = vunpack.c.h.b16 %v609
          %v1236 = vunpack.c.l.b16 %v610
          %v1237 = vunpack.c.h.b16 %v610
          %v1238 = vunpack.c.l.b16 %v611
          %v1239 = vunpack.c.h.b16 %v611
          %v1240 = vunpack.c.l.b16 %v612
          %v1241 = vunpack.c.h.b16 %v612
          %v1242 = vunpack.c.l.b16 %v613
          %v1243 = vunpack.c.h.b16 %v613
          %v1244 = vunpack.c.l.b16 %v614
          %v1245 = vunpack.c.h.b16 %v614
          %v1246 = vunpack.c.l.b16 %v615
          %v1247 = vunpack.c.h.b16 %v615
          %v1248 = vunpack.c.l.b16 %v616
          %v1249 = vunpack.c.h.b16 %v616
          %v1250 = vunpack.c.l.b16 %v617
          %v1251 = vunpack.c.h.b16 %v617
          %v1252 = vunpack.c.l.b16 %v618
          %v1253 = vunpack.c.h.b16 %v618
          %v1254 = vunpack.c.l.b16 %v619
          %v1255 = vunpack.c.h.b16 %v619
          %v1256 = vunpack.c.l.b16 %v620
          %v1257 = vunpack.c.h.b16 %v620
          %v1258 = vunpack.c.l.b16 %v621
          %v1259 = vunpack.c.h.b16 %v621
          %v1260 = vunpack.c.l.b16 %v622
          %v1261 = vunpack.c.h.b16 %v622
          %v1262 = vunpack.c.l.b16 %v623
          %v1263 = vunpack.c.h.b16 %v623
          %v1264 = vunpack.c.l.b16 %v624
          %v1265 = vunpack.c.h.b16 %v624
          %v1266 = vunpack.c.l.b16 %v625
          %v1267 = vunpack.c.h.b16 %v625
          %v1268 = vunpack.c.l.b16 %v626
          %v1269 = vunpack.c.h.b16 %v626
          %v1270 = vunpack.c.l.b16 %v627
          %v1271 = vunpack.c.h.b16 %v627
          %v1272 = vunpack.c.l.b16 %v628
          %v1273 = vunpack.c.h.b16 %v628
          %v1274 = vunpack.c.l.b16 %v629
          %v1275 = vunpack.c.h.b16 %v629
          %v1276 = vunpack.c.l.b16 %v630
          %v1277 = vunpack.c.h.b16 %v630
          %v1278 = vunpack.c.l.b16 %v631
          %v1279 = vunpack.c.h.b16 %v631
          %v1280 = vunpack.c.l.b16 %v632
          %v1281 = vunpack.c.h.b16 %v632
          %v1282 = vunpack.c.l.b16 %v633
          %v1283 = vunpack.c.h.b16 %v633
          %v1284 = vunpack.c.l.b16 %v634
          %v1285 = vunpack.c.h.b16 %v634
          %v1286 = vunpack.c.l.b16 %v635
          %v1287 = vunpack.c.h.b16 %v635
          %v1288 = vunpack.c.l.b16 %v636
          %v1289 = vunpack.c.h.b16 %v636
          %v1290 = vunpack.c.l.b16 %v637
          %v1291 = vunpack.c.h.b16 %v637
          %v1292 = vunpack.c.l.b16 %v638
          %v1293 = vunpack.c.h.b16 %v638
          %v1294 = vunpack.c.l.b16 %v639
          %v1295 = vunpack.c.h.b16 %v639
          %v1296 = vunpack.c.l.b16 %v640
          %v1297 = vunpack.c.h.b16 %v640
          %v1298 = vunpack.c.l.b16 %v641
          %v1299 = vunpack.c.h.b16 %v641
          %v1300 = vunpack.c.l.b16 %v642
          %v1301 = vunpack.c.h.b16 %v642
          %v1302 = vunpack.c.l.b16 %v643
          %v1303 = vunpack.c.h.b16 %v643
          %v1304 = vunpack.c.l.b16 %v644
          %v1305 = vunpack.c.h.b16 %v644
          %v1306 = vunpack.c.l.b16 %v645
          %v1307 = vunpack.c.h.b16 %v645
          %v1308 = vunpack.c.l.b16 %v646
          %v1309 = vunpack.c.h.b16 %v646
          %v1310 = vunpack.c.l.b16 %v647
          %v1311 = vunpack.c.h.b16 %v647
          %v1312 = vunpack.c.l.b16 %v648
          %v1313 = vunpack.c.h.b16 %v648
          %v1314 = vunpack.c.l.b16 %v649
          %v1315 = vunpack.c.h.b16 %v649
          %v1316 = vunpack.c.l.b16 %v650
          %v1317 = vunpack.c.h.b16 %v650
          %v1318 = vunpack.c.l.b16 %v651
          %v1319 = vunpack.c.h.b16 %v651
          %v1320 = vunpack.c.l.b16 %v652
          %v1321 = vunpack.c.h.b16 %v652
          %v1322 = vunpack.c.l.b16 %v653
          %v1323 = vunpack.c.h.b16 %v653
          %v1324 = vunpack.c.l.b16 %v654
          %v1325 = vunpack.c.h.b16 %v654
          %v1326 = vunpack.c.l.b16 %v655
          %v1327 = vunpack.c.h.b16 %v655
          %v1328 = vunpack.c.l.b16 %v656
          %v1329 = vunpack.c.h.b16 %v656
          %v1330 = vunpack.c.l.b16 %v657
          %v1331 = vunpack.c.h.b16 %v657
          %v1332 = vunpack.c.l.b16 %v658
          %v1333 = vunpack.c.h.b16 %v658
          %v1334 = vunpack.c.l.b16 %v659
          %v1335 = vunpack.c.h.b16 %v659
          %v1336 = vunpack.c.l.b16 %v660
          %v1337 = vunpack.c.h.b16 %v660
          %v1338 = vunpack.c.l.b16 %v661
          %v1339 = vunpack.c.h.b16 %v661
          %v1340 = vunpack.c.l.b16 %v662
          %v1341 = vunpack.c.h.b16 %v662
          %v1342 = vunpack.c.l.b16 %v663
          %v1343 = vunpack.c.h.b16 %v663
          %v1344 = vunpack.c.l.b16 %v664
          %v1345 = vunpack.c.h.b16 %v664
          %v1346 = vunpack.c.l.b16 %v665
          %v1347 = vunpack.c.h.b16 %v665
          %v1348 = vunpack.c.l.b16 %v666
          %v1349 = vunpack.c.h.b16 %v666
          %v1350 = vunpack.c.l.b16 %v667
          %v1351 = vunpack.c.h.b16 %v667
          %v1352 = vunpack.c.l.b16 %v668
          %v1353 = vunpack.c.h.b16 %v668
          %v1354 = vunpack.c.l.b16 %v669
          %v1355 = vunpack.c.h.b16 %v669
          %v1356 = vunpack.c.l.b16 %v670
          %v1357 = vunpack.c.h.b16 %v670
          %v1358 = vunpack.c.l.b16 %v671
          %v1359 = vunpack.c.h.b16 %v671
          %v1360 = vunpack.c.l.b16 %v672
          %v1361 = vunpack.c.h.b16 %v672
          %v1362 = vunpack.c.l.b16 %v673
          %v1363 = vunpack.c.h.b16 %v673
          %v1364 = vunpack.c.l.b16 %v674
          %v1365 = vunpack.c.h.b16 %v674
          %v1366 = vunpack.c.l.b16 %v675
          %v1367 = vunpack.c.h.b16 %v675
          %v1368 = vunpack.c.l.b16 %v676
          %v1369 = vunpack.c.h.b16 %v676
          %v1370 = vunpack.c.l.b16 %v677
          %v1371 = vunpack.c.h.b16 %v677
          %v1372 = vunpack.c.l.b16 %v678
          %v1373 = vunpack.c.h.b16 %v678
          %v1374 = vunpack.c.l.b16 %v679
          %v1375 = vunpack.c.h.b16 %v679
          %v1376 = vunpack.c.l.b16 %v680
          %v1377 = vunpack.c.h.b16 %v680
          %v1378 = vunpack.c.l.b16 %v681
          %v1379 = vunpack.c.h.b16 %v681
          %v1380 = vunpack.c.l.b16 %v682
          %v1381 = vunpack.c.h.b16 %v682
          %v1382 = vunpack.c.l.b16 %v683
          %v1383 = vunpack.c.h.b16 %v683
          %v1384 = vunpack.c.l.b16 %v684
          %v1385 = vunpack.c.h.b16 %v684
          %v1386 = vunpack.c.l.b16 %v685
          %v1387 = vunpack.c.h.b16 %v685
          %v1388 = vunpack.c.l.b16 %v686
          %v1389 = vunpack.c.h.b16 %v686
          %v1390 = vunpack.c.l.b16 %v687
          %v1391 = vunpack.c.h.b16 %v687
          %v1392 = vunpack.c.l.b16 %v688
          %v1393 = vunpack.c.h.b16 %v688
          %v1394 = vunpack.c.l.b16 %v689
          %v1395 = vunpack.c.h.b16 %v689
          %v1396 = vunpack.c.l.b16 %v690
          %v1397 = vunpack.c.h.b16 %v690
          %v1398 = vunpack.c.l.b16 %v691
          %v1399 = vunpack.c.h.b16 %v691
          %v1400 = vunpack.c.l.b16 %v692
          %v1401 = vunpack.c.h.b16 %v692
          %v1402 = vunpack.c.l.b16 %v693
          %v1403 = vunpack.c.h.b16 %v693
          %v1404 = vunpack.c.l.b16 %v694
          %v1405 = vunpack.c.h.b16 %v694
          %v1406 = vunpack.c.l.b16 %v695
          %v1407 = vunpack.c.h.b16 %v695
          %v1408 = vunpack.c.l.b16 %v696
          %v1409 = vunpack.c.h.b16 %v696
          %v1410 = vunpack.c.l.b16 %v697
          %v1411 = vunpack.c.h.b16 %v697
          %v1412 = vunpack.c.l.b16 %v698
          %v1413 = vunpack.c.h.b16 %v698
          %v1414 = vunpack.c.l.b16 %v699
          %v1415 = vunpack.c.h.b16 %v699
          %v1416 = vunpack.c.l.b16 %v700
          %v1417 = vunpack.c.h.b16 %v700
          %v1418 = vunpack.c.l.b16 %v701
          %v1419 = vunpack.c.h.b16 %v701
          %v1420 = vunpack.c.l.b16 %v702
          %v1421 = vunpack.c.h.b16 %v702
          %v1422 = vunpack.c.l.b16 %v703
          %v1423 = vunpack.c.h.b16 %v703
          %v1424 = vunpack.c.l.b16 %v704
          %v1425 = vunpack.c.h.b16 %v704
          %v1426 = vunpack.c.l.b16 %v705
          %v1427 = vunpack.c.h.b16 %v705
          %v1428 = vunpack.c.l.b16 %v706
          %v1429 = vunpack.c.h.b16 %v706
          %v1430 = vunpack.c.l.b16 %v707
          %v1431 = vunpack.c.h.b16 %v707
          %v1432 = vunpack.c.l.b16 %v708
          %v1433 = vunpack.c.h.b16 %v708
          %v1434 = vunpack.c.l.b16 %v709
          %v1435 = vunpack.c.h.b16 %v709
          %v1436 = vunpack.c.l.b16 %v710
          %v1437 = vunpack.c.h.b16 %v710
          %v1438 = vunpack.c.l.b16 %v711
          %v1439 = vunpack.c.h.b16 %v711
          %v1440 = vunpack.c.l.b16 %v712
          %v1441 = vunpack.c.h.b16 %v712
          %v1442 = vunpack.c.l.b16 %v713
          %v1443 = vunpack.c.h.b16 %v713
          %v1444 = vunpack.c.l.b16 %v714
          %v1445 = vunpack.c.h.b16 %v714
          %v1446 = vunpack.c.l.b16 %v715
          %v1447 = vunpack.c.h.b16 %v715
          %v1448 = vunpack.c.l.b16 %v716
          %v1449 = vunpack.c.h.b16 %v716
          %v1450 = vunpack.c.l.b16 %v717
          %v1451 = vunpack.c.h.b16 %v717
          %v1452 = vunpack.c.l.b16 %v718
          %v1453 = vunpack.c.h.b16 %v718
          %v1454 = vunpack.c.l.b16 %v719
          %v1455 = vunpack.c.h.b16 %v719
          %v1456 = vunpack.c.l.b16 %v720
          %v1457 = vunpack.c.h.b16 %v720
          %v1458 = vunpack.c.l.b16 %v721
          %v1459 = vunpack.c.h.b16 %v721
          %v1460 = vunpack.c.l.b16 %v722
          %v1461 = vunpack.c.h.b16 %v722
          %v1462 = vunpack.c.l.b16 %v723
          %v1463 = vunpack.c.h.b16 %v723
          %v1464 = vunpack.c.l.b16 %v724
          %v1465 = vunpack.c.h.b16 %v724
          %v1466 = vunpack.c.l.b16 %v725
          %v1467 = vunpack.c.h.b16 %v725
          %v1468 = vunpack.c.l.b16 %v726
          %v1469 = vunpack.c.h.b16 %v726
          %v1470 = vunpack.c.l.b16 %v727
          %v1471 = vunpack.c.h.b16 %v727
          %v1472 = vunpack.c.l.b16 %v728
          %v1473 = vunpack.c.h.b16 %v728
          %v1474 = vunpack.c.l.b16 %v729
          %v1475 = vunpack.c.h.b16 %v729
          %v1476 = vunpack.c.l.b16 %v730
          %v1477 = vunpack.c.h.b16 %v730
          %v1478 = vunpack.c.l.b16 %v731
          %v1479 = vunpack.c.h.b16 %v731
          %v1480 = vunpack.c.l.b16 %v732
          %v1481 = vunpack.c.h.b16 %v732
          %v1482 = vunpack.c.l.b16 %v733
          %v1483 = vunpack.c.h.b16 %v733
          %v1484 = vunpack.c.l.b16 %v734
          %v1485 = vunpack.c.h.b16 %v734
          %v1486 = vunpack.c.l.b16 %v735
          %v1487 = vunpack.c.h.b16 %v735
          %v1488 = vunpack.c.l.b16 %v736
          %v1489 = vunpack.c.h.b16 %v736
          %v1490 = vunpack.c.l.b16 %v737
          %v1491 = vunpack.c.h.b16 %v737
          %v1492 = vunpack.c.l.b16 %v738
          %v1493 = vunpack.c.h.b16 %v738
          %v1494 = vunpack.c.l.b16 %v739
          %v1495 = vunpack.c.h.b16 %v739
          %v1496 = vunpack.c.l.b16 %v740
          %v1497 = vunpack.c.h.b16 %v740
          %v1498 = vunpack.c.l.b16 %v741
          %v1499 = vunpack.c.h.b16 %v741
          %v1500 = vunpack.c.l.b16 %v742
          %v1501 = vunpack.c.h.b16 %v742
          %v1502 = vunpack.c.l.b16 %v743
          %v1503 = vunpack.c.h.b16 %v743
          %v1504 = vunpack.c.l.b16 %v744
          %v1505 = vunpack.c.h.b16 %v744
          %v1506 = vunpack.c.l.b16 %v745
          %v1507 = vunpack.c.h.b16 %v745
          %v1508 = vunpack.c.l.b16 %v746
          %v1509 = vunpack.c.h.b16 %v746
          %v1510 = vunpack.c.l.b16 %v747
          %v1511 = vunpack.c.h.b16 %v747
          %v1512 = vunpack.c.l.b16 %v748
          %v1513 = vunpack.c.h.b16 %v748
          %v1514 = vunpack.c.l.b16 %v749
          %v1515 = vunpack.c.h.b16 %v749
          %v1516 = vunpack.c.l.b16 %v750
          %v1517 = vunpack.c.h.b16 %v750
          %v1518 = vunpack.c.l.b16 %v751
          %v1519 = vunpack.c.h.b16 %v751
          %v1520 = vunpack.c.l.b16 %v752
          %v1521 = vunpack.c.h.b16 %v752
          %v1522 = vunpack.c.l.b16 %v753
          %v1523 = vunpack.c.h.b16 %v753
          %v1524 = vunpack.c.l.b16 %v754
          %v1525 = vunpack.c.h.b16 %v754
          %v1526 = vunpack.c.l.b16 %v755
          %v1527 = vunpack.c.h.b16 %v755
          %v1528 = vunpack.c.l.b16 %v756
          %v1529 = vunpack.c.h.b16 %v756
          %v1530 = vunpack.c.l.b16 %v757
          %v1531 = vunpack.c.h.b16 %v757
          %v1532 = vunpack.c.l.b16 %v758
          %v1533 = vunpack.c.h.b16 %v758
          %v1534 = vunpack.c.l.b16 %v759
          %v1535 = vunpack.c.h.b16 %v759
          %v1536 = vunpack.c.l.b16 %v760
          %v1537 = vunpack.c.h.b16 %v760
          %v1538 = vunpack.c.l.b16 %v761
          %v1539 = vunpack.c.h.b16 %v761
          %v1540 = vunpack.c.l.b16 %v762
          %v1541 = vunpack.c.h.b16 %v762
          %v1542 = vunpack.c.l.b16 %v763
          %v1543 = vunpack.c.h.b16 %v763
          %v1544 = vunpack.c.l.b16 %v764
          %v1545 = vunpack.c.h.b16 %v764
          %v1546 = vunpack.c.l.b16 %v765
          %v1547 = vunpack.c.h.b16 %v765
          %v1548 = vunpack.c.l.b16 %v766
          %v1549 = vunpack.c.h.b16 %v766
          %v1550 = vunpack.c.l.b16 %v767
          %v1551 = vunpack.c.h.b16 %v767
          %v1552 = vunpack.c.l.b16 %v768
          %v1553 = vunpack.c.h.b16 %v768
          %v1554 = vunpack.c.l.b16 %v769
          %v1555 = vunpack.c.h.b16 %v769
          %v1556 = vunpack.c.l.b16 %v770
          %v1557 = vunpack.c.h.b16 %v770
          %v1558 = vunpack.c.l.b16 %v771
          %v1559 = vunpack.c.h.b16 %v771
          %v1560 = vunpack.c.l.b16 %v772
          %v1561 = vunpack.c.h.b16 %v772
          %v1562 = vunpack.c.l.b16 %v773
          %v1563 = vunpack.c.h.b16 %v773
          %v1564 = vunpack.c.l.b16 %v774
          %v1565 = vunpack.c.h.b16 %v774
          %v1566 = vunpack.c.l.b16 %v775
          %v1567 = vunpack.c.h.b16 %v775
          %v1568 = vunpack.c.l.b16 %v776
          %v1569 = vunpack.c.h.b16 %v776
          %v1570 = vunpack.c.l.b16 %v777
          %v1571 = vunpack.c.h.b16 %v777
          %v1572 = vunpack.c.l.b16 %v778
          %v1573 = vunpack.c.h.b16 %v778
          %v1574 = vunpack.c.l.b16 %v779
          %v1575 = vunpack.c.h.b16 %v779
          %v1576 = vunpack.c.l.b16 %v780
          %v1577 = vunpack.c.h.b16 %v780
          %v1578 = vunpack.c.l.b16 %v781
          %v1579 = vunpack.c.h.b16 %v781
          %v1580 = vunpack.c.l.b16 %v782
          %v1581 = vunpack.c.h.b16 %v782
          %v1582 = vunpack.c.l.b16 %v783
          %v1583 = vunpack.c.h.b16 %v783
          %v1584 = vunpack.c.l.b16 %v784
          %v1585 = vunpack.c.h.b16 %v784
          %v1586 = vunpack.c.l.b16 %v785
          %v1587 = vunpack.c.h.b16 %v785
          %v1588 = vunpack.c.l.b16 %v786
          %v1589 = vunpack.c.h.b16 %v786
          %v1590 = vunpack.c.l.b16 %v787
          %v1591 = vunpack.c.h.b16 %v787
          %v1592 = vunpack.c.l.b16 %v788
          %v1593 = vunpack.c.h.b16 %v788
          %v1594 = vunpack.c.l.b16 %v789
          %v1595 = vunpack.c.h.b16 %v789
          %v1596 = vunpack.c.l.b16 %v790
          %v1597 = vunpack.c.h.b16 %v790
          %v1598 = vunpack.c.l.b16 %v791
          %v1599 = vunpack.c.h.b16 %v791
          %v1600 = vunpack.c.l.b16 %v792
          %v1601 = vunpack.c.h.b16 %v792
          %v1602 = vunpack.c.l.b16 %v793
          %v1603 = vunpack.c.h.b16 %v793
          %v1604 = vunpack.c.l.b16 %v794
          %v1605 = vunpack.c.h.b16 %v794
          %v1606 = vunpack.c.l.b16 %v795
          %v1607 = vunpack.c.h.b16 %v795
          %v1608 = vunpack.c.l.b16 %v796
          %v1609 = vunpack.c.h.b16 %v796
          %v1610 = vunpack.c.l.b16 %v797
          %v1611 = vunpack.c.h.b16 %v797
          %v1612 = vunpack.c.l.b16 %v798
          %v1613 = vunpack.c.h.b16 %v798
          %v1614 = vunpack.c.l.b16 %v799
          %v1615 = vunpack.c.h.b16 %v799
          %v1616 = vunpack.c.l.b16 %v800
          %v1617 = vunpack.c.h.b16 %v800
          %v1618 = vunpack.c.l.b16 %v801
          %v1619 = vunpack.c.h.b16 %v801
          %v1620 = vunpack.c.l.b16 %v802
          %v1621 = vunpack.c.h.b16 %v802
          %v1622 = vunpack.c.l.b16 %v803
          %v1623 = vunpack.c.h.b16 %v803
          %v1624 = vunpack.c.l.b16 %v804
          %v1625 = vunpack.c.h.b16 %v804
          %v1626 = vunpack.c.l.b16 %v805
          %v1627 = vunpack.c.h.b16 %v805
          %v1628 = vunpack.c.l.b16 %v806
          %v1629 = vunpack.c.h.b16 %v806
          %v1630 = vunpack.c.l.b16 %v807
          %v1631 = vunpack.c.h.b16 %v807
          %v1632 = vunpack.c.l.b16 %v808
          %v1633 = vunpack.c.h.b16 %v808
          %v1634 = vunpack.c.l.b16 %v809
          %v1635 = vunpack.c.h.b16 %v809
          %v1636 = vunpack.c.l.b16 %v810
          %v1637 = vunpack.c.h.b16 %v810
          %v1638 = vunpack.c.l.b16 %v811
          %v1639 = vunpack.c.h.b16 %v811
          %v1640 = vunpack.c.l.b16 %v812
          %v1641 = vunpack.c.h.b16 %v812
          %v1642 = vunpack.c.l.b16 %v813
          %v1643 = vunpack.c.h.b16 %v813
          %v1644 = vunpack.c.l.b16 %v814
          %v1645 = vunpack.c.h.b16 %v814
          %v1646 = vunpack.c.l.b16 %v815
          %v1647 = vunpack.c.h.b16 %v815
          %v1648 = vunpack.c.l.b16 %v816
          %v1649 = vunpack.c.h.b16 %v816
          %v1650 = vunpack.c.l.b16 %v817
          %v1651 = vunpack.c.h.b16 %v817
          %v1652 = vunpack.c.l.b16 %v818
          %v1653 = vunpack.c.h.b16 %v818
          %v1654 = vunpack.c.l.b16 %v819
          %v1655 = vunpack.c.h.b16 %v819
          %v1656 = vunpack.c.l.b16 %v820
          %v1657 = vunpack.c.h.b16 %v820
          %v1658 = vunpack.c.l.b16 %v821
          %v1659 = vunpack.c.h.b16 %v821
          %v1660 = vunpack.c.l.b16 %v822
          %v1661 = vunpack.c.h.b16 %v822
          %v1662 = vunpack.c.l.b16 %v823
          %v1663 = vunpack.c.h.b16 %v823
          %v1664 = vunpack.c.l.b16 %v824
          %v1665 = vunpack.c.h.b16 %v824
          %v1666 = vunpack.c.l.b16 %v825
          %v1667 = vunpack.c.h.b16 %v825
          %v1668 = vunpack.c.l.b16 %v826
          %v1669 = vunpack.c.h.b16 %v826
          %v1670 = vunpack.c.l.b16 %v827
          %v1671 = vunpack.c.h.b16 %v827
          %v1672 = vunpack.c.l.b16 %v828
          %v1673 = vunpack.c.h.b16 %v828
          %v1674 = vunpack.c.l.b16 %v829
          %v1675 = vunpack.c.h.b16 %v829
          %v1676 = vunpack.c.l.b16 %v830
          %v1677 = vunpack.c.h.b16 %v830
          %v1678 = vunpack.c.l.b16 %v831
          %v1679 = vunpack.c.h.b16 %v831
          %v1680 = vunpack.c.l.b16 %v832
          %v1681 = vunpack.c.h.b16 %v832
          %v1682 = vunpack.c.l.b16 %v833
          %v1683 = vunpack.c.h.b16 %v833
          %v1684 = vunpack.c.l.b16 %v834
          %v1685 = vunpack.c.h.b16 %v834
          %v1686 = vunpack.c.l.b16 %v835
          %v1687 = vunpack.c.h.b16 %v835
          %v1688 = vunpack.c.l.b16 %v836
          %v1689 = vunpack.c.h.b16 %v836
          %v1690 = vunpack.c.l.b16 %v837
          %v1691 = vunpack.c.h.b16 %v837
          %v1692 = vunpack.c.l.b16 %v838
          %v1693 = vunpack.c.h.b16 %v838
          %v1694 = vunpack.c.l.b16 %v839
          %v1695 = vunpack.c.h.b16 %v839
          %v1696 = vunpack.c.l.b16 %v840
          %v1697 = vunpack.c.h.b16 %v840
          %v1698 = vunpack.c.l.b16 %v841
          %v1699 = vunpack.c.h.b16 %v841
          %v1700 = vunpack.c.l.b16 %v842
          %v1701 = vunpack.c.h.b16 %v842
          %v1702 = vunpack.c.l.b16 %v843
          %v1703 = vunpack.c.h.b16 %v843
          %v1704 = vunpack.c.l.b16 %v844
          %v1705 = vunpack.c.h.b16 %v844
          %v1706 = vunpack.c.l.b16 %v845
          %v1707 = vunpack.c.h.b16 %v845
          %v1708 = vunpack.c.l.b16 %v846
          %v1709 = vunpack.c.h.b16 %v846
          %v1710 = vunpack.c.l.b16 %v847
          %v1711 = vunpack.c.h.b16 %v847
          %v1712 = vunpack.c.l.b16 %v848
          %v1713 = vunpack.c.h.b16 %v848
          %v1714 = vunpack.c.l.b16 %v849
          %v1715 = vunpack.c.h.b16 %v849
          %v1716 = vunpack.c.l.b16 %v850
          %v1717 = vunpack.c.h.b16 %v850
          %v1718 = vunpack.c.l.b16 %v851
          %v1719 = vunpack.c.h.b16 %v851
          %v1720 = vunpack.c.l.b16 %v852
          %v1721 = vunpack.c.h.b16 %v852
          %v1722 = vunpack.c.l.b16 %v853
          %v1723 = vunpack.c.h.b16 %v853
          %v1724 = vunpack.c.l.b16 %v854
          %v1725 = vunpack.c.h.b16 %v854
          %v1726 = vunpack.c.l.b16 %v855
          %v1727 = vunpack.c.h.b16 %v855
          %v1728 = vunpack.c.l.b16 %v856
          %v1729 = vunpack.c.h.b16 %v856
          %v1730 = vunpack.c.l.b16 %v857
          %v1731 = vunpack.c.h.b16 %v857
          %v1732 = vunpack.c.l.b16 %v858
          %v1733 = vunpack.c.h.b16 %v858
          %v1734 = vunpack.c.l.b16 %v859
          %v1735 = vunpack.c.h.b16 %v859
          %v1736 = vunpack.c.l.b16 %v860
          %v1737 = vunpack.c.h.b16 %v860
          %v1738 = vunpack.c.l.b16 %v861
          %v1739 = vunpack.c.h.b16 %v861
          %v1740 = vunpack.c.l.b16 %v862
          %v1741 = vunpack.c.h.b16 %v862
          %v1742 = vunpack.c.l.b16 %v863
          %v1743 = vunpack.c.h.b16 %v863
          %v1744 = vunpack.c.l.b16 %v864
          %v1745 = vunpack.c.h.b16 %v864
          %v1746 = vunpack.c.l.b16 %v865
          %v1747 = vunpack.c.h.b16 %v865
          %v1748 = vunpack.c.l.b16 %v866
          %v1749 = vunpack.c.h.b16 %v866
          %v1750 = vunpack.c.l.b16 %v867
          %v1751 = vunpack.c.h.b16 %v867
          %v1752 = vunpack.c.l.b16 %v868
          %v1753 = vunpack.c.h.b16 %v868
          %v1754 = vunpack.c.l.b16 %v869
          %v1755 = vunpack.c.h.b16 %v869
          %v1756 = vunpack.c.l.b16 %v870
          %v1757 = vunpack.c.h.b16 %v870
          %v1758 = vunpack.c.l.b16 %v871
          %v1759 = vunpack.c.h.b16 %v871
          %v1760 = vunpack.c.l.b16 %v872
          %v1761 = vunpack.c.h.b16 %v872
          %v1762 = vunpack.c.l.b16 %v873
          %v1763 = vunpack.c.h.b16 %v873
          %v1764 = vunpack.c.l.b16 %v874
          %v1765 = vunpack.c.h.b16 %v874
          %v1766 = vunpack.c.l.b16 %v875
          %v1767 = vunpack.c.h.b16 %v875
          %v1768 = vunpack.c.l.b16 %v876
          %v1769 = vunpack.c.h.b16 %v876
          %v1770 = vunpack.c.l.b16 %v877
          %v1771 = vunpack.c.h.b16 %v877
          %v1772 = vunpack.c.l.b16 %v878
          %v1773 = vunpack.c.h.b16 %v878
          %v1774 = vunpack.c.l.b16 %v879
          %v1775 = vunpack.c.h.b16 %v879
          %v1776 = vpack.c.b16 %v1206, %v1200
          %v1777 = vpack.c.b16 %v1207, %v1201
          %v1778 = vpack.c.b16 %v1208, %v1202
          %v1779 = vpack.c.b16 %v1209, %v1203
          %v1780 = vpack.c.b16 %v1210, %v1204
          %v1781 = vpack.c.b16 %v1211, %v1205
          %v1782 = vpack.c.b16 %v1218, %v1212
          %v1783 = vpack.c.b16 %v1219, %v1213
          %v1784 = vpack.c.b16 %v1220, %v1214
          %v1785 = vpack.c.b16 %v1221, %v1215
          %v1786 = vpack.c.b16 %v1222, %v1216
          %v1787 = vpack.c.b16 %v1223, %v1217
          %v1788 = vpack.c.b16 %v1230, %v1224
          %v1789 = vpack.c.b16 %v1231, %v1225
          %v1790 = vpack.c.b16 %v1232, %v1226
          %v1791 = vpack.c.b16 %v1233, %v1227
          %v1792 = vpack.c.b16 %v1234, %v1228
          %v1793 = vpack.c.b16 %v1235, %v1229
          %v1794 = vpack.c.b16 %v1242, %v1236
          %v1795 = vpack.c.b16 %v1243, %v1237
          %v1796 = vpack.c.b16 %v1244, %v1238
          %v1797 = vpack.c.b16 %v1245, %v1239
          %v1798 = vpack.c.b16 %v1246, %v1240
          %v1799 = vpack.c.b16 %v1247, %v1241
          %v1800 = vpack.c.b16 %v1254, %v1248
          %v1801 = vpack.c.b16 %v1255, %v1249
          %v1802 = vpack.c.b16 %v1256, %v1250
          %v1803 = vpack.c.b16 %v1257, %v1251
          %v1804 = vpack.c.b16 %v1258, %v1252
          %v1805 = vpack.c.b16 %v1259, %v1253
          %v1806 = vpack.c.b16 %v1266, %v1260
          %v1807 = vpack.c.b16 %v1267, %v1261
          %v1808 = vpack.c.b16 %v1268, %v1262
          %v1809 = vpack.c.b16 %v1269, %v1263
          %v1810 = vpack.c.b16 %v1270, %v1264
          %v1811 = vpack.c.b16 %v1271, %v1265
          %v1812 = vpack.c.b16 %v1278, %v1272
          %v1813 = vpack.c.b16 %v1279, %v1273
          %v1814 = vpack.c.b16 %v1280, %v1274
          %v1815 = vpack.c.b16 %v1281, %v1275
          %v1816 = vpack.c.b16 %v1282, %v1276
          %v1817 = vpack.c.b16 %v1283, %v1277
          %v1818 = vpack.c.b16 %v1290, %v1284
          %v1819 = vpack.c.b16 %v1291, %v1285
          %v1820 = vpack.c.b16 %v1292, %v1286
          %v1821 = vpack.c.b16 %v1293, %v1287
          %v1822 = vpack.c.b16 %v1294, %v1288
          %v1823 = vpack.c.b16 %v1295, %v1289
          %v1824 = vpack.c.b16 %v1302, %v1296
          %v1825 = vpack.c.b16 %v1303, %v1297
          %v1826 = vpack.c.b16 %v1304, %v1298
          %v1827 = vpack.c.b16 %v1305, %v1299
          %v1828 = vpack.c.b16 %v1306, %v1300
          %v1829 = vpack.c.b16 %v1307, %v1301
          %v1830 = vpack.c.b16 %v1314, %v1308
          %v1831 = vpack.c.b16 %v1315, %v1309
          %v1832 = vpack.c.b16 %v1316, %v1310
          %v1833 = vpack.c.b16 %v1317, %v1311
          %v1834 = vpack.c.b16 %v1318, %v1312
          %v1835 = vpack.c.b16 %v1319, %v1313
          %v1836 = vpack.c.b16 %v1326, %v1320
          %v1837 = vpack.c.b16 %v1327, %v1321
          %v1838 = vpack.c.b16 %v1328, %v1322
          %v1839 = vpack.c.b16 %v1329, %v1323
          %v1840 = vpack.c.b16 %v1330, %v1324
          %v1841 = vpack.c.b16 %v1331, %v1325
          %v1842 = vpack.c.b16 %v1338, %v1332
          %v1843 = vpack.c.b16 %v1339, %v1333
          %v1844 = vpack.c.b16 %v1340, %v1334
          %v1845 = vpack.c.b16 %v1341, %v1335
          %v1846 = vpack.c.b16 %v1342, %v1336
          %v1847 = vpack.c.b16 %v1343, %v1337
          %v1848 = vpack.c.b16 %v1350, %v1344
          %v1849 = vpack.c.b16 %v1351, %v1345
          %v1850 = vpack.c.b16 %v1352, %v1346
          %v1851 = vpack.c.b16 %v1353, %v1347
          %v1852 = vpack.c.b16 %v1354, %v1348
          %v1853 = vpack.c.b16 %v1355, %v1349
          %v1854 = vpack.c.b16 %v1362, %v1356
          %v1855 = vpack.c.b16 %v1363, %v1357
          %v1856 = vpack.c.b16 %v1364, %v1358
          %v1857 = vpack.c.b16 %v1365, %v1359
          %v1858 = vpack.c.b16 %v1366, %v1360
          %v1859 = vpack.c.b16 %v1367, %v1361
          %v1860 = vpack.c.b16 %v1374, %v1368
          %v1861 = vpack.c.b16 %v1375, %v1369
          %v1862 = vpack.c.b16 %v1376, %v1370
          %v1863 = vpack.c.b16 %v1377, %v1371
          %v1864 = vpack.c.b16 %v1378, %v1372
          %v1865 = vpack.c.b16 %v1379, %v1373
          %v1866 = vpack.c.b16 %v1386, %v1380
          %v1867 = vpack.c.b16 %v1387, %v1381
          %v1868 = vpack.c.b16 %v1388, %v1382
          %v1869 = vpack.c.b16 %v1389, %v1383
          %v1870 = vpack.c.b16 %v1390, %v1384
          %v1871 = vpack.c.b16 %v1391, %v1385
          %v1872 = vpack.c.b16 %v1398, %v1392
          %v1873 = vpack.c.b16 %v1399, %v1393
          %v1874 = vpack.c.b16 %v1400, %v1394
          %v1875 = vpack.c.b16 %v1401, %v1395
          %v1876 = vpack.c.b16 %v1402, %v1396
          %v1877 = vpack.c.b16 %v1403, %v1397
          %v1878 = vpack.c.b16 %v1410, %v1404
          %v1879 = vpack.c.b16 %v1411, %v1405
          %v1880 = vpack.c.b16 %v1412, %v1406
          %v1881 = vpack.c.b16 %v1413, %v1407
          %v1882 = vpack.c.b16 %v1414, %v1408
          %v1883 = vpack.c.b16 %v1415, %v1409
          %v1884 = vpack.c.b16 %v1422, %v1416
          %v1885 = vpack.c.b16 %v1423, %v1417
          %v1886 = vpack.c.b16 %v1424, %v1418
          %v1887 = vpack.c.b16 %v1425, %v1419
          %v1888 = vpack.c.b16 %v1426, %v1420
          %v1889 = vpack.c.b16 %v1427, %v1421
          %v1890 = vpack.c.b16 %v1434, %v1428
          %v1891 = vpack.c.b16 %v1435, %v1429
          %v1892 = vpack.c.b16 %v1436, %v1430
          %v1893 = vpack.c.b16 %v1437, %v1431
          %v1894 = vpack.c.b16 %v1438, %v1432
          %v1895 = vpack.c.b16 %v1439, %v1433
          %v1896 = vpack.c.b16 %v1446, %v1440
          %v1897 = vpack.c.b16 %v1447, %v1441
          %v1898 = vpack.c.b16 %v1448, %v1442
          %v1899 = vpack.c.b16 %v1449, %v1443
          %v1900 = vpack.c.b16 %v1450, %v1444
          %v1901 = vpack.c.b16 %v1451, %v1445
          %v1902 = vpack.c.b16 %v1458, %v1452
          %v1903 = vpack.c.b16 %v1459, %v1453
          %v1904 = vpack.c.b16 %v1460, %v1454
          %v1905 = vpack.c.b16 %v1461, %v1455
          %v1906 = vpack.c.b16 %v1462, %v1456
          %v1907 = vpack.c.b16 %v1463, %v1457
          %v1908 = vpack.c.b16 %v1470, %v1464
          %v1909 = vpack.c.b16 %v1471, %v1465
          %v1910 = vpack.c.b16 %v1472, %v1466
          %v1911 = vpack.c.b16 %v1473, %v1467
          %v1912 = vpack.c.b16 %v1474, %v1468
          %v1913 = vpack.c.b16 %v1475, %v1469
          %v1914 = vpack.c.b16 %v1482, %v1476
          %v1915 = vpack.c.b16 %v1483, %v1477
          %v1916 = vpack.c.b16 %v1484, %v1478
          %v1917 = vpack.c.b16 %v1485, %v1479
          %v1918 = vpack.c.b16 %v1486, %v1480
          %v1919 = vpack.c.b16 %v1487, %v1481
          %v1920 = vpack.c.b16 %v1494, %v1488
          %v1921 = vpack.c.b16 %v1495, %v1489
          %v1922 = vpack.c.b16 %v1496, %v1490
          %v1923 = vpack.c.b16 %v1497, %v1491
          %v1924 = vpack.c.b16 %v1498, %v1492
          %v1925 = vpack.c.b16 %v1499, %v1493
          %v1926 = vpack.c.b16 %v1506, %v1500
          %v1927 = vpack.c.b16 %v1507, %v1501
          %v1928 = vpack.c.b16 %v1508, %v1502
          %v1929 = vpack.c.b16 %v1509, %v1503
          %v1930 = vpack.c.b16 %v1510, %v1504
          %v1931 = vpack.c.b16 %v1511, %v1505
          %v1932 = vpack.c.b16 %v1518, %v1512
          %v1933 = vpack.c.b16 %v1519, %v1513
          %v1934 = vpack.c.b16 %v1520, %v1514
          %v1935 = vpack.c.b16 %v1521, %v1515
          %v1936 = vpack.c.b16 %v1522, %v1516
          %v1937 = vpack.c.b16 %v1523, %v1517
          %v1938 = vpack.c.b16 %v1530, %v1524
          %v1939 = vpack.c.b16 %v1531, %v1525
          %v1940 = vpack.c.b16 %v1532, %v1526
          %v1941 = vpack.c.b16 %v1533, %v1527
          %v1942 = vpack.c.b16 %v1534, %v1528
          %v1943 = vpack.c.b16 %v1535, %v1529
          %v1944 = vpack.c.b16 %v1542, %v1536
          %v1945 = vpack.c.b16 %v1543, %v1537
          %v1946 = vpack.c.b16 %v1544, %v1538
          %v1947 = vpack.c.b16 %v1545, %v1539
          %v1948 = vpack.c.b16 %v1546, %v1540
          %v1949 = vpack.c.b16 %v1547, %v1541
          %v1950 = vpack.c.b16 %v1554, %v1548
          %v1951 = vpack.c.b16 %v1555, %v1549
          %v1952 = vpack.c.b16 %v1556, %v1550
          %v1953 = vpack.c.b16 %v1557, %v1551
          %v1954 = vpack.c.b16 %v1558, %v1552
          %v1955 = vpack.c.b16 %v1559, %v1553
          %v1956 = vpack.c.b16 %v1566, %v1560
          %v1957 = vpack.c.b16 %v1567, %v1561
          %v1958 = vpack.c.b16 %v1568, %v1562
          %v1959 = vpack.c.b16 %v1569, %v1563
          %v1960 = vpack.c.b16 %v1570, %v1564
          %v1961 = vpack.c.b16 %v1571, %v1565
          %v1962 = vpack.c.b16 %v1578, %v1572
          %v1963 = vpack.c.b16 %v1579, %v1573
          %v1964 = vpack.c.b16 %v1580, %v1574
          %v1965 = vpack.c.b16 %v1581, %v1575
          %v1966 = vpack.c.b16 %v1582, %v1576
          %v1967 = vpack.c.b16 %v1583, %v1577
          %v1968 = vpack.c.b16 %v1590, %v1584
          %v1969 = vpack.c.b16 %v1591, %v1585
          %v1970 = vpack.c.b16 %v1592, %v1586
          %v1971 = vpack.c.b16 %v1593, %v1587
          %v1972 = vpack.c.b16 %v1594, %v1588
          %v1973 = vpack.c.b16 %v1595, %v1589
          %v1974 = vpack.c.b16 %v1602, %v1596
          %v1975 = vpack.c.b16 %v1603, %v1597
          %v1976 = vpack.c.b16 %v1604, %v1598
          %v1977 = vpack.c.b16 %v1605, %v1599
          %v1978 = vpack.c.b16 %v1606, %v1600
          %v1979 = vpack.c.b16 %v1607, %v1601
          %v1980 = vpack.c.b16 %v1614, %v1608
          %v1981 = vpack.c.b16 %v1615, %v1609
          %v1982 = vpack.c.b16 %v1616, %v1610
          %v1983 = vpack.c.b16 %v1617, %v1611
          %v1984 = vpack.c.b16 %v1618, %v1612
          %v1985 = vpack.c.b16 %v1619, %v1613
          %v1986 = vpack.c.b16 %v1626, %v1620
          %v1987 = vpack.c.b16 %v1627, %v1621
          %v1988 = vpack.c.b16 %v1628, %v1622
          %v1989 = vpack.c.b16 %v1629, %v1623
          %v1990 = vpack.c.b16 %v1630, %v1624
          %v1991 = vpack.c.b16 %v1631, %v1625
          %v1992 = vpack.c.b16 %v1638, %v1632
          %v1993 = vpack.c.b16 %v1639, %v1633
          %v1994 = vpack.c.b16 %v1640, %v1634
          %v1995 = vpack.c.b16 %v1641, %v1635
          %v1996 = vpack.c.b16 %v1642, %v1636
          %v1997 = vpack.c.b16 %v1643, %v1637
          %v1998 = vpack.c.b16 %v1650, %v1644
          %v1999 = vpack.c.b16 %v1651, %v1645
          %v2000 = vpack.c.b16 %v1652, %v1646
          %v2001 = vpack.c.b16 %v1653, %v1647
          %v2002 = vpack.c.b16 %v1654, %v1648
          %v2003 = vpack.c.b16 %v1655, %v1649
          %v2004 = vpack.c.b16 %v1662, %v1656
          %v2005 = vpack.c.b16 %v1663, %v1657
          %v2006 = vpack.c.b16 %v1664, %v1658
          %v2007 = vpack.c.b16 %v1665, %v1659
          %v2008 = vpack.c.b16 %v1666, %v1660
          %v2009 = vpack.c.b16 %v1667, %v1661
          %v2010 = vpack.c.b16 %v1674, %v1668
          %v2011 = vpack.c.b16 %v1675, %v1669
          %v2012 = vpack.c.b16 %v1676, %v1670
          %v2013 = vpack.c.b16 %v1677, %v1671
          %v2014 = vpack.c.b16 %v1678, %v1672
          %v2015 = vpack.c.b16 %v1679, %v1673
          %v2016 = vpack.c.b16 %v1686, %v1680
          %v2017 = vpack.c.b16 %v1687, %v1681
          %v2018 = vpack.c.b16 %v1688, %v1682
          %v2019 = vpack.c.b16 %v1689, %v1683
          %v2020 = vpack.c.b16 %v1690, %v1684
          %v2021 = vpack.c.b16 %v1691, %v1685
          %v2022 = vpack.c.b16 %v1698, %v1692
          %v2023 = vpack.c.b16 %v1699, %v1693
          %v2024 = vpack.c.b16 %v1700, %v1694
          %v2025 = vpack.c.b16 %v1701, %v1695
          %v2026 = vpack.c.b16 %v1702, %v1696
          %v2027 = vpack.c.b16 %v1703, %v1697
          %v2028 = vpack.c.b16 %v1710, %v1704
          %v2029 = vpack.c.b16 %v1711, %v1705
          %v2030 = vpack.c.b16 %v1712, %v1706
          %v2031 = vpack.c.b16 %v1713, %v1707
          %v2032 = vpack.c.b16 %v1714, %v1708
          %v2033 = vpack.c.b16 %v1715, %v1709
          %v2034 = vpack.c.b16 %v1722, %v1716
          %v2035 = vpack.c.b16 %v1723, %v1717
          %v2036 = vpack.c.b16 %v1724, %v1718
          %v2037 = vpack.c.b16 %v1725, %v1719
          %v2038 = vpack.c.b16 %v1726, %v1720
          %v2039 = vpack.c.b16 %v1727, %v1721
          %v2040 = vpack.c.b16 %v1734, %v1728
          %v2041 = vpack.c.b16 %v1735, %v1729
          %v2042 = vpack.c.b16 %v1736, %v1730
          %v2043 = vpack.c.b16 %v1737, %v1731
          %v2044 = vpack.c.b16 %v1738, %v1732
          %v2045 = vpack.c.b16 %v1739, %v1733
          %v2046 = vpack.c.b16 %v1746, %v1740
          %v2047 = vpack.c.b16 %v1747, %v1741
          %v2048 = vpack.c.b16 %v1748, %v1742
          %v2049 = vpack.c.b16 %v1749, %v1743
          %v2050 = vpack.c.b16 %v1750, %v1744
          %v2051 = vpack.c.b16 %v1751, %v1745
          %v2052 = vpack.c.b16 %v1758, %v1752
          %v2053 = vpack.c.b16 %v1759, %v1753
          %v2054 = vpack.c.b16 %v1760, %v1754
          %v2055 = vpack.c.b16 %v1761, %v1755
          %v2056 = vpack.c.b16 %v1762, %v1756
          %v2057 = vpack.c.b16 %v1763, %v1757
          %v2058 = vpack.c.b16 %v1770, %v1764
          %v2059 = vpack.c.b16 %v1771, %v1765
          %v2060 = vpack.c.b16 %v1772, %v1766
          %v2061 = vpack.c.b16 %v1773, %v1767
          %v2062 = vpack.c.b16 %v1774, %v1768
          %v2063 = vpack.c.b16 %v1775, %v1769
          %2352 = vmatprep.subr.bf16.mxu0 %v1777
          %2353 = vmatpush1.bf16.msra.mxu0 %v1776
          %2354 = vmatprep.subr.bf16.mxu0 %v1783
          %2355 = vmatpush1.bf16.msra.mxu0 %v1782
          %2356 = vmatprep.subr.bf16.mxu0 %v1789
          %2357 = vmatpush1.bf16.msra.mxu0 %v1788
          %2358 = vmatprep.subr.bf16.mxu0 %v1795
          %2359 = vmatpush1.bf16.msra.mxu0 %v1794
          %2360 = vmatprep.subr.bf16.mxu0 %v1801
          %2361 = vmatpush1.bf16.msra.mxu0 %v1800
          %2362 = vmatprep.subr.bf16.mxu0 %v1807
          %2363 = vmatpush1.bf16.msra.mxu0 %v1806
          %2364 = vmatprep.subr.bf16.mxu0 %v1813
          %2365 = vmatpush1.bf16.msra.mxu0 %v1812
          %2366 = vmatprep.subr.bf16.mxu0 %v1819
          %2367 = vmatpush1.bf16.msra.mxu0 %v1818
          %2368 = vmatprep.subr.bf16.mxu0 %v1825
          %2369 = vmatpush1.bf16.msra.mxu0 %v1824
          %2370 = vmatprep.subr.bf16.mxu0 %v1831
          %2371 = vmatpush1.bf16.msra.mxu0 %v1830
          %2372 = vmatprep.subr.bf16.mxu0 %v1837
          %2373 = vmatpush1.bf16.msra.mxu0 %v1836
          %2374 = vmatprep.subr.bf16.mxu0 %v1843
          %2375 = vmatpush1.bf16.msra.mxu0 %v1842
          %2376 = vmatprep.subr.bf16.mxu0 %v1849
          %2377 = vmatpush1.bf16.msra.mxu0 %v1848
          %2378 = vmatprep.subr.bf16.mxu0 %v1855
          %2379 = vmatpush1.bf16.msra.mxu0 %v1854
          %2380 = vmatprep.subr.bf16.mxu0 %v1861
          %2381 = vmatpush1.bf16.msra.mxu0 %v1860
          %2382 = vmatprep.subr.bf16.mxu0 %v1867
          %2383 = vmatpush1.bf16.msra.mxu0 %v1866
          %2384 = vmatprep.mubr.bf16.mxu0 %v587
          %2385 = vmatmul.mubr.bf16.gmra.mrb[0].mxu0 %v586
          %v2386 = vpop.f32.mrb[0].mxu0
          %v2387 = vadd.f32 %v885, %v2386
          %v2388 = vpop.f32.mrb[0].mxu0
          %v2389 = vadd.f32 %v889, %v2388
          %v2390 = vpop.f32.mrb[0].mxu0
          %v2391 = vpop.f32.mrb[0].mxu0
          %2392 = vdwg.mxu0
          %2393 = vmatprep.subr.bf16.mxu0 %v1873
          %2394 = vmatpush1.bf16.msra.mxu0 %v1872
          %2395 = vmatprep.subr.bf16.mxu0 %v1879
          %2396 = vmatpush1.bf16.msra.mxu0 %v1878
          %2397 = vmatprep.subr.bf16.mxu0 %v1885
          %2398 = vmatpush1.bf16.msra.mxu0 %v1884
          %2399 = vmatprep.subr.bf16.mxu0 %v1891
          %2400 = vmatpush1.bf16.msra.mxu0 %v1890
          %2401 = vmatprep.subr.bf16.mxu0 %v1897
          %2402 = vmatpush1.bf16.msra.mxu0 %v1896
          %2403 = vmatprep.subr.bf16.mxu0 %v1903
          %2404 = vmatpush1.bf16.msra.mxu0 %v1902
          %2405 = vmatprep.subr.bf16.mxu0 %v1909
          %2406 = vmatpush1.bf16.msra.mxu0 %v1908
          %2407 = vmatprep.subr.bf16.mxu0 %v1915
          %2408 = vmatpush1.bf16.msra.mxu0 %v1914
          %2409 = vmatprep.subr.bf16.mxu0 %v1921
          %2410 = vmatpush1.bf16.msra.mxu0 %v1920
          %2411 = vmatprep.subr.bf16.mxu0 %v1927
          %2412 = vmatpush1.bf16.msra.mxu0 %v1926
          %2413 = vmatprep.subr.bf16.mxu0 %v1933
          %2414 = vmatpush1.bf16.msra.mxu0 %v1932
          %2415 = vmatprep.subr.bf16.mxu0 %v1939
          %2416 = vmatpush1.bf16.msra.mxu0 %v1938
          %2417 = vmatprep.subr.bf16.mxu0 %v1945
          %2418 = vmatpush1.bf16.msra.mxu0 %v1944
          %2419 = vmatprep.subr.bf16.mxu0 %v1951
          %2420 = vmatpush1.bf16.msra.mxu0 %v1950
          %2421 = vmatprep.subr.bf16.mxu0 %v1957
          %2422 = vmatpush1.bf16.msra.mxu0 %v1956
          %2423 = vmatprep.subr.bf16.mxu0 %v1963
          %2424 = vmatpush1.bf16.msra.mxu0 %v1962
          %2425 = vmatprep.mubr.bf16.mxu0 %v589
          %2426 = vmatmul.mubr.bf16.gmra.mrb[0].mxu0 %v588
          %v2427 = vpop.f32.mrb[0].mxu0
          %v2428 = vadd.f32 %v2387, %v2427
          %v2429 = vpop.f32.mrb[0].mxu0
          %v2430 = vadd.f32 %v2389, %v2429
          %v2431 = vpop.f32.mrb[0].mxu0
          %v2432 = vpop.f32.mrb[0].mxu0
          %2433 = vdwg.mxu0
          %2434 = vmatprep.subr.bf16.mxu0 %v1969
          %2435 = vmatpush1.bf16.msra.mxu0 %v1968
          %2436 = vmatprep.subr.bf16.mxu0 %v1975
          %2437 = vmatpush1.bf16.msra.mxu0 %v1974
          %2438 = vmatprep.subr.bf16.mxu0 %v1981
          %2439 = vmatpush1.bf16.msra.mxu0 %v1980
          %2440 = vmatprep.subr.bf16.mxu0 %v1987
          %2441 = vmatpush1.bf16.msra.mxu0 %v1986
          %2442 = vmatprep.subr.bf16.mxu0 %v1993
          %2443 = vmatpush1.bf16.msra.mxu0 %v1992
          %2444 = vmatprep.subr.bf16.mxu0 %v1999
          %2445 = vmatpush1.bf16.msra.mxu0 %v1998
          %2446 = vmatprep.subr.bf16.mxu0 %v2005
          %2447 = vmatpush1.bf16.msra.mxu0 %v2004
          %2448 = vmatprep.subr.bf16.mxu0 %v2011
          %2449 = vmatpush1.bf16.msra.mxu0 %v2010
          %2450 = vmatprep.subr.bf16.mxu0 %v2017
          %2451 = vmatpush1.bf16.msra.mxu0 %v2016
          %2452 = vmatprep.subr.bf16.mxu0 %v2023
          %2453 = vmatpush1.bf16.msra.mxu0 %v2022
          %2454 = vmatprep.subr.bf16.mxu0 %v2029
          %2455 = vmatpush1.bf16.msra.mxu0 %v2028
          %2456 = vmatprep.subr.bf16.mxu0 %v2035
          %2457 = vmatpush1.bf16.msra.mxu0 %v2034
          %2458 = vmatprep.subr.bf16.mxu0 %v2041
          %2459 = vmatpush1.bf16.msra.mxu0 %v2040
          %2460 = vmatprep.subr.bf16.mxu0 %v2047
          %2461 = vmatpush1.bf16.msra.mxu0 %v2046
          %2462 = vmatprep.subr.bf16.mxu0 %v2053
          %2463 = vmatpush1.bf16.msra.mxu0 %v2052
          %2464 = vmatprep.subr.bf16.mxu0 %v2059
          %2465 = vmatpush1.bf16.msra.mxu0 %v2058
          %2466 = vmatprep.mubr.bf16.mxu0 %v591
          %2467 = vmatmul.mubr.bf16.gmra.mrb[0].mxu0 %v590
          %v2468 = vpop.f32.mrb[0].mxu0
          %v2469 = vadd.f32 %v2428, %v2468
          %v2470 = vpop.f32.mrb[0].mxu0
          %v2471 = vadd.f32 %v2430, %v2470
          %v2472 = vpop.f32.mrb[0].mxu0
          %v2473 = vpop.f32.mrb[0].mxu0
          %2474 = vdwg.mxu0
          %2475 = vmatprep.subr.bf16.mxu0 %v1779
          %2476 = vmatpush1.bf16.msra.mxu0 %v1778
          %2477 = vmatprep.subr.bf16.mxu0 %v1785
          %2478 = vmatpush1.bf16.msra.mxu0 %v1784
          %2479 = vmatprep.subr.bf16.mxu0 %v1791
          %2480 = vmatpush1.bf16.msra.mxu0 %v1790
          %2481 = vmatprep.subr.bf16.mxu0 %v1797
          %2482 = vmatpush1.bf16.msra.mxu0 %v1796
          %2483 = vmatprep.subr.bf16.mxu0 %v1803
          %2484 = vmatpush1.bf16.msra.mxu0 %v1802
          %2485 = vmatprep.subr.bf16.mxu0 %v1809
          %2486 = vmatpush1.bf16.msra.mxu0 %v1808
          %2487 = vmatprep.subr.bf16.mxu0 %v1815
          %2488 = vmatpush1.bf16.msra.mxu0 %v1814
          %2489 = vmatprep.subr.bf16.mxu0 %v1821
          %2490 = vmatpush1.bf16.msra.mxu0 %v1820
          %2491 = vmatprep.subr.bf16.mxu0 %v1827
          %2492 = vmatpush1.bf16.msra.mxu0 %v1826
          %2493 = vmatprep.subr.bf16.mxu0 %v1833
          %2494 = vmatpush1.bf16.msra.mxu0 %v1832
          %2495 = vmatprep.subr.bf16.mxu0 %v1839
          %2496 = vmatpush1.bf16.msra.mxu0 %v1838
          %2497 = vmatprep.subr.bf16.mxu0 %v1845
          %2498 = vmatpush1.bf16.msra.mxu0 %v1844
          %2499 = vmatprep.subr.bf16.mxu0 %v1851
          %2500 = vmatpush1.bf16.msra.mxu0 %v1850
          %2501 = vmatprep.subr.bf16.mxu0 %v1857
          %2502 = vmatpush1.bf16.msra.mxu0 %v1856
          %2503 = vmatprep.subr.bf16.mxu0 %v1863
          %2504 = vmatpush1.bf16.msra.mxu0 %v1862
          %2505 = vmatprep.subr.bf16.mxu0 %v1869
          %2506 = vmatpush1.bf16.msra.mxu0 %v1868
          %2507 = vmatprep.mubr.bf16.mxu0 %v587
          %2508 = vmatmul.mubr.bf16.gmra.mrb[0].mxu0 %v586
          %v2509 = vpop.f32.mrb[0].mxu0
          %v2510 = vadd.f32 %v893, %v2509
          %v2511 = vpop.f32.mrb[0].mxu0
          %v2512 = vadd.f32 %v897, %v2511
          %v2513 = vpop.f32.mrb[0].mxu0
          %v2514 = vpop.f32.mrb[0].mxu0
          %2515 = vdwg.mxu0
          %2516 = vmatprep.subr.bf16.mxu0 %v1875
          %2517 = vmatpush1.bf16.msra.mxu0 %v1874
          %2518 = vmatprep.subr.bf16.mxu0 %v1881
          %2519 = vmatpush1.bf16.msra.mxu0 %v1880
          %2520 = vmatprep.subr.bf16.mxu0 %v1887
          %2521 = vmatpush1.bf16.msra.mxu0 %v1886
          %2522 = vmatprep.subr.bf16.mxu0 %v1893
          %2523 = vmatpush1.bf16.msra.mxu0 %v1892
          %2524 = vmatprep.subr.bf16.mxu0 %v1899
          %2525 = vmatpush1.bf16.msra.mxu0 %v1898
          %2526 = vmatprep.subr.bf16.mxu0 %v1905
          %2527 = vmatpush1.bf16.msra.mxu0 %v1904
          %2528 = vmatprep.subr.bf16.mxu0 %v1911
          %2529 = vmatpush1.bf16.msra.mxu0 %v1910
          %2530 = vmatprep.subr.bf16.mxu0 %v1917
          %2531 = vmatpush1.bf16.msra.mxu0 %v1916
          %2532 = vmatprep.subr.bf16.mxu0 %v1923
          %2533 = vmatpush1.bf16.msra.mxu0 %v1922
          %2534 = vmatprep.subr.bf16.mxu0 %v1929
          %2535 = vmatpush1.bf16.msra.mxu0 %v1928
          %2536 = vmatprep.subr.bf16.mxu0 %v1935
          %2537 = vmatpush1.bf16.msra.mxu0 %v1934
          %2538 = vmatprep.subr.bf16.mxu0 %v1941
          %2539 = vmatpush1.bf16.msra.mxu0 %v1940
          %2540 = vmatprep.subr.bf16.mxu0 %v1947
          %2541 = vmatpush1.bf16.msra.mxu0 %v1946
          %2542 = vmatprep.subr.bf16.mxu0 %v1953
          %2543 = vmatpush1.bf16.msra.mxu0 %v1952
          %2544 = vmatprep.subr.bf16.mxu0 %v1959
          %2545 = vmatpush1.bf16.msra.mxu0 %v1958
          %2546 = vmatprep.subr.bf16.mxu0 %v1965
          %2547 = vmatpush1.bf16.msra.mxu0 %v1964
          %2548 = vmatprep.mubr.bf16.mxu0 %v589
          %2549 = vmatmul.mubr.bf16.gmra.mrb[0].mxu0 %v588
          %v2550 = vpop.f32.mrb[0].mxu0
          %v2551 = vadd.f32 %v2510, %v2550
          %v2552 = vpop.f32.mrb[0].mxu0
          %v2553 = vadd.f32 %v2512, %v2552
          %v2554 = vpop.f32.mrb[0].mxu0
          %v2555 = vpop.f32.mrb[0].mxu0
          %2556 = vdwg.mxu0
          %2557 = vmatprep.subr.bf16.mxu0 %v1971
          %2558 = vmatpush1.bf16.msra.mxu0 %v1970
          %2559 = vmatprep.subr.bf16.mxu0 %v1977
          %2560 = vmatpush1.bf16.msra.mxu0 %v1976
          %2561 = vmatprep.subr.bf16.mxu0 %v1983
          %2562 = vmatpush1.bf16.msra.mxu0 %v1982
          %2563 = vmatprep.subr.bf16.mxu0 %v1989
          %2564 = vmatpush1.bf16.msra.mxu0 %v1988
          %2565 = vmatprep.subr.bf16.mxu0 %v1995
          %2566 = vmatpush1.bf16.msra.mxu0 %v1994
          %2567 = vmatprep.subr.bf16.mxu0 %v2001
          %2568 = vmatpush1.bf16.msra.mxu0 %v2000
          %2569 = vmatprep.subr.bf16.mxu0 %v2007
          %2570 = vmatpush1.bf16.msra.mxu0 %v2006
          %2571 = vmatprep.subr.bf16.mxu0 %v2013
          %2572 = vmatpush1.bf16.msra.mxu0 %v2012
          %2573 = vmatprep.subr.bf16.mxu0 %v2019
          %2574 = vmatpush1.bf16.msra.mxu0 %v2018
          %2575 = vmatprep.subr.bf16.mxu0 %v2025
          %2576 = vmatpush1.bf16.msra.mxu0 %v2024
          %2577 = vmatprep.subr.bf16.mxu0 %v2031
          %2578 = vmatpush1.bf16.msra.mxu0 %v2030
          %2579 = vmatprep.subr.bf16.mxu0 %v2037
          %2580 = vmatpush1.bf16.msra.mxu0 %v2036
          %2581 = vmatprep.subr.bf16.mxu0 %v2043
          %2582 = vmatpush1.bf16.msra.mxu0 %v2042
          %2583 = vmatprep.subr.bf16.mxu0 %v2049
          %2584 = vmatpush1.bf16.msra.mxu0 %v2048
          %2585 = vmatprep.subr.bf16.mxu0 %v2055
          %2586 = vmatpush1.bf16.msra.mxu0 %v2054
          %2587 = vmatprep.subr.bf16.mxu0 %v2061
          %2588 = vmatpush1.bf16.msra.mxu0 %v2060
          %2589 = vmatprep.mubr.bf16.mxu0 %v591
          %2590 = vmatmul.mubr.bf16.gmra.mrb[0].mxu0 %v590
          %v2591 = vpop.f32.mrb[0].mxu0
          %v2592 = vadd.f32 %v2551, %v2591
          %v2593 = vpop.f32.mrb[0].mxu0
          %v2594 = vadd.f32 %v2553, %v2593
          %v2595 = vpop.f32.mrb[0].mxu0
          %v2596 = vpop.f32.mrb[0].mxu0
          %2597 = vdwg.mxu0
          %2598 = vmatprep.subr.bf16.mxu0 %v1781
          %2599 = vmatpush1.bf16.msra.mxu0 %v1780
          %2600 = vmatprep.subr.bf16.mxu0 %v1787
          %2601 = vmatpush1.bf16.msra.mxu0 %v1786
          %2602 = vmatprep.subr.bf16.mxu0 %v1793
          %2603 = vmatpush1.bf16.msra.mxu0 %v1792
          %2604 = vmatprep.subr.bf16.mxu0 %v1799
          %2605 = vmatpush1.bf16.msra.mxu0 %v1798
          %2606 = vmatprep.subr.bf16.mxu0 %v1805
          %2607 = vmatpush1.bf16.msra.mxu0 %v1804
          %2608 = vmatprep.subr.bf16.mxu0 %v1811
          %2609 = vmatpush1.bf16.msra.mxu0 %v1810
          %2610 = vmatprep.subr.bf16.mxu0 %v1817
          %2611 = vmatpush1.bf16.msra.mxu0 %v1816
          %2612 = vmatprep.subr.bf16.mxu0 %v1823
          %2613 = vmatpush1.bf16.msra.mxu0 %v1822
          %2614 = vmatprep.subr.bf16.mxu0 %v1829
          %2615 = vmatpush1.bf16.msra.mxu0 %v1828
          %2616 = vmatprep.subr.bf16.mxu0 %v1835
          %2617 = vmatpush1.bf16.msra.mxu0 %v1834
          %2618 = vmatprep.subr.bf16.mxu0 %v1841
          %2619 = vmatpush1.bf16.msra.mxu0 %v1840
          %2620 = vmatprep.subr.bf16.mxu0 %v1847
          %2621 = vmatpush1.bf16.msra.mxu0 %v1846
          %2622 = vmatprep.subr.bf16.mxu0 %v1853
          %2623 = vmatpush1.bf16.msra.mxu0 %v1852
          %2624 = vmatprep.subr.bf16.mxu0 %v1859
          %2625 = vmatpush1.bf16.msra.mxu0 %v1858
          %2626 = vmatprep.subr.bf16.mxu0 %v1865
          %2627 = vmatpush1.bf16.msra.mxu0 %v1864
          %2628 = vmatprep.subr.bf16.mxu0 %v1871
          %2629 = vmatpush1.bf16.msra.mxu0 %v1870
          %2630 = vmatprep.mubr.bf16.mxu0 %v587
          %2631 = vmatmul.mubr.bf16.gmra.mrb[0].mxu0 %v586
          %v2632 = vpop.f32.mrb[0].mxu0
          %v2633 = vadd.f32 %v901, %v2632
          %v2634 = vpop.f32.mrb[0].mxu0
          %v2635 = vadd.f32 %v905, %v2634
          %v2636 = vpop.f32.mrb[0].mxu0
          %v2637 = vpop.f32.mrb[0].mxu0
          %2638 = vdwg.mxu0
          %2639 = vmatprep.subr.bf16.mxu0 %v1877
          %2640 = vmatpush1.bf16.msra.mxu0 %v1876
          %2641 = vmatprep.subr.bf16.mxu0 %v1883
          %2642 = vmatpush1.bf16.msra.mxu0 %v1882
          %2643 = vmatprep.subr.bf16.mxu0 %v1889
          %2644 = vmatpush1.bf16.msra.mxu0 %v1888
          %2645 = vmatprep.subr.bf16.mxu0 %v1895
          %2646 = vmatpush1.bf16.msra.mxu0 %v1894
          %2647 = vmatprep.subr.bf16.mxu0 %v1901
          %2648 = vmatpush1.bf16.msra.mxu0 %v1900
          %2649 = vmatprep.subr.bf16.mxu0 %v1907
          %2650 = vmatpush1.bf16.msra.mxu0 %v1906
          %2651 = vmatprep.subr.bf16.mxu0 %v1913
          %2652 = vmatpush1.bf16.msra.mxu0 %v1912
          %2653 = vmatprep.subr.bf16.mxu0 %v1919
          %2654 = vmatpush1.bf16.msra.mxu0 %v1918
          %2655 = vmatprep.subr.bf16.mxu0 %v1925
          %2656 = vmatpush1.bf16.msra.mxu0 %v1924
          %2657 = vmatprep.subr.bf16.mxu0 %v1931
          %2658 = vmatpush1.bf16.msra.mxu0 %v1930
          %2659 = vmatprep.subr.bf16.mxu0 %v1937
          %2660 = vmatpush1.bf16.msra.mxu0 %v1936
          %2661 = vmatprep.subr.bf16.mxu0 %v1943
          %2662 = vmatpush1.bf16.msra.mxu0 %v1942
          %2663 = vmatprep.subr.bf16.mxu0 %v1949
          %2664 = vmatpush1.bf16.msra.mxu0 %v1948
          %2665 = vmatprep.subr.bf16.mxu0 %v1955
          %2666 = vmatpush1.bf16.msra.mxu0 %v1954
          %2667 = vmatprep.subr.bf16.mxu0 %v1961
          %2668 = vmatpush1.bf16.msra.mxu0 %v1960
          %2669 = vmatprep.subr.bf16.mxu0 %v1967
          %2670 = vmatpush1.bf16.msra.mxu0 %v1966
          %2671 = vmatprep.mubr.bf16.mxu0 %v589
          %2672 = vmatmul.mubr.bf16.gmra.mrb[0].mxu0 %v588
          %v2673 = vpop.f32.mrb[0].mxu0
          %v2674 = vadd.f32 %v2633, %v2673
          %v2675 = vpop.f32.mrb[0].mxu0
          %v2676 = vadd.f32 %v2635, %v2675
          %v2677 = vpop.f32.mrb[0].mxu0
          %v2678 = vpop.f32.mrb[0].mxu0
          %2679 = vdwg.mxu0
          %2680 = vmatprep.subr.bf16.mxu0 %v1973
          %2681 = vmatpush1.bf16.msra.mxu0 %v1972
          %2682 = vmatprep.subr.bf16.mxu0 %v1979
          %2683 = vmatpush1.bf16.msra.mxu0 %v1978
          %2684 = vmatprep.subr.bf16.mxu0 %v1985
          %2685 = vmatpush1.bf16.msra.mxu0 %v1984
          %2686 = vmatprep.subr.bf16.mxu0 %v1991
          %2687 = vmatpush1.bf16.msra.mxu0 %v1990
          %2688 = vmatprep.subr.bf16.mxu0 %v1997
          %2689 = vmatpush1.bf16.msra.mxu0 %v1996
          %2690 = vmatprep.subr.bf16.mxu0 %v2003
          %2691 = vmatpush1.bf16.msra.mxu0 %v2002
          %2692 = vmatprep.subr.bf16.mxu0 %v2009
          %2693 = vmatpush1.bf16.msra.mxu0 %v2008
          %2694 = vmatprep.subr.bf16.mxu0 %v2015
          %2695 = vmatpush1.bf16.msra.mxu0 %v2014
          %2696 = vmatprep.subr.bf16.mxu0 %v2021
          %2697 = vmatpush1.bf16.msra.mxu0 %v2020
          %2698 = vmatprep.subr.bf16.mxu0 %v2027
          %2699 = vmatpush1.bf16.msra.mxu0 %v2026
          %2700 = vmatprep.subr.bf16.mxu0 %v2033
          %2701 = vmatpush1.bf16.msra.mxu0 %v2032
          %2702 = vmatprep.subr.bf16.mxu0 %v2039
          %2703 = vmatpush1.bf16.msra.mxu0 %v2038
          %2704 = vmatprep.subr.bf16.mxu0 %v2045
          %2705 = vmatpush1.bf16.msra.mxu0 %v2044
          %2706 = vmatprep.subr.bf16.mxu0 %v2051
          %2707 = vmatpush1.bf16.msra.mxu0 %v2050
          %2708 = vmatprep.subr.bf16.mxu0 %v2057
          %2709 = vmatpush1.bf16.msra.mxu0 %v2056
          %2710 = vmatprep.subr.bf16.mxu0 %v2063
          %2711 = vmatpush1.bf16.msra.mxu0 %v2062
          %2712 = vmatprep.mubr.bf16.mxu0 %v591
          %2713 = vmatmul.mubr.bf16.gmra.mrb[0].mxu0 %v590
          %v2714 = vpop.f32.mrb[0].mxu0
          %v2715 = vadd.f32 %v2674, %v2714
          %v2716 = vpop.f32.mrb[0].mxu0
          %v2717 = vadd.f32 %v2676, %v2716
          %v2718 = vpop.f32.mrb[0].mxu0
          %v2719 = vpop.f32.mrb[0].mxu0
          %2720 = vdwg.mxu0
          %v2721 = vtanh.pop %v2469
          %v2722 = vtanh.pop %v2471
          %v2723 = vtanh.pop %v2592
          %v2724 = vtanh.pop %v2594
          %v2725 = vtanh.pop %v2715
          %v2726 = vtanh.pop %v2717
          %v2727 = vpack.c.bf16 %v2721, %v2721
          %v2728 = vpack.c.bf16 %v2722, %v2722
          %v2729 = vpack.c.bf16 %v2723, %v2723
          %v2730 = vpack.c.bf16 %v2724, %v2724
          %v2731 = vpack.c.bf16 %v2725, %v2725
          %v2732 = vpack.c.bf16 %v2726, %v2726
          %v2733 = vld [vmem:[#allocation9] sm:$0xff]
          %v2734 = vld [vmem:[#allocation9 + $0x8] sm:$0xff]
          %v2735 = vld [vmem:[#allocation9 + $0x10] sm:$0xff]
          %v2736 = vld [vmem:[#allocation9 + $0x18] sm:$0xff]
          %v2737 = vld [vmem:[#allocation9 + $0x20] sm:$0xff]
          %v2738 = vld [vmem:[#allocation9 + $0x28] sm:$0xff]
          %v2739 = vld [vmem:[#allocation9 + $0x30] sm:$0xff]
          %v2740 = vld [vmem:[#allocation9 + $0x38] sm:$0xff]
          %v2741 = vld [vmem:[#allocation9 + $0x40] sm:$0xff]
          %v2742 = vld [vmem:[#allocation9 + $0x48] sm:$0xff]
          %v2743 = vld [vmem:[#allocation9 + $0x50] sm:$0xff]
          %v2744 = vld [vmem:[#allocation9 + $0x58] sm:$0xff]
          %v2745 = vld [vmem:[#allocation9 + $0x60] sm:$0xff]
          %v2746 = vld [vmem:[#allocation9 + $0x68] sm:$0xff]
          %v2747 = vld [vmem:[#allocation9 + $0x70] sm:$0xff]
          %v2748 = vld [vmem:[#allocation9 + $0x78] sm:$0xff]
          %v2749 = vld [vmem:[#allocation9 + $0x80] sm:$0xff]
          %v2750 = vld [vmem:[#allocation9 + $0x88] sm:$0xff]
          %v2751 = vld [vmem:[#allocation9 + $0x90] sm:$0xff]
          %v2752 = vld [vmem:[#allocation9 + $0x98] sm:$0xff]
          %v2753 = vld [vmem:[#allocation9 + $0xa0] sm:$0xff]
          %v2754 = vld [vmem:[#allocation9 + $0xa8] sm:$0xff]
          %v2755 = vld [vmem:[#allocation9 + $0xb0] sm:$0xff]
          %v2756 = vld [vmem:[#allocation9 + $0xb8] sm:$0xff]
          %v2757 = vld [vmem:[#allocation9 + $0xc0] sm:$0xff]
          %v2758 = vld [vmem:[#allocation9 + $0xc8] sm:$0xff]
          %v2759 = vld [vmem:[#allocation9 + $0xd0] sm:$0xff]
          %v2760 = vld [vmem:[#allocation9 + $0xd8] sm:$0xff]
          %v2761 = vld [vmem:[#allocation9 + $0xe0] sm:$0xff]
          %v2762 = vld [vmem:[#allocation9 + $0xe8] sm:$0xff]
          %v2763 = vld [vmem:[#allocation9 + $0xf0] sm:$0xff]
          %v2764 = vld [vmem:[#allocation9 + $0xf8] sm:$0xff]
          %v2765 = vld [vmem:[#allocation9 + $0x100] sm:$0xff]
          %v2766 = vld [vmem:[#allocation9 + $0x108] sm:$0xff]
          %v2767 = vld [vmem:[#allocation9 + $0x110] sm:$0xff]
          %v2768 = vld [vmem:[#allocation9 + $0x118] sm:$0xff]
          %v2769 = vld [vmem:[#allocation9 + $0x120] sm:$0xff]
          %v2770 = vld [vmem:[#allocation9 + $0x128] sm:$0xff]
          %v2771 = vld [vmem:[#allocation9 + $0x130] sm:$0xff]
          %v2772 = vld [vmem:[#allocation9 + $0x138] sm:$0xff]
          %v2773 = vld [vmem:[#allocation9 + $0x140] sm:$0xff]
          %v2774 = vld [vmem:[#allocation9 + $0x148] sm:$0xff]
          %v2775 = vld [vmem:[#allocation9 + $0x150] sm:$0xff]
          %v2776 = vld [vmem:[#allocation9 + $0x158] sm:$0xff]
          %v2777 = vld [vmem:[#allocation9 + $0x160] sm:$0xff]
          %v2778 = vld [vmem:[#allocation9 + $0x168] sm:$0xff]
          %v2779 = vld [vmem:[#allocation9 + $0x170] sm:$0xff]
          %v2780 = vld [vmem:[#allocation9 + $0x178] sm:$0xff]
          %v2781 = vld [vmem:[#allocation9 + $0x180] sm:$0xff]
          %v2782 = vld [vmem:[#allocation9 + $0x188] sm:$0xff]
          %v2783 = vld [vmem:[#allocation9 + $0x190] sm:$0xff]
          %v2784 = vld [vmem:[#allocation9 + $0x198] sm:$0xff]
          %v2785 = vld [vmem:[#allocation9 + $0x1a0] sm:$0xff]
          %v2786 = vld [vmem:[#allocation9 + $0x1a8] sm:$0xff]
          %v2787 = vld [vmem:[#allocation9 + $0x1b0] sm:$0xff]
          %v2788 = vld [vmem:[#allocation9 + $0x1b8] sm:$0xff]
          %v2789 = vld [vmem:[#allocation9 + $0x1c0] sm:$0xff]
          %v2790 = vld [vmem:[#allocation9 + $0x1c8] sm:$0xff]
          %v2791 = vld [vmem:[#allocation9 + $0x1d0] sm:$0xff]
          %v2792 = vld [vmem:[#allocation9 + $0x1d8] sm:$0xff]
          %v2793 = vld [vmem:[#allocation9 + $0x1e0] sm:$0xff]
          %v2794 = vld [vmem:[#allocation9 + $0x1e8] sm:$0xff]
          %v2795 = vld [vmem:[#allocation9 + $0x1f0] sm:$0xff]
          %v2796 = vld [vmem:[#allocation9 + $0x1f8] sm:$0xff]
          %v2797 = vld [vmem:[#allocation9 + $0x200] sm:$0xff]
          %v2798 = vld [vmem:[#allocation9 + $0x208] sm:$0xff]
          %v2799 = vld [vmem:[#allocation9 + $0x210] sm:$0xff]
          %v2800 = vld [vmem:[#allocation9 + $0x218] sm:$0xff]
          %v2801 = vld [vmem:[#allocation9 + $0x220] sm:$0xff]
          %v2802 = vld [vmem:[#allocation9 + $0x228] sm:$0xff]
          %v2803 = vld [vmem:[#allocation9 + $0x230] sm:$0xff]
          %v2804 = vld [vmem:[#allocation9 + $0x238] sm:$0xff]
          %v2805 = vld [vmem:[#allocation9 + $0x240] sm:$0xff]
          %v2806 = vld [vmem:[#allocation9 + $0x248] sm:$0xff]
          %v2807 = vld [vmem:[#allocation9 + $0x250] sm:$0xff]
          %v2808 = vld [vmem:[#allocation9 + $0x258] sm:$0xff]
          %v2809 = vld [vmem:[#allocation9 + $0x260] sm:$0xff]
          %v2810 = vld [vmem:[#allocation9 + $0x268] sm:$0xff]
          %v2811 = vld [vmem:[#allocation9 + $0x270] sm:$0xff]
          %v2812 = vld [vmem:[#allocation9 + $0x278] sm:$0xff]
          %v2813 = vld [vmem:[#allocation9 + $0x280] sm:$0xff]
          %v2814 = vld [vmem:[#allocation9 + $0x288] sm:$0xff]
          %v2815 = vld [vmem:[#allocation9 + $0x290] sm:$0xff]
          %v2816 = vld [vmem:[#allocation9 + $0x298] sm:$0xff]
          %v2817 = vld [vmem:[#allocation9 + $0x2a0] sm:$0xff]
          %v2818 = vld [vmem:[#allocation9 + $0x2a8] sm:$0xff]
          %v2819 = vld [vmem:[#allocation9 + $0x2b0] sm:$0xff]
          %v2820 = vld [vmem:[#allocation9 + $0x2b8] sm:$0xff]
          %v2821 = vld [vmem:[#allocation9 + $0x2c0] sm:$0xff]
          %v2822 = vld [vmem:[#allocation9 + $0x2c8] sm:$0xff]
          %v2823 = vld [vmem:[#allocation9 + $0x2d0] sm:$0xff]
          %v2824 = vld [vmem:[#allocation9 + $0x2d8] sm:$0xff]
          %v2825 = vld [vmem:[#allocation9 + $0x2e0] sm:$0xff]
          %v2826 = vld [vmem:[#allocation9 + $0x2e8] sm:$0xff]
          %v2827 = vld [vmem:[#allocation9 + $0x2f0] sm:$0xff]
          %v2828 = vld [vmem:[#allocation9 + $0x2f8] sm:$0xff]
          %v2829 = vld [vmem:[#allocation9 + $0x300] sm:$0xff]
          %v2830 = vld [vmem:[#allocation9 + $0x308] sm:$0xff]
          %v2831 = vld [vmem:[#allocation9 + $0x310] sm:$0xff]
          %v2832 = vld [vmem:[#allocation9 + $0x318] sm:$0xff]
          %v2833 = vld [vmem:[#allocation9 + $0x320] sm:$0xff]
          %v2834 = vld [vmem:[#allocation9 + $0x328] sm:$0xff]
          %v2835 = vld [vmem:[#allocation9 + $0x330] sm:$0xff]
          %v2836 = vld [vmem:[#allocation9 + $0x338] sm:$0xff]
          %v2837 = vld [vmem:[#allocation9 + $0x340] sm:$0xff]
          %v2838 = vld [vmem:[#allocation9 + $0x348] sm:$0xff]
          %v2839 = vld [vmem:[#allocation9 + $0x350] sm:$0xff]
          %v2840 = vld [vmem:[#allocation9 + $0x358] sm:$0xff]
          %v2841 = vld [vmem:[#allocation9 + $0x360] sm:$0xff]
          %v2842 = vld [vmem:[#allocation9 + $0x368] sm:$0xff]
          %v2843 = vld [vmem:[#allocation9 + $0x370] sm:$0xff]
          %v2844 = vld [vmem:[#allocation9 + $0x378] sm:$0xff]
          %v2845 = vld [vmem:[#allocation9 + $0x380] sm:$0xff]
          %v2846 = vld [vmem:[#allocation9 + $0x388] sm:$0xff]
          %v2847 = vld [vmem:[#allocation9 + $0x390] sm:$0xff]
          %v2848 = vld [vmem:[#allocation9 + $0x398] sm:$0xff]
          %v2849 = vld [vmem:[#allocation9 + $0x3a0] sm:$0xff]
          %v2850 = vld [vmem:[#allocation9 + $0x3a8] sm:$0xff]
          %v2851 = vld [vmem:[#allocation9 + $0x3b0] sm:$0xff]
          %v2852 = vld [vmem:[#allocation9 + $0x3b8] sm:$0xff]
          %v2853 = vld [vmem:[#allocation9 + $0x3c0] sm:$0xff]
          %v2854 = vld [vmem:[#allocation9 + $0x3c8] sm:$0xff]
          %v2855 = vld [vmem:[#allocation9 + $0x3d0] sm:$0xff]
          %v2856 = vld [vmem:[#allocation9 + $0x3d8] sm:$0xff]
          %v2857 = vld [vmem:[#allocation9 + $0x3e0] sm:$0xff]
          %v2858 = vld [vmem:[#allocation9 + $0x3e8] sm:$0xff]
          %v2859 = vld [vmem:[#allocation9 + $0x3f0] sm:$0xff]
          %v2860 = vld [vmem:[#allocation9 + $0x3f8] sm:$0xff]
          %v2861 = vld [vmem:[#allocation9 + $0x400] sm:$0xff]
          %v2862 = vld [vmem:[#allocation9 + $0x408] sm:$0xff]
          %v2863 = vld [vmem:[#allocation9 + $0x410] sm:$0xff]
          %v2864 = vld [vmem:[#allocation9 + $0x418] sm:$0xff]
          %v2865 = vld [vmem:[#allocation9 + $0x420] sm:$0xff]
          %v2866 = vld [vmem:[#allocation9 + $0x428] sm:$0xff]
          %v2867 = vld [vmem:[#allocation9 + $0x430] sm:$0xff]
          %v2868 = vld [vmem:[#allocation9 + $0x438] sm:$0xff]
          %v2869 = vld [vmem:[#allocation9 + $0x440] sm:$0xff]
          %v2870 = vld [vmem:[#allocation9 + $0x448] sm:$0xff]
          %v2871 = vld [vmem:[#allocation9 + $0x450] sm:$0xff]
          %v2872 = vld [vmem:[#allocation9 + $0x458] sm:$0xff]
          %v2873 = vld [vmem:[#allocation9 + $0x460] sm:$0xff]
          %v2874 = vld [vmem:[#allocation9 + $0x468] sm:$0xff]
          %v2875 = vld [vmem:[#allocation9 + $0x470] sm:$0xff]
          %v2876 = vld [vmem:[#allocation9 + $0x478] sm:$0xff]
          %v2877 = vld [vmem:[#allocation9 + $0x480] sm:$0xff]
          %v2878 = vld [vmem:[#allocation9 + $0x488] sm:$0xff]
          %v2879 = vld [vmem:[#allocation9 + $0x490] sm:$0xff]
          %v2880 = vld [vmem:[#allocation9 + $0x498] sm:$0xff]
          %v2881 = vld [vmem:[#allocation9 + $0x4a0] sm:$0xff]
          %v2882 = vld [vmem:[#allocation9 + $0x4a8] sm:$0xff]
          %v2883 = vld [vmem:[#allocation9 + $0x4b0] sm:$0xff]
          %v2884 = vld [vmem:[#allocation9 + $0x4b8] sm:$0xff]
          %v2885 = vld [vmem:[#allocation9 + $0x4c0] sm:$0xff]
          %v2886 = vld [vmem:[#allocation9 + $0x4c8] sm:$0xff]
          %v2887 = vld [vmem:[#allocation9 + $0x4d0] sm:$0xff]
          %v2888 = vld [vmem:[#allocation9 + $0x4d8] sm:$0xff]
          %v2889 = vld [vmem:[#allocation9 + $0x4e0] sm:$0xff]
          %v2890 = vld [vmem:[#allocation9 + $0x4e8] sm:$0xff]
          %v2891 = vld [vmem:[#allocation9 + $0x4f0] sm:$0xff]
          %v2892 = vld [vmem:[#allocation9 + $0x4f8] sm:$0xff]
          %v2893 = vld [vmem:[#allocation9 + $0x500] sm:$0xff]
          %v2894 = vld [vmem:[#allocation9 + $0x508] sm:$0xff]
          %v2895 = vld [vmem:[#allocation9 + $0x510] sm:$0xff]
          %v2896 = vld [vmem:[#allocation9 + $0x518] sm:$0xff]
          %v2897 = vld [vmem:[#allocation9 + $0x520] sm:$0xff]
          %v2898 = vld [vmem:[#allocation9 + $0x528] sm:$0xff]
          %v2899 = vld [vmem:[#allocation9 + $0x530] sm:$0xff]
          %v2900 = vld [vmem:[#allocation9 + $0x538] sm:$0xff]
          %v2901 = vld [vmem:[#allocation9 + $0x540] sm:$0xff]
          %v2902 = vld [vmem:[#allocation9 + $0x548] sm:$0xff]
          %v2903 = vld [vmem:[#allocation9 + $0x550] sm:$0xff]
          %v2904 = vld [vmem:[#allocation9 + $0x558] sm:$0xff]
          %v2905 = vld [vmem:[#allocation9 + $0x560] sm:$0xff]
          %v2906 = vld [vmem:[#allocation9 + $0x568] sm:$0xff]
          %v2907 = vld [vmem:[#allocation9 + $0x570] sm:$0xff]
          %v2908 = vld [vmem:[#allocation9 + $0x578] sm:$0xff]
          %v2909 = vld [vmem:[#allocation9 + $0x580] sm:$0xff]
          %v2910 = vld [vmem:[#allocation9 + $0x588] sm:$0xff]
          %v2911 = vld [vmem:[#allocation9 + $0x590] sm:$0xff]
          %v2912 = vld [vmem:[#allocation9 + $0x598] sm:$0xff]
          %v2913 = vld [vmem:[#allocation9 + $0x5a0] sm:$0xff]
          %v2914 = vld [vmem:[#allocation9 + $0x5a8] sm:$0xff]
          %v2915 = vld [vmem:[#allocation9 + $0x5b0] sm:$0xff]
          %v2916 = vld [vmem:[#allocation9 + $0x5b8] sm:$0xff]
          %v2917 = vld [vmem:[#allocation9 + $0x5c0] sm:$0xff]
          %v2918 = vld [vmem:[#allocation9 + $0x5c8] sm:$0xff]
          %v2919 = vld [vmem:[#allocation9 + $0x5d0] sm:$0xff]
          %v2920 = vld [vmem:[#allocation9 + $0x5d8] sm:$0xff]
          %v2921 = vld [vmem:[#allocation9 + $0x5e0] sm:$0xff]
          %v2922 = vld [vmem:[#allocation9 + $0x5e8] sm:$0xff]
          %v2923 = vld [vmem:[#allocation9 + $0x5f0] sm:$0xff]
          %v2924 = vld [vmem:[#allocation9 + $0x5f8] sm:$0xff]
          %v2925 = vld [vmem:[#allocation9 + $0x600] sm:$0xff]
          %v2926 = vld [vmem:[#allocation9 + $0x608] sm:$0xff]
          %v2927 = vld [vmem:[#allocation9 + $0x610] sm:$0xff]
          %v2928 = vld [vmem:[#allocation9 + $0x618] sm:$0xff]
          %v2929 = vld [vmem:[#allocation9 + $0x620] sm:$0xff]
          %v2930 = vld [vmem:[#allocation9 + $0x628] sm:$0xff]
          %v2931 = vld [vmem:[#allocation9 + $0x630] sm:$0xff]
          %v2932 = vld [vmem:[#allocation9 + $0x638] sm:$0xff]
          %v2933 = vld [vmem:[#allocation9 + $0x640] sm:$0xff]
          %v2934 = vld [vmem:[#allocation9 + $0x648] sm:$0xff]
          %v2935 = vld [vmem:[#allocation9 + $0x650] sm:$0xff]
          %v2936 = vld [vmem:[#allocation9 + $0x658] sm:$0xff]
          %v2937 = vld [vmem:[#allocation9 + $0x660] sm:$0xff]
          %v2938 = vld [vmem:[#allocation9 + $0x668] sm:$0xff]
          %v2939 = vld [vmem:[#allocation9 + $0x670] sm:$0xff]
          %v2940 = vld [vmem:[#allocation9 + $0x678] sm:$0xff]
          %v2941 = vld [vmem:[#allocation9 + $0x680] sm:$0xff]
          %v2942 = vld [vmem:[#allocation9 + $0x688] sm:$0xff]
          %v2943 = vld [vmem:[#allocation9 + $0x690] sm:$0xff]
          %v2944 = vld [vmem:[#allocation9 + $0x698] sm:$0xff]
          %v2945 = vld [vmem:[#allocation9 + $0x6a0] sm:$0xff]
          %v2946 = vld [vmem:[#allocation9 + $0x6a8] sm:$0xff]
          %v2947 = vld [vmem:[#allocation9 + $0x6b0] sm:$0xff]
          %v2948 = vld [vmem:[#allocation9 + $0x6b8] sm:$0xff]
          %v2949 = vld [vmem:[#allocation9 + $0x6c0] sm:$0xff]
          %v2950 = vld [vmem:[#allocation9 + $0x6c8] sm:$0xff]
          %v2951 = vld [vmem:[#allocation9 + $0x6d0] sm:$0xff]
          %v2952 = vld [vmem:[#allocation9 + $0x6d8] sm:$0xff]
          %v2953 = vld [vmem:[#allocation9 + $0x6e0] sm:$0xff]
          %v2954 = vld [vmem:[#allocation9 + $0x6e8] sm:$0xff]
          %v2955 = vld [vmem:[#allocation9 + $0x6f0] sm:$0xff]
          %v2956 = vld [vmem:[#allocation9 + $0x6f8] sm:$0xff]
          %v2957 = vld [vmem:[#allocation9 + $0x700] sm:$0xff]
          %v2958 = vld [vmem:[#allocation9 + $0x708] sm:$0xff]
          %v2959 = vld [vmem:[#allocation9 + $0x710] sm:$0xff]
          %v2960 = vld [vmem:[#allocation9 + $0x718] sm:$0xff]
          %v2961 = vld [vmem:[#allocation9 + $0x720] sm:$0xff]
          %v2962 = vld [vmem:[#allocation9 + $0x728] sm:$0xff]
          %v2963 = vld [vmem:[#allocation9 + $0x730] sm:$0xff]
          %v2964 = vld [vmem:[#allocation9 + $0x738] sm:$0xff]
          %v2965 = vld [vmem:[#allocation9 + $0x740] sm:$0xff]
          %v2966 = vld [vmem:[#allocation9 + $0x748] sm:$0xff]
          %v2967 = vld [vmem:[#allocation9 + $0x750] sm:$0xff]
          %v2968 = vld [vmem:[#allocation9 + $0x758] sm:$0xff]
          %v2969 = vld [vmem:[#allocation9 + $0x760] sm:$0xff]
          %v2970 = vld [vmem:[#allocation9 + $0x768] sm:$0xff]
          %v2971 = vld [vmem:[#allocation9 + $0x770] sm:$0xff]
          %v2972 = vld [vmem:[#allocation9 + $0x778] sm:$0xff]
          %v2973 = vld [vmem:[#allocation9 + $0x780] sm:$0xff]
          %v2974 = vld [vmem:[#allocation9 + $0x788] sm:$0xff]
          %v2975 = vld [vmem:[#allocation9 + $0x790] sm:$0xff]
          %v2976 = vld [vmem:[#allocation9 + $0x798] sm:$0xff]
          %v2977 = vld [vmem:[#allocation9 + $0x7a0] sm:$0xff]
          %v2978 = vld [vmem:[#allocation9 + $0x7a8] sm:$0xff]
          %v2979 = vld [vmem:[#allocation9 + $0x7b0] sm:$0xff]
          %v2980 = vld [vmem:[#allocation9 + $0x7b8] sm:$0xff]
          %v2981 = vld [vmem:[#allocation9 + $0x7c0] sm:$0xff]
          %v2982 = vld [vmem:[#allocation9 + $0x7c8] sm:$0xff]
          %v2983 = vld [vmem:[#allocation9 + $0x7d0] sm:$0xff]
          %v2984 = vld [vmem:[#allocation9 + $0x7d8] sm:$0xff]
          %v2985 = vld [vmem:[#allocation9 + $0x7e0] sm:$0xff]
          %v2986 = vld [vmem:[#allocation9 + $0x7e8] sm:$0xff]
          %v2987 = vld [vmem:[#allocation9 + $0x7f0] sm:$0xff]
          %v2988 = vld [vmem:[#allocation9 + $0x7f8] sm:$0xff]
          %v2989 = vld [vmem:[#allocation9 + $0x800] sm:$0xff]
          %v2990 = vld [vmem:[#allocation9 + $0x808] sm:$0xff]
          %v2991 = vld [vmem:[#allocation9 + $0x810] sm:$0xff]
          %v2992 = vld [vmem:[#allocation9 + $0x818] sm:$0xff]
          %v2993 = vld [vmem:[#allocation9 + $0x820] sm:$0xff]
          %v2994 = vld [vmem:[#allocation9 + $0x828] sm:$0xff]
          %v2995 = vld [vmem:[#allocation9 + $0x830] sm:$0xff]
          %v2996 = vld [vmem:[#allocation9 + $0x838] sm:$0xff]
          %v2997 = vld [vmem:[#allocation9 + $0x840] sm:$0xff]
          %v2998 = vld [vmem:[#allocation9 + $0x848] sm:$0xff]
          %v2999 = vld [vmem:[#allocation9 + $0x850] sm:$0xff]
          %v3000 = vld [vmem:[#allocation9 + $0x858] sm:$0xff]
          %v3001 = vld [vmem:[#allocation9 + $0x860] sm:$0xff]
          %v3002 = vld [vmem:[#allocation9 + $0x868] sm:$0xff]
          %v3003 = vld [vmem:[#allocation9 + $0x870] sm:$0xff]
          %v3004 = vld [vmem:[#allocation9 + $0x878] sm:$0xff]
          %v3005 = vld [vmem:[#allocation9 + $0x880] sm:$0xff]
          %v3006 = vld [vmem:[#allocation9 + $0x888] sm:$0xff]
          %v3007 = vld [vmem:[#allocation9 + $0x890] sm:$0xff]
          %v3008 = vld [vmem:[#allocation9 + $0x898] sm:$0xff]
          %v3009 = vld [vmem:[#allocation9 + $0x8a0] sm:$0xff]
          %v3010 = vld [vmem:[#allocation9 + $0x8a8] sm:$0xff]
          %v3011 = vld [vmem:[#allocation9 + $0x8b0] sm:$0xff]
          %v3012 = vld [vmem:[#allocation9 + $0x8b8] sm:$0xff]
          %v3013 = vld [vmem:[#allocation9 + $0x8c0] sm:$0xff]
          %v3014 = vld [vmem:[#allocation9 + $0x8c8] sm:$0xff]
          %v3015 = vld [vmem:[#allocation9 + $0x8d0] sm:$0xff]
          %v3016 = vld [vmem:[#allocation9 + $0x8d8] sm:$0xff]
          %v3017 = vld [vmem:[#allocation9 + $0x8e0] sm:$0xff]
          %v3018 = vld [vmem:[#allocation9 + $0x8e8] sm:$0xff]
          %v3019 = vld [vmem:[#allocation9 + $0x8f0] sm:$0xff]
          %v3020 = vld [vmem:[#allocation9 + $0x8f8] sm:$0xff]
          %v3021 = vld [vmem:[#allocation9 + $0x900] sm:$0xff]
          %v3022 = vld [vmem:[#allocation9 + $0x908] sm:$0xff]
          %v3023 = vld [vmem:[#allocation9 + $0x910] sm:$0xff]
          %v3024 = vld [vmem:[#allocation9 + $0x918] sm:$0xff]
          %v3025 = vld [vmem:[#allocation9 + $0x920] sm:$0xff]
          %v3026 = vld [vmem:[#allocation9 + $0x928] sm:$0xff]
          %v3027 = vld [vmem:[#allocation9 + $0x930] sm:$0xff]
          %v3028 = vld [vmem:[#allocation9 + $0x938] sm:$0xff]
          %v3029 = vld [vmem:[#allocation9 + $0x940] sm:$0xff]
          %v3030 = vld [vmem:[#allocation9 + $0x948] sm:$0xff]
          %v3031 = vld [vmem:[#allocation9 + $0x950] sm:$0xff]
          %v3032 = vld [vmem:[#allocation9 + $0x958] sm:$0xff]
          %v3033 = vld [vmem:[#allocation9 + $0x960] sm:$0xff]
          %v3034 = vld [vmem:[#allocation9 + $0x968] sm:$0xff]
          %v3035 = vld [vmem:[#allocation9 + $0x970] sm:$0xff]
          %v3036 = vld [vmem:[#allocation9 + $0x978] sm:$0xff]
          %v3037 = vld [vmem:[#allocation9 + $0x980] sm:$0xff]
          %v3038 = vld [vmem:[#allocation9 + $0x988] sm:$0xff]
          %v3039 = vld [vmem:[#allocation9 + $0x990] sm:$0xff]
          %v3040 = vld [vmem:[#allocation9 + $0x998] sm:$0xff]
          %v3041 = vld [vmem:[#allocation9 + $0x9a0] sm:$0xff]
          %v3042 = vld [vmem:[#allocation9 + $0x9a8] sm:$0xff]
          %v3043 = vld [vmem:[#allocation9 + $0x9b0] sm:$0xff]
          %v3044 = vld [vmem:[#allocation9 + $0x9b8] sm:$0xff]
          %v3045 = vld [vmem:[#allocation9 + $0x9c0] sm:$0xff]
          %v3046 = vld [vmem:[#allocation9 + $0x9c8] sm:$0xff]
          %v3047 = vld [vmem:[#allocation9 + $0x9d0] sm:$0xff]
          %v3048 = vld [vmem:[#allocation9 + $0x9d8] sm:$0xff]
          %v3049 = vld [vmem:[#allocation9 + $0x9e0] sm:$0xff]
          %v3050 = vld [vmem:[#allocation9 + $0x9e8] sm:$0xff]
          %v3051 = vld [vmem:[#allocation9 + $0x9f0] sm:$0xff]
          %v3052 = vld [vmem:[#allocation9 + $0x9f8] sm:$0xff]
          %v3053 = vld [vmem:[#allocation9 + $0xa00] sm:$0xff]
          %v3054 = vld [vmem:[#allocation9 + $0xa08] sm:$0xff]
          %v3055 = vld [vmem:[#allocation9 + $0xa10] sm:$0xff]
          %v3056 = vld [vmem:[#allocation9 + $0xa18] sm:$0xff]
          %v3057 = vld [vmem:[#allocation9 + $0xa20] sm:$0xff]
          %v3058 = vld [vmem:[#allocation9 + $0xa28] sm:$0xff]
          %v3059 = vld [vmem:[#allocation9 + $0xa30] sm:$0xff]
          %v3060 = vld [vmem:[#allocation9 + $0xa38] sm:$0xff]
          %v3061 = vld [vmem:[#allocation9 + $0xa40] sm:$0xff]
          %v3062 = vld [vmem:[#allocation9 + $0xa48] sm:$0xff]
          %v3063 = vld [vmem:[#allocation9 + $0xa50] sm:$0xff]
          %v3064 = vld [vmem:[#allocation9 + $0xa58] sm:$0xff]
          %v3065 = vld [vmem:[#allocation9 + $0xa60] sm:$0xff]
          %v3066 = vld [vmem:[#allocation9 + $0xa68] sm:$0xff]
          %v3067 = vld [vmem:[#allocation9 + $0xa70] sm:$0xff]
          %v3068 = vld [vmem:[#allocation9 + $0xa78] sm:$0xff]
          %v3069 = vld [vmem:[#allocation9 + $0xa80] sm:$0xff]
          %v3070 = vld [vmem:[#allocation9 + $0xa88] sm:$0xff]
          %v3071 = vld [vmem:[#allocation9 + $0xa90] sm:$0xff]
          %v3072 = vld [vmem:[#allocation9 + $0xa98] sm:$0xff]
          %v3073 = vld [vmem:[#allocation9 + $0xaa0] sm:$0xff]
          %v3074 = vld [vmem:[#allocation9 + $0xaa8] sm:$0xff]
          %v3075 = vld [vmem:[#allocation9 + $0xab0] sm:$0xff]
          %v3076 = vld [vmem:[#allocation9 + $0xab8] sm:$0xff]
          %v3077 = vld [vmem:[#allocation9 + $0xac0] sm:$0xff]
          %v3078 = vld [vmem:[#allocation9 + $0xac8] sm:$0xff]
          %v3079 = vld [vmem:[#allocation9 + $0xad0] sm:$0xff]
          %v3080 = vld [vmem:[#allocation9 + $0xad8] sm:$0xff]
          %v3081 = vld [vmem:[#allocation9 + $0xae0] sm:$0xff]
          %v3082 = vld [vmem:[#allocation9 + $0xae8] sm:$0xff]
          %v3083 = vld [vmem:[#allocation9 + $0xaf0] sm:$0xff]
          %v3084 = vld [vmem:[#allocation9 + $0xaf8] sm:$0xff]
          %v3085 = vld [vmem:[#allocation9 + $0xb00] sm:$0xff]
          %v3086 = vld [vmem:[#allocation9 + $0xb08] sm:$0xff]
          %v3087 = vld [vmem:[#allocation9 + $0xb10] sm:$0xff]
          %v3088 = vld [vmem:[#allocation9 + $0xb18] sm:$0xff]
          %v3089 = vld [vmem:[#allocation9 + $0xb20] sm:$0xff]
          %v3090 = vld [vmem:[#allocation9 + $0xb28] sm:$0xff]
          %v3091 = vld [vmem:[#allocation9 + $0xb30] sm:$0xff]
          %v3092 = vld [vmem:[#allocation9 + $0xb38] sm:$0xff]
          %v3093 = vld [vmem:[#allocation9 + $0xb40] sm:$0xff]
          %v3094 = vld [vmem:[#allocation9 + $0xb48] sm:$0xff]
          %v3095 = vld [vmem:[#allocation9 + $0xb50] sm:$0xff]
          %v3096 = vld [vmem:[#allocation9 + $0xb58] sm:$0xff]
          %v3097 = vld [vmem:[#allocation9 + $0xb60] sm:$0xff]
          %v3098 = vld [vmem:[#allocation9 + $0xb68] sm:$0xff]
          %v3099 = vld [vmem:[#allocation9 + $0xb70] sm:$0xff]
          %v3100 = vld [vmem:[#allocation9 + $0xb78] sm:$0xff]
          %v3101 = vld [vmem:[#allocation9 + $0xb80] sm:$0xff]
          %v3102 = vld [vmem:[#allocation9 + $0xb88] sm:$0xff]
          %v3103 = vld [vmem:[#allocation9 + $0xb90] sm:$0xff]
          %v3104 = vld [vmem:[#allocation9 + $0xb98] sm:$0xff]
          %v3105 = vld [vmem:[#allocation9 + $0xba0] sm:$0xff]
          %v3106 = vld [vmem:[#allocation9 + $0xba8] sm:$0xff]
          %v3107 = vld [vmem:[#allocation9 + $0xbb0] sm:$0xff]
          %v3108 = vld [vmem:[#allocation9 + $0xbb8] sm:$0xff]
          %v3109 = vld [vmem:[#allocation9 + $0xbc0] sm:$0xff]
          %v3110 = vld [vmem:[#allocation9 + $0xbc8] sm:$0xff]
          %v3111 = vld [vmem:[#allocation9 + $0xbd0] sm:$0xff]
          %v3112 = vld [vmem:[#allocation9 + $0xbd8] sm:$0xff]
          %v3113 = vld [vmem:[#allocation9 + $0xbe0] sm:$0xff]
          %v3114 = vld [vmem:[#allocation9 + $0xbe8] sm:$0xff]
          %v3115 = vld [vmem:[#allocation9 + $0xbf0] sm:$0xff]
          %v3116 = vld [vmem:[#allocation9 + $0xbf8] sm:$0xff]
          %v3117 = vld [vmem:[#allocation11] sm:$0xff]
          %v3119 = vlaneseq
          %v3120 = vshrl.u32 %v3119, 7
          %v3121 = vsub.s32 0, %v3120
          %v3122 = vrot.slane %v3117, %v3121
          %v3123 = vlaneseq
          %v3124 = vshrl.u32 %v3123, 7
          %v3125 = vsub.s32 1, %v3124
          %v3126 = vrot.slane %v3117, %v3125
          %v3127 = vlaneseq
          %v3128 = vshrl.u32 %v3127, 7
          %v3129 = vsub.s32 2, %v3128
          %v3130 = vrot.slane %v3117, %v3129
          %v3131 = vlaneseq
          %v3132 = vshrl.u32 %v3131, 7
          %v3133 = vsub.s32 3, %v3132
          %v3134 = vrot.slane %v3117, %v3133
          %v3135 = vlaneseq
          %v3136 = vshrl.u32 %v3135, 7
          %v3137 = vsub.s32 4, %v3136
          %v3138 = vrot.slane %v3117, %v3137
          %v3139 = vlaneseq
          %v3140 = vshrl.u32 %v3139, 7
          %v3141 = vsub.s32 5, %v3140
          %v3142 = vrot.slane %v3117, %v3141
          %v3143 = vlaneseq
          %v3144 = vshrl.u32 %v3143, 7
          %v3145 = vsub.s32 6, %v3144
          %v3146 = vrot.slane %v3117, %v3145
          %v3147 = vlaneseq
          %v3148 = vshrl.u32 %v3147, 7
          %v3149 = vsub.s32 7, %v3148
          %v3150 = vrot.slane %v3117, %v3149
          %v3543 = vunpack.c.l.b16 %v2733
          %v3544 = vunpack.c.h.b16 %v2733
          %v3545 = vunpack.c.l.b16 %v2734
          %v3546 = vunpack.c.h.b16 %v2734
          %v3547 = vunpack.c.l.b16 %v2735
          %v3548 = vunpack.c.h.b16 %v2735
          %v3549 = vunpack.c.l.b16 %v2736
          %v3550 = vunpack.c.h.b16 %v2736
          %v3551 = vunpack.c.l.b16 %v2737
          %v3552 = vunpack.c.h.b16 %v2737
          %v3553 = vunpack.c.l.b16 %v2738
          %v3554 = vunpack.c.h.b16 %v2738
          %v3555 = vunpack.c.l.b16 %v2739
          %v3556 = vunpack.c.h.b16 %v2739
          %v3557 = vunpack.c.l.b16 %v2740
          %v3558 = vunpack.c.h.b16 %v2740
          %v3559 = vunpack.c.l.b16 %v2741
          %v3560 = vunpack.c.h.b16 %v2741
          %v3561 = vunpack.c.l.b16 %v2742
          %v3562 = vunpack.c.h.b16 %v2742
          %v3563 = vunpack.c.l.b16 %v2743
          %v3564 = vunpack.c.h.b16 %v2743
          %v3565 = vunpack.c.l.b16 %v2744
          %v3566 = vunpack.c.h.b16 %v2744
          %v3567 = vunpack.c.l.b16 %v2745
          %v3568 = vunpack.c.h.b16 %v2745
          %v3569 = vunpack.c.l.b16 %v2746
          %v3570 = vunpack.c.h.b16 %v2746
          %v3571 = vunpack.c.l.b16 %v2747
          %v3572 = vunpack.c.h.b16 %v2747
          %v3573 = vunpack.c.l.b16 %v2748
          %v3574 = vunpack.c.h.b16 %v2748
          %v3575 = vunpack.c.l.b16 %v2749
          %v3576 = vunpack.c.h.b16 %v2749
          %v3577 = vunpack.c.l.b16 %v2750
          %v3578 = vunpack.c.h.b16 %v2750
          %v3579 = vunpack.c.l.b16 %v2751
          %v3580 = vunpack.c.h.b16 %v2751
          %v3581 = vunpack.c.l.b16 %v2752
          %v3582 = vunpack.c.h.b16 %v2752
          %v3583 = vunpack.c.l.b16 %v2753
          %v3584 = vunpack.c.h.b16 %v2753
          %v3585 = vunpack.c.l.b16 %v2754
          %v3586 = vunpack.c.h.b16 %v2754
          %v3587 = vunpack.c.l.b16 %v2755
          %v3588 = vunpack.c.h.b16 %v2755
          %v3589 = vunpack.c.l.b16 %v2756
          %v3590 = vunpack.c.h.b16 %v2756
          %v3591 = vunpack.c.l.b16 %v2757
          %v3592 = vunpack.c.h.b16 %v2757
          %v3593 = vunpack.c.l.b16 %v2758
          %v3594 = vunpack.c.h.b16 %v2758
          %v3595 = vunpack.c.l.b16 %v2759
          %v3596 = vunpack.c.h.b16 %v2759
          %v3597 = vunpack.c.l.b16 %v2760
          %v3598 = vunpack.c.h.b16 %v2760
          %v3599 = vunpack.c.l.b16 %v2761
          %v3600 = vunpack.c.h.b16 %v2761
          %v3601 = vunpack.c.l.b16 %v2762
          %v3602 = vunpack.c.h.b16 %v2762
          %v3603 = vunpack.c.l.b16 %v2763
          %v3604 = vunpack.c.h.b16 %v2763
          %v3605 = vunpack.c.l.b16 %v2764
          %v3606 = vunpack.c.h.b16 %v2764
          %v3607 = vunpack.c.l.b16 %v2765
          %v3608 = vunpack.c.h.b16 %v2765
          %v3609 = vunpack.c.l.b16 %v2766
          %v3610 = vunpack.c.h.b16 %v2766
          %v3611 = vunpack.c.l.b16 %v2767
          %v3612 = vunpack.c.h.b16 %v2767
          %v3613 = vunpack.c.l.b16 %v2768
          %v3614 = vunpack.c.h.b16 %v2768
          %v3615 = vunpack.c.l.b16 %v2769
          %v3616 = vunpack.c.h.b16 %v2769
          %v3617 = vunpack.c.l.b16 %v2770
          %v3618 = vunpack.c.h.b16 %v2770
          %v3619 = vunpack.c.l.b16 %v2771
          %v3620 = vunpack.c.h.b16 %v2771
          %v3621 = vunpack.c.l.b16 %v2772
          %v3622 = vunpack.c.h.b16 %v2772
          %v3623 = vunpack.c.l.b16 %v2773
          %v3624 = vunpack.c.h.b16 %v2773
          %v3625 = vunpack.c.l.b16 %v2774
          %v3626 = vunpack.c.h.b16 %v2774
          %v3627 = vunpack.c.l.b16 %v2775
          %v3628 = vunpack.c.h.b16 %v2775
          %v3629 = vunpack.c.l.b16 %v2776
          %v3630 = vunpack.c.h.b16 %v2776
          %v3631 = vunpack.c.l.b16 %v2777
          %v3632 = vunpack.c.h.b16 %v2777
          %v3633 = vunpack.c.l.b16 %v2778
          %v3634 = vunpack.c.h.b16 %v2778
          %v3635 = vunpack.c.l.b16 %v2779
          %v3636 = vunpack.c.h.b16 %v2779
          %v3637 = vunpack.c.l.b16 %v2780
          %v3638 = vunpack.c.h.b16 %v2780
          %v3639 = vunpack.c.l.b16 %v2781
          %v3640 = vunpack.c.h.b16 %v2781
          %v3641 = vunpack.c.l.b16 %v2782
          %v3642 = vunpack.c.h.b16 %v2782
          %v3643 = vunpack.c.l.b16 %v2783
          %v3644 = vunpack.c.h.b16 %v2783
          %v3645 = vunpack.c.l.b16 %v2784
          %v3646 = vunpack.c.h.b16 %v2784
          %v3647 = vunpack.c.l.b16 %v2785
          %v3648 = vunpack.c.h.b16 %v2785
          %v3649 = vunpack.c.l.b16 %v2786
          %v3650 = vunpack.c.h.b16 %v2786
          %v3651 = vunpack.c.l.b16 %v2787
          %v3652 = vunpack.c.h.b16 %v2787
          %v3653 = vunpack.c.l.b16 %v2788
          %v3654 = vunpack.c.h.b16 %v2788
          %v3655 = vunpack.c.l.b16 %v2789
          %v3656 = vunpack.c.h.b16 %v2789
          %v3657 = vunpack.c.l.b16 %v2790
          %v3658 = vunpack.c.h.b16 %v2790
          %v3659 = vunpack.c.l.b16 %v2791
          %v3660 = vunpack.c.h.b16 %v2791
          %v3661 = vunpack.c.l.b16 %v2792
          %v3662 = vunpack.c.h.b16 %v2792
          %v3663 = vunpack.c.l.b16 %v2793
          %v3664 = vunpack.c.h.b16 %v2793
          %v3665 = vunpack.c.l.b16 %v2794
          %v3666 = vunpack.c.h.b16 %v2794
          %v3667 = vunpack.c.l.b16 %v2795
          %v3668 = vunpack.c.h.b16 %v2795
          %v3669 = vunpack.c.l.b16 %v2796
          %v3670 = vunpack.c.h.b16 %v2796
          %v3671 = vunpack.c.l.b16 %v2797
          %v3672 = vunpack.c.h.b16 %v2797
          %v3673 = vunpack.c.l.b16 %v2798
          %v3674 = vunpack.c.h.b16 %v2798
          %v3675 = vunpack.c.l.b16 %v2799
          %v3676 = vunpack.c.h.b16 %v2799
          %v3677 = vunpack.c.l.b16 %v2800
          %v3678 = vunpack.c.h.b16 %v2800
          %v3679 = vunpack.c.l.b16 %v2801
          %v3680 = vunpack.c.h.b16 %v2801
          %v3681 = vunpack.c.l.b16 %v2802
          %v3682 = vunpack.c.h.b16 %v2802
          %v3683 = vunpack.c.l.b16 %v2803
          %v3684 = vunpack.c.h.b16 %v2803
          %v3685 = vunpack.c.l.b16 %v2804
          %v3686 = vunpack.c.h.b16 %v2804
          %v3687 = vunpack.c.l.b16 %v2805
          %v3688 = vunpack.c.h.b16 %v2805
          %v3689 = vunpack.c.l.b16 %v2806
          %v3690 = vunpack.c.h.b16 %v2806
          %v3691 = vunpack.c.l.b16 %v2807
          %v3692 = vunpack.c.h.b16 %v2807
          %v3693 = vunpack.c.l.b16 %v2808
          %v3694 = vunpack.c.h.b16 %v2808
          %v3695 = vunpack.c.l.b16 %v2809
          %v3696 = vunpack.c.h.b16 %v2809
          %v3697 = vunpack.c.l.b16 %v2810
          %v3698 = vunpack.c.h.b16 %v2810
          %v3699 = vunpack.c.l.b16 %v2811
          %v3700 = vunpack.c.h.b16 %v2811
          %v3701 = vunpack.c.l.b16 %v2812
          %v3702 = vunpack.c.h.b16 %v2812
          %v3703 = vunpack.c.l.b16 %v2813
          %v3704 = vunpack.c.h.b16 %v2813
          %v3705 = vunpack.c.l.b16 %v2814
          %v3706 = vunpack.c.h.b16 %v2814
          %v3707 = vunpack.c.l.b16 %v2815
          %v3708 = vunpack.c.h.b16 %v2815
          %v3709 = vunpack.c.l.b16 %v2816
          %v3710 = vunpack.c.h.b16 %v2816
          %v3711 = vunpack.c.l.b16 %v2817
          %v3712 = vunpack.c.h.b16 %v2817
          %v3713 = vunpack.c.l.b16 %v2818
          %v3714 = vunpack.c.h.b16 %v2818
          %v3715 = vunpack.c.l.b16 %v2819
          %v3716 = vunpack.c.h.b16 %v2819
          %v3717 = vunpack.c.l.b16 %v2820
          %v3718 = vunpack.c.h.b16 %v2820
          %v3719 = vunpack.c.l.b16 %v2821
          %v3720 = vunpack.c.h.b16 %v2821
          %v3721 = vunpack.c.l.b16 %v2822
          %v3722 = vunpack.c.h.b16 %v2822
          %v3723 = vunpack.c.l.b16 %v2823
          %v3724 = vunpack.c.h.b16 %v2823
          %v3725 = vunpack.c.l.b16 %v2824
          %v3726 = vunpack.c.h.b16 %v2824
          %v3727 = vunpack.c.l.b16 %v2825
          %v3728 = vunpack.c.h.b16 %v2825
          %v3729 = vunpack.c.l.b16 %v2826
          %v3730 = vunpack.c.h.b16 %v2826
          %v3731 = vunpack.c.l.b16 %v2827
          %v3732 = vunpack.c.h.b16 %v2827
          %v3733 = vunpack.c.l.b16 %v2828
          %v3734 = vunpack.c.h.b16 %v2828
          %v3735 = vunpack.c.l.b16 %v2829
          %v3736 = vunpack.c.h.b16 %v2829
          %v3737 = vunpack.c.l.b16 %v2830
          %v3738 = vunpack.c.h.b16 %v2830
          %v3739 = vunpack.c.l.b16 %v2831
          %v3740 = vunpack.c.h.b16 %v2831
          %v3741 = vunpack.c.l.b16 %v2832
          %v3742 = vunpack.c.h.b16 %v2832
          %v3743 = vunpack.c.l.b16 %v2833
          %v3744 = vunpack.c.h.b16 %v2833
          %v3745 = vunpack.c.l.b16 %v2834
          %v3746 = vunpack.c.h.b16 %v2834
          %v3747 = vunpack.c.l.b16 %v2835
          %v3748 = vunpack.c.h.b16 %v2835
          %v3749 = vunpack.c.l.b16 %v2836
          %v3750 = vunpack.c.h.b16 %v2836
          %v3751 = vunpack.c.l.b16 %v2837
          %v3752 = vunpack.c.h.b16 %v2837
          %v3753 = vunpack.c.l.b16 %v2838
          %v3754 = vunpack.c.h.b16 %v2838
          %v3755 = vunpack.c.l.b16 %v2839
          %v3756 = vunpack.c.h.b16 %v2839
          %v3757 = vunpack.c.l.b16 %v2840
          %v3758 = vunpack.c.h.b16 %v2840
          %v3759 = vunpack.c.l.b16 %v2841
          %v3760 = vunpack.c.h.b16 %v2841
          %v3761 = vunpack.c.l.b16 %v2842
          %v3762 = vunpack.c.h.b16 %v2842
          %v3763 = vunpack.c.l.b16 %v2843
          %v3764 = vunpack.c.h.b16 %v2843
          %v3765 = vunpack.c.l.b16 %v2844
          %v3766 = vunpack.c.h.b16 %v2844
          %v3767 = vunpack.c.l.b16 %v2845
          %v3768 = vunpack.c.h.b16 %v2845
          %v3769 = vunpack.c.l.b16 %v2846
          %v3770 = vunpack.c.h.b16 %v2846
          %v3771 = vunpack.c.l.b16 %v2847
          %v3772 = vunpack.c.h.b16 %v2847
          %v3773 = vunpack.c.l.b16 %v2848
          %v3774 = vunpack.c.h.b16 %v2848
          %v3775 = vunpack.c.l.b16 %v2849
          %v3776 = vunpack.c.h.b16 %v2849
          %v3777 = vunpack.c.l.b16 %v2850
          %v3778 = vunpack.c.h.b16 %v2850
          %v3779 = vunpack.c.l.b16 %v2851
          %v3780 = vunpack.c.h.b16 %v2851
          %v3781 = vunpack.c.l.b16 %v2852
          %v3782 = vunpack.c.h.b16 %v2852
          %v3783 = vunpack.c.l.b16 %v2853
          %v3784 = vunpack.c.h.b16 %v2853
          %v3785 = vunpack.c.l.b16 %v2854
          %v3786 = vunpack.c.h.b16 %v2854
          %v3787 = vunpack.c.l.b16 %v2855
          %v3788 = vunpack.c.h.b16 %v2855
          %v3789 = vunpack.c.l.b16 %v2856
          %v3790 = vunpack.c.h.b16 %v2856
          %v3791 = vunpack.c.l.b16 %v2857
          %v3792 = vunpack.c.h.b16 %v2857
          %v3793 = vunpack.c.l.b16 %v2858
          %v3794 = vunpack.c.h.b16 %v2858
          %v3795 = vunpack.c.l.b16 %v2859
          %v3796 = vunpack.c.h.b16 %v2859
          %v3797 = vunpack.c.l.b16 %v2860
          %v3798 = vunpack.c.h.b16 %v2860
          %v3799 = vunpack.c.l.b16 %v2861
          %v3800 = vunpack.c.h.b16 %v2861
          %v3801 = vunpack.c.l.b16 %v2862
          %v3802 = vunpack.c.h.b16 %v2862
          %v3803 = vunpack.c.l.b16 %v2863
          %v3804 = vunpack.c.h.b16 %v2863
          %v3805 = vunpack.c.l.b16 %v2864
          %v3806 = vunpack.c.h.b16 %v2864
          %v3807 = vunpack.c.l.b16 %v2865
          %v3808 = vunpack.c.h.b16 %v2865
          %v3809 = vunpack.c.l.b16 %v2866
          %v3810 = vunpack.c.h.b16 %v2866
          %v3811 = vunpack.c.l.b16 %v2867
          %v3812 = vunpack.c.h.b16 %v2867
          %v3813 = vunpack.c.l.b16 %v2868
          %v3814 = vunpack.c.h.b16 %v2868
          %v3815 = vunpack.c.l.b16 %v2869
          %v3816 = vunpack.c.h.b16 %v2869
          %v3817 = vunpack.c.l.b16 %v2870
          %v3818 = vunpack.c.h.b16 %v2870
          %v3819 = vunpack.c.l.b16 %v2871
          %v3820 = vunpack.c.h.b16 %v2871
          %v3821 = vunpack.c.l.b16 %v2872
          %v3822 = vunpack.c.h.b16 %v2872
          %v3823 = vunpack.c.l.b16 %v2873
          %v3824 = vunpack.c.h.b16 %v2873
          %v3825 = vunpack.c.l.b16 %v2874
          %v3826 = vunpack.c.h.b16 %v2874
          %v3827 = vunpack.c.l.b16 %v2875
          %v3828 = vunpack.c.h.b16 %v2875
          %v3829 = vunpack.c.l.b16 %v2876
          %v3830 = vunpack.c.h.b16 %v2876
          %v3831 = vunpack.c.l.b16 %v2877
          %v3832 = vunpack.c.h.b16 %v2877
          %v3833 = vunpack.c.l.b16 %v2878
          %v3834 = vunpack.c.h.b16 %v2878
          %v3835 = vunpack.c.l.b16 %v2879
          %v3836 = vunpack.c.h.b16 %v2879
          %v3837 = vunpack.c.l.b16 %v2880
          %v3838 = vunpack.c.h.b16 %v2880
          %v3839 = vunpack.c.l.b16 %v2881
          %v3840 = vunpack.c.h.b16 %v2881
          %v3841 = vunpack.c.l.b16 %v2882
          %v3842 = vunpack.c.h.b16 %v2882
          %v3843 = vunpack.c.l.b16 %v2883
          %v3844 = vunpack.c.h.b16 %v2883
          %v3845 = vunpack.c.l.b16 %v2884
          %v3846 = vunpack.c.h.b16 %v2884
          %v3847 = vunpack.c.l.b16 %v2885
          %v3848 = vunpack.c.h.b16 %v2885
          %v3849 = vunpack.c.l.b16 %v2886
          %v3850 = vunpack.c.h.b16 %v2886
          %v3851 = vunpack.c.l.b16 %v2887
          %v3852 = vunpack.c.h.b16 %v2887
          %v3853 = vunpack.c.l.b16 %v2888
          %v3854 = vunpack.c.h.b16 %v2888
          %v3855 = vunpack.c.l.b16 %v2889
          %v3856 = vunpack.c.h.b16 %v2889
          %v3857 = vunpack.c.l.b16 %v2890
          %v3858 = vunpack.c.h.b16 %v2890
          %v3859 = vunpack.c.l.b16 %v2891
          %v3860 = vunpack.c.h.b16 %v2891
          %v3861 = vunpack.c.l.b16 %v2892
          %v3862 = vunpack.c.h.b16 %v2892
          %v3863 = vunpack.c.l.b16 %v2893
          %v3864 = vunpack.c.h.b16 %v2893
          %v3865 = vunpack.c.l.b16 %v2894
          %v3866 = vunpack.c.h.b16 %v2894
          %v3867 = vunpack.c.l.b16 %v2895
          %v3868 = vunpack.c.h.b16 %v2895
          %v3869 = vunpack.c.l.b16 %v2896
          %v3870 = vunpack.c.h.b16 %v2896
          %v3871 = vunpack.c.l.b16 %v2897
          %v3872 = vunpack.c.h.b16 %v2897
          %v3873 = vunpack.c.l.b16 %v2898
          %v3874 = vunpack.c.h.b16 %v2898
          %v3875 = vunpack.c.l.b16 %v2899
          %v3876 = vunpack.c.h.b16 %v2899
          %v3877 = vunpack.c.l.b16 %v2900
          %v3878 = vunpack.c.h.b16 %v2900
          %v3879 = vunpack.c.l.b16 %v2901
          %v3880 = vunpack.c.h.b16 %v2901
          %v3881 = vunpack.c.l.b16 %v2902
          %v3882 = vunpack.c.h.b16 %v2902
          %v3883 = vunpack.c.l.b16 %v2903
          %v3884 = vunpack.c.h.b16 %v2903
          %v3885 = vunpack.c.l.b16 %v2904
          %v3886 = vunpack.c.h.b16 %v2904
          %v3887 = vunpack.c.l.b16 %v2905
          %v3888 = vunpack.c.h.b16 %v2905
          %v3889 = vunpack.c.l.b16 %v2906
          %v3890 = vunpack.c.h.b16 %v2906
          %v3891 = vunpack.c.l.b16 %v2907
          %v3892 = vunpack.c.h.b16 %v2907
          %v3893 = vunpack.c.l.b16 %v2908
          %v3894 = vunpack.c.h.b16 %v2908
          %v3895 = vunpack.c.l.b16 %v2909
          %v3896 = vunpack.c.h.b16 %v2909
          %v3897 = vunpack.c.l.b16 %v2910
          %v3898 = vunpack.c.h.b16 %v2910
          %v3899 = vunpack.c.l.b16 %v2911
          %v3900 = vunpack.c.h.b16 %v2911
          %v3901 = vunpack.c.l.b16 %v2912
          %v3902 = vunpack.c.h.b16 %v2912
          %v3903 = vunpack.c.l.b16 %v2913
          %v3904 = vunpack.c.h.b16 %v2913
          %v3905 = vunpack.c.l.b16 %v2914
          %v3906 = vunpack.c.h.b16 %v2914
          %v3907 = vunpack.c.l.b16 %v2915
          %v3908 = vunpack.c.h.b16 %v2915
          %v3909 = vunpack.c.l.b16 %v2916
          %v3910 = vunpack.c.h.b16 %v2916
          %v3911 = vunpack.c.l.b16 %v2917
          %v3912 = vunpack.c.h.b16 %v2917
          %v3913 = vunpack.c.l.b16 %v2918
          %v3914 = vunpack.c.h.b16 %v2918
          %v3915 = vunpack.c.l.b16 %v2919
          %v3916 = vunpack.c.h.b16 %v2919
          %v3917 = vunpack.c.l.b16 %v2920
          %v3918 = vunpack.c.h.b16 %v2920
          %v3919 = vunpack.c.l.b16 %v2921
          %v3920 = vunpack.c.h.b16 %v2921
          %v3921 = vunpack.c.l.b16 %v2922
          %v3922 = vunpack.c.h.b16 %v2922
          %v3923 = vunpack.c.l.b16 %v2923
          %v3924 = vunpack.c.h.b16 %v2923
          %v3925 = vunpack.c.l.b16 %v2924
          %v3926 = vunpack.c.h.b16 %v2924
          %v3927 = vunpack.c.l.b16 %v2925
          %v3928 = vunpack.c.h.b16 %v2925
          %v3929 = vunpack.c.l.b16 %v2926
          %v3930 = vunpack.c.h.b16 %v2926
          %v3931 = vunpack.c.l.b16 %v2927
          %v3932 = vunpack.c.h.b16 %v2927
          %v3933 = vunpack.c.l.b16 %v2928
          %v3934 = vunpack.c.h.b16 %v2928
          %v3935 = vunpack.c.l.b16 %v2929
          %v3936 = vunpack.c.h.b16 %v2929
          %v3937 = vunpack.c.l.b16 %v2930
          %v3938 = vunpack.c.h.b16 %v2930
          %v3939 = vunpack.c.l.b16 %v2931
          %v3940 = vunpack.c.h.b16 %v2931
          %v3941 = vunpack.c.l.b16 %v2932
          %v3942 = vunpack.c.h.b16 %v2932
          %v3943 = vunpack.c.l.b16 %v2933
          %v3944 = vunpack.c.h.b16 %v2933
          %v3945 = vunpack.c.l.b16 %v2934
          %v3946 = vunpack.c.h.b16 %v2934
          %v3947 = vunpack.c.l.b16 %v2935
          %v3948 = vunpack.c.h.b16 %v2935
          %v3949 = vunpack.c.l.b16 %v2936
          %v3950 = vunpack.c.h.b16 %v2936
          %v3951 = vunpack.c.l.b16 %v2937
          %v3952 = vunpack.c.h.b16 %v2937
          %v3953 = vunpack.c.l.b16 %v2938
          %v3954 = vunpack.c.h.b16 %v2938
          %v3955 = vunpack.c.l.b16 %v2939
          %v3956 = vunpack.c.h.b16 %v2939
          %v3957 = vunpack.c.l.b16 %v2940
          %v3958 = vunpack.c.h.b16 %v2940
          %v3959 = vunpack.c.l.b16 %v2941
          %v3960 = vunpack.c.h.b16 %v2941
          %v3961 = vunpack.c.l.b16 %v2942
          %v3962 = vunpack.c.h.b16 %v2942
          %v3963 = vunpack.c.l.b16 %v2943
          %v3964 = vunpack.c.h.b16 %v2943
          %v3965 = vunpack.c.l.b16 %v2944
          %v3966 = vunpack.c.h.b16 %v2944
          %v3967 = vunpack.c.l.b16 %v2945
          %v3968 = vunpack.c.h.b16 %v2945
          %v3969 = vunpack.c.l.b16 %v2946
          %v3970 = vunpack.c.h.b16 %v2946
          %v3971 = vunpack.c.l.b16 %v2947
          %v3972 = vunpack.c.h.b16 %v2947
          %v3973 = vunpack.c.l.b16 %v2948
          %v3974 = vunpack.c.h.b16 %v2948
          %v3975 = vunpack.c.l.b16 %v2949
          %v3976 = vunpack.c.h.b16 %v2949
          %v3977 = vunpack.c.l.b16 %v2950
          %v3978 = vunpack.c.h.b16 %v2950
          %v3979 = vunpack.c.l.b16 %v2951
          %v3980 = vunpack.c.h.b16 %v2951
          %v3981 = vunpack.c.l.b16 %v2952
          %v3982 = vunpack.c.h.b16 %v2952
          %v3983 = vunpack.c.l.b16 %v2953
          %v3984 = vunpack.c.h.b16 %v2953
          %v3985 = vunpack.c.l.b16 %v2954
          %v3986 = vunpack.c.h.b16 %v2954
          %v3987 = vunpack.c.l.b16 %v2955
          %v3988 = vunpack.c.h.b16 %v2955
          %v3989 = vunpack.c.l.b16 %v2956
          %v3990 = vunpack.c.h.b16 %v2956
          %v3991 = vunpack.c.l.b16 %v2957
          %v3992 = vunpack.c.h.b16 %v2957
          %v3993 = vunpack.c.l.b16 %v2958
          %v3994 = vunpack.c.h.b16 %v2958
          %v3995 = vunpack.c.l.b16 %v2959
          %v3996 = vunpack.c.h.b16 %v2959
          %v3997 = vunpack.c.l.b16 %v2960
          %v3998 = vunpack.c.h.b16 %v2960
          %v3999 = vunpack.c.l.b16 %v2961
          %v4000 = vunpack.c.h.b16 %v2961
          %v4001 = vunpack.c.l.b16 %v2962
          %v4002 = vunpack.c.h.b16 %v2962
          %v4003 = vunpack.c.l.b16 %v2963
          %v4004 = vunpack.c.h.b16 %v2963
          %v4005 = vunpack.c.l.b16 %v2964
          %v4006 = vunpack.c.h.b16 %v2964
          %v4007 = vunpack.c.l.b16 %v2965
          %v4008 = vunpack.c.h.b16 %v2965
          %v4009 = vunpack.c.l.b16 %v2966
          %v4010 = vunpack.c.h.b16 %v2966
          %v4011 = vunpack.c.l.b16 %v2967
          %v4012 = vunpack.c.h.b16 %v2967
          %v4013 = vunpack.c.l.b16 %v2968
          %v4014 = vunpack.c.h.b16 %v2968
          %v4015 = vunpack.c.l.b16 %v2969
          %v4016 = vunpack.c.h.b16 %v2969
          %v4017 = vunpack.c.l.b16 %v2970
          %v4018 = vunpack.c.h.b16 %v2970
          %v4019 = vunpack.c.l.b16 %v2971
          %v4020 = vunpack.c.h.b16 %v2971
          %v4021 = vunpack.c.l.b16 %v2972
          %v4022 = vunpack.c.h.b16 %v2972
          %v4023 = vunpack.c.l.b16 %v2973
          %v4024 = vunpack.c.h.b16 %v2973
          %v4025 = vunpack.c.l.b16 %v2974
          %v4026 = vunpack.c.h.b16 %v2974
          %v4027 = vunpack.c.l.b16 %v2975
          %v4028 = vunpack.c.h.b16 %v2975
          %v4029 = vunpack.c.l.b16 %v2976
          %v4030 = vunpack.c.h.b16 %v2976
          %v4031 = vunpack.c.l.b16 %v2977
          %v4032 = vunpack.c.h.b16 %v2977
          %v4033 = vunpack.c.l.b16 %v2978
          %v4034 = vunpack.c.h.b16 %v2978
          %v4035 = vunpack.c.l.b16 %v2979
          %v4036 = vunpack.c.h.b16 %v2979
          %v4037 = vunpack.c.l.b16 %v2980
          %v4038 = vunpack.c.h.b16 %v2980
          %v4039 = vunpack.c.l.b16 %v2981
          %v4040 = vunpack.c.h.b16 %v2981
          %v4041 = vunpack.c.l.b16 %v2982
          %v4042 = vunpack.c.h.b16 %v2982
          %v4043 = vunpack.c.l.b16 %v2983
          %v4044 = vunpack.c.h.b16 %v2983
          %v4045 = vunpack.c.l.b16 %v2984
          %v4046 = vunpack.c.h.b16 %v2984
          %v4047 = vunpack.c.l.b16 %v2985
          %v4048 = vunpack.c.h.b16 %v2985
          %v4049 = vunpack.c.l.b16 %v2986
          %v4050 = vunpack.c.h.b16 %v2986
          %v4051 = vunpack.c.l.b16 %v2987
          %v4052 = vunpack.c.h.b16 %v2987
          %v4053 = vunpack.c.l.b16 %v2988
          %v4054 = vunpack.c.h.b16 %v2988
          %v4055 = vunpack.c.l.b16 %v2989
          %v4056 = vunpack.c.h.b16 %v2989
          %v4057 = vunpack.c.l.b16 %v2990
          %v4058 = vunpack.c.h.b16 %v2990
          %v4059 = vunpack.c.l.b16 %v2991
          %v4060 = vunpack.c.h.b16 %v2991
          %v4061 = vunpack.c.l.b16 %v2992
          %v4062 = vunpack.c.h.b16 %v2992
          %v4063 = vunpack.c.l.b16 %v2993
          %v4064 = vunpack.c.h.b16 %v2993
          %v4065 = vunpack.c.l.b16 %v2994
          %v4066 = vunpack.c.h.b16 %v2994
          %v4067 = vunpack.c.l.b16 %v2995
          %v4068 = vunpack.c.h.b16 %v2995
          %v4069 = vunpack.c.l.b16 %v2996
          %v4070 = vunpack.c.h.b16 %v2996
          %v4071 = vunpack.c.l.b16 %v2997
          %v4072 = vunpack.c.h.b16 %v2997
          %v4073 = vunpack.c.l.b16 %v2998
          %v4074 = vunpack.c.h.b16 %v2998
          %v4075 = vunpack.c.l.b16 %v2999
          %v4076 = vunpack.c.h.b16 %v2999
          %v4077 = vunpack.c.l.b16 %v3000
          %v4078 = vunpack.c.h.b16 %v3000
          %v4079 = vunpack.c.l.b16 %v3001
          %v4080 = vunpack.c.h.b16 %v3001
          %v4081 = vunpack.c.l.b16 %v3002
          %v4082 = vunpack.c.h.b16 %v3002
          %v4083 = vunpack.c.l.b16 %v3003
          %v4084 = vunpack.c.h.b16 %v3003
          %v4085 = vunpack.c.l.b16 %v3004
          %v4086 = vunpack.c.h.b16 %v3004
          %v4087 = vunpack.c.l.b16 %v3005
          %v4088 = vunpack.c.h.b16 %v3005
          %v4089 = vunpack.c.l.b16 %v3006
          %v4090 = vunpack.c.h.b16 %v3006
          %v4091 = vunpack.c.l.b16 %v3007
          %v4092 = vunpack.c.h.b16 %v3007
          %v4093 = vunpack.c.l.b16 %v3008
          %v4094 = vunpack.c.h.b16 %v3008
          %v4095 = vunpack.c.l.b16 %v3009
          %v4096 = vunpack.c.h.b16 %v3009
          %v4097 = vunpack.c.l.b16 %v3010
          %v4098 = vunpack.c.h.b16 %v3010
          %v4099 = vunpack.c.l.b16 %v3011
          %v4100 = vunpack.c.h.b16 %v3011
          %v4101 = vunpack.c.l.b16 %v3012
          %v4102 = vunpack.c.h.b16 %v3012
          %v4103 = vunpack.c.l.b16 %v3013
          %v4104 = vunpack.c.h.b16 %v3013
          %v4105 = vunpack.c.l.b16 %v3014
          %v4106 = vunpack.c.h.b16 %v3014
          %v4107 = vunpack.c.l.b16 %v3015
          %v4108 = vunpack.c.h.b16 %v3015
          %v4109 = vunpack.c.l.b16 %v3016
          %v4110 = vunpack.c.h.b16 %v3016
          %v4111 = vunpack.c.l.b16 %v3017
          %v4112 = vunpack.c.h.b16 %v3017
          %v4113 = vunpack.c.l.b16 %v3018
          %v4114 = vunpack.c.h.b16 %v3018
          %v4115 = vunpack.c.l.b16 %v3019
          %v4116 = vunpack.c.h.b16 %v3019
          %v4117 = vunpack.c.l.b16 %v3020
          %v4118 = vunpack.c.h.b16 %v3020
          %v4119 = vunpack.c.l.b16 %v3021
          %v4120 = vunpack.c.h.b16 %v3021
          %v4121 = vunpack.c.l.b16 %v3022
          %v4122 = vunpack.c.h.b16 %v3022
          %v4123 = vunpack.c.l.b16 %v3023
          %v4124 = vunpack.c.h.b16 %v3023
          %v4125 = vunpack.c.l.b16 %v3024
          %v4126 = vunpack.c.h.b16 %v3024
          %v4127 = vunpack.c.l.b16 %v3025
          %v4128 = vunpack.c.h.b16 %v3025
          %v4129 = vunpack.c.l.b16 %v3026
          %v4130 = vunpack.c.h.b16 %v3026
          %v4131 = vunpack.c.l.b16 %v3027
          %v4132 = vunpack.c.h.b16 %v3027
          %v4133 = vunpack.c.l.b16 %v3028
          %v4134 = vunpack.c.h.b16 %v3028
          %v4135 = vunpack.c.l.b16 %v3029
          %v4136 = vunpack.c.h.b16 %v3029
          %v4137 = vunpack.c.l.b16 %v3030
          %v4138 = vunpack.c.h.b16 %v3030
          %v4139 = vunpack.c.l.b16 %v3031
          %v4140 = vunpack.c.h.b16 %v3031
          %v4141 = vunpack.c.l.b16 %v3032
          %v4142 = vunpack.c.h.b16 %v3032
          %v4143 = vunpack.c.l.b16 %v3033
          %v4144 = vunpack.c.h.b16 %v3033
          %v4145 = vunpack.c.l.b16 %v3034
          %v4146 = vunpack.c.h.b16 %v3034
          %v4147 = vunpack.c.l.b16 %v3035
          %v4148 = vunpack.c.h.b16 %v3035
          %v4149 = vunpack.c.l.b16 %v3036
          %v4150 = vunpack.c.h.b16 %v3036
          %v4151 = vunpack.c.l.b16 %v3037
          %v4152 = vunpack.c.h.b16 %v3037
          %v4153 = vunpack.c.l.b16 %v3038
          %v4154 = vunpack.c.h.b16 %v3038
          %v4155 = vunpack.c.l.b16 %v3039
          %v4156 = vunpack.c.h.b16 %v3039
          %v4157 = vunpack.c.l.b16 %v3040
          %v4158 = vunpack.c.h.b16 %v3040
          %v4159 = vunpack.c.l.b16 %v3041
          %v4160 = vunpack.c.h.b16 %v3041
          %v4161 = vunpack.c.l.b16 %v3042
          %v4162 = vunpack.c.h.b16 %v3042
          %v4163 = vunpack.c.l.b16 %v3043
          %v4164 = vunpack.c.h.b16 %v3043
          %v4165 = vunpack.c.l.b16 %v3044
          %v4166 = vunpack.c.h.b16 %v3044
          %v4167 = vunpack.c.l.b16 %v3045
          %v4168 = vunpack.c.h.b16 %v3045
          %v4169 = vunpack.c.l.b16 %v3046
          %v4170 = vunpack.c.h.b16 %v3046
          %v4171 = vunpack.c.l.b16 %v3047
          %v4172 = vunpack.c.h.b16 %v3047
          %v4173 = vunpack.c.l.b16 %v3048
          %v4174 = vunpack.c.h.b16 %v3048
          %v4175 = vunpack.c.l.b16 %v3049
          %v4176 = vunpack.c.h.b16 %v3049
          %v4177 = vunpack.c.l.b16 %v3050
          %v4178 = vunpack.c.h.b16 %v3050
          %v4179 = vunpack.c.l.b16 %v3051
          %v4180 = vunpack.c.h.b16 %v3051
          %v4181 = vunpack.c.l.b16 %v3052
          %v4182 = vunpack.c.h.b16 %v3052
          %v4183 = vunpack.c.l.b16 %v3053
          %v4184 = vunpack.c.h.b16 %v3053
          %v4185 = vunpack.c.l.b16 %v3054
          %v4186 = vunpack.c.h.b16 %v3054
          %v4187 = vunpack.c.l.b16 %v3055
          %v4188 = vunpack.c.h.b16 %v3055
          %v4189 = vunpack.c.l.b16 %v3056
          %v4190 = vunpack.c.h.b16 %v3056
          %v4191 = vunpack.c.l.b16 %v3057
          %v4192 = vunpack.c.h.b16 %v3057
          %v4193 = vunpack.c.l.b16 %v3058
          %v4194 = vunpack.c.h.b16 %v3058
          %v4195 = vunpack.c.l.b16 %v3059
          %v4196 = vunpack.c.h.b16 %v3059
          %v4197 = vunpack.c.l.b16 %v3060
          %v4198 = vunpack.c.h.b16 %v3060
          %v4199 = vunpack.c.l.b16 %v3061
          %v4200 = vunpack.c.h.b16 %v3061
          %v4201 = vunpack.c.l.b16 %v3062
          %v4202 = vunpack.c.h.b16 %v3062
          %v4203 = vunpack.c.l.b16 %v3063
          %v4204 = vunpack.c.h.b16 %v3063
          %v4205 = vunpack.c.l.b16 %v3064
          %v4206 = vunpack.c.h.b16 %v3064
          %v4207 = vunpack.c.l.b16 %v3065
          %v4208 = vunpack.c.h.b16 %v3065
          %v4209 = vunpack.c.l.b16 %v3066
          %v4210 = vunpack.c.h.b16 %v3066
          %v4211 = vunpack.c.l.b16 %v3067
          %v4212 = vunpack.c.h.b16 %v3067
          %v4213 = vunpack.c.l.b16 %v3068
          %v4214 = vunpack.c.h.b16 %v3068
          %v4215 = vunpack.c.l.b16 %v3069
          %v4216 = vunpack.c.h.b16 %v3069
          %v4217 = vunpack.c.l.b16 %v3070
          %v4218 = vunpack.c.h.b16 %v3070
          %v4219 = vunpack.c.l.b16 %v3071
          %v4220 = vunpack.c.h.b16 %v3071
          %v4221 = vunpack.c.l.b16 %v3072
          %v4222 = vunpack.c.h.b16 %v3072
          %v4223 = vunpack.c.l.b16 %v3073
          %v4224 = vunpack.c.h.b16 %v3073
          %v4225 = vunpack.c.l.b16 %v3074
          %v4226 = vunpack.c.h.b16 %v3074
          %v4227 = vunpack.c.l.b16 %v3075
          %v4228 = vunpack.c.h.b16 %v3075
          %v4229 = vunpack.c.l.b16 %v3076
          %v4230 = vunpack.c.h.b16 %v3076
          %v4231 = vunpack.c.l.b16 %v3077
          %v4232 = vunpack.c.h.b16 %v3077
          %v4233 = vunpack.c.l.b16 %v3078
          %v4234 = vunpack.c.h.b16 %v3078
          %v4235 = vunpack.c.l.b16 %v3079
          %v4236 = vunpack.c.h.b16 %v3079
          %v4237 = vunpack.c.l.b16 %v3080
          %v4238 = vunpack.c.h.b16 %v3080
          %v4239 = vunpack.c.l.b16 %v3081
          %v4240 = vunpack.c.h.b16 %v3081
          %v4241 = vunpack.c.l.b16 %v3082
          %v4242 = vunpack.c.h.b16 %v3082
          %v4243 = vunpack.c.l.b16 %v3083
          %v4244 = vunpack.c.h.b16 %v3083
          %v4245 = vunpack.c.l.b16 %v3084
          %v4246 = vunpack.c.h.b16 %v3084
          %v4247 = vunpack.c.l.b16 %v3085
          %v4248 = vunpack.c.h.b16 %v3085
          %v4249 = vunpack.c.l.b16 %v3086
          %v4250 = vunpack.c.h.b16 %v3086
          %v4251 = vunpack.c.l.b16 %v3087
          %v4252 = vunpack.c.h.b16 %v3087
          %v4253 = vunpack.c.l.b16 %v3088
          %v4254 = vunpack.c.h.b16 %v3088
          %v4255 = vunpack.c.l.b16 %v3089
          %v4256 = vunpack.c.h.b16 %v3089
          %v4257 = vunpack.c.l.b16 %v3090
          %v4258 = vunpack.c.h.b16 %v3090
          %v4259 = vunpack.c.l.b16 %v3091
          %v4260 = vunpack.c.h.b16 %v3091
          %v4261 = vunpack.c.l.b16 %v3092
          %v4262 = vunpack.c.h.b16 %v3092
          %v4263 = vunpack.c.l.b16 %v3093
          %v4264 = vunpack.c.h.b16 %v3093
          %v4265 = vunpack.c.l.b16 %v3094
          %v4266 = vunpack.c.h.b16 %v3094
          %v4267 = vunpack.c.l.b16 %v3095
          %v4268 = vunpack.c.h.b16 %v3095
          %v4269 = vunpack.c.l.b16 %v3096
          %v4270 = vunpack.c.h.b16 %v3096
          %v4271 = vunpack.c.l.b16 %v3097
          %v4272 = vunpack.c.h.b16 %v3097
          %v4273 = vunpack.c.l.b16 %v3098
          %v4274 = vunpack.c.h.b16 %v3098
          %v4275 = vunpack.c.l.b16 %v3099
          %v4276 = vunpack.c.h.b16 %v3099
          %v4277 = vunpack.c.l.b16 %v3100
          %v4278 = vunpack.c.h.b16 %v3100
          %v4279 = vunpack.c.l.b16 %v3101
          %v4280 = vunpack.c.h.b16 %v3101
          %v4281 = vunpack.c.l.b16 %v3102
          %v4282 = vunpack.c.h.b16 %v3102
          %v4283 = vunpack.c.l.b16 %v3103
          %v4284 = vunpack.c.h.b16 %v3103
          %v4285 = vunpack.c.l.b16 %v3104
          %v4286 = vunpack.c.h.b16 %v3104
          %v4287 = vunpack.c.l.b16 %v3105
          %v4288 = vunpack.c.h.b16 %v3105
          %v4289 = vunpack.c.l.b16 %v3106
          %v4290 = vunpack.c.h.b16 %v3106
          %v4291 = vunpack.c.l.b16 %v3107
          %v4292 = vunpack.c.h.b16 %v3107
          %v4293 = vunpack.c.l.b16 %v3108
          %v4294 = vunpack.c.h.b16 %v3108
          %v4295 = vunpack.c.l.b16 %v3109
          %v4296 = vunpack.c.h.b16 %v3109
          %v4297 = vunpack.c.l.b16 %v3110
          %v4298 = vunpack.c.h.b16 %v3110
          %v4299 = vunpack.c.l.b16 %v3111
          %v4300 = vunpack.c.h.b16 %v3111
          %v4301 = vunpack.c.l.b16 %v3112
          %v4302 = vunpack.c.h.b16 %v3112
          %v4303 = vunpack.c.l.b16 %v3113
          %v4304 = vunpack.c.h.b16 %v3113
          %v4305 = vunpack.c.l.b16 %v3114
          %v4306 = vunpack.c.h.b16 %v3114
          %v4307 = vunpack.c.l.b16 %v3115
          %v4308 = vunpack.c.h.b16 %v3115
          %v4309 = vunpack.c.l.b16 %v3116
          %v4310 = vunpack.c.h.b16 %v3116
          %v4311 = vpack.c.b16 %v3551, %v3543
          %v4312 = vpack.c.b16 %v3552, %v3544
          %v4313 = vpack.c.b16 %v3553, %v3545
          %v4314 = vpack.c.b16 %v3554, %v3546
          %v4315 = vpack.c.b16 %v3555, %v3547
          %v4316 = vpack.c.b16 %v3556, %v3548
          %v4317 = vpack.c.b16 %v3557, %v3549
          %v4318 = vpack.c.b16 %v3558, %v3550
          %v4319 = vpack.c.b16 %v3567, %v3559
          %v4320 = vpack.c.b16 %v3568, %v3560
          %v4321 = vpack.c.b16 %v3569, %v3561
          %v4322 = vpack.c.b16 %v3570, %v3562
          %v4323 = vpack.c.b16 %v3571, %v3563
          %v4324 = vpack.c.b16 %v3572, %v3564
          %v4325 = vpack.c.b16 %v3573, %v3565
          %v4326 = vpack.c.b16 %v3574, %v3566
          %v4327 = vpack.c.b16 %v3583, %v3575
          %v4328 = vpack.c.b16 %v3584, %v3576
          %v4329 = vpack.c.b16 %v3585, %v3577
          %v4330 = vpack.c.b16 %v3586, %v3578
          %v4331 = vpack.c.b16 %v3587, %v3579
          %v4332 = vpack.c.b16 %v3588, %v3580
          %v4333 = vpack.c.b16 %v3589, %v3581
          %v4334 = vpack.c.b16 %v3590, %v3582
          %v4335 = vpack.c.b16 %v3599, %v3591
          %v4336 = vpack.c.b16 %v3600, %v3592
          %v4337 = vpack.c.b16 %v3601, %v3593
          %v4338 = vpack.c.b16 %v3602, %v3594
          %v4339 = vpack.c.b16 %v3603, %v3595
          %v4340 = vpack.c.b16 %v3604, %v3596
          %v4341 = vpack.c.b16 %v3605, %v3597
          %v4342 = vpack.c.b16 %v3606, %v3598
          %v4343 = vpack.c.b16 %v3615, %v3607
          %v4344 = vpack.c.b16 %v3616, %v3608
          %v4345 = vpack.c.b16 %v3617, %v3609
          %v4346 = vpack.c.b16 %v3618, %v3610
          %v4347 = vpack.c.b16 %v3619, %v3611
          %v4348 = vpack.c.b16 %v3620, %v3612
          %v4349 = vpack.c.b16 %v3621, %v3613
          %v4350 = vpack.c.b16 %v3622, %v3614
          %v4351 = vpack.c.b16 %v3631, %v3623
          %v4352 = vpack.c.b16 %v3632, %v3624
          %v4353 = vpack.c.b16 %v3633, %v3625
          %v4354 = vpack.c.b16 %v3634, %v3626
          %v4355 = vpack.c.b16 %v3635, %v3627
          %v4356 = vpack.c.b16 %v3636, %v3628
          %v4357 = vpack.c.b16 %v3637, %v3629
          %v4358 = vpack.c.b16 %v3638, %v3630
          %v4359 = vpack.c.b16 %v3647, %v3639
          %v4360 = vpack.c.b16 %v3648, %v3640
          %v4361 = vpack.c.b16 %v3649, %v3641
          %v4362 = vpack.c.b16 %v3650, %v3642
          %v4363 = vpack.c.b16 %v3651, %v3643
          %v4364 = vpack.c.b16 %v3652, %v3644
          %v4365 = vpack.c.b16 %v3653, %v3645
          %v4366 = vpack.c.b16 %v3654, %v3646
          %v4367 = vpack.c.b16 %v3663, %v3655
          %v4368 = vpack.c.b16 %v3664, %v3656
          %v4369 = vpack.c.b16 %v3665, %v3657
          %v4370 = vpack.c.b16 %v3666, %v3658
          %v4371 = vpack.c.b16 %v3667, %v3659
          %v4372 = vpack.c.b16 %v3668, %v3660
          %v4373 = vpack.c.b16 %v3669, %v3661
          %v4374 = vpack.c.b16 %v3670, %v3662
          %v4375 = vpack.c.b16 %v3679, %v3671
          %v4376 = vpack.c.b16 %v3680, %v3672
          %v4377 = vpack.c.b16 %v3681, %v3673
          %v4378 = vpack.c.b16 %v3682, %v3674
          %v4379 = vpack.c.b16 %v3683, %v3675
          %v4380 = vpack.c.b16 %v3684, %v3676
          %v4381 = vpack.c.b16 %v3685, %v3677
          %v4382 = vpack.c.b16 %v3686, %v3678
          %v4383 = vpack.c.b16 %v3695, %v3687
          %v4384 = vpack.c.b16 %v3696, %v3688
          %v4385 = vpack.c.b16 %v3697, %v3689
          %v4386 = vpack.c.b16 %v3698, %v3690
          %v4387 = vpack.c.b16 %v3699, %v3691
          %v4388 = vpack.c.b16 %v3700, %v3692
          %v4389 = vpack.c.b16 %v3701, %v3693
          %v4390 = vpack.c.b16 %v3702, %v3694
          %v4391 = vpack.c.b16 %v3711, %v3703
          %v4392 = vpack.c.b16 %v3712, %v3704
          %v4393 = vpack.c.b16 %v3713, %v3705
          %v4394 = vpack.c.b16 %v3714, %v3706
          %v4395 = vpack.c.b16 %v3715, %v3707
          %v4396 = vpack.c.b16 %v3716, %v3708
          %v4397 = vpack.c.b16 %v3717, %v3709
          %v4398 = vpack.c.b16 %v3718, %v3710
          %v4399 = vpack.c.b16 %v3727, %v3719
          %v4400 = vpack.c.b16 %v3728, %v3720
          %v4401 = vpack.c.b16 %v3729, %v3721
          %v4402 = vpack.c.b16 %v3730, %v3722
          %v4403 = vpack.c.b16 %v3731, %v3723
          %v4404 = vpack.c.b16 %v3732, %v3724
          %v4405 = vpack.c.b16 %v3733, %v3725
          %v4406 = vpack.c.b16 %v3734, %v3726
          %v4407 = vpack.c.b16 %v3743, %v3735
          %v4408 = vpack.c.b16 %v3744, %v3736
          %v4409 = vpack.c.b16 %v3745, %v3737
          %v4410 = vpack.c.b16 %v3746, %v3738
          %v4411 = vpack.c.b16 %v3747, %v3739
          %v4412 = vpack.c.b16 %v3748, %v3740
          %v4413 = vpack.c.b16 %v3749, %v3741
          %v4414 = vpack.c.b16 %v3750, %v3742
          %v4415 = vpack.c.b16 %v3759, %v3751
          %v4416 = vpack.c.b16 %v3760, %v3752
          %v4417 = vpack.c.b16 %v3761, %v3753
          %v4418 = vpack.c.b16 %v3762, %v3754
          %v4419 = vpack.c.b16 %v3763, %v3755
          %v4420 = vpack.c.b16 %v3764, %v3756
          %v4421 = vpack.c.b16 %v3765, %v3757
          %v4422 = vpack.c.b16 %v3766, %v3758
          %v4423 = vpack.c.b16 %v3775, %v3767
          %v4424 = vpack.c.b16 %v3776, %v3768
          %v4425 = vpack.c.b16 %v3777, %v3769
          %v4426 = vpack.c.b16 %v3778, %v3770
          %v4427 = vpack.c.b16 %v3779, %v3771
          %v4428 = vpack.c.b16 %v3780, %v3772
          %v4429 = vpack.c.b16 %v3781, %v3773
          %v4430 = vpack.c.b16 %v3782, %v3774
          %v4431 = vpack.c.b16 %v3791, %v3783
          %v4432 = vpack.c.b16 %v3792, %v3784
          %v4433 = vpack.c.b16 %v3793, %v3785
          %v4434 = vpack.c.b16 %v3794, %v3786
          %v4435 = vpack.c.b16 %v3795, %v3787
          %v4436 = vpack.c.b16 %v3796, %v3788
          %v4437 = vpack.c.b16 %v3797, %v3789
          %v4438 = vpack.c.b16 %v3798, %v3790
          %v4439 = vpack.c.b16 %v3807, %v3799
          %v4440 = vpack.c.b16 %v3808, %v3800
          %v4441 = vpack.c.b16 %v3809, %v3801
          %v4442 = vpack.c.b16 %v3810, %v3802
          %v4443 = vpack.c.b16 %v3811, %v3803
          %v4444 = vpack.c.b16 %v3812, %v3804
          %v4445 = vpack.c.b16 %v3813, %v3805
          %v4446 = vpack.c.b16 %v3814, %v3806
          %v4447 = vpack.c.b16 %v3823, %v3815
          %v4448 = vpack.c.b16 %v3824, %v3816
          %v4449 = vpack.c.b16 %v3825, %v3817
          %v4450 = vpack.c.b16 %v3826, %v3818
          %v4451 = vpack.c.b16 %v3827, %v3819
          %v4452 = vpack.c.b16 %v3828, %v3820
          %v4453 = vpack.c.b16 %v3829, %v3821
          %v4454 = vpack.c.b16 %v3830, %v3822
          %v4455 = vpack.c.b16 %v3839, %v3831
          %v4456 = vpack.c.b16 %v3840, %v3832
          %v4457 = vpack.c.b16 %v3841, %v3833
          %v4458 = vpack.c.b16 %v3842, %v3834
          %v4459 = vpack.c.b16 %v3843, %v3835
          %v4460 = vpack.c.b16 %v3844, %v3836
          %v4461 = vpack.c.b16 %v3845, %v3837
          %v4462 = vpack.c.b16 %v3846, %v3838
          %v4463 = vpack.c.b16 %v3855, %v3847
          %v4464 = vpack.c.b16 %v3856, %v3848
          %v4465 = vpack.c.b16 %v3857, %v3849
          %v4466 = vpack.c.b16 %v3858, %v3850
          %v4467 = vpack.c.b16 %v3859, %v3851
          %v4468 = vpack.c.b16 %v3860, %v3852
          %v4469 = vpack.c.b16 %v3861, %v3853
          %v4470 = vpack.c.b16 %v3862, %v3854
          %v4471 = vpack.c.b16 %v3871, %v3863
          %v4472 = vpack.c.b16 %v3872, %v3864
          %v4473 = vpack.c.b16 %v3873, %v3865
          %v4474 = vpack.c.b16 %v3874, %v3866
          %v4475 = vpack.c.b16 %v3875, %v3867
          %v4476 = vpack.c.b16 %v3876, %v3868
          %v4477 = vpack.c.b16 %v3877, %v3869
          %v4478 = vpack.c.b16 %v3878, %v3870
          %v4479 = vpack.c.b16 %v3887, %v3879
          %v4480 = vpack.c.b16 %v3888, %v3880
          %v4481 = vpack.c.b16 %v3889, %v3881
          %v4482 = vpack.c.b16 %v3890, %v3882
          %v4483 = vpack.c.b16 %v3891, %v3883
          %v4484 = vpack.c.b16 %v3892, %v3884
          %v4485 = vpack.c.b16 %v3893, %v3885
          %v4486 = vpack.c.b16 %v3894, %v3886
          %v4487 = vpack.c.b16 %v3903, %v3895
          %v4488 = vpack.c.b16 %v3904, %v3896
          %v4489 = vpack.c.b16 %v3905, %v3897
          %v4490 = vpack.c.b16 %v3906, %v3898
          %v4491 = vpack.c.b16 %v3907, %v3899
          %v4492 = vpack.c.b16 %v3908, %v3900
          %v4493 = vpack.c.b16 %v3909, %v3901
          %v4494 = vpack.c.b16 %v3910, %v3902
          %v4495 = vpack.c.b16 %v3919, %v3911
          %v4496 = vpack.c.b16 %v3920, %v3912
          %v4497 = vpack.c.b16 %v3921, %v3913
          %v4498 = vpack.c.b16 %v3922, %v3914
          %v4499 = vpack.c.b16 %v3923, %v3915
          %v4500 = vpack.c.b16 %v3924, %v3916
          %v4501 = vpack.c.b16 %v3925, %v3917
          %v4502 = vpack.c.b16 %v3926, %v3918
          %v4503 = vpack.c.b16 %v3935, %v3927
          %v4504 = vpack.c.b16 %v3936, %v3928
          %v4505 = vpack.c.b16 %v3937, %v3929
          %v4506 = vpack.c.b16 %v3938, %v3930
          %v4507 = vpack.c.b16 %v3939, %v3931
          %v4508 = vpack.c.b16 %v3940, %v3932
          %v4509 = vpack.c.b16 %v3941, %v3933
          %v4510 = vpack.c.b16 %v3942, %v3934
          %v4511 = vpack.c.b16 %v3951, %v3943
          %v4512 = vpack.c.b16 %v3952, %v3944
          %v4513 = vpack.c.b16 %v3953, %v3945
          %v4514 = vpack.c.b16 %v3954, %v3946
          %v4515 = vpack.c.b16 %v3955, %v3947
          %v4516 = vpack.c.b16 %v3956, %v3948
          %v4517 = vpack.c.b16 %v3957, %v3949
          %v4518 = vpack.c.b16 %v3958, %v3950
          %v4519 = vpack.c.b16 %v3967, %v3959
          %v4520 = vpack.c.b16 %v3968, %v3960
          %v4521 = vpack.c.b16 %v3969, %v3961
          %v4522 = vpack.c.b16 %v3970, %v3962
          %v4523 = vpack.c.b16 %v3971, %v3963
          %v4524 = vpack.c.b16 %v3972, %v3964
          %v4525 = vpack.c.b16 %v3973, %v3965
          %v4526 = vpack.c.b16 %v3974, %v3966
          %v4527 = vpack.c.b16 %v3983, %v3975
          %v4528 = vpack.c.b16 %v3984, %v3976
          %v4529 = vpack.c.b16 %v3985, %v3977
          %v4530 = vpack.c.b16 %v3986, %v3978
          %v4531 = vpack.c.b16 %v3987, %v3979
          %v4532 = vpack.c.b16 %v3988, %v3980
          %v4533 = vpack.c.b16 %v3989, %v3981
          %v4534 = vpack.c.b16 %v3990, %v3982
          %v4535 = vpack.c.b16 %v3999, %v3991
          %v4536 = vpack.c.b16 %v4000, %v3992
          %v4537 = vpack.c.b16 %v4001, %v3993
          %v4538 = vpack.c.b16 %v4002, %v3994
          %v4539 = vpack.c.b16 %v4003, %v3995
          %v4540 = vpack.c.b16 %v4004, %v3996
          %v4541 = vpack.c.b16 %v4005, %v3997
          %v4542 = vpack.c.b16 %v4006, %v3998
          %v4543 = vpack.c.b16 %v4015, %v4007
          %v4544 = vpack.c.b16 %v4016, %v4008
          %v4545 = vpack.c.b16 %v4017, %v4009
          %v4546 = vpack.c.b16 %v4018, %v4010
          %v4547 = vpack.c.b16 %v4019, %v4011
          %v4548 = vpack.c.b16 %v4020, %v4012
          %v4549 = vpack.c.b16 %v4021, %v4013
          %v4550 = vpack.c.b16 %v4022, %v4014
          %v4551 = vpack.c.b16 %v4031, %v4023
          %v4552 = vpack.c.b16 %v4032, %v4024
          %v4553 = vpack.c.b16 %v4033, %v4025
          %v4554 = vpack.c.b16 %v4034, %v4026
          %v4555 = vpack.c.b16 %v4035, %v4027
          %v4556 = vpack.c.b16 %v4036, %v4028
          %v4557 = vpack.c.b16 %v4037, %v4029
          %v4558 = vpack.c.b16 %v4038, %v4030
          %v4559 = vpack.c.b16 %v4047, %v4039
          %v4560 = vpack.c.b16 %v4048, %v4040
          %v4561 = vpack.c.b16 %v4049, %v4041
          %v4562 = vpack.c.b16 %v4050, %v4042
          %v4563 = vpack.c.b16 %v4051, %v4043
          %v4564 = vpack.c.b16 %v4052, %v4044
          %v4565 = vpack.c.b16 %v4053, %v4045
          %v4566 = vpack.c.b16 %v4054, %v4046
          %v4567 = vpack.c.b16 %v4063, %v4055
          %v4568 = vpack.c.b16 %v4064, %v4056
          %v4569 = vpack.c.b16 %v4065, %v4057
          %v4570 = vpack.c.b16 %v4066, %v4058
          %v4571 = vpack.c.b16 %v4067, %v4059
          %v4572 = vpack.c.b16 %v4068, %v4060
          %v4573 = vpack.c.b16 %v4069, %v4061
          %v4574 = vpack.c.b16 %v4070, %v4062
          %v4575 = vpack.c.b16 %v4079, %v4071
          %v4576 = vpack.c.b16 %v4080, %v4072
          %v4577 = vpack.c.b16 %v4081, %v4073
          %v4578 = vpack.c.b16 %v4082, %v4074
          %v4579 = vpack.c.b16 %v4083, %v4075
          %v4580 = vpack.c.b16 %v4084, %v4076
          %v4581 = vpack.c.b16 %v4085, %v4077
          %v4582 = vpack.c.b16 %v4086, %v4078
          %v4583 = vpack.c.b16 %v4095, %v4087
          %v4584 = vpack.c.b16 %v4096, %v4088
          %v4585 = vpack.c.b16 %v4097, %v4089
          %v4586 = vpack.c.b16 %v4098, %v4090
          %v4587 = vpack.c.b16 %v4099, %v4091
          %v4588 = vpack.c.b16 %v4100, %v4092
          %v4589 = vpack.c.b16 %v4101, %v4093
          %v4590 = vpack.c.b16 %v4102, %v4094
          %v4591 = vpack.c.b16 %v4111, %v4103
          %v4592 = vpack.c.b16 %v4112, %v4104
          %v4593 = vpack.c.b16 %v4113, %v4105
          %v4594 = vpack.c.b16 %v4114, %v4106
          %v4595 = vpack.c.b16 %v4115, %v4107
          %v4596 = vpack.c.b16 %v4116, %v4108
          %v4597 = vpack.c.b16 %v4117, %v4109
          %v4598 = vpack.c.b16 %v4118, %v4110
          %v4599 = vpack.c.b16 %v4127, %v4119
          %v4600 = vpack.c.b16 %v4128, %v4120
          %v4601 = vpack.c.b16 %v4129, %v4121
          %v4602 = vpack.c.b16 %v4130, %v4122
          %v4603 = vpack.c.b16 %v4131, %v4123
          %v4604 = vpack.c.b16 %v4132, %v4124
          %v4605 = vpack.c.b16 %v4133, %v4125
          %v4606 = vpack.c.b16 %v4134, %v4126
          %v4607 = vpack.c.b16 %v4143, %v4135
          %v4608 = vpack.c.b16 %v4144, %v4136
          %v4609 = vpack.c.b16 %v4145, %v4137
          %v4610 = vpack.c.b16 %v4146, %v4138
          %v4611 = vpack.c.b16 %v4147, %v4139
          %v4612 = vpack.c.b16 %v4148, %v4140
          %v4613 = vpack.c.b16 %v4149, %v4141
          %v4614 = vpack.c.b16 %v4150, %v4142
          %v4615 = vpack.c.b16 %v4159, %v4151
          %v4616 = vpack.c.b16 %v4160, %v4152
          %v4617 = vpack.c.b16 %v4161, %v4153
          %v4618 = vpack.c.b16 %v4162, %v4154
          %v4619 = vpack.c.b16 %v4163, %v4155
          %v4620 = vpack.c.b16 %v4164, %v4156
          %v4621 = vpack.c.b16 %v4165, %v4157
          %v4622 = vpack.c.b16 %v4166, %v4158
          %v4623 = vpack.c.b16 %v4175, %v4167
          %v4624 = vpack.c.b16 %v4176, %v4168
          %v4625 = vpack.c.b16 %v4177, %v4169
          %v4626 = vpack.c.b16 %v4178, %v4170
          %v4627 = vpack.c.b16 %v4179, %v4171
          %v4628 = vpack.c.b16 %v4180, %v4172
          %v4629 = vpack.c.b16 %v4181, %v4173
          %v4630 = vpack.c.b16 %v4182, %v4174
          %v4631 = vpack.c.b16 %v4191, %v4183
          %v4632 = vpack.c.b16 %v4192, %v4184
          %v4633 = vpack.c.b16 %v4193, %v4185
          %v4634 = vpack.c.b16 %v4194, %v4186
          %v4635 = vpack.c.b16 %v4195, %v4187
          %v4636 = vpack.c.b16 %v4196, %v4188
          %v4637 = vpack.c.b16 %v4197, %v4189
          %v4638 = vpack.c.b16 %v4198, %v4190
          %v4639 = vpack.c.b16 %v4207, %v4199
          %v4640 = vpack.c.b16 %v4208, %v4200
          %v4641 = vpack.c.b16 %v4209, %v4201
          %v4642 = vpack.c.b16 %v4210, %v4202
          %v4643 = vpack.c.b16 %v4211, %v4203
          %v4644 = vpack.c.b16 %v4212, %v4204
          %v4645 = vpack.c.b16 %v4213, %v4205
          %v4646 = vpack.c.b16 %v4214, %v4206
          %v4647 = vpack.c.b16 %v4223, %v4215
          %v4648 = vpack.c.b16 %v4224, %v4216
          %v4649 = vpack.c.b16 %v4225, %v4217
          %v4650 = vpack.c.b16 %v4226, %v4218
          %v4651 = vpack.c.b16 %v4227, %v4219
          %v4652 = vpack.c.b16 %v4228, %v4220
          %v4653 = vpack.c.b16 %v4229, %v4221
          %v4654 = vpack.c.b16 %v4230, %v4222
          %v4655 = vpack.c.b16 %v4239, %v4231
          %v4656 = vpack.c.b16 %v4240, %v4232
          %v4657 = vpack.c.b16 %v4241, %v4233
          %v4658 = vpack.c.b16 %v4242, %v4234
          %v4659 = vpack.c.b16 %v4243, %v4235
          %v4660 = vpack.c.b16 %v4244, %v4236
          %v4661 = vpack.c.b16 %v4245, %v4237
          %v4662 = vpack.c.b16 %v4246, %v4238
          %v4663 = vpack.c.b16 %v4255, %v4247
          %v4664 = vpack.c.b16 %v4256, %v4248
          %v4665 = vpack.c.b16 %v4257, %v4249
          %v4666 = vpack.c.b16 %v4258, %v4250
          %v4667 = vpack.c.b16 %v4259, %v4251
          %v4668 = vpack.c.b16 %v4260, %v4252
          %v4669 = vpack.c.b16 %v4261, %v4253
          %v4670 = vpack.c.b16 %v4262, %v4254
          %v4671 = vpack.c.b16 %v4271, %v4263
          %v4672 = vpack.c.b16 %v4272, %v4264
          %v4673 = vpack.c.b16 %v4273, %v4265
          %v4674 = vpack.c.b16 %v4274, %v4266
          %v4675 = vpack.c.b16 %v4275, %v4267
          %v4676 = vpack.c.b16 %v4276, %v4268
          %v4677 = vpack.c.b16 %v4277, %v4269
          %v4678 = vpack.c.b16 %v4278, %v4270
          %v4679 = vpack.c.b16 %v4287, %v4279
          %v4680 = vpack.c.b16 %v4288, %v4280
          %v4681 = vpack.c.b16 %v4289, %v4281
          %v4682 = vpack.c.b16 %v4290, %v4282
          %v4683 = vpack.c.b16 %v4291, %v4283
          %v4684 = vpack.c.b16 %v4292, %v4284
          %v4685 = vpack.c.b16 %v4293, %v4285
          %v4686 = vpack.c.b16 %v4294, %v4286
          %v4687 = vpack.c.b16 %v4303, %v4295
          %v4688 = vpack.c.b16 %v4304, %v4296
          %v4689 = vpack.c.b16 %v4305, %v4297
          %v4690 = vpack.c.b16 %v4306, %v4298
          %v4691 = vpack.c.b16 %v4307, %v4299
          %v4692 = vpack.c.b16 %v4308, %v4300
          %v4693 = vpack.c.b16 %v4309, %v4301
          %v4694 = vpack.c.b16 %v4310, %v4302
          %5079 = vmatprep.subr.bf16.mxu0 %v4312
          %5080 = vmatpush1.bf16.msra.mxu0 %v4311
          %5081 = vmatprep.subr.bf16.mxu0 %v4320
          %5082 = vmatpush1.bf16.msra.mxu0 %v4319
          %5083 = vmatprep.subr.bf16.mxu0 %v4328
          %5084 = vmatpush1.bf16.msra.mxu0 %v4327
          %5085 = vmatprep.subr.bf16.mxu0 %v4336
          %5086 = vmatpush1.bf16.msra.mxu0 %v4335
          %5087 = vmatprep.subr.bf16.mxu0 %v4344
          %5088 = vmatpush1.bf16.msra.mxu0 %v4343
          %5089 = vmatprep.subr.bf16.mxu0 %v4352
          %5090 = vmatpush1.bf16.msra.mxu0 %v4351
          %5091 = vmatprep.subr.bf16.mxu0 %v4360
          %5092 = vmatpush1.bf16.msra.mxu0 %v4359
          %5093 = vmatprep.subr.bf16.mxu0 %v4368
          %5094 = vmatpush1.bf16.msra.mxu0 %v4367
          %5095 = vmatprep.subr.bf16.mxu0 %v4376
          %5096 = vmatpush1.bf16.msra.mxu0 %v4375
          %5097 = vmatprep.subr.bf16.mxu0 %v4384
          %5098 = vmatpush1.bf16.msra.mxu0 %v4383
          %5099 = vmatprep.subr.bf16.mxu0 %v4392
          %5100 = vmatpush1.bf16.msra.mxu0 %v4391
          %5101 = vmatprep.subr.bf16.mxu0 %v4400
          %5102 = vmatpush1.bf16.msra.mxu0 %v4399
          %5103 = vmatprep.subr.bf16.mxu0 %v4408
          %5104 = vmatpush1.bf16.msra.mxu0 %v4407
          %5105 = vmatprep.subr.bf16.mxu0 %v4416
          %5106 = vmatpush1.bf16.msra.mxu0 %v4415
          %5107 = vmatprep.subr.bf16.mxu0 %v4424
          %5108 = vmatpush1.bf16.msra.mxu0 %v4423
          %5109 = vmatprep.subr.bf16.mxu0 %v4432
          %5110 = vmatpush1.bf16.msra.mxu0 %v4431
          %5111 = vmatprep.mubr.bf16.mxu0 %v2728
          %5112 = vmatmul.mubr.bf16.gmra.mrb[0].mxu0 %v2727
          %v5113 = vpop.f32.mrb[0].mxu0
          %v5114 = vadd.f32 %v3122, %v5113
          %v5115 = vpop.f32.mrb[0].mxu0
          %v5116 = vadd.f32 %v3126, %v5115
          %v5117 = vpop.f32.mrb[0].mxu0
          %v5118 = vpop.f32.mrb[0].mxu0
          %5119 = vdwg.mxu0
          %5120 = vmatprep.subr.bf16.mxu0 %v4440
          %5121 = vmatpush1.bf16.msra.mxu0 %v4439
          %5122 = vmatprep.subr.bf16.mxu0 %v4448
          %5123 = vmatpush1.bf16.msra.mxu0 %v4447
          %5124 = vmatprep.subr.bf16.mxu0 %v4456
          %5125 = vmatpush1.bf16.msra.mxu0 %v4455
          %5126 = vmatprep.subr.bf16.mxu0 %v4464
          %5127 = vmatpush1.bf16.msra.mxu0 %v4463
          %5128 = vmatprep.subr.bf16.mxu0 %v4472
          %5129 = vmatpush1.bf16.msra.mxu0 %v4471
          %5130 = vmatprep.subr.bf16.mxu0 %v4480
          %5131 = vmatpush1.bf16.msra.mxu0 %v4479
          %5132 = vmatprep.subr.bf16.mxu0 %v4488
          %5133 = vmatpush1.bf16.msra.mxu0 %v4487
          %5134 = vmatprep.subr.bf16.mxu0 %v4496
          %5135 = vmatpush1.bf16.msra.mxu0 %v4495
          %5136 = vmatprep.subr.bf16.mxu0 %v4504
          %5137 = vmatpush1.bf16.msra.mxu0 %v4503
          %5138 = vmatprep.subr.bf16.mxu0 %v4512
          %5139 = vmatpush1.bf16.msra.mxu0 %v4511
          %5140 = vmatprep.subr.bf16.mxu0 %v4520
          %5141 = vmatpush1.bf16.msra.mxu0 %v4519
          %5142 = vmatprep.subr.bf16.mxu0 %v4528
          %5143 = vmatpush1.bf16.msra.mxu0 %v4527
          %5144 = vmatprep.subr.bf16.mxu0 %v4536
          %5145 = vmatpush1.bf16.msra.mxu0 %v4535
          %5146 = vmatprep.subr.bf16.mxu0 %v4544
          %5147 = vmatpush1.bf16.msra.mxu0 %v4543
          %5148 = vmatprep.subr.bf16.mxu0 %v4552
          %5149 = vmatpush1.bf16.msra.mxu0 %v4551
          %5150 = vmatprep.subr.bf16.mxu0 %v4560
          %5151 = vmatpush1.bf16.msra.mxu0 %v4559
          %5152 = vmatprep.mubr.bf16.mxu0 %v2730
          %5153 = vmatmul.mubr.bf16.gmra.mrb[0].mxu0 %v2729
          %v5154 = vpop.f32.mrb[0].mxu0
          %v5155 = vadd.f32 %v5114, %v5154
          %v5156 = vpop.f32.mrb[0].mxu0
          %v5157 = vadd.f32 %v5116, %v5156
          %v5158 = vpop.f32.mrb[0].mxu0
          %v5159 = vpop.f32.mrb[0].mxu0
          %5160 = vdwg.mxu0
          %5161 = vmatprep.subr.bf16.mxu0 %v4568
          %5162 = vmatpush1.bf16.msra.mxu0 %v4567
          %5163 = vmatprep.subr.bf16.mxu0 %v4576
          %5164 = vmatpush1.bf16.msra.mxu0 %v4575
          %5165 = vmatprep.subr.bf16.mxu0 %v4584
          %5166 = vmatpush1.bf16.msra.mxu0 %v4583
          %5167 = vmatprep.subr.bf16.mxu0 %v4592
          %5168 = vmatpush1.bf16.msra.mxu0 %v4591
          %5169 = vmatprep.subr.bf16.mxu0 %v4600
          %5170 = vmatpush1.bf16.msra.mxu0 %v4599
          %5171 = vmatprep.subr.bf16.mxu0 %v4608
          %5172 = vmatpush1.bf16.msra.mxu0 %v4607
          %5173 = vmatprep.subr.bf16.mxu0 %v4616
          %5174 = vmatpush1.bf16.msra.mxu0 %v4615
          %5175 = vmatprep.subr.bf16.mxu0 %v4624
          %5176 = vmatpush1.bf16.msra.mxu0 %v4623
          %5177 = vmatprep.subr.bf16.mxu0 %v4632
          %5178 = vmatpush1.bf16.msra.mxu0 %v4631
          %5179 = vmatprep.subr.bf16.mxu0 %v4640
          %5180 = vmatpush1.bf16.msra.mxu0 %v4639
          %5181 = vmatprep.subr.bf16.mxu0 %v4648
          %5182 = vmatpush1.bf16.msra.mxu0 %v4647
          %5183 = vmatprep.subr.bf16.mxu0 %v4656
          %5184 = vmatpush1.bf16.msra.mxu0 %v4655
          %5185 = vmatprep.subr.bf16.mxu0 %v4664
          %5186 = vmatpush1.bf16.msra.mxu0 %v4663
          %5187 = vmatprep.subr.bf16.mxu0 %v4672
          %5188 = vmatpush1.bf16.msra.mxu0 %v4671
          %5189 = vmatprep.subr.bf16.mxu0 %v4680
          %5190 = vmatpush1.bf16.msra.mxu0 %v4679
          %5191 = vmatprep.subr.bf16.mxu0 %v4688
          %5192 = vmatpush1.bf16.msra.mxu0 %v4687
          %5193 = vmatprep.mubr.bf16.mxu0 %v2732
          %5194 = vmatmul.mubr.bf16.gmra.mrb[0].mxu0 %v2731
          %v5195 = vpop.f32.mrb[0].mxu0
          %v5196 = vadd.f32 %v5155, %v5195
          %v5197 = vpop.f32.mrb[0].mxu0
          %v5198 = vadd.f32 %v5157, %v5197
          %v5199 = vpop.f32.mrb[0].mxu0
          %v5200 = vpop.f32.mrb[0].mxu0
          %5201 = vdwg.mxu0
          %5202 = vmatprep.subr.bf16.mxu0 %v4314
          %5203 = vmatpush1.bf16.msra.mxu0 %v4313
          %5204 = vmatprep.subr.bf16.mxu0 %v4322
          %5205 = vmatpush1.bf16.msra.mxu0 %v4321
          %5206 = vmatprep.subr.bf16.mxu0 %v4330
          %5207 = vmatpush1.bf16.msra.mxu0 %v4329
          %5208 = vmatprep.subr.bf16.mxu0 %v4338
          %5209 = vmatpush1.bf16.msra.mxu0 %v4337
          %5210 = vmatprep.subr.bf16.mxu0 %v4346
          %5211 = vmatpush1.bf16.msra.mxu0 %v4345
          %5212 = vmatprep.subr.bf16.mxu0 %v4354
          %5213 = vmatpush1.bf16.msra.mxu0 %v4353
          %5214 = vmatprep.subr.bf16.mxu0 %v4362
          %5215 = vmatpush1.bf16.msra.mxu0 %v4361
          %5216 = vmatprep.subr.bf16.mxu0 %v4370
          %5217 = vmatpush1.bf16.msra.mxu0 %v4369
          %5218 = vmatprep.subr.bf16.mxu0 %v4378
          %5219 = vmatpush1.bf16.msra.mxu0 %v4377
          %5220 = vmatprep.subr.bf16.mxu0 %v4386
          %5221 = vmatpush1.bf16.msra.mxu0 %v4385
          %5222 = vmatprep.subr.bf16.mxu0 %v4394
          %5223 = vmatpush1.bf16.msra.mxu0 %v4393
          %5224 = vmatprep.subr.bf16.mxu0 %v4402
          %5225 = vmatpush1.bf16.msra.mxu0 %v4401
          %5226 = vmatprep.subr.bf16.mxu0 %v4410
          %5227 = vmatpush1.bf16.msra.mxu0 %v4409
          %5228 = vmatprep.subr.bf16.mxu0 %v4418
          %5229 = vmatpush1.bf16.msra.mxu0 %v4417
          %5230 = vmatprep.subr.bf16.mxu0 %v4426
          %5231 = vmatpush1.bf16.msra.mxu0 %v4425
          %5232 = vmatprep.subr.bf16.mxu0 %v4434
          %5233 = vmatpush1.bf16.msra.mxu0 %v4433
          %5234 = vmatprep.mubr.bf16.mxu0 %v2728
          %5235 = vmatmul.mubr.bf16.gmra.mrb[0].mxu0 %v2727
          %v5236 = vpop.f32.mrb[0].mxu0
          %v5237 = vadd.f32 %v3130, %v5236
          %v5238 = vpop.f32.mrb[0].mxu0
          %v5239 = vadd.f32 %v3134, %v5238
          %v5240 = vpop.f32.mrb[0].mxu0
          %v5241 = vpop.f32.mrb[0].mxu0
          %5242 = vdwg.mxu0
          %5243 = vmatprep.subr.bf16.mxu0 %v4442
          %5244 = vmatpush1.bf16.msra.mxu0 %v4441
          %5245 = vmatprep.subr.bf16.mxu0 %v4450
          %5246 = vmatpush1.bf16.msra.mxu0 %v4449
          %5247 = vmatprep.subr.bf16.mxu0 %v4458
          %5248 = vmatpush1.bf16.msra.mxu0 %v4457
          %5249 = vmatprep.subr.bf16.mxu0 %v4466
          %5250 = vmatpush1.bf16.msra.mxu0 %v4465
          %5251 = vmatprep.subr.bf16.mxu0 %v4474
          %5252 = vmatpush1.bf16.msra.mxu0 %v4473
          %5253 = vmatprep.subr.bf16.mxu0 %v4482
          %5254 = vmatpush1.bf16.msra.mxu0 %v4481
          %5255 = vmatprep.subr.bf16.mxu0 %v4490
          %5256 = vmatpush1.bf16.msra.mxu0 %v4489
          %5257 = vmatprep.subr.bf16.mxu0 %v4498
          %5258 = vmatpush1.bf16.msra.mxu0 %v4497
          %5259 = vmatprep.subr.bf16.mxu0 %v4506
          %5260 = vmatpush1.bf16.msra.mxu0 %v4505
          %5261 = vmatprep.subr.bf16.mxu0 %v4514
          %5262 = vmatpush1.bf16.msra.mxu0 %v4513
          %5263 = vmatprep.subr.bf16.mxu0 %v4522
          %5264 = vmatpush1.bf16.msra.mxu0 %v4521
          %5265 = vmatprep.subr.bf16.mxu0 %v4530
          %5266 = vmatpush1.bf16.msra.mxu0 %v4529
          %5267 = vmatprep.subr.bf16.mxu0 %v4538
          %5268 = vmatpush1.bf16.msra.mxu0 %v4537
          %5269 = vmatprep.subr.bf16.mxu0 %v4546
          %5270 = vmatpush1.bf16.msra.mxu0 %v4545
          %5271 = vmatprep.subr.bf16.mxu0 %v4554
          %5272 = vmatpush1.bf16.msra.mxu0 %v4553
          %5273 = vmatprep.subr.bf16.mxu0 %v4562
          %5274 = vmatpush1.bf16.msra.mxu0 %v4561
          %5275 = vmatprep.mubr.bf16.mxu0 %v2730
          %5276 = vmatmul.mubr.bf16.gmra.mrb[0].mxu0 %v2729
          %v5277 = vpop.f32.mrb[0].mxu0
          %v5278 = vadd.f32 %v5237, %v5277
          %v5279 = vpop.f32.mrb[0].mxu0
          %v5280 = vadd.f32 %v5239, %v5279
          %v5281 = vpop.f32.mrb[0].mxu0
          %v5282 = vpop.f32.mrb[0].mxu0
          %5283 = vdwg.mxu0
          %5284 = vmatprep.subr.bf16.mxu0 %v4570
          %5285 = vmatpush1.bf16.msra.mxu0 %v4569
          %5286 = vmatprep.subr.bf16.mxu0 %v4578
          %5287 = vmatpush1.bf16.msra.mxu0 %v4577
          %5288 = vmatprep.subr.bf16.mxu0 %v4586
          %5289 = vmatpush1.bf16.msra.mxu0 %v4585
          %5290 = vmatprep.subr.bf16.mxu0 %v4594
          %5291 = vmatpush1.bf16.msra.mxu0 %v4593
          %5292 = vmatprep.subr.bf16.mxu0 %v4602
          %5293 = vmatpush1.bf16.msra.mxu0 %v4601
          %5294 = vmatprep.subr.bf16.mxu0 %v4610
          %5295 = vmatpush1.bf16.msra.mxu0 %v4609
          %5296 = vmatprep.subr.bf16.mxu0 %v4618
          %5297 = vmatpush1.bf16.msra.mxu0 %v4617
          %5298 = vmatprep.subr.bf16.mxu0 %v4626
          %5299 = vmatpush1.bf16.msra.mxu0 %v4625
          %5300 = vmatprep.subr.bf16.mxu0 %v4634
          %5301 = vmatpush1.bf16.msra.mxu0 %v4633
          %5302 = vmatprep.subr.bf16.mxu0 %v4642
          %5303 = vmatpush1.bf16.msra.mxu0 %v4641
          %5304 = vmatprep.subr.bf16.mxu0 %v4650
          %5305 = vmatpush1.bf16.msra.mxu0 %v4649
          %5306 = vmatprep.subr.bf16.mxu0 %v4658
          %5307 = vmatpush1.bf16.msra.mxu0 %v4657
          %5308 = vmatprep.subr.bf16.mxu0 %v4666
          %5309 = vmatpush1.bf16.msra.mxu0 %v4665
          %5310 = vmatprep.subr.bf16.mxu0 %v4674
          %5311 = vmatpush1.bf16.msra.mxu0 %v4673
          %5312 = vmatprep.subr.bf16.mxu0 %v4682
          %5313 = vmatpush1.bf16.msra.mxu0 %v4681
          %5314 = vmatprep.subr.bf16.mxu0 %v4690
          %5315 = vmatpush1.bf16.msra.mxu0 %v4689
          %5316 = vmatprep.mubr.bf16.mxu0 %v2732
          %5317 = vmatmul.mubr.bf16.gmra.mrb[0].mxu0 %v2731
          %v5318 = vpop.f32.mrb[0].mxu0
          %v5319 = vadd.f32 %v5278, %v5318
          %v5320 = vpop.f32.mrb[0].mxu0
          %v5321 = vadd.f32 %v5280, %v5320
          %v5322 = vpop.f32.mrb[0].mxu0
          %v5323 = vpop.f32.mrb[0].mxu0
          %5324 = vdwg.mxu0
          %5325 = vmatprep.subr.bf16.mxu0 %v4316
          %5326 = vmatpush1.bf16.msra.mxu0 %v4315
          %5327 = vmatprep.subr.bf16.mxu0 %v4324
          %5328 = vmatpush1.bf16.msra.mxu0 %v4323
          %5329 = vmatprep.subr.bf16.mxu0 %v4332
          %5330 = vmatpush1.bf16.msra.mxu0 %v4331
          %5331 = vmatprep.subr.bf16.mxu0 %v4340
          %5332 = vmatpush1.bf16.msra.mxu0 %v4339
          %5333 = vmatprep.subr.bf16.mxu0 %v4348
          %5334 = vmatpush1.bf16.msra.mxu0 %v4347
          %5335 = vmatprep.subr.bf16.mxu0 %v4356
          %5336 = vmatpush1.bf16.msra.mxu0 %v4355
          %5337 = vmatprep.subr.bf16.mxu0 %v4364
          %5338 = vmatpush1.bf16.msra.mxu0 %v4363
          %5339 = vmatprep.subr.bf16.mxu0 %v4372
          %5340 = vmatpush1.bf16.msra.mxu0 %v4371
          %5341 = vmatprep.subr.bf16.mxu0 %v4380
          %5342 = vmatpush1.bf16.msra.mxu0 %v4379
          %5343 = vmatprep.subr.bf16.mxu0 %v4388
          %5344 = vmatpush1.bf16.msra.mxu0 %v4387
          %5345 = vmatprep.subr.bf16.mxu0 %v4396
          %5346 = vmatpush1.bf16.msra.mxu0 %v4395
          %5347 = vmatprep.subr.bf16.mxu0 %v4404
          %5348 = vmatpush1.bf16.msra.mxu0 %v4403
          %5349 = vmatprep.subr.bf16.mxu0 %v4412
          %5350 = vmatpush1.bf16.msra.mxu0 %v4411
          %5351 = vmatprep.subr.bf16.mxu0 %v4420
          %5352 = vmatpush1.bf16.msra.mxu0 %v4419
          %5353 = vmatprep.subr.bf16.mxu0 %v4428
          %5354 = vmatpush1.bf16.msra.mxu0 %v4427
          %5355 = vmatprep.subr.bf16.mxu0 %v4436
          %5356 = vmatpush1.bf16.msra.mxu0 %v4435
          %5357 = vmatprep.mubr.bf16.mxu0 %v2728
          %5358 = vmatmul.mubr.bf16.gmra.mrb[0].mxu0 %v2727
          %v5359 = vpop.f32.mrb[0].mxu0
          %v5360 = vadd.f32 %v3138, %v5359
          %v5361 = vpop.f32.mrb[0].mxu0
          %v5362 = vadd.f32 %v3142, %v5361
          %v5363 = vpop.f32.mrb[0].mxu0
          %v5364 = vpop.f32.mrb[0].mxu0
          %5365 = vdwg.mxu0
          %5366 = vmatprep.subr.bf16.mxu0 %v4444
          %5367 = vmatpush1.bf16.msra.mxu0 %v4443
          %5368 = vmatprep.subr.bf16.mxu0 %v4452
          %5369 = vmatpush1.bf16.msra.mxu0 %v4451
          %5370 = vmatprep.subr.bf16.mxu0 %v4460
          %5371 = vmatpush1.bf16.msra.mxu0 %v4459
          %5372 = vmatprep.subr.bf16.mxu0 %v4468
          %5373 = vmatpush1.bf16.msra.mxu0 %v4467
          %5374 = vmatprep.subr.bf16.mxu0 %v4476
          %5375 = vmatpush1.bf16.msra.mxu0 %v4475
          %5376 = vmatprep.subr.bf16.mxu0 %v4484
          %5377 = vmatpush1.bf16.msra.mxu0 %v4483
          %5378 = vmatprep.subr.bf16.mxu0 %v4492
          %5379 = vmatpush1.bf16.msra.mxu0 %v4491
          %5380 = vmatprep.subr.bf16.mxu0 %v4500
          %5381 = vmatpush1.bf16.msra.mxu0 %v4499
          %5382 = vmatprep.subr.bf16.mxu0 %v4508
          %5383 = vmatpush1.bf16.msra.mxu0 %v4507
          %5384 = vmatprep.subr.bf16.mxu0 %v4516
          %5385 = vmatpush1.bf16.msra.mxu0 %v4515
          %5386 = vmatprep.subr.bf16.mxu0 %v4524
          %5387 = vmatpush1.bf16.msra.mxu0 %v4523
          %5388 = vmatprep.subr.bf16.mxu0 %v4532
          %5389 = vmatpush1.bf16.msra.mxu0 %v4531
          %5390 = vmatprep.subr.bf16.mxu0 %v4540
          %5391 = vmatpush1.bf16.msra.mxu0 %v4539
          %5392 = vmatprep.subr.bf16.mxu0 %v4548
          %5393 = vmatpush1.bf16.msra.mxu0 %v4547
          %5394 = vmatprep.subr.bf16.mxu0 %v4556
          %5395 = vmatpush1.bf16.msra.mxu0 %v4555
          %5396 = vmatprep.subr.bf16.mxu0 %v4564
          %5397 = vmatpush1.bf16.msra.mxu0 %v4563
          %5398 = vmatprep.mubr.bf16.mxu0 %v2730
          %5399 = vmatmul.mubr.bf16.gmra.mrb[0].mxu0 %v2729
          %v5400 = vpop.f32.mrb[0].mxu0
          %v5401 = vadd.f32 %v5360, %v5400
          %v5402 = vpop.f32.mrb[0].mxu0
          %v5403 = vadd.f32 %v5362, %v5402
          %v5404 = vpop.f32.mrb[0].mxu0
          %v5405 = vpop.f32.mrb[0].mxu0
          %5406 = vdwg.mxu0
          %5407 = vmatprep.subr.bf16.mxu0 %v4572
          %5408 = vmatpush1.bf16.msra.mxu0 %v4571
          %5409 = vmatprep.subr.bf16.mxu0 %v4580
          %5410 = vmatpush1.bf16.msra.mxu0 %v4579
          %5411 = vmatprep.subr.bf16.mxu0 %v4588
          %5412 = vmatpush1.bf16.msra.mxu0 %v4587
          %5413 = vmatprep.subr.bf16.mxu0 %v4596
          %5414 = vmatpush1.bf16.msra.mxu0 %v4595
          %5415 = vmatprep.subr.bf16.mxu0 %v4604
          %5416 = vmatpush1.bf16.msra.mxu0 %v4603
          %5417 = vmatprep.subr.bf16.mxu0 %v4612
          %5418 = vmatpush1.bf16.msra.mxu0 %v4611
          %5419 = vmatprep.subr.bf16.mxu0 %v4620
          %5420 = vmatpush1.bf16.msra.mxu0 %v4619
          %5421 = vmatprep.subr.bf16.mxu0 %v4628
          %5422 = vmatpush1.bf16.msra.mxu0 %v4627
          %5423 = vmatprep.subr.bf16.mxu0 %v4636
          %5424 = vmatpush1.bf16.msra.mxu0 %v4635
          %5425 = vmatprep.subr.bf16.mxu0 %v4644
          %5426 = vmatpush1.bf16.msra.mxu0 %v4643
          %5427 = vmatprep.subr.bf16.mxu0 %v4652
          %5428 = vmatpush1.bf16.msra.mxu0 %v4651
          %5429 = vmatprep.subr.bf16.mxu0 %v4660
          %5430 = vmatpush1.bf16.msra.mxu0 %v4659
          %5431 = vmatprep.subr.bf16.mxu0 %v4668
          %5432 = vmatpush1.bf16.msra.mxu0 %v4667
          %5433 = vmatprep.subr.bf16.mxu0 %v4676
          %5434 = vmatpush1.bf16.msra.mxu0 %v4675
          %5435 = vmatprep.subr.bf16.mxu0 %v4684
          %5436 = vmatpush1.bf16.msra.mxu0 %v4683
          %5437 = vmatprep.subr.bf16.mxu0 %v4692
          %5438 = vmatpush1.bf16.msra.mxu0 %v4691
          %5439 = vmatprep.mubr.bf16.mxu0 %v2732
          %5440 = vmatmul.mubr.bf16.gmra.mrb[0].mxu0 %v2731
          %v5441 = vpop.f32.mrb[0].mxu0
          %v5442 = vadd.f32 %v5401, %v5441
          %v5443 = vpop.f32.mrb[0].mxu0
          %v5444 = vadd.f32 %v5403, %v5443
          %v5445 = vpop.f32.mrb[0].mxu0
          %v5446 = vpop.f32.mrb[0].mxu0
          %5447 = vdwg.mxu0
          %5448 = vmatprep.subr.bf16.mxu0 %v4318
          %5449 = vmatpush1.bf16.msra.mxu0 %v4317
          %5450 = vmatprep.subr.bf16.mxu0 %v4326
          %5451 = vmatpush1.bf16.msra.mxu0 %v4325
          %5452 = vmatprep.subr.bf16.mxu0 %v4334
          %5453 = vmatpush1.bf16.msra.mxu0 %v4333
          %5454 = vmatprep.subr.bf16.mxu0 %v4342
          %5455 = vmatpush1.bf16.msra.mxu0 %v4341
          %5456 = vmatprep.subr.bf16.mxu0 %v4350
          %5457 = vmatpush1.bf16.msra.mxu0 %v4349
          %5458 = vmatprep.subr.bf16.mxu0 %v4358
          %5459 = vmatpush1.bf16.msra.mxu0 %v4357
          %5460 = vmatprep.subr.bf16.mxu0 %v4366
          %5461 = vmatpush1.bf16.msra.mxu0 %v4365
          %5462 = vmatprep.subr.bf16.mxu0 %v4374
          %5463 = vmatpush1.bf16.msra.mxu0 %v4373
          %5464 = vmatprep.subr.bf16.mxu0 %v4382
          %5465 = vmatpush1.bf16.msra.mxu0 %v4381
          %5466 = vmatprep.subr.bf16.mxu0 %v4390
          %5467 = vmatpush1.bf16.msra.mxu0 %v4389
          %5468 = vmatprep.subr.bf16.mxu0 %v4398
          %5469 = vmatpush1.bf16.msra.mxu0 %v4397
          %5470 = vmatprep.subr.bf16.mxu0 %v4406
          %5471 = vmatpush1.bf16.msra.mxu0 %v4405
          %5472 = vmatprep.subr.bf16.mxu0 %v4414
          %5473 = vmatpush1.bf16.msra.mxu0 %v4413
          %5474 = vmatprep.subr.bf16.mxu0 %v4422
          %5475 = vmatpush1.bf16.msra.mxu0 %v4421
          %5476 = vmatprep.subr.bf16.mxu0 %v4430
          %5477 = vmatpush1.bf16.msra.mxu0 %v4429
          %5478 = vmatprep.subr.bf16.mxu0 %v4438
          %5479 = vmatpush1.bf16.msra.mxu0 %v4437
          %5480 = vmatprep.mubr.bf16.mxu0 %v2728
          %5481 = vmatmul.mubr.bf16.gmra.mrb[0].mxu0 %v2727
          %v5482 = vpop.f32.mrb[0].mxu0
          %v5483 = vadd.f32 %v3146, %v5482
          %v5484 = vpop.f32.mrb[0].mxu0
          %v5485 = vadd.f32 %v3150, %v5484
          %v5486 = vpop.f32.mrb[0].mxu0
          %v5487 = vpop.f32.mrb[0].mxu0
          %5488 = vdwg.mxu0
          %5489 = vmatprep.subr.bf16.mxu0 %v4446
          %5490 = vmatpush1.bf16.msra.mxu0 %v4445
          %5491 = vmatprep.subr.bf16.mxu0 %v4454
          %5492 = vmatpush1.bf16.msra.mxu0 %v4453
          %5493 = vmatprep.subr.bf16.mxu0 %v4462
          %5494 = vmatpush1.bf16.msra.mxu0 %v4461
          %5495 = vmatprep.subr.bf16.mxu0 %v4470
          %5496 = vmatpush1.bf16.msra.mxu0 %v4469
          %5497 = vmatprep.subr.bf16.mxu0 %v4478
          %5498 = vmatpush1.bf16.msra.mxu0 %v4477
          %5499 = vmatprep.subr.bf16.mxu0 %v4486
          %5500 = vmatpush1.bf16.msra.mxu0 %v4485
          %5501 = vmatprep.subr.bf16.mxu0 %v4494
          %5502 = vmatpush1.bf16.msra.mxu0 %v4493
          %5503 = vmatprep.subr.bf16.mxu0 %v4502
          %5504 = vmatpush1.bf16.msra.mxu0 %v4501
          %5505 = vmatprep.subr.bf16.mxu0 %v4510
          %5506 = vmatpush1.bf16.msra.mxu0 %v4509
          %5507 = vmatprep.subr.bf16.mxu0 %v4518
          %5508 = vmatpush1.bf16.msra.mxu0 %v4517
          %5509 = vmatprep.subr.bf16.mxu0 %v4526
          %5510 = vmatpush1.bf16.msra.mxu0 %v4525
          %5511 = vmatprep.subr.bf16.mxu0 %v4534
          %5512 = vmatpush1.bf16.msra.mxu0 %v4533
          %5513 = vmatprep.subr.bf16.mxu0 %v4542
          %5514 = vmatpush1.bf16.msra.mxu0 %v4541
          %5515 = vmatprep.subr.bf16.mxu0 %v4550
          %5516 = vmatpush1.bf16.msra.mxu0 %v4549
          %5517 = vmatprep.subr.bf16.mxu0 %v4558
          %5518 = vmatpush1.bf16.msra.mxu0 %v4557
          %5519 = vmatprep.subr.bf16.mxu0 %v4566
          %5520 = vmatpush1.bf16.msra.mxu0 %v4565
          %5521 = vmatprep.mubr.bf16.mxu0 %v2730
          %5522 = vmatmul.mubr.bf16.gmra.mrb[0].mxu0 %v2729
          %v5523 = vpop.f32.mrb[0].mxu0
          %v5524 = vadd.f32 %v5483, %v5523
          %v5525 = vpop.f32.mrb[0].mxu0
          %v5526 = vadd.f32 %v5485, %v5525
          %v5527 = vpop.f32.mrb[0].mxu0
          %v5528 = vpop.f32.mrb[0].mxu0
          %5529 = vdwg.mxu0
          %5530 = vmatprep.subr.bf16.mxu0 %v4574
          %5531 = vmatpush1.bf16.msra.mxu0 %v4573
          %5532 = vmatprep.subr.bf16.mxu0 %v4582
          %5533 = vmatpush1.bf16.msra.mxu0 %v4581
          %5534 = vmatprep.subr.bf16.mxu0 %v4590
          %5535 = vmatpush1.bf16.msra.mxu0 %v4589
          %5536 = vmatprep.subr.bf16.mxu0 %v4598
          %5537 = vmatpush1.bf16.msra.mxu0 %v4597
          %5538 = vmatprep.subr.bf16.mxu0 %v4606
          %5539 = vmatpush1.bf16.msra.mxu0 %v4605
          %5540 = vmatprep.subr.bf16.mxu0 %v4614
          %5541 = vmatpush1.bf16.msra.mxu0 %v4613
          %5542 = vmatprep.subr.bf16.mxu0 %v4622
          %5543 = vmatpush1.bf16.msra.mxu0 %v4621
          %5544 = vmatprep.subr.bf16.mxu0 %v4630
          %5545 = vmatpush1.bf16.msra.mxu0 %v4629
          %5546 = vmatprep.subr.bf16.mxu0 %v4638
          %5547 = vmatpush1.bf16.msra.mxu0 %v4637
          %5548 = vmatprep.subr.bf16.mxu0 %v4646
          %5549 = vmatpush1.bf16.msra.mxu0 %v4645
          %5550 = vmatprep.subr.bf16.mxu0 %v4654
          %5551 = vmatpush1.bf16.msra.mxu0 %v4653
          %5552 = vmatprep.subr.bf16.mxu0 %v4662
          %5553 = vmatpush1.bf16.msra.mxu0 %v4661
          %5554 = vmatprep.subr.bf16.mxu0 %v4670
          %5555 = vmatpush1.bf16.msra.mxu0 %v4669
          %5556 = vmatprep.subr.bf16.mxu0 %v4678
          %5557 = vmatpush1.bf16.msra.mxu0 %v4677
          %5558 = vmatprep.subr.bf16.mxu0 %v4686
          %5559 = vmatpush1.bf16.msra.mxu0 %v4685
          %5560 = vmatprep.subr.bf16.mxu0 %v4694
          %5561 = vmatpush1.bf16.msra.mxu0 %v4693
          %5562 = vmatprep.mubr.bf16.mxu0 %v2732
          %5563 = vmatmul.mubr.bf16.gmra.mrb[0].mxu0 %v2731
          %v5564 = vpop.f32.mrb[0].mxu0
          %v5565 = vadd.f32 %v5524, %v5564
          %v5566 = vpop.f32.mrb[0].mxu0
          %v5567 = vadd.f32 %v5526, %v5566
          %v5568 = vpop.f32.mrb[0].mxu0
          %v5569 = vpop.f32.mrb[0].mxu0
          %5570 = vdwg.mxu0
          %vm5571 = vcmask 1041408
          %v5572 = vsel %vm5571, %v5196, 0.0
          %v5573 = vsel %vm5571, %v5198, 0.0
          %v5574 = vadd.f32 %v5572, %v5573
          %v5575 = vsel %vm5571, %v5319, 0.0
          %v5576 = vadd.f32 %v5574, %v5575
          %v5577 = vsel %vm5571, %v5321, 0.0
          %v5578 = vadd.f32 %v5576, %v5577
          %v5579 = vsel %vm5571, %v5442, 0.0
          %v5580 = vadd.f32 %v5578, %v5579
          %v5581 = vsel %vm5571, %v5444, 0.0
          %v5582 = vadd.f32 %v5580, %v5581
          %v5583 = vsel %vm5571, %v5565, 0.0
          %v5584 = vadd.f32 %v5582, %v5583
          %v5585 = vsel %vm5571, %v5567, 0.0
          %v5586 = vadd.f32 %v5584, %v5585
          %5587 = vadd.xlane.f32.xlu0 %v5586
          %v5588 = vpop.xlane.xlu0 %5587
          %v5589 = vmul.f32 %v5588, 0.001
          %v5590 = vmul.f32 %v5196, %v5196
          %v5591 = vmul.f32 %v5198, %v5198
          %v5592 = vmul.f32 %v5319, %v5319
          %v5593 = vmul.f32 %v5321, %v5321
          %v5594 = vmul.f32 %v5442, %v5442
          %v5595 = vmul.f32 %v5444, %v5444
          %v5596 = vmul.f32 %v5565, %v5565
          %v5597 = vmul.f32 %v5567, %v5567
          %v5598 = vsel %vm5571, %v5590, 0.0
          %v5599 = vsel %vm5571, %v5591, 0.0
          %v5600 = vadd.f32 %v5598, %v5599
          %v5601 = vsel %vm5571, %v5592, 0.0
          %v5602 = vadd.f32 %v5600, %v5601
          %v5603 = vsel %vm5571, %v5593, 0.0
          %v5604 = vadd.f32 %v5602, %v5603
          %v5605 = vsel %vm5571, %v5594, 0.0
          %v5606 = vadd.f32 %v5604, %v5605
          %v5607 = vsel %vm5571, %v5595, 0.0
          %v5608 = vadd.f32 %v5606, %v5607
          %v5609 = vsel %vm5571, %v5596, 0.0
          %v5610 = vadd.f32 %v5608, %v5609
          %v5611 = vsel %vm5571, %v5597, 0.0
          %v5612 = vadd.f32 %v5610, %v5611
          %5613 = vadd.xlane.f32.xlu0 %v5612
          %v5614 = vpop.xlane.xlu0 %5613
          %v5615 = vmul.f32 %v5614, 0.001
          %v5616 = vmul.f32 %v5589, %v5589
          %v5617 = vsub.f32 %v5615, %v5616
          %v5618 = vsub.f32 %v5196, %v5589
          %v5619 = vsub.f32 %v5198, %v5589
          %v5620 = vsub.f32 %v5319, %v5589
          %v5621 = vsub.f32 %v5321, %v5589
          %v5622 = vsub.f32 %v5442, %v5589
          %v5623 = vsub.f32 %v5444, %v5589
          %v5624 = vsub.f32 %v5565, %v5589
          %v5625 = vsub.f32 %v5567, %v5589
          %v5626 = vadd.f32 %v5617, 1e-05
          %v5627 = vrsqrt.pop %v5626
          %v5628 = vmul.f32 %v5618, %v5627
          %v5629 = vmul.f32 %v5619, %v5627
          %v5630 = vmul.f32 %v5620, %v5627
          %v5631 = vmul.f32 %v5621, %v5627
          %v5632 = vmul.f32 %v5622, %v5627
          %v5633 = vmul.f32 %v5623, %v5627
          %v5634 = vmul.f32 %v5624, %v5627
          %v5635 = vmul.f32 %v5625, %v5627
          %v5636 = vld [vmem:[#allocation12] sm:$0xff]
          %v5638 = vlaneseq
          %v5639 = vshrl.u32 %v5638, 7
          %v5640 = vsub.s32 0, %v5639
          %v5641 = vrot.slane %v5636, %v5640
          %v5642 = vlaneseq
          %v5643 = vshrl.u32 %v5642, 7
          %v5644 = vsub.s32 1, %v5643
          %v5645 = vrot.slane %v5636, %v5644
          %v5646 = vlaneseq
          %v5647 = vshrl.u32 %v5646, 7
          %v5648 = vsub.s32 2, %v5647
          %v5649 = vrot.slane %v5636, %v5648
          %v5650 = vlaneseq
          %v5651 = vshrl.u32 %v5650, 7
          %v5652 = vsub.s32 3, %v5651
          %v5653 = vrot.slane %v5636, %v5652
          %v5654 = vlaneseq
          %v5655 = vshrl.u32 %v5654, 7
          %v5656 = vsub.s32 4, %v5655
          %v5657 = vrot.slane %v5636, %v5656
          %v5658 = vlaneseq
          %v5659 = vshrl.u32 %v5658, 7
          %v5660 = vsub.s32 5, %v5659
          %v5661 = vrot.slane %v5636, %v5660
          %v5662 = vlaneseq
          %v5663 = vshrl.u32 %v5662, 7
          %v5664 = vsub.s32 6, %v5663
          %v5665 = vrot.slane %v5636, %v5664
          %v5666 = vlaneseq
          %v5667 = vshrl.u32 %v5666, 7
          %v5668 = vsub.s32 7, %v5667
          %v5669 = vrot.slane %v5636, %v5668
          %v5678 = vmul.f32 %v5628, %v5641
          %v5679 = vmul.f32 %v5629, %v5645
          %v5680 = vmul.f32 %v5630, %v5649
          %v5681 = vmul.f32 %v5631, %v5653
          %v5682 = vmul.f32 %v5632, %v5657
          %v5683 = vmul.f32 %v5633, %v5661
          %v5684 = vmul.f32 %v5634, %v5665
          %v5685 = vmul.f32 %v5635, %v5669
          %v5686 = vld [vmem:[#allocation14] sm:$0xff]
          %v5688 = vlaneseq
          %v5689 = vshrl.u32 %v5688, 7
          %v5690 = vsub.s32 0, %v5689
          %v5691 = vrot.slane %v5686, %v5690
          %v5692 = vlaneseq
          %v5693 = vshrl.u32 %v5692, 7
          %v5694 = vsub.s32 1, %v5693
          %v5695 = vrot.slane %v5686, %v5694
          %v5696 = vlaneseq
          %v5697 = vshrl.u32 %v5696, 7
          %v5698 = vsub.s32 2, %v5697
          %v5699 = vrot.slane %v5686, %v5698
          %v5700 = vlaneseq
          %v5701 = vshrl.u32 %v5700, 7
          %v5702 = vsub.s32 3, %v5701
          %v5703 = vrot.slane %v5686, %v5702
          %v5704 = vlaneseq
          %v5705 = vshrl.u32 %v5704, 7
          %v5706 = vsub.s32 4, %v5705
          %v5707 = vrot.slane %v5686, %v5706
          %v5708 = vlaneseq
          %v5709 = vshrl.u32 %v5708, 7
          %v5710 = vsub.s32 5, %v5709
          %v5711 = vrot.slane %v5686, %v5710
          %v5712 = vlaneseq
          %v5713 = vshrl.u32 %v5712, 7
          %v5714 = vsub.s32 6, %v5713
          %v5715 = vrot.slane %v5686, %v5714
          %v5716 = vlaneseq
          %v5717 = vshrl.u32 %v5716, 7
          %v5718 = vsub.s32 7, %v5717
          %v5719 = vrot.slane %v5686, %v5718
          %v5728 = vadd.f32 %v5678, %v5691
          %v5729 = vadd.f32 %v5679, %v5695
          %v5730 = vadd.f32 %v5680, %v5699
          %v5731 = vadd.f32 %v5681, %v5703
          %v5732 = vadd.f32 %v5682, %v5707
          %v5733 = vadd.f32 %v5683, %v5711
          %v5734 = vadd.f32 %v5684, %v5715
          %v5735 = vadd.f32 %v5685, %v5719
          %v5736 = vmul.f32 %v5728, 0.5
          %v5737 = vmul.f32 %v5729, 0.5
          %v5738 = vmul.f32 %v5730, 0.5
          %v5739 = vmul.f32 %v5731, 0.5
          %v5740 = vmul.f32 %v5732, 0.5
          %v5741 = vmul.f32 %v5733, 0.5
          %v5742 = vmul.f32 %v5734, 0.5
          %v5743 = vmul.f32 %v5735, 0.5
          %v5744 = vmul.f32 %v5728, 0.70710677
          %v5745 = vmul.f32 %v5729, 0.70710677
          %v5746 = vmul.f32 %v5730, 0.70710677
          %v5747 = vmul.f32 %v5731, 0.70710677
          %v5748 = vmul.f32 %v5732, 0.70710677
          %v5749 = vmul.f32 %v5733, 0.70710677
          %v5750 = vmul.f32 %v5734, 0.70710677
          %v5751 = vmul.f32 %v5735, 0.70710677
          %v5752 = verf.f32.pop %v5744
          %v5753 = verf.f32.pop %v5745
          %v5754 = verf.f32.pop %v5746
          %v5755 = verf.f32.pop %v5747
          %v5756 = verf.f32.pop %v5748
          %v5757 = verf.f32.pop %v5749
          %v5758 = verf.f32.pop %v5750
          %v5759 = verf.f32.pop %v5751
          %v5760 = vadd.f32 %v5752, 1.0
          %v5761 = vadd.f32 %v5753, 1.0
          %v5762 = vadd.f32 %v5754, 1.0
          %v5763 = vadd.f32 %v5755, 1.0
          %v5764 = vadd.f32 %v5756, 1.0
          %v5765 = vadd.f32 %v5757, 1.0
          %v5766 = vadd.f32 %v5758, 1.0
          %v5767 = vadd.f32 %v5759, 1.0
          %v5768 = vmul.f32 %v5736, %v5760
          %v5769 = vmul.f32 %v5737, %v5761
          %v5770 = vmul.f32 %v5738, %v5762
          %v5771 = vmul.f32 %v5739, %v5763
          %v5772 = vmul.f32 %v5740, %v5764
          %v5773 = vmul.f32 %v5741, %v5765
          %v5774 = vmul.f32 %v5742, %v5766
          %v5775 = vmul.f32 %v5743, %v5767
          %v5776 = vpack.c.bf16 %v5768, %v5768
          %v5777 = vpack.c.bf16 %v5769, %v5769
          %v5778 = vpack.c.bf16 %v5770, %v5770
          %v5779 = vpack.c.bf16 %v5771, %v5771
          %v5780 = vpack.c.bf16 %v5772, %v5772
          %v5781 = vpack.c.bf16 %v5773, %v5773
          %v5782 = vpack.c.bf16 %v5774, %v5774
          %v5783 = vpack.c.bf16 %v5775, %v5775
          %v5792 = vcombine.low %v5776, %v5777
          %v5793 = vcombine.low %v5778, %v5779
          %v5794 = vcombine.low %v5780, %v5781
          %v5795 = vcombine.low %v5782, %v5783
          %v5797 = vunpack.c.l.s4 1966171168
          %v5798 = vunpack.c.0.s8 %v5797
          %v5799 = vlaneseq
          %v5800 = vshrl.u32 %v5799, 7
          %v5801 = vsub.s32 %v5798, %v5800
          %v5802 = vrot.slane %v5792, %v5801
          %v5804 = vunpack.c.l.s4 1966171168
          %v5805 = vunpack.c.0.s8 %v5804
          %v5806 = vlaneseq
          %v5807 = vshrl.u32 %v5806, 7
          %v5808 = vsub.s32 %v5805, %v5807
          %v5809 = vrot.slane %v5793, %v5808
          %v5811 = vunpack.c.l.s4 1966171168
          %v5812 = vunpack.c.0.s8 %v5811
          %v5813 = vlaneseq
          %v5814 = vshrl.u32 %v5813, 7
          %v5815 = vsub.s32 %v5812, %v5814
          %v5816 = vrot.slane %v5794, %v5815
          %v5818 = vunpack.c.l.s4 1966171168
          %v5819 = vunpack.c.0.s8 %v5818
          %v5820 = vlaneseq
          %v5821 = vshrl.u32 %v5820, 7
          %v5822 = vsub.s32 %v5819, %v5821
          %v5823 = vrot.slane %v5795, %v5822
          %v5824 = vcombine.low %v5802, %v5809
          %v5825 = vcombine.low %v5816, %v5823
          %v5827 = vunpack.c.l.s4 1966171168
          %v5828 = vunpack.c.0.s8 %v5827
          %v5829 = vlaneseq
          %v5830 = vshrl.u32 %v5829, 7
          %v5831 = vsub.s32 %v5828, %v5830
          %v5832 = vrot.slane %v5824, %v5831
          %v5834 = vunpack.c.l.s4 1966171168
          %v5835 = vunpack.c.0.s8 %v5834
          %v5836 = vlaneseq
          %v5837 = vshrl.u32 %v5836, 7
          %v5838 = vsub.s32 %v5835, %v5837
          %v5839 = vrot.slane %v5825, %v5838
          %v5840 = vcombine.low %v5832, %v5839
          %5842 = vst [vmem:[#allocation2] sm:$0xff] %v5840
        $region104: #{tpu_custom_call.1} parent=59 // pred_fallthru
          _
        %v5843 = vld [vmem:[#allocation2] sm:$0xff]
        %v5844 = vld [vmem:[%s478] sm:$0xff]
        %v5845 = vld [vmem:[%s478 + $0x8] sm:$0xff]
        %v5846 = vld [vmem:[%s478 + $0x10] sm:$0xff]
        %v5847 = vld [vmem:[%s478 + $0x18] sm:$0xff]
        %v5848 = vld [vmem:[%s478 + $0x20] sm:$0xff]
        %v5849 = vld [vmem:[%s478 + $0x28] sm:$0xff]
        %v5850 = vld [vmem:[%s478 + $0x30] sm:$0xff]
        %v5851 = vld [vmem:[%s478 + $0x38] sm:$0xff]
        %v5852 = vld [vmem:[%s478 + $0x40] sm:$0xff]
        %v5853 = vld [vmem:[%s478 + $0x48] sm:$0xff]
        %v5854 = vld [vmem:[%s478 + $0x50] sm:$0xff]
        %v5855 = vld [vmem:[%s478 + $0x58] sm:$0xff]
        %v5856 = vld [vmem:[%s478 + $0x60] sm:$0xff]
        %v5857 = vld [vmem:[%s478 + $0x68] sm:$0xff]
        %v5858 = vld [vmem:[%s478 + $0x70] sm:$0xff]
        %v5859 = vld [vmem:[%s478 + $0x78] sm:$0xff]
        %v5860 = vld [vmem:[%s478 + $0x80] sm:$0xff]
        %v5861 = vld [vmem:[%s478 + $0x88] sm:$0xff]
        %v5862 = vld [vmem:[%s478 + $0x90] sm:$0xff]
        %v5863 = vld [vmem:[%s478 + $0x98] sm:$0xff]
        %v5864 = vld [vmem:[%s478 + $0xa0] sm:$0xff]
        %v5865 = vld [vmem:[%s478 + $0xa8] sm:$0xff]
        %v5866 = vld [vmem:[%s478 + $0xb0] sm:$0xff]
        %v5867 = vld [vmem:[%s478 + $0xb8] sm:$0xff]
        %v5868 = vld [vmem:[%s478 + $0xc0] sm:$0xff]
        %v5869 = vld [vmem:[%s478 + $0xc8] sm:$0xff]
        %v5870 = vld [vmem:[%s478 + $0xd0] sm:$0xff]
        %v5871 = vld [vmem:[%s478 + $0xd8] sm:$0xff]
        %v5872 = vld [vmem:[%s478 + $0xe0] sm:$0xff]
        %v5873 = vld [vmem:[%s478 + $0xe8] sm:$0xff]
        %v5874 = vld [vmem:[%s478 + $0xf0] sm:$0xff]
        %v5875 = vld [vmem:[%s478 + $0xf8] sm:$0xff]
        %v5876 = vld [vmem:[%s478 + $0x100] sm:$0xff]
        %v5877 = vld [vmem:[%s478 + $0x108] sm:$0xff]
        %v5878 = vld [vmem:[%s478 + $0x110] sm:$0xff]
        %v5879 = vld [vmem:[%s478 + $0x118] sm:$0xff]
        %v5880 = vld [vmem:[%s478 + $0x120] sm:$0xff]
        %v5881 = vld [vmem:[%s478 + $0x128] sm:$0xff]
        %v5882 = vld [vmem:[%s478 + $0x130] sm:$0xff]
        %v5883 = vld [vmem:[%s478 + $0x138] sm:$0xff]
        %v5884 = vld [vmem:[%s478 + $0x140] sm:$0xff]
        %v5885 = vld [vmem:[%s478 + $0x148] sm:$0xff]
        %v5886 = vld [vmem:[%s478 + $0x150] sm:$0xff]
        %v5887 = vld [vmem:[%s478 + $0x158] sm:$0xff]
        %v5888 = vld [vmem:[%s478 + $0x160] sm:$0xff]
        %v5889 = vld [vmem:[%s478 + $0x168] sm:$0xff]
        %v5890 = vld [vmem:[%s478 + $0x170] sm:$0xff]
        %v5891 = vld [vmem:[%s478 + $0x178] sm:$0xff]
        %v5892 = vld [vmem:[%s478 + $0x180] sm:$0xff]
        %v5893 = vld [vmem:[%s478 + $0x188] sm:$0xff]
        %v5894 = vld [vmem:[%s478 + $0x190] sm:$0xff]
        %v5895 = vld [vmem:[%s478 + $0x198] sm:$0xff]
        %v5896 = vld [vmem:[%s478 + $0x1a0] sm:$0xff]
        %v5897 = vld [vmem:[%s478 + $0x1a8] sm:$0xff]
        %v5898 = vld [vmem:[%s478 + $0x1b0] sm:$0xff]
        %v5899 = vld [vmem:[%s478 + $0x1b8] sm:$0xff]
        %v5900 = vld [vmem:[%s478 + $0x1c0] sm:$0xff]
        %v5901 = vld [vmem:[%s478 + $0x1c8] sm:$0xff]
        %v5902 = vld [vmem:[%s478 + $0x1d0] sm:$0xff]
        %v5903 = vld [vmem:[%s478 + $0x1d8] sm:$0xff]
        %v5904 = vld [vmem:[%s478 + $0x1e0] sm:$0xff]
        %v5905 = vld [vmem:[%s478 + $0x1e8] sm:$0xff]
        %v5906 = vld [vmem:[%s478 + $0x1f0] sm:$0xff]
        %v5907 = vld [vmem:[%s478 + $0x1f8] sm:$0xff]
        %v5908 = vld [vmem:[%s478 + $0x200] sm:$0xff]
        %v5909 = vld [vmem:[%s478 + $0x208] sm:$0xff]
        %v5910 = vld [vmem:[%s478 + $0x210] sm:$0xff]
        %v5911 = vld [vmem:[%s478 + $0x218] sm:$0xff]
        %v5912 = vld [vmem:[%s478 + $0x220] sm:$0xff]
        %v5913 = vld [vmem:[%s478 + $0x228] sm:$0xff]
        %v5914 = vld [vmem:[%s478 + $0x230] sm:$0xff]
        %v5915 = vld [vmem:[%s478 + $0x238] sm:$0xff]
        %v5916 = vld [vmem:[%s478 + $0x240] sm:$0xff]
        %v5917 = vld [vmem:[%s478 + $0x248] sm:$0xff]
        %v5918 = vld [vmem:[%s478 + $0x250] sm:$0xff]
        %v5919 = vld [vmem:[%s478 + $0x258] sm:$0xff]
        %v5920 = vld [vmem:[%s478 + $0x260] sm:$0xff]
        %v5921 = vld [vmem:[%s478 + $0x268] sm:$0xff]
        %v5922 = vld [vmem:[%s478 + $0x270] sm:$0xff]
        %v5923 = vld [vmem:[%s478 + $0x278] sm:$0xff]
        %v5924 = vld [vmem:[%s478 + $0x280] sm:$0xff]
        %v5925 = vld [vmem:[%s478 + $0x288] sm:$0xff]
        %v5926 = vld [vmem:[%s478 + $0x290] sm:$0xff]
        %v5927 = vld [vmem:[%s478 + $0x298] sm:$0xff]
        %v5928 = vld [vmem:[%s478 + $0x2a0] sm:$0xff]
        %v5929 = vld [vmem:[%s478 + $0x2a8] sm:$0xff]
        %v5930 = vld [vmem:[%s478 + $0x2b0] sm:$0xff]
        %v5931 = vld [vmem:[%s478 + $0x2b8] sm:$0xff]
        %v5932 = vld [vmem:[%s478 + $0x2c0] sm:$0xff]
        %v5933 = vld [vmem:[%s478 + $0x2c8] sm:$0xff]
        %v5934 = vld [vmem:[%s478 + $0x2d0] sm:$0xff]
        %v5935 = vld [vmem:[%s478 + $0x2d8] sm:$0xff]
        %v5936 = vld [vmem:[%s478 + $0x2e0] sm:$0xff]
        %v5937 = vld [vmem:[%s478 + $0x2e8] sm:$0xff]
        %v5938 = vld [vmem:[%s478 + $0x2f0] sm:$0xff]
        %v5939 = vld [vmem:[%s478 + $0x2f8] sm:$0xff]
        %v5940 = vld [vmem:[%s478 + $0x300] sm:$0xff]
        %v5941 = vld [vmem:[%s478 + $0x308] sm:$0xff]
        %v5942 = vld [vmem:[%s478 + $0x310] sm:$0xff]
        %v5943 = vld [vmem:[%s478 + $0x318] sm:$0xff]
        %v5944 = vld [vmem:[%s478 + $0x320] sm:$0xff]
        %v5945 = vld [vmem:[%s478 + $0x328] sm:$0xff]
        %v5946 = vld [vmem:[%s478 + $0x330] sm:$0xff]
        %v5947 = vld [vmem:[%s478 + $0x338] sm:$0xff]
        %v5948 = vld [vmem:[%s478 + $0x340] sm:$0xff]
        %v5949 = vld [vmem:[%s478 + $0x348] sm:$0xff]
        %v5950 = vld [vmem:[%s478 + $0x350] sm:$0xff]
        %v5951 = vld [vmem:[%s478 + $0x358] sm:$0xff]
        %v5952 = vld [vmem:[%s478 + $0x360] sm:$0xff]
        %v5953 = vld [vmem:[%s478 + $0x368] sm:$0xff]
        %v5954 = vld [vmem:[%s478 + $0x370] sm:$0xff]
        %v5955 = vld [vmem:[%s478 + $0x378] sm:$0xff]
        %v5956 = vld [vmem:[%s478 + $0x380] sm:$0xff]
        %v5957 = vld [vmem:[%s478 + $0x388] sm:$0xff]
        %v5958 = vld [vmem:[%s478 + $0x390] sm:$0xff]
        %v5959 = vld [vmem:[%s478 + $0x398] sm:$0xff]
        %v5960 = vld [vmem:[%s478 + $0x3a0] sm:$0xff]
        %v5961 = vld [vmem:[%s478 + $0x3a8] sm:$0xff]
        %v5962 = vld [vmem:[%s478 + $0x3b0] sm:$0xff]
        %v5963 = vld [vmem:[%s478 + $0x3b8] sm:$0xff]
        %v5964 = vld [vmem:[%s478 + $0x3c0] sm:$0xff]
        %v5965 = vld [vmem:[%s478 + $0x3c8] sm:$0xff]
        %v5966 = vld [vmem:[%s478 + $0x3d0] sm:$0xff]
        %v5967 = vld [vmem:[%s478 + $0x3d8] sm:$0xff]
        %v5968 = vld [vmem:[%s478 + $0x3e0] sm:$0xff]
        %v5969 = vld [vmem:[%s478 + $0x3e8] sm:$0xff]
        %v5970 = vld [vmem:[%s478 + $0x3f0] sm:$0xff]
        %v5971 = vld [vmem:[%s478 + $0x3f8] sm:$0xff]
        %v5972 = vld [vmem:[%s478 + $0x400] sm:$0xff]
        %v5973 = vld [vmem:[%s478 + $0x408] sm:$0xff]
        %v5974 = vld [vmem:[%s478 + $0x410] sm:$0xff]
        %v5975 = vld [vmem:[%s478 + $0x418] sm:$0xff]
        %v5976 = vld [vmem:[%s478 + $0x420] sm:$0xff]
        %v5977 = vld [vmem:[%s478 + $0x428] sm:$0xff]
        %v5978 = vld [vmem:[%s478 + $0x430] sm:$0xff]
        %v5979 = vld [vmem:[%s478 + $0x438] sm:$0xff]
        %v5980 = vld [vmem:[%s478 + $0x440] sm:$0xff]
        %v5981 = vld [vmem:[%s478 + $0x448] sm:$0xff]
        %v5982 = vld [vmem:[%s478 + $0x450] sm:$0xff]
        %v5983 = vld [vmem:[%s478 + $0x458] sm:$0xff]
        %v5984 = vld [vmem:[%s478 + $0x460] sm:$0xff]
        %v5985 = vld [vmem:[%s478 + $0x468] sm:$0xff]
        %v5986 = vld [vmem:[%s478 + $0x470] sm:$0xff]
        %v5987 = vld [vmem:[%s478 + $0x478] sm:$0xff]
        %v5988 = vld [vmem:[%s478 + $0x480] sm:$0xff]
        %v5989 = vld [vmem:[%s478 + $0x488] sm:$0xff]
        %v5990 = vld [vmem:[%s478 + $0x490] sm:$0xff]
        %v5991 = vld [vmem:[%s478 + $0x498] sm:$0xff]
        %v5992 = vld [vmem:[%s478 + $0x4a0] sm:$0xff]
        %v5993 = vld [vmem:[%s478 + $0x4a8] sm:$0xff]
        %v5994 = vld [vmem:[%s478 + $0x4b0] sm:$0xff]
        %v5995 = vld [vmem:[%s478 + $0x4b8] sm:$0xff]
        %v5996 = vld [vmem:[%s478 + $0x4c0] sm:$0xff]
        %v5997 = vld [vmem:[%s478 + $0x4c8] sm:$0xff]
        %v5998 = vld [vmem:[%s478 + $0x4d0] sm:$0xff]
        %v5999 = vld [vmem:[%s478 + $0x4d8] sm:$0xff]
        %v6000 = vld [vmem:[%s478 + $0x4e0] sm:$0xff]
        %v6001 = vld [vmem:[%s478 + $0x4e8] sm:$0xff]
        %v6002 = vld [vmem:[%s478 + $0x4f0] sm:$0xff]
        %v6003 = vld [vmem:[%s478 + $0x4f8] sm:$0xff]
        %v6004 = vld [vmem:[%s478 + $0x500] sm:$0xff]
        %v6005 = vld [vmem:[%s478 + $0x508] sm:$0xff]
        %v6006 = vld [vmem:[%s478 + $0x510] sm:$0xff]
        %v6007 = vld [vmem:[%s478 + $0x518] sm:$0xff]
        %v6008 = vld [vmem:[%s478 + $0x520] sm:$0xff]
        %v6009 = vld [vmem:[%s478 + $0x528] sm:$0xff]
        %v6010 = vld [vmem:[%s478 + $0x530] sm:$0xff]
        %v6011 = vld [vmem:[%s478 + $0x538] sm:$0xff]
        %v6012 = vld [vmem:[%s478 + $0x540] sm:$0xff]
        %v6013 = vld [vmem:[%s478 + $0x548] sm:$0xff]
        %v6014 = vld [vmem:[%s478 + $0x550] sm:$0xff]
        %v6015 = vld [vmem:[%s478 + $0x558] sm:$0xff]
        %v6016 = vld [vmem:[%s478 + $0x560] sm:$0xff]
        %v6017 = vld [vmem:[%s478 + $0x568] sm:$0xff]
        %v6018 = vld [vmem:[%s478 + $0x570] sm:$0xff]
        %v6019 = vld [vmem:[%s478 + $0x578] sm:$0xff]
        %v6020 = vld [vmem:[%s478 + $0x580] sm:$0xff]
        %v6021 = vld [vmem:[%s478 + $0x588] sm:$0xff]
        %v6022 = vld [vmem:[%s478 + $0x590] sm:$0xff]
        %v6023 = vld [vmem:[%s478 + $0x598] sm:$0xff]
        %v6024 = vld [vmem:[%s478 + $0x5a0] sm:$0xff]
        %v6025 = vld [vmem:[%s478 + $0x5a8] sm:$0xff]
        %v6026 = vld [vmem:[%s478 + $0x5b0] sm:$0xff]
        %v6027 = vld [vmem:[%s478 + $0x5b8] sm:$0xff]
        %v6028 = vld [vmem:[%s478 + $0x5c0] sm:$0xff]
        %v6029 = vld [vmem:[%s478 + $0x5c8] sm:$0xff]
        %v6030 = vld [vmem:[%s478 + $0x5d0] sm:$0xff]
        %v6031 = vld [vmem:[%s478 + $0x5d8] sm:$0xff]
        %v6032 = vld [vmem:[%s478 + $0x5e0] sm:$0xff]
        %v6033 = vld [vmem:[%s478 + $0x5e8] sm:$0xff]
        %v6034 = vld [vmem:[%s478 + $0x5f0] sm:$0xff]
        %v6035 = vld [vmem:[%s478 + $0x5f8] sm:$0xff]
        %v6036 = vld [vmem:[%s478 + $0x600] sm:$0xff]
        %v6037 = vld [vmem:[%s478 + $0x608] sm:$0xff]
        %v6038 = vld [vmem:[%s478 + $0x610] sm:$0xff]
        %v6039 = vld [vmem:[%s478 + $0x618] sm:$0xff]
        %v6040 = vld [vmem:[%s478 + $0x620] sm:$0xff]
        %v6041 = vld [vmem:[%s478 + $0x628] sm:$0xff]
        %v6042 = vld [vmem:[%s478 + $0x630] sm:$0xff]
        %v6043 = vld [vmem:[%s478 + $0x638] sm:$0xff]
        %v6044 = vld [vmem:[%s478 + $0x640] sm:$0xff]
        %v6045 = vld [vmem:[%s478 + $0x648] sm:$0xff]
        %v6046 = vld [vmem:[%s478 + $0x650] sm:$0xff]
        %v6047 = vld [vmem:[%s478 + $0x658] sm:$0xff]
        %v6048 = vld [vmem:[%s478 + $0x660] sm:$0xff]
        %v6049 = vld [vmem:[%s478 + $0x668] sm:$0xff]
        %v6050 = vld [vmem:[%s478 + $0x670] sm:$0xff]
        %v6051 = vld [vmem:[%s478 + $0x678] sm:$0xff]
        %v6052 = vld [vmem:[%s478 + $0x680] sm:$0xff]
        %v6053 = vld [vmem:[%s478 + $0x688] sm:$0xff]
        %v6054 = vld [vmem:[%s478 + $0x690] sm:$0xff]
        %v6055 = vld [vmem:[%s478 + $0x698] sm:$0xff]
        %v6056 = vld [vmem:[%s478 + $0x6a0] sm:$0xff]
        %v6057 = vld [vmem:[%s478 + $0x6a8] sm:$0xff]
        %v6058 = vld [vmem:[%s478 + $0x6b0] sm:$0xff]
        %v6059 = vld [vmem:[%s478 + $0x6b8] sm:$0xff]
        %v6060 = vld [vmem:[%s478 + $0x6c0] sm:$0xff]
        %v6061 = vld [vmem:[%s478 + $0x6c8] sm:$0xff]
        %v6062 = vld [vmem:[%s478 + $0x6d0] sm:$0xff]
        %v6063 = vld [vmem:[%s478 + $0x6d8] sm:$0xff]
        %v6064 = vld [vmem:[%s478 + $0x6e0] sm:$0xff]
        %v6065 = vld [vmem:[%s478 + $0x6e8] sm:$0xff]
        %v6066 = vld [vmem:[%s478 + $0x6f0] sm:$0xff]
        %v6067 = vld [vmem:[%s478 + $0x6f8] sm:$0xff]
        %v6068 = vld [vmem:[%s478 + $0x700] sm:$0xff]
        %v6069 = vld [vmem:[%s478 + $0x708] sm:$0xff]
        %v6070 = vld [vmem:[%s478 + $0x710] sm:$0xff]
        %v6071 = vld [vmem:[%s478 + $0x718] sm:$0xff]
        %v6072 = vld [vmem:[%s478 + $0x720] sm:$0xff]
        %v6073 = vld [vmem:[%s478 + $0x728] sm:$0xff]
        %v6074 = vld [vmem:[%s478 + $0x730] sm:$0xff]
        %v6075 = vld [vmem:[%s478 + $0x738] sm:$0xff]
        %v6076 = vld [vmem:[%s478 + $0x740] sm:$0xff]
        %v6077 = vld [vmem:[%s478 + $0x748] sm:$0xff]
        %v6078 = vld [vmem:[%s478 + $0x750] sm:$0xff]
        %v6079 = vld [vmem:[%s478 + $0x758] sm:$0xff]
        %v6080 = vld [vmem:[%s478 + $0x760] sm:$0xff]
        %v6081 = vld [vmem:[%s478 + $0x768] sm:$0xff]
        %v6082 = vld [vmem:[%s478 + $0x770] sm:$0xff]
        %v6083 = vld [vmem:[%s478 + $0x778] sm:$0xff]
        %v6084 = vld [vmem:[%s478 + $0x780] sm:$0xff]
        %v6085 = vld [vmem:[%s478 + $0x788] sm:$0xff]
        %v6086 = vld [vmem:[%s478 + $0x790] sm:$0xff]
        %v6087 = vld [vmem:[%s478 + $0x798] sm:$0xff]
        %v6088 = vld [vmem:[%s478 + $0x7a0] sm:$0xff]
        %v6089 = vld [vmem:[%s478 + $0x7a8] sm:$0xff]
        %v6090 = vld [vmem:[%s478 + $0x7b0] sm:$0xff]
        %v6091 = vld [vmem:[%s478 + $0x7b8] sm:$0xff]
        %v6092 = vld [vmem:[%s478 + $0x7c0] sm:$0xff]
        %v6093 = vld [vmem:[%s478 + $0x7c8] sm:$0xff]
        %v6094 = vld [vmem:[%s478 + $0x7d0] sm:$0xff]
        %v6095 = vld [vmem:[%s478 + $0x7d8] sm:$0xff]
        %v6096 = vld [vmem:[%s478 + $0x7e0] sm:$0xff]
        %v6097 = vld [vmem:[%s478 + $0x7e8] sm:$0xff]
        %v6098 = vld [vmem:[%s478 + $0x7f0] sm:$0xff]
        %v6099 = vld [vmem:[%s478 + $0x7f8] sm:$0xff]
        %v6100 = vunpack.c.l.s8.bf16 %v5844
        %v6101 = vunpack.c.l.s8.bf16 %v5845
        %v6102 = vunpack.c.l.s8.bf16 %v5846
        %v6103 = vunpack.c.l.s8.bf16 %v5847
        %v6104 = vunpack.c.l.s8.bf16 %v5848
        %v6105 = vunpack.c.l.s8.bf16 %v5849
        %v6106 = vunpack.c.l.s8.bf16 %v5850
        %v6107 = vunpack.c.l.s8.bf16 %v5851
        %v6108 = vunpack.c.h.s8.bf16 %v5844
        %v6109 = vunpack.c.h.s8.bf16 %v5845
        %v6110 = vunpack.c.h.s8.bf16 %v5846
        %v6111 = vunpack.c.h.s8.bf16 %v5847
        %v6112 = vunpack.c.h.s8.bf16 %v5848
        %v6113 = vunpack.c.h.s8.bf16 %v5849
        %v6114 = vunpack.c.h.s8.bf16 %v5850
        %v6115 = vunpack.c.h.s8.bf16 %v5851
        %v6116 = vunpack.c.l.s8.bf16 %v5852
        %v6117 = vunpack.c.l.s8.bf16 %v5853
        %v6118 = vunpack.c.l.s8.bf16 %v5854
        %v6119 = vunpack.c.l.s8.bf16 %v5855
        %v6120 = vunpack.c.l.s8.bf16 %v5856
        %v6121 = vunpack.c.l.s8.bf16 %v5857
        %v6122 = vunpack.c.l.s8.bf16 %v5858
        %v6123 = vunpack.c.l.s8.bf16 %v5859
        %v6124 = vunpack.c.h.s8.bf16 %v5852
        %v6125 = vunpack.c.h.s8.bf16 %v5853
        %v6126 = vunpack.c.h.s8.bf16 %v5854
        %v6127 = vunpack.c.h.s8.bf16 %v5855
        %v6128 = vunpack.c.h.s8.bf16 %v5856
        %v6129 = vunpack.c.h.s8.bf16 %v5857
        %v6130 = vunpack.c.h.s8.bf16 %v5858
        %v6131 = vunpack.c.h.s8.bf16 %v5859
        %v6132 = vunpack.c.l.s8.bf16 %v5860
        %v6133 = vunpack.c.l.s8.bf16 %v5861
        %v6134 = vunpack.c.l.s8.bf16 %v5862
        %v6135 = vunpack.c.l.s8.bf16 %v5863
        %v6136 = vunpack.c.l.s8.bf16 %v5864
        %v6137 = vunpack.c.l.s8.bf16 %v5865
        %v6138 = vunpack.c.l.s8.bf16 %v5866
        %v6139 = vunpack.c.l.s8.bf16 %v5867
        %v6140 = vunpack.c.h.s8.bf16 %v5860
        %v6141 = vunpack.c.h.s8.bf16 %v5861
        %v6142 = vunpack.c.h.s8.bf16 %v5862
        %v6143 = vunpack.c.h.s8.bf16 %v5863
        %v6144 = vunpack.c.h.s8.bf16 %v5864
        %v6145 = vunpack.c.h.s8.bf16 %v5865
        %v6146 = vunpack.c.h.s8.bf16 %v5866
        %v6147 = vunpack.c.h.s8.bf16 %v5867
        %v6148 = vunpack.c.l.s8.bf16 %v5868
        %v6149 = vunpack.c.l.s8.bf16 %v5869
        %v6150 = vunpack.c.l.s8.bf16 %v5870
        %v6151 = vunpack.c.l.s8.bf16 %v5871
        %v6152 = vunpack.c.l.s8.bf16 %v5872
        %v6153 = vunpack.c.l.s8.bf16 %v5873
        %v6154 = vunpack.c.l.s8.bf16 %v5874
        %v6155 = vunpack.c.l.s8.bf16 %v5875
        %v6156 = vunpack.c.h.s8.bf16 %v5868
        %v6157 = vunpack.c.h.s8.bf16 %v5869
        %v6158 = vunpack.c.h.s8.bf16 %v5870
        %v6159 = vunpack.c.h.s8.bf16 %v5871
        %v6160 = vunpack.c.h.s8.bf16 %v5872
        %v6161 = vunpack.c.h.s8.bf16 %v5873
        %v6162 = vunpack.c.h.s8.bf16 %v5874
        %v6163 = vunpack.c.h.s8.bf16 %v5875
        %v6164 = vunpack.c.l.s8.bf16 %v5876
        %v6165 = vunpack.c.l.s8.bf16 %v5877
        %v6166 = vunpack.c.l.s8.bf16 %v5878
        %v6167 = vunpack.c.l.s8.bf16 %v5879
        %v6168 = vunpack.c.l.s8.bf16 %v5880
        %v6169 = vunpack.c.l.s8.bf16 %v5881
        %v6170 = vunpack.c.l.s8.bf16 %v5882
        %v6171 = vunpack.c.l.s8.bf16 %v5883
        %v6172 = vunpack.c.h.s8.bf16 %v5876
        %v6173 = vunpack.c.h.s8.bf16 %v5877
        %v6174 = vunpack.c.h.s8.bf16 %v5878
        %v6175 = vunpack.c.h.s8.bf16 %v5879
        %v6176 = vunpack.c.h.s8.bf16 %v5880
        %v6177 = vunpack.c.h.s8.bf16 %v5881
        %v6178 = vunpack.c.h.s8.bf16 %v5882
        %v6179 = vunpack.c.h.s8.bf16 %v5883
        %v6180 = vunpack.c.l.s8.bf16 %v5884
        %v6181 = vunpack.c.l.s8.bf16 %v5885
        %v6182 = vunpack.c.l.s8.bf16 %v5886
        %v6183 = vunpack.c.l.s8.bf16 %v5887
        %v6184 = vunpack.c.l.s8.bf16 %v5888
        %v6185 = vunpack.c.l.s8.bf16 %v5889
        %v6186 = vunpack.c.l.s8.bf16 %v5890
        %v6187 = vunpack.c.l.s8.bf16 %v5891
        %v6188 = vunpack.c.h.s8.bf16 %v5884
        %v6189 = vunpack.c.h.s8.bf16 %v5885
        %v6190 = vunpack.c.h.s8.bf16 %v5886
        %v6191 = vunpack.c.h.s8.bf16 %v5887
        %v6192 = vunpack.c.h.s8.bf16 %v5888
        %v6193 = vunpack.c.h.s8.bf16 %v5889
        %v6194 = vunpack.c.h.s8.bf16 %v5890
        %v6195 = vunpack.c.h.s8.bf16 %v5891
        %v6196 = vunpack.c.l.s8.bf16 %v5892
        %v6197 = vunpack.c.l.s8.bf16 %v5893
        %v6198 = vunpack.c.l.s8.bf16 %v5894
        %v6199 = vunpack.c.l.s8.bf16 %v5895
        %v6200 = vunpack.c.l.s8.bf16 %v5896
        %v6201 = vunpack.c.l.s8.bf16 %v5897
        %v6202 = vunpack.c.l.s8.bf16 %v5898
        %v6203 = vunpack.c.l.s8.bf16 %v5899
        %v6204 = vunpack.c.h.s8.bf16 %v5892
        %v6205 = vunpack.c.h.s8.bf16 %v5893
        %v6206 = vunpack.c.h.s8.bf16 %v5894
        %v6207 = vunpack.c.h.s8.bf16 %v5895
        %v6208 = vunpack.c.h.s8.bf16 %v5896
        %v6209 = vunpack.c.h.s8.bf16 %v5897
        %v6210 = vunpack.c.h.s8.bf16 %v5898
        %v6211 = vunpack.c.h.s8.bf16 %v5899
        %v6212 = vunpack.c.l.s8.bf16 %v5900
        %v6213 = vunpack.c.l.s8.bf16 %v5901
        %v6214 = vunpack.c.l.s8.bf16 %v5902
        %v6215 = vunpack.c.l.s8.bf16 %v5903
        %v6216 = vunpack.c.l.s8.bf16 %v5904
        %v6217 = vunpack.c.l.s8.bf16 %v5905
        %v6218 = vunpack.c.l.s8.bf16 %v5906
        %v6219 = vunpack.c.l.s8.bf16 %v5907
        %v6220 = vunpack.c.h.s8.bf16 %v5900
        %v6221 = vunpack.c.h.s8.bf16 %v5901
        %v6222 = vunpack.c.h.s8.bf16 %v5902
        %v6223 = vunpack.c.h.s8.bf16 %v5903
        %v6224 = vunpack.c.h.s8.bf16 %v5904
        %v6225 = vunpack.c.h.s8.bf16 %v5905
        %v6226 = vunpack.c.h.s8.bf16 %v5906
        %v6227 = vunpack.c.h.s8.bf16 %v5907
        %v6228 = vunpack.c.l.s8.bf16 %v5908
        %v6229 = vunpack.c.l.s8.bf16 %v5909
        %v6230 = vunpack.c.l.s8.bf16 %v5910
        %v6231 = vunpack.c.l.s8.bf16 %v5911
        %v6232 = vunpack.c.l.s8.bf16 %v5912
        %v6233 = vunpack.c.l.s8.bf16 %v5913
        %v6234 = vunpack.c.l.s8.bf16 %v5914
        %v6235 = vunpack.c.l.s8.bf16 %v5915
        %v6236 = vunpack.c.h.s8.bf16 %v5908
        %v6237 = vunpack.c.h.s8.bf16 %v5909
        %v6238 = vunpack.c.h.s8.bf16 %v5910
        %v6239 = vunpack.c.h.s8.bf16 %v5911
        %v6240 = vunpack.c.h.s8.bf16 %v5912
        %v6241 = vunpack.c.h.s8.bf16 %v5913
        %v6242 = vunpack.c.h.s8.bf16 %v5914
        %v6243 = vunpack.c.h.s8.bf16 %v5915
        %v6244 = vunpack.c.l.s8.bf16 %v5916
        %v6245 = vunpack.c.l.s8.bf16 %v5917
        %v6246 = vunpack.c.l.s8.bf16 %v5918
        %v6247 = vunpack.c.l.s8.bf16 %v5919
        %v6248 = vunpack.c.l.s8.bf16 %v5920
        %v6249 = vunpack.c.l.s8.bf16 %v5921
        %v6250 = vunpack.c.l.s8.bf16 %v5922
        %v6251 = vunpack.c.l.s8.bf16 %v5923
        %v6252 = vunpack.c.h.s8.bf16 %v5916
        %v6253 = vunpack.c.h.s8.bf16 %v5917
        %v6254 = vunpack.c.h.s8.bf16 %v5918
        %v6255 = vunpack.c.h.s8.bf16 %v5919
        %v6256 = vunpack.c.h.s8.bf16 %v5920
        %v6257 = vunpack.c.h.s8.bf16 %v5921
        %v6258 = vunpack.c.h.s8.bf16 %v5922
        %v6259 = vunpack.c.h.s8.bf16 %v5923
        %v6260 = vunpack.c.l.s8.bf16 %v5924
        %v6261 = vunpack.c.l.s8.bf16 %v5925
        %v6262 = vunpack.c.l.s8.bf16 %v5926
        %v6263 = vunpack.c.l.s8.bf16 %v5927
        %v6264 = vunpack.c.l.s8.bf16 %v5928
        %v6265 = vunpack.c.l.s8.bf16 %v5929
        %v6266 = vunpack.c.l.s8.bf16 %v5930
        %v6267 = vunpack.c.l.s8.bf16 %v5931
        %v6268 = vunpack.c.h.s8.bf16 %v5924
        %v6269 = vunpack.c.h.s8.bf16 %v5925
        %v6270 = vunpack.c.h.s8.bf16 %v5926
        %v6271 = vunpack.c.h.s8.bf16 %v5927
        %v6272 = vunpack.c.h.s8.bf16 %v5928
        %v6273 = vunpack.c.h.s8.bf16 %v5929
        %v6274 = vunpack.c.h.s8.bf16 %v5930
        %v6275 = vunpack.c.h.s8.bf16 %v5931
        %v6276 = vunpack.c.l.s8.bf16 %v5932
        %v6277 = vunpack.c.l.s8.bf16 %v5933
        %v6278 = vunpack.c.l.s8.bf16 %v5934
        %v6279 = vunpack.c.l.s8.bf16 %v5935
        %v6280 = vunpack.c.l.s8.bf16 %v5936
        %v6281 = vunpack.c.l.s8.bf16 %v5937
        %v6282 = vunpack.c.l.s8.bf16 %v5938
        %v6283 = vunpack.c.l.s8.bf16 %v5939
        %v6284 = vunpack.c.h.s8.bf16 %v5932
        %v6285 = vunpack.c.h.s8.bf16 %v5933
        %v6286 = vunpack.c.h.s8.bf16 %v5934
        %v6287 = vunpack.c.h.s8.bf16 %v5935
        %v6288 = vunpack.c.h.s8.bf16 %v5936
        %v6289 = vunpack.c.h.s8.bf16 %v5937
        %v6290 = vunpack.c.h.s8.bf16 %v5938
        %v6291 = vunpack.c.h.s8.bf16 %v5939
        %v6292 = vunpack.c.l.s8.bf16 %v5940
        %v6293 = vunpack.c.l.s8.bf16 %v5941
        %v6294 = vunpack.c.l.s8.bf16 %v5942
        %v6295 = vunpack.c.l.s8.bf16 %v5943
        %v6296 = vunpack.c.l.s8.bf16 %v5944
        %v6297 = vunpack.c.l.s8.bf16 %v5945
        %v6298 = vunpack.c.l.s8.bf16 %v5946
        %v6299 = vunpack.c.l.s8.bf16 %v5947
        %v6300 = vunpack.c.h.s8.bf16 %v5940
        %v6301 = vunpack.c.h.s8.bf16 %v5941
        %v6302 = vunpack.c.h.s8.bf16 %v5942
        %v6303 = vunpack.c.h.s8.bf16 %v5943
        %v6304 = vunpack.c.h.s8.bf16 %v5944
        %v6305 = vunpack.c.h.s8.bf16 %v5945
        %v6306 = vunpack.c.h.s8.bf16 %v5946
        %v6307 = vunpack.c.h.s8.bf16 %v5947
        %v6308 = vunpack.c.l.s8.bf16 %v5948
        %v6309 = vunpack.c.l.s8.bf16 %v5949
        %v6310 = vunpack.c.l.s8.bf16 %v5950
        %v6311 = vunpack.c.l.s8.bf16 %v5951
        %v6312 = vunpack.c.l.s8.bf16 %v5952
        %v6313 = vunpack.c.l.s8.bf16 %v5953
        %v6314 = vunpack.c.l.s8.bf16 %v5954
        %v6315 = vunpack.c.l.s8.bf16 %v5955
        %v6316 = vunpack.c.h.s8.bf16 %v5948
        %v6317 = vunpack.c.h.s8.bf16 %v5949
        %v6318 = vunpack.c.h.s8.bf16 %v5950
        %v6319 = vunpack.c.h.s8.bf16 %v5951
        %v6320 = vunpack.c.h.s8.bf16 %v5952
        %v6321 = vunpack.c.h.s8.bf16 %v5953
        %v6322 = vunpack.c.h.s8.bf16 %v5954
        %v6323 = vunpack.c.h.s8.bf16 %v5955
        %v6324 = vunpack.c.l.s8.bf16 %v5956
        %v6325 = vunpack.c.l.s8.bf16 %v5957
        %v6326 = vunpack.c.l.s8.bf16 %v5958
        %v6327 = vunpack.c.l.s8.bf16 %v5959
        %v6328 = vunpack.c.l.s8.bf16 %v5960
        %v6329 = vunpack.c.l.s8.bf16 %v5961
        %v6330 = vunpack.c.l.s8.bf16 %v5962
        %v6331 = vunpack.c.l.s8.bf16 %v5963
        %v6332 = vunpack.c.h.s8.bf16 %v5956
        %v6333 = vunpack.c.h.s8.bf16 %v5957
        %v6334 = vunpack.c.h.s8.bf16 %v5958
        %v6335 = vunpack.c.h.s8.bf16 %v5959
        %v6336 = vunpack.c.h.s8.bf16 %v5960
        %v6337 = vunpack.c.h.s8.bf16 %v5961
        %v6338 = vunpack.c.h.s8.bf16 %v5962
        %v6339 = vunpack.c.h.s8.bf16 %v5963
        %v6340 = vunpack.c.l.s8.bf16 %v5964
        %v6341 = vunpack.c.l.s8.bf16 %v5965
        %v6342 = vunpack.c.l.s8.bf16 %v5966
        %v6343 = vunpack.c.l.s8.bf16 %v5967
        %v6344 = vunpack.c.l.s8.bf16 %v5968
        %v6345 = vunpack.c.l.s8.bf16 %v5969
        %v6346 = vunpack.c.l.s8.bf16 %v5970
        %v6347 = vunpack.c.l.s8.bf16 %v5971
        %v6348 = vunpack.c.h.s8.bf16 %v5964
        %v6349 = vunpack.c.h.s8.bf16 %v5965
        %v6350 = vunpack.c.h.s8.bf16 %v5966
        %v6351 = vunpack.c.h.s8.bf16 %v5967
        %v6352 = vunpack.c.h.s8.bf16 %v5968
        %v6353 = vunpack.c.h.s8.bf16 %v5969
        %v6354 = vunpack.c.h.s8.bf16 %v5970
        %v6355 = vunpack.c.h.s8.bf16 %v5971
        %v6356 = vunpack.c.l.s8.bf16 %v5972
        %v6357 = vunpack.c.l.s8.bf16 %v5973
        %v6358 = vunpack.c.l.s8.bf16 %v5974
        %v6359 = vunpack.c.l.s8.bf16 %v5975
        %v6360 = vunpack.c.l.s8.bf16 %v5976
        %v6361 = vunpack.c.l.s8.bf16 %v5977
        %v6362 = vunpack.c.l.s8.bf16 %v5978
        %v6363 = vunpack.c.l.s8.bf16 %v5979
        %v6364 = vunpack.c.h.s8.bf16 %v5972
        %v6365 = vunpack.c.h.s8.bf16 %v5973
        %v6366 = vunpack.c.h.s8.bf16 %v5974
        %v6367 = vunpack.c.h.s8.bf16 %v5975
        %v6368 = vunpack.c.h.s8.bf16 %v5976
        %v6369 = vunpack.c.h.s8.bf16 %v5977
        %v6370 = vunpack.c.h.s8.bf16 %v5978
        %v6371 = vunpack.c.h.s8.bf16 %v5979
        %v6372 = vunpack.c.l.s8.bf16 %v5980
        %v6373 = vunpack.c.l.s8.bf16 %v5981
        %v6374 = vunpack.c.l.s8.bf16 %v5982
        %v6375 = vunpack.c.l.s8.bf16 %v5983
        %v6376 = vunpack.c.l.s8.bf16 %v5984
        %v6377 = vunpack.c.l.s8.bf16 %v5985
        %v6378 = vunpack.c.l.s8.bf16 %v5986
        %v6379 = vunpack.c.l.s8.bf16 %v5987
        %v6380 = vunpack.c.h.s8.bf16 %v5980
        %v6381 = vunpack.c.h.s8.bf16 %v5981
        %v6382 = vunpack.c.h.s8.bf16 %v5982
        %v6383 = vunpack.c.h.s8.bf16 %v5983
        %v6384 = vunpack.c.h.s8.bf16 %v5984
        %v6385 = vunpack.c.h.s8.bf16 %v5985
        %v6386 = vunpack.c.h.s8.bf16 %v5986
        %v6387 = vunpack.c.h.s8.bf16 %v5987
        %v6388 = vunpack.c.l.s8.bf16 %v5988
        %v6389 = vunpack.c.l.s8.bf16 %v5989
        %v6390 = vunpack.c.l.s8.bf16 %v5990
        %v6391 = vunpack.c.l.s8.bf16 %v5991
        %v6392 = vunpack.c.l.s8.bf16 %v5992
        %v6393 = vunpack.c.l.s8.bf16 %v5993
        %v6394 = vunpack.c.l.s8.bf16 %v5994
        %v6395 = vunpack.c.l.s8.bf16 %v5995
        %v6396 = vunpack.c.h.s8.bf16 %v5988
        %v6397 = vunpack.c.h.s8.bf16 %v5989
        %v6398 = vunpack.c.h.s8.bf16 %v5990
        %v6399 = vunpack.c.h.s8.bf16 %v5991
        %v6400 = vunpack.c.h.s8.bf16 %v5992
        %v6401 = vunpack.c.h.s8.bf16 %v5993
        %v6402 = vunpack.c.h.s8.bf16 %v5994
        %v6403 = vunpack.c.h.s8.bf16 %v5995
        %v6404 = vunpack.c.l.s8.bf16 %v5996
        %v6405 = vunpack.c.l.s8.bf16 %v5997
        %v6406 = vunpack.c.l.s8.bf16 %v5998
        %v6407 = vunpack.c.l.s8.bf16 %v5999
        %v6408 = vunpack.c.l.s8.bf16 %v6000
        %v6409 = vunpack.c.l.s8.bf16 %v6001
        %v6410 = vunpack.c.l.s8.bf16 %v6002
        %v6411 = vunpack.c.l.s8.bf16 %v6003
        %v6412 = vunpack.c.h.s8.bf16 %v5996
        %v6413 = vunpack.c.h.s8.bf16 %v5997
        %v6414 = vunpack.c.h.s8.bf16 %v5998
        %v6415 = vunpack.c.h.s8.bf16 %v5999
        %v6416 = vunpack.c.h.s8.bf16 %v6000
        %v6417 = vunpack.c.h.s8.bf16 %v6001
        %v6418 = vunpack.c.h.s8.bf16 %v6002
        %v6419 = vunpack.c.h.s8.bf16 %v6003
        %v6420 = vunpack.c.l.s8.bf16 %v6004
        %v6421 = vunpack.c.l.s8.bf16 %v6005
        %v6422 = vunpack.c.l.s8.bf16 %v6006
        %v6423 = vunpack.c.l.s8.bf16 %v6007
        %v6424 = vunpack.c.l.s8.bf16 %v6008
        %v6425 = vunpack.c.l.s8.bf16 %v6009
        %v6426 = vunpack.c.l.s8.bf16 %v6010
        %v6427 = vunpack.c.l.s8.bf16 %v6011
        %v6428 = vunpack.c.h.s8.bf16 %v6004
        %v6429 = vunpack.c.h.s8.bf16 %v6005
        %v6430 = vunpack.c.h.s8.bf16 %v6006
        %v6431 = vunpack.c.h.s8.bf16 %v6007
        %v6432 = vunpack.c.h.s8.bf16 %v6008
        %v6433 = vunpack.c.h.s8.bf16 %v6009
        %v6434 = vunpack.c.h.s8.bf16 %v6010
        %v6435 = vunpack.c.h.s8.bf16 %v6011
        %v6436 = vunpack.c.l.s8.bf16 %v6012
        %v6437 = vunpack.c.l.s8.bf16 %v6013
        %v6438 = vunpack.c.l.s8.bf16 %v6014
        %v6439 = vunpack.c.l.s8.bf16 %v6015
        %v6440 = vunpack.c.l.s8.bf16 %v6016
        %v6441 = vunpack.c.l.s8.bf16 %v6017
        %v6442 = vunpack.c.l.s8.bf16 %v6018
        %v6443 = vunpack.c.l.s8.bf16 %v6019
        %v6444 = vunpack.c.h.s8.bf16 %v6012
        %v6445 = vunpack.c.h.s8.bf16 %v6013
        %v6446 = vunpack.c.h.s8.bf16 %v6014
        %v6447 = vunpack.c.h.s8.bf16 %v6015
        %v6448 = vunpack.c.h.s8.bf16 %v6016
        %v6449 = vunpack.c.h.s8.bf16 %v6017
        %v6450 = vunpack.c.h.s8.bf16 %v6018
        %v6451 = vunpack.c.h.s8.bf16 %v6019
        %v6452 = vunpack.c.l.s8.bf16 %v6020
        %v6453 = vunpack.c.l.s8.bf16 %v6021
        %v6454 = vunpack.c.l.s8.bf16 %v6022
        %v6455 = vunpack.c.l.s8.bf16 %v6023
        %v6456 = vunpack.c.l.s8.bf16 %v6024
        %v6457 = vunpack.c.l.s8.bf16 %v6025
        %v6458 = vunpack.c.l.s8.bf16 %v6026
        %v6459 = vunpack.c.l.s8.bf16 %v6027
        %v6460 = vunpack.c.h.s8.bf16 %v6020
        %v6461 = vunpack.c.h.s8.bf16 %v6021
        %v6462 = vunpack.c.h.s8.bf16 %v6022
        %v6463 = vunpack.c.h.s8.bf16 %v6023
        %v6464 = vunpack.c.h.s8.bf16 %v6024
        %v6465 = vunpack.c.h.s8.bf16 %v6025
        %v6466 = vunpack.c.h.s8.bf16 %v6026
        %v6467 = vunpack.c.h.s8.bf16 %v6027
        %v6468 = vunpack.c.l.s8.bf16 %v6028
        %v6469 = vunpack.c.l.s8.bf16 %v6029
        %v6470 = vunpack.c.l.s8.bf16 %v6030
        %v6471 = vunpack.c.l.s8.bf16 %v6031
        %v6472 = vunpack.c.l.s8.bf16 %v6032
        %v6473 = vunpack.c.l.s8.bf16 %v6033
        %v6474 = vunpack.c.l.s8.bf16 %v6034
        %v6475 = vunpack.c.l.s8.bf16 %v6035
        %v6476 = vunpack.c.h.s8.bf16 %v6028
        %v6477 = vunpack.c.h.s8.bf16 %v6029
        %v6478 = vunpack.c.h.s8.bf16 %v6030
        %v6479 = vunpack.c.h.s8.bf16 %v6031
        %v6480 = vunpack.c.h.s8.bf16 %v6032
        %v6481 = vunpack.c.h.s8.bf16 %v6033
        %v6482 = vunpack.c.h.s8.bf16 %v6034
        %v6483 = vunpack.c.h.s8.bf16 %v6035
        %v6484 = vunpack.c.l.s8.bf16 %v6036
        %v6485 = vunpack.c.l.s8.bf16 %v6037
        %v6486 = vunpack.c.l.s8.bf16 %v6038
        %v6487 = vunpack.c.l.s8.bf16 %v6039
        %v6488 = vunpack.c.l.s8.bf16 %v6040
        %v6489 = vunpack.c.l.s8.bf16 %v6041
        %v6490 = vunpack.c.l.s8.bf16 %v6042
        %v6491 = vunpack.c.l.s8.bf16 %v6043
        %v6492 = vunpack.c.h.s8.bf16 %v6036
        %v6493 = vunpack.c.h.s8.bf16 %v6037
        %v6494 = vunpack.c.h.s8.bf16 %v6038
        %v6495 = vunpack.c.h.s8.bf16 %v6039
        %v6496 = vunpack.c.h.s8.bf16 %v6040
        %v6497 = vunpack.c.h.s8.bf16 %v6041
        %v6498 = vunpack.c.h.s8.bf16 %v6042
        %v6499 = vunpack.c.h.s8.bf16 %v6043
        %v6500 = vunpack.c.l.s8.bf16 %v6044
        %v6501 = vunpack.c.l.s8.bf16 %v6045
        %v6502 = vunpack.c.l.s8.bf16 %v6046
        %v6503 = vunpack.c.l.s8.bf16 %v6047
        %v6504 = vunpack.c.l.s8.bf16 %v6048
        %v6505 = vunpack.c.l.s8.bf16 %v6049
        %v6506 = vunpack.c.l.s8.bf16 %v6050
        %v6507 = vunpack.c.l.s8.bf16 %v6051
        %v6508 = vunpack.c.h.s8.bf16 %v6044
        %v6509 = vunpack.c.h.s8.bf16 %v6045
        %v6510 = vunpack.c.h.s8.bf16 %v6046
        %v6511 = vunpack.c.h.s8.bf16 %v6047
        %v6512 = vunpack.c.h.s8.bf16 %v6048
        %v6513 = vunpack.c.h.s8.bf16 %v6049
        %v6514 = vunpack.c.h.s8.bf16 %v6050
        %v6515 = vunpack.c.h.s8.bf16 %v6051
        %v6516 = vunpack.c.l.s8.bf16 %v6052
        %v6517 = vunpack.c.l.s8.bf16 %v6053
        %v6518 = vunpack.c.l.s8.bf16 %v6054
        %v6519 = vunpack.c.l.s8.bf16 %v6055
        %v6520 = vunpack.c.l.s8.bf16 %v6056
        %v6521 = vunpack.c.l.s8.bf16 %v6057
        %v6522 = vunpack.c.l.s8.bf16 %v6058
        %v6523 = vunpack.c.l.s8.bf16 %v6059
        %v6524 = vunpack.c.h.s8.bf16 %v6052
        %v6525 = vunpack.c.h.s8.bf16 %v6053
        %v6526 = vunpack.c.h.s8.bf16 %v6054
        %v6527 = vunpack.c.h.s8.bf16 %v6055
        %v6528 = vunpack.c.h.s8.bf16 %v6056
        %v6529 = vunpack.c.h.s8.bf16 %v6057
        %v6530 = vunpack.c.h.s8.bf16 %v6058
        %v6531 = vunpack.c.h.s8.bf16 %v6059
        %v6532 = vunpack.c.l.s8.bf16 %v6060
        %v6533 = vunpack.c.l.s8.bf16 %v6061
        %v6534 = vunpack.c.l.s8.bf16 %v6062
        %v6535 = vunpack.c.l.s8.bf16 %v6063
        %v6536 = vunpack.c.l.s8.bf16 %v6064
        %v6537 = vunpack.c.l.s8.bf16 %v6065
        %v6538 = vunpack.c.l.s8.bf16 %v6066
        %v6539 = vunpack.c.l.s8.bf16 %v6067
        %v6540 = vunpack.c.h.s8.bf16 %v6060
        %v6541 = vunpack.c.h.s8.bf16 %v6061
        %v6542 = vunpack.c.h.s8.bf16 %v6062
        %v6543 = vunpack.c.h.s8.bf16 %v6063
        %v6544 = vunpack.c.h.s8.bf16 %v6064
        %v6545 = vunpack.c.h.s8.bf16 %v6065
        %v6546 = vunpack.c.h.s8.bf16 %v6066
        %v6547 = vunpack.c.h.s8.bf16 %v6067
        %v6548 = vunpack.c.l.s8.bf16 %v6068
        %v6549 = vunpack.c.l.s8.bf16 %v6069
        %v6550 = vunpack.c.l.s8.bf16 %v6070
        %v6551 = vunpack.c.l.s8.bf16 %v6071
        %v6552 = vunpack.c.l.s8.bf16 %v6072
        %v6553 = vunpack.c.l.s8.bf16 %v6073
        %v6554 = vunpack.c.l.s8.bf16 %v6074
        %v6555 = vunpack.c.l.s8.bf16 %v6075
        %v6556 = vunpack.c.h.s8.bf16 %v6068
        %v6557 = vunpack.c.h.s8.bf16 %v6069
        %v6558 = vunpack.c.h.s8.bf16 %v6070
        %v6559 = vunpack.c.h.s8.bf16 %v6071
        %v6560 = vunpack.c.h.s8.bf16 %v6072
        %v6561 = vunpack.c.h.s8.bf16 %v6073
        %v6562 = vunpack.c.h.s8.bf16 %v6074
        %v6563 = vunpack.c.h.s8.bf16 %v6075
        %v6564 = vunpack.c.l.s8.bf16 %v6076
        %v6565 = vunpack.c.l.s8.bf16 %v6077
        %v6566 = vunpack.c.l.s8.bf16 %v6078
        %v6567 = vunpack.c.l.s8.bf16 %v6079
        %v6568 = vunpack.c.l.s8.bf16 %v6080
        %v6569 = vunpack.c.l.s8.bf16 %v6081
        %v6570 = vunpack.c.l.s8.bf16 %v6082
        %v6571 = vunpack.c.l.s8.bf16 %v6083
        %v6572 = vunpack.c.h.s8.bf16 %v6076
        %v6573 = vunpack.c.h.s8.bf16 %v6077
        %v6574 = vunpack.c.h.s8.bf16 %v6078
        %v6575 = vunpack.c.h.s8.bf16 %v6079
        %v6576 = vunpack.c.h.s8.bf16 %v6080
        %v6577 = vunpack.c.h.s8.bf16 %v6081
        %v6578 = vunpack.c.h.s8.bf16 %v6082
        %v6579 = vunpack.c.h.s8.bf16 %v6083
        %v6580 = vunpack.c.l.s8.bf16 %v6084
        %v6581 = vunpack.c.l.s8.bf16 %v6085
        %v6582 = vunpack.c.l.s8.bf16 %v6086
        %v6583 = vunpack.c.l.s8.bf16 %v6087
        %v6584 = vunpack.c.l.s8.bf16 %v6088
        %v6585 = vunpack.c.l.s8.bf16 %v6089
        %v6586 = vunpack.c.l.s8.bf16 %v6090
        %v6587 = vunpack.c.l.s8.bf16 %v6091
        %v6588 = vunpack.c.h.s8.bf16 %v6084
        %v6589 = vunpack.c.h.s8.bf16 %v6085
        %v6590 = vunpack.c.h.s8.bf16 %v6086
        %v6591 = vunpack.c.h.s8.bf16 %v6087
        %v6592 = vunpack.c.h.s8.bf16 %v6088
        %v6593 = vunpack.c.h.s8.bf16 %v6089
        %v6594 = vunpack.c.h.s8.bf16 %v6090
        %v6595 = vunpack.c.h.s8.bf16 %v6091
        %v6596 = vunpack.c.l.s8.bf16 %v6092
        %v6597 = vunpack.c.l.s8.bf16 %v6093
        %v6598 = vunpack.c.l.s8.bf16 %v6094
        %v6599 = vunpack.c.l.s8.bf16 %v6095
        %v6600 = vunpack.c.l.s8.bf16 %v6096
        %v6601 = vunpack.c.l.s8.bf16 %v6097
        %v6602 = vunpack.c.l.s8.bf16 %v6098
        %v6603 = vunpack.c.l.s8.bf16 %v6099
        %v6604 = vunpack.c.h.s8.bf16 %v6092
        %v6605 = vunpack.c.h.s8.bf16 %v6093
        %v6606 = vunpack.c.h.s8.bf16 %v6094
        %v6607 = vunpack.c.h.s8.bf16 %v6095
        %v6608 = vunpack.c.h.s8.bf16 %v6096
        %v6609 = vunpack.c.h.s8.bf16 %v6097
        %v6610 = vunpack.c.h.s8.bf16 %v6098
        %v6611 = vunpack.c.h.s8.bf16 %v6099
        %v6613 = vcombine.high %v5843, %v5843
        %v6615 = vunpack.c.l.s4 1966171168
        %v6616 = vunpack.c.0.s8 %v6615
        %v6617 = vlaneseq
        %v6618 = vshrl.u32 %v6617, 7
        %v6619 = vsub.s32 %v6616, %v6618
        %v6620 = vrot.slane %v5843, %v6619
        %v6622 = vunpack.c.l.s4 1966171168
        %v6623 = vunpack.c.0.s8 %v6622
        %v6624 = vlaneseq
        %v6625 = vshrl.u32 %v6624, 7
        %v6626 = vsub.s32 %v6623, %v6625
        %v6627 = vrot.slane %v6613, %v6626
        %v6628 = vcombine.high %v6620, %v6620
        %v6629 = vcombine.high %v6627, %v6627
        %v6631 = vunpack.c.l.s4 1966171168
        %v6632 = vunpack.c.0.s8 %v6631
        %v6633 = vlaneseq
        %v6634 = vshrl.u32 %v6633, 7
        %v6635 = vsub.s32 %v6632, %v6634
        %v6636 = vrot.slane %v6620, %v6635
        %v6638 = vunpack.c.l.s4 1966171168
        %v6639 = vunpack.c.0.s8 %v6638
        %v6640 = vlaneseq
        %v6641 = vshrl.u32 %v6640, 7
        %v6642 = vsub.s32 %v6639, %v6641
        %v6643 = vrot.slane %v6627, %v6642
        %v6645 = vunpack.c.l.s4 1966171168
        %v6646 = vunpack.c.0.s8 %v6645
        %v6647 = vlaneseq
        %v6648 = vshrl.u32 %v6647, 7
        %v6649 = vsub.s32 %v6646, %v6648
        %v6650 = vrot.slane %v6628, %v6649
        %v6652 = vunpack.c.l.s4 1966171168
        %v6653 = vunpack.c.0.s8 %v6652
        %v6654 = vlaneseq
        %v6655 = vshrl.u32 %v6654, 7
        %v6656 = vsub.s32 %v6653, %v6655
        %v6657 = vrot.slane %v6629, %v6656
        %v6658 = vcombine.high %v6636, %v6636
        %v6659 = vcombine.high %v6643, %v6643
        %v6660 = vcombine.high %v6650, %v6650
        %v6661 = vcombine.high %v6657, %v6657
        %6670 = vmatprep.subr.bf16.mxu0 %v6101
        %6671 = vmatpush1.bf16.msra.mxu0 %v6100
        %6672 = vmatprep.subr.bf16.mxu0 %v6109
        %6673 = vmatpush1.bf16.msra.mxu0 %v6108
        %6674 = vmatprep.subr.bf16.mxu0 %v6117
        %6675 = vmatpush1.bf16.msra.mxu0 %v6116
        %6676 = vmatprep.subr.bf16.mxu0 %v6125
        %6677 = vmatpush1.bf16.msra.mxu0 %v6124
        %6678 = vmatprep.subr.bf16.mxu0 %v6133
        %6679 = vmatpush1.bf16.msra.mxu0 %v6132
        %6680 = vmatprep.subr.bf16.mxu0 %v6141
        %6681 = vmatpush1.bf16.msra.mxu0 %v6140
        %6682 = vmatprep.subr.bf16.mxu0 %v6149
        %6683 = vmatpush1.bf16.msra.mxu0 %v6148
        %6684 = vmatprep.subr.bf16.mxu0 %v6157
        %6685 = vmatpush1.bf16.msra.mxu0 %v6156
        %6686 = vmatprep.subr.bf16.mxu0 %v6165
        %6687 = vmatpush1.bf16.msra.mxu0 %v6164
        %6688 = vmatprep.subr.bf16.mxu0 %v6173
        %6689 = vmatpush1.bf16.msra.mxu0 %v6172
        %6690 = vmatprep.subr.bf16.mxu0 %v6181
        %6691 = vmatpush1.bf16.msra.mxu0 %v6180
        %6692 = vmatprep.subr.bf16.mxu0 %v6189
        %6693 = vmatpush1.bf16.msra.mxu0 %v6188
        %6694 = vmatprep.subr.bf16.mxu0 %v6197
        %6695 = vmatpush1.bf16.msra.mxu0 %v6196
        %6696 = vmatprep.subr.bf16.mxu0 %v6205
        %6697 = vmatpush1.bf16.msra.mxu0 %v6204
        %6698 = vmatprep.subr.bf16.mxu0 %v6213
        %6699 = vmatpush1.bf16.msra.mxu0 %v6212
        %6700 = vmatprep.subr.bf16.mxu0 %v6221
        %6701 = vmatpush1.bf16.msra.mxu0 %v6220
        %6702 = vmatprep.mubr.bf16.mxu0 %v6650
        %6703 = vmatmul.mubr.bf16.gmra.mrb[0].mxu0 %v6636
        %v6704 = vpop.f32.mrb[0].mxu0
        %v6705 = vadd.f32 0.0, %v6704
        %v6706 = vpop.f32.mrb[0].mxu0
        %v6707 = vadd.f32 0.0, %v6706
        %v6708 = vpop.f32.mrb[0].mxu0
        %v6709 = vpop.f32.mrb[0].mxu0
        %6710 = vdwg.mxu0
        %6711 = vmatprep.subr.bf16.mxu0 %v6229
        %6712 = vmatpush1.bf16.msra.mxu0 %v6228
        %6713 = vmatprep.subr.bf16.mxu0 %v6237
        %6714 = vmatpush1.bf16.msra.mxu0 %v6236
        %6715 = vmatprep.subr.bf16.mxu0 %v6245
        %6716 = vmatpush1.bf16.msra.mxu0 %v6244
        %6717 = vmatprep.subr.bf16.mxu0 %v6253
        %6718 = vmatpush1.bf16.msra.mxu0 %v6252
        %6719 = vmatprep.subr.bf16.mxu0 %v6261
        %6720 = vmatpush1.bf16.msra.mxu0 %v6260
        %6721 = vmatprep.subr.bf16.mxu0 %v6269
        %6722 = vmatpush1.bf16.msra.mxu0 %v6268
        %6723 = vmatprep.subr.bf16.mxu0 %v6277
        %6724 = vmatpush1.bf16.msra.mxu0 %v6276
        %6725 = vmatprep.subr.bf16.mxu0 %v6285
        %6726 = vmatpush1.bf16.msra.mxu0 %v6284
        %6727 = vmatprep.subr.bf16.mxu0 %v6293
        %6728 = vmatpush1.bf16.msra.mxu0 %v6292
        %6729 = vmatprep.subr.bf16.mxu0 %v6301
        %6730 = vmatpush1.bf16.msra.mxu0 %v6300
        %6731 = vmatprep.subr.bf16.mxu0 %v6309
        %6732 = vmatpush1.bf16.msra.mxu0 %v6308
        %6733 = vmatprep.subr.bf16.mxu0 %v6317
        %6734 = vmatpush1.bf16.msra.mxu0 %v6316
        %6735 = vmatprep.subr.bf16.mxu0 %v6325
        %6736 = vmatpush1.bf16.msra.mxu0 %v6324
        %6737 = vmatprep.subr.bf16.mxu0 %v6333
        %6738 = vmatpush1.bf16.msra.mxu0 %v6332
        %6739 = vmatprep.subr.bf16.mxu0 %v6341
        %6740 = vmatpush1.bf16.msra.mxu0 %v6340
        %6741 = vmatprep.subr.bf16.mxu0 %v6349
        %6742 = vmatpush1.bf16.msra.mxu0 %v6348
        %6743 = vmatprep.mubr.bf16.mxu0 %v6660
        %6744 = vmatmul.mubr.bf16.gmra.mrb[0].mxu0 %v6658
        %v6745 = vpop.f32.mrb[0].mxu0
        %v6746 = vadd.f32 %v6705, %v6745
        %v6747 = vpop.f32.mrb[0].mxu0
        %v6748 = vadd.f32 %v6707, %v6747
        %v6749 = vpop.f32.mrb[0].mxu0
        %v6750 = vpop.f32.mrb[0].mxu0
        %6751 = vdwg.mxu0
        %6752 = vmatprep.subr.bf16.mxu0 %v6357
        %6753 = vmatpush1.bf16.msra.mxu0 %v6356
        %6754 = vmatprep.subr.bf16.mxu0 %v6365
        %6755 = vmatpush1.bf16.msra.mxu0 %v6364
        %6756 = vmatprep.subr.bf16.mxu0 %v6373
        %6757 = vmatpush1.bf16.msra.mxu0 %v6372
        %6758 = vmatprep.subr.bf16.mxu0 %v6381
        %6759 = vmatpush1.bf16.msra.mxu0 %v6380
        %6760 = vmatprep.subr.bf16.mxu0 %v6389
        %6761 = vmatpush1.bf16.msra.mxu0 %v6388
        %6762 = vmatprep.subr.bf16.mxu0 %v6397
        %6763 = vmatpush1.bf16.msra.mxu0 %v6396
        %6764 = vmatprep.subr.bf16.mxu0 %v6405
        %6765 = vmatpush1.bf16.msra.mxu0 %v6404
        %6766 = vmatprep.subr.bf16.mxu0 %v6413
        %6767 = vmatpush1.bf16.msra.mxu0 %v6412
        %6768 = vmatprep.subr.bf16.mxu0 %v6421
        %6769 = vmatpush1.bf16.msra.mxu0 %v6420
        %6770 = vmatprep.subr.bf16.mxu0 %v6429
        %6771 = vmatpush1.bf16.msra.mxu0 %v6428
        %6772 = vmatprep.subr.bf16.mxu0 %v6437
        %6773 = vmatpush1.bf16.msra.mxu0 %v6436
        %6774 = vmatprep.subr.bf16.mxu0 %v6445
        %6775 = vmatpush1.bf16.msra.mxu0 %v6444
        %6776 = vmatprep.subr.bf16.mxu0 %v6453
        %6777 = vmatpush1.bf16.msra.mxu0 %v6452
        %6778 = vmatprep.subr.bf16.mxu0 %v6461
        %6779 = vmatpush1.bf16.msra.mxu0 %v6460
        %6780 = vmatprep.subr.bf16.mxu0 %v6469
        %6781 = vmatpush1.bf16.msra.mxu0 %v6468
        %6782 = vmatprep.subr.bf16.mxu0 %v6477
        %6783 = vmatpush1.bf16.msra.mxu0 %v6476
        %6784 = vmatprep.mubr.bf16.mxu0 %v6657
        %6785 = vmatmul.mubr.bf16.gmra.mrb[0].mxu0 %v6643
        %v6786 = vpop.f32.mrb[0].mxu0
        %v6787 = vadd.f32 %v6746, %v6786
        %v6788 = vpop.f32.mrb[0].mxu0
        %v6789 = vadd.f32 %v6748, %v6788
        %v6790 = vpop.f32.mrb[0].mxu0
        %v6791 = vpop.f32.mrb[0].mxu0
        %6792 = vdwg.mxu0
        %6793 = vmatprep.subr.bf16.mxu0 %v6485
        %6794 = vmatpush1.bf16.msra.mxu0 %v6484
        %6795 = vmatprep.subr.bf16.mxu0 %v6493
        %6796 = vmatpush1.bf16.msra.mxu0 %v6492
        %6797 = vmatprep.subr.bf16.mxu0 %v6501
        %6798 = vmatpush1.bf16.msra.mxu0 %v6500
        %6799 = vmatprep.subr.bf16.mxu0 %v6509
        %6800 = vmatpush1.bf16.msra.mxu0 %v6508
        %6801 = vmatprep.subr.bf16.mxu0 %v6517
        %6802 = vmatpush1.bf16.msra.mxu0 %v6516
        %6803 = vmatprep.subr.bf16.mxu0 %v6525
        %6804 = vmatpush1.bf16.msra.mxu0 %v6524
        %6805 = vmatprep.subr.bf16.mxu0 %v6533
        %6806 = vmatpush1.bf16.msra.mxu0 %v6532
        %6807 = vmatprep.subr.bf16.mxu0 %v6541
        %6808 = vmatpush1.bf16.msra.mxu0 %v6540
        %6809 = vmatprep.subr.bf16.mxu0 %v6549
        %6810 = vmatpush1.bf16.msra.mxu0 %v6548
        %6811 = vmatprep.subr.bf16.mxu0 %v6557
        %6812 = vmatpush1.bf16.msra.mxu0 %v6556
        %6813 = vmatprep.subr.bf16.mxu0 %v6565
        %6814 = vmatpush1.bf16.msra.mxu0 %v6564
        %6815 = vmatprep.subr.bf16.mxu0 %v6573
        %6816 = vmatpush1.bf16.msra.mxu0 %v6572
        %6817 = vmatprep.subr.bf16.mxu0 %v6581
        %6818 = vmatpush1.bf16.msra.mxu0 %v6580
        %6819 = vmatprep.subr.bf16.mxu0 %v6589
        %6820 = vmatpush1.bf16.msra.mxu0 %v6588
        %6821 = vmatprep.subr.bf16.mxu0 %v6597
        %6822 = vmatpush1.bf16.msra.mxu0 %v6596
        %6823 = vmatprep.subr.bf16.mxu0 %v6605
        %6824 = vmatpush1.bf16.msra.mxu0 %v6604
        %6825 = vmatprep.mubr.bf16.mxu0 %v6661
        %6826 = vmatmul.mubr.bf16.gmra.mrb[0].mxu0 %v6659
        %v6827 = vpop.f32.mrb[0].mxu0
        %v6828 = vadd.f32 %v6787, %v6827
        %v6829 = vpop.f32.mrb[0].mxu0
        %v6830 = vadd.f32 %v6789, %v6829
        %v6831 = vpop.f32.mrb[0].mxu0
        %v6832 = vpop.f32.mrb[0].mxu0
        %6833 = vdwg.mxu0
        %6834 = vmatprep.subr.bf16.mxu0 %v6103
        %6835 = vmatpush1.bf16.msra.mxu0 %v6102
        %6836 = vmatprep.subr.bf16.mxu0 %v6111
        %6837 = vmatpush1.bf16.msra.mxu0 %v6110
        %6838 = vmatprep.subr.bf16.mxu0 %v6119
        %6839 = vmatpush1.bf16.msra.mxu0 %v6118
        %6840 = vmatprep.subr.bf16.mxu0 %v6127
        %6841 = vmatpush1.bf16.msra.mxu0 %v6126
        %6842 = vmatprep.subr.bf16.mxu0 %v6135
        %6843 = vmatpush1.bf16.msra.mxu0 %v6134
        %6844 = vmatprep.subr.bf16.mxu0 %v6143
        %6845 = vmatpush1.bf16.msra.mxu0 %v6142
        %6846 = vmatprep.subr.bf16.mxu0 %v6151
        %6847 = vmatpush1.bf16.msra.mxu0 %v6150
        %6848 = vmatprep.subr.bf16.mxu0 %v6159
        %6849 = vmatpush1.bf16.msra.mxu0 %v6158
        %6850 = vmatprep.subr.bf16.mxu0 %v6167
        %6851 = vmatpush1.bf16.msra.mxu0 %v6166
        %6852 = vmatprep.subr.bf16.mxu0 %v6175
        %6853 = vmatpush1.bf16.msra.mxu0 %v6174
        %6854 = vmatprep.subr.bf16.mxu0 %v6183
        %6855 = vmatpush1.bf16.msra.mxu0 %v6182
        %6856 = vmatprep.subr.bf16.mxu0 %v6191
        %6857 = vmatpush1.bf16.msra.mxu0 %v6190
        %6858 = vmatprep.subr.bf16.mxu0 %v6199
        %6859 = vmatpush1.bf16.msra.mxu0 %v6198
        %6860 = vmatprep.subr.bf16.mxu0 %v6207
        %6861 = vmatpush1.bf16.msra.mxu0 %v6206
        %6862 = vmatprep.subr.bf16.mxu0 %v6215
        %6863 = vmatpush1.bf16.msra.mxu0 %v6214
        %6864 = vmatprep.subr.bf16.mxu0 %v6223
        %6865 = vmatpush1.bf16.msra.mxu0 %v6222
        %6866 = vmatprep.mubr.bf16.mxu0 %v6650
        %6867 = vmatmul.mubr.bf16.gmra.mrb[0].mxu0 %v6636
        %v6868 = vpop.f32.mrb[0].mxu0
        %v6869 = vadd.f32 0.0, %v6868
        %v6870 = vpop.f32.mrb[0].mxu0
        %v6871 = vadd.f32 0.0, %v6870
        %v6872 = vpop.f32.mrb[0].mxu0
        %v6873 = vpop.f32.mrb[0].mxu0
        %6874 = vdwg.mxu0
        %6875 = vmatprep.subr.bf16.mxu0 %v6231
        %6876 = vmatpush1.bf16.msra.mxu0 %v6230
        %6877 = vmatprep.subr.bf16.mxu0 %v6239
        %6878 = vmatpush1.bf16.msra.mxu0 %v6238
        %6879 = vmatprep.subr.bf16.mxu0 %v6247
        %6880 = vmatpush1.bf16.msra.mxu0 %v6246
        %6881 = vmatprep.subr.bf16.mxu0 %v6255
        %6882 = vmatpush1.bf16.msra.mxu0 %v6254
        %6883 = vmatprep.subr.bf16.mxu0 %v6263
        %6884 = vmatpush1.bf16.msra.mxu0 %v6262
        %6885 = vmatprep.subr.bf16.mxu0 %v6271
        %6886 = vmatpush1.bf16.msra.mxu0 %v6270
        %6887 = vmatprep.subr.bf16.mxu0 %v6279
        %6888 = vmatpush1.bf16.msra.mxu0 %v6278
        %6889 = vmatprep.subr.bf16.mxu0 %v6287
        %6890 = vmatpush1.bf16.msra.mxu0 %v6286
        %6891 = vmatprep.subr.bf16.mxu0 %v6295
        %6892 = vmatpush1.bf16.msra.mxu0 %v6294
        %6893 = vmatprep.subr.bf16.mxu0 %v6303
        %6894 = vmatpush1.bf16.msra.mxu0 %v6302
        %6895 = vmatprep.subr.bf16.mxu0 %v6311
        %6896 = vmatpush1.bf16.msra.mxu0 %v6310
        %6897 = vmatprep.subr.bf16.mxu0 %v6319
        %6898 = vmatpush1.bf16.msra.mxu0 %v6318
        %6899 = vmatprep.subr.bf16.mxu0 %v6327
        %6900 = vmatpush1.bf16.msra.mxu0 %v6326
        %6901 = vmatprep.subr.bf16.mxu0 %v6335
        %6902 = vmatpush1.bf16.msra.mxu0 %v6334
        %6903 = vmatprep.subr.bf16.mxu0 %v6343
        %6904 = vmatpush1.bf16.msra.mxu0 %v6342
        %6905 = vmatprep.subr.bf16.mxu0 %v6351
        %6906 = vmatpush1.bf16.msra.mxu0 %v6350
        %6907 = vmatprep.mubr.bf16.mxu0 %v6660
        %6908 = vmatmul.mubr.bf16.gmra.mrb[0].mxu0 %v6658
        %v6909 = vpop.f32.mrb[0].mxu0
        %v6910 = vadd.f32 %v6869, %v6909
        %v6911 = vpop.f32.mrb[0].mxu0
        %v6912 = vadd.f32 %v6871, %v6911
        %v6913 = vpop.f32.mrb[0].mxu0
        %v6914 = vpop.f32.mrb[0].mxu0
        %6915 = vdwg.mxu0
        %6916 = vmatprep.subr.bf16.mxu0 %v6359
        %6917 = vmatpush1.bf16.msra.mxu0 %v6358
        %6918 = vmatprep.subr.bf16.mxu0 %v6367
        %6919 = vmatpush1.bf16.msra.mxu0 %v6366
        %6920 = vmatprep.subr.bf16.mxu0 %v6375
        %6921 = vmatpush1.bf16.msra.mxu0 %v6374
        %6922 = vmatprep.subr.bf16.mxu0 %v6383
        %6923 = vmatpush1.bf16.msra.mxu0 %v6382
        %6924 = vmatprep.subr.bf16.mxu0 %v6391
        %6925 = vmatpush1.bf16.msra.mxu0 %v6390
        %6926 = vmatprep.subr.bf16.mxu0 %v6399
        %6927 = vmatpush1.bf16.msra.mxu0 %v6398
        %6928 = vmatprep.subr.bf16.mxu0 %v6407
        %6929 = vmatpush1.bf16.msra.mxu0 %v6406
        %6930 = vmatprep.subr.bf16.mxu0 %v6415
        %6931 = vmatpush1.bf16.msra.mxu0 %v6414
        %6932 = vmatprep.subr.bf16.mxu0 %v6423
        %6933 = vmatpush1.bf16.msra.mxu0 %v6422
        %6934 = vmatprep.subr.bf16.mxu0 %v6431
        %6935 = vmatpush1.bf16.msra.mxu0 %v6430
        %6936 = vmatprep.subr.bf16.mxu0 %v6439
        %6937 = vmatpush1.bf16.msra.mxu0 %v6438
        %6938 = vmatprep.subr.bf16.mxu0 %v6447
        %6939 = vmatpush1.bf16.msra.mxu0 %v6446
        %6940 = vmatprep.subr.bf16.mxu0 %v6455
        %6941 = vmatpush1.bf16.msra.mxu0 %v6454
        %6942 = vmatprep.subr.bf16.mxu0 %v6463
        %6943 = vmatpush1.bf16.msra.mxu0 %v6462
        %6944 = vmatprep.subr.bf16.mxu0 %v6471
        %6945 = vmatpush1.bf16.msra.mxu0 %v6470
        %6946 = vmatprep.subr.bf16.mxu0 %v6479
        %6947 = vmatpush1.bf16.msra.mxu0 %v6478
        %6948 = vmatprep.mubr.bf16.mxu0 %v6657
        %6949 = vmatmul.mubr.bf16.gmra.mrb[0].mxu0 %v6643
        %v6950 = vpop.f32.mrb[0].mxu0
        %v6951 = vadd.f32 %v6910, %v6950
        %v6952 = vpop.f32.mrb[0].mxu0
        %v6953 = vadd.f32 %v6912, %v6952
        %v6954 = vpop.f32.mrb[0].mxu0
        %v6955 = vpop.f32.mrb[0].mxu0
        %6956 = vdwg.mxu0
        %6957 = vmatprep.subr.bf16.mxu0 %v6487
        %6958 = vmatpush1.bf16.msra.mxu0 %v6486
        %6959 = vmatprep.subr.bf16.mxu0 %v6495
        %6960 = vmatpush1.bf16.msra.mxu0 %v6494
        %6961 = vmatprep.subr.bf16.mxu0 %v6503
        %6962 = vmatpush1.bf16.msra.mxu0 %v6502
        %6963 = vmatprep.subr.bf16.mxu0 %v6511
        %6964 = vmatpush1.bf16.msra.mxu0 %v6510
        %6965 = vmatprep.subr.bf16.mxu0 %v6519
        %6966 = vmatpush1.bf16.msra.mxu0 %v6518
        %6967 = vmatprep.subr.bf16.mxu0 %v6527
        %6968 = vmatpush1.bf16.msra.mxu0 %v6526
        %6969 = vmatprep.subr.bf16.mxu0 %v6535
        %6970 = vmatpush1.bf16.msra.mxu0 %v6534
        %6971 = vmatprep.subr.bf16.mxu0 %v6543
        %6972 = vmatpush1.bf16.msra.mxu0 %v6542
        %6973 = vmatprep.subr.bf16.mxu0 %v6551
        %6974 = vmatpush1.bf16.msra.mxu0 %v6550
        %6975 = vmatprep.subr.bf16.mxu0 %v6559
        %6976 = vmatpush1.bf16.msra.mxu0 %v6558
        %6977 = vmatprep.subr.bf16.mxu0 %v6567
        %6978 = vmatpush1.bf16.msra.mxu0 %v6566
        %6979 = vmatprep.subr.bf16.mxu0 %v6575
        %6980 = vmatpush1.bf16.msra.mxu0 %v6574
        %6981 = vmatprep.subr.bf16.mxu0 %v6583
        %6982 = vmatpush1.bf16.msra.mxu0 %v6582
        %6983 = vmatprep.subr.bf16.mxu0 %v6591
        %6984 = vmatpush1.bf16.msra.mxu0 %v6590
        %6985 = vmatprep.subr.bf16.mxu0 %v6599
        %6986 = vmatpush1.bf16.msra.mxu0 %v6598
        %6987 = vmatprep.subr.bf16.mxu0 %v6607
        %6988 = vmatpush1.bf16.msra.mxu0 %v6606
        %6989 = vmatprep.mubr.bf16.mxu0 %v6661
        %6990 = vmatmul.mubr.bf16.gmra.mrb[0].mxu0 %v6659
        %v6991 = vpop.f32.mrb[0].mxu0
        %v6992 = vadd.f32 %v6951, %v6991
        %v6993 = vpop.f32.mrb[0].mxu0
        %v6994 = vadd.f32 %v6953, %v6993
        %v6995 = vpop.f32.mrb[0].mxu0
        %v6996 = vpop.f32.mrb[0].mxu0
        %6997 = vdwg.mxu0
        %6998 = vmatprep.subr.bf16.mxu0 %v6105
        %6999 = vmatpush1.bf16.msra.mxu0 %v6104
        %7000 = vmatprep.subr.bf16.mxu0 %v6113
        %7001 = vmatpush1.bf16.msra.mxu0 %v6112
        %7002 = vmatprep.subr.bf16.mxu0 %v6121
        %7003 = vmatpush1.bf16.msra.mxu0 %v6120
        %7004 = vmatprep.subr.bf16.mxu0 %v6129
        %7005 = vmatpush1.bf16.msra.mxu0 %v6128
        %7006 = vmatprep.subr.bf16.mxu0 %v6137
        %7007 = vmatpush1.bf16.msra.mxu0 %v6136
        %7008 = vmatprep.subr.bf16.mxu0 %v6145
        %7009 = vmatpush1.bf16.msra.mxu0 %v6144
        %7010 = vmatprep.subr.bf16.mxu0 %v6153
        %7011 = vmatpush1.bf16.msra.mxu0 %v6152
        %7012 = vmatprep.subr.bf16.mxu0 %v6161
        %7013 = vmatpush1.bf16.msra.mxu0 %v6160
        %7014 = vmatprep.subr.bf16.mxu0 %v6169
        %7015 = vmatpush1.bf16.msra.mxu0 %v6168
        %7016 = vmatprep.subr.bf16.mxu0 %v6177
        %7017 = vmatpush1.bf16.msra.mxu0 %v6176
        %7018 = vmatprep.subr.bf16.mxu0 %v6185
        %7019 = vmatpush1.bf16.msra.mxu0 %v6184
        %7020 = vmatprep.subr.bf16.mxu0 %v6193
        %7021 = vmatpush1.bf16.msra.mxu0 %v6192
        %7022 = vmatprep.subr.bf16.mxu0 %v6201
        %7023 = vmatpush1.bf16.msra.mxu0 %v6200
        %7024 = vmatprep.subr.bf16.mxu0 %v6209
        %7025 = vmatpush1.bf16.msra.mxu0 %v6208
        %7026 = vmatprep.subr.bf16.mxu0 %v6217
        %7027 = vmatpush1.bf16.msra.mxu0 %v6216
        %7028 = vmatprep.subr.bf16.mxu0 %v6225
        %7029 = vmatpush1.bf16.msra.mxu0 %v6224
        %7030 = vmatprep.mubr.bf16.mxu0 %v6650
        %7031 = vmatmul.mubr.bf16.gmra.mrb[0].mxu0 %v6636
        %v7032 = vpop.f32.mrb[0].mxu0
        %v7033 = vadd.f32 0.0, %v7032
        %v7034 = vpop.f32.mrb[0].mxu0
        %v7035 = vadd.f32 0.0, %v7034
        %v7036 = vpop.f32.mrb[0].mxu0
        %v7037 = vpop.f32.mrb[0].mxu0
        %7038 = vdwg.mxu0
        %7039 = vmatprep.subr.bf16.mxu0 %v6233
        %7040 = vmatpush1.bf16.msra.mxu0 %v6232
        %7041 = vmatprep.subr.bf16.mxu0 %v6241
        %7042 = vmatpush1.bf16.msra.mxu0 %v6240
        %7043 = vmatprep.subr.bf16.mxu0 %v6249
        %7044 = vmatpush1.bf16.msra.mxu0 %v6248
        %7045 = vmatprep.subr.bf16.mxu0 %v6257
        %7046 = vmatpush1.bf16.msra.mxu0 %v6256
        %7047 = vmatprep.subr.bf16.mxu0 %v6265
        %7048 = vmatpush1.bf16.msra.mxu0 %v6264
        %7049 = vmatprep.subr.bf16.mxu0 %v6273
        %7050 = vmatpush1.bf16.msra.mxu0 %v6272
        %7051 = vmatprep.subr.bf16.mxu0 %v6281
        %7052 = vmatpush1.bf16.msra.mxu0 %v6280
        %7053 = vmatprep.subr.bf16.mxu0 %v6289
        %7054 = vmatpush1.bf16.msra.mxu0 %v6288
        %7055 = vmatprep.subr.bf16.mxu0 %v6297
        %7056 = vmatpush1.bf16.msra.mxu0 %v6296
        %7057 = vmatprep.subr.bf16.mxu0 %v6305
        %7058 = vmatpush1.bf16.msra.mxu0 %v6304
        %7059 = vmatprep.subr.bf16.mxu0 %v6313
        %7060 = vmatpush1.bf16.msra.mxu0 %v6312
        %7061 = vmatprep.subr.bf16.mxu0 %v6321
        %7062 = vmatpush1.bf16.msra.mxu0 %v6320
        %7063 = vmatprep.subr.bf16.mxu0 %v6329
        %7064 = vmatpush1.bf16.msra.mxu0 %v6328
        %7065 = vmatprep.subr.bf16.mxu0 %v6337
        %7066 = vmatpush1.bf16.msra.mxu0 %v6336
        %7067 = vmatprep.subr.bf16.mxu0 %v6345
        %7068 = vmatpush1.bf16.msra.mxu0 %v6344
        %7069 = vmatprep.subr.bf16.mxu0 %v6353
        %7070 = vmatpush1.bf16.msra.mxu0 %v6352
        %7071 = vmatprep.mubr.bf16.mxu0 %v6660
        %7072 = vmatmul.mubr.bf16.gmra.mrb[0].mxu0 %v6658
        %v7073 = vpop.f32.mrb[0].mxu0
        %v7074 = vadd.f32 %v7033, %v7073
        %v7075 = vpop.f32.mrb[0].mxu0
        %v7076 = vadd.f32 %v7035, %v7075
        %v7077 = vpop.f32.mrb[0].mxu0
        %v7078 = vpop.f32.mrb[0].mxu0
        %7079 = vdwg.mxu0
        %7080 = vmatprep.subr.bf16.mxu0 %v6361
        %7081 = vmatpush1.bf16.msra.mxu0 %v6360
        %7082 = vmatprep.subr.bf16.mxu0 %v6369
        %7083 = vmatpush1.bf16.msra.mxu0 %v6368
        %7084 = vmatprep.subr.bf16.mxu0 %v6377
        %7085 = vmatpush1.bf16.msra.mxu0 %v6376
        %7086 = vmatprep.subr.bf16.mxu0 %v6385
        %7087 = vmatpush1.bf16.msra.mxu0 %v6384
        %7088 = vmatprep.subr.bf16.mxu0 %v6393
        %7089 = vmatpush1.bf16.msra.mxu0 %v6392
        %7090 = vmatprep.subr.bf16.mxu0 %v6401
        %7091 = vmatpush1.bf16.msra.mxu0 %v6400
        %7092 = vmatprep.subr.bf16.mxu0 %v6409
        %7093 = vmatpush1.bf16.msra.mxu0 %v6408
        %7094 = vmatprep.subr.bf16.mxu0 %v6417
        %7095 = vmatpush1.bf16.msra.mxu0 %v6416
        %7096 = vmatprep.subr.bf16.mxu0 %v6425
        %7097 = vmatpush1.bf16.msra.mxu0 %v6424
        %7098 = vmatprep.subr.bf16.mxu0 %v6433
        %7099 = vmatpush1.bf16.msra.mxu0 %v6432
        %7100 = vmatprep.subr.bf16.mxu0 %v6441
        %7101 = vmatpush1.bf16.msra.mxu0 %v6440
        %7102 = vmatprep.subr.bf16.mxu0 %v6449
        %7103 = vmatpush1.bf16.msra.mxu0 %v6448
        %7104 = vmatprep.subr.bf16.mxu0 %v6457
        %7105 = vmatpush1.bf16.msra.mxu0 %v6456
        %7106 = vmatprep.subr.bf16.mxu0 %v6465
        %7107 = vmatpush1.bf16.msra.mxu0 %v6464
        %7108 = vmatprep.subr.bf16.mxu0 %v6473
        %7109 = vmatpush1.bf16.msra.mxu0 %v6472
        %7110 = vmatprep.subr.bf16.mxu0 %v6481
        %7111 = vmatpush1.bf16.msra.mxu0 %v6480
        %7112 = vmatprep.mubr.bf16.mxu0 %v6657
        %7113 = vmatmul.mubr.bf16.gmra.mrb[0].mxu0 %v6643
        %v7114 = vpop.f32.mrb[0].mxu0
        %v7115 = vadd.f32 %v7074, %v7114
        %v7116 = vpop.f32.mrb[0].mxu0
        %v7117 = vadd.f32 %v7076, %v7116
        %v7118 = vpop.f32.mrb[0].mxu0
        %v7119 = vpop.f32.mrb[0].mxu0
        %7120 = vdwg.mxu0
        %7121 = vmatprep.subr.bf16.mxu0 %v6489
        %7122 = vmatpush1.bf16.msra.mxu0 %v6488
        %7123 = vmatprep.subr.bf16.mxu0 %v6497
        %7124 = vmatpush1.bf16.msra.mxu0 %v6496
        %7125 = vmatprep.subr.bf16.mxu0 %v6505
        %7126 = vmatpush1.bf16.msra.mxu0 %v6504
        %7127 = vmatprep.subr.bf16.mxu0 %v6513
        %7128 = vmatpush1.bf16.msra.mxu0 %v6512
        %7129 = vmatprep.subr.bf16.mxu0 %v6521
        %7130 = vmatpush1.bf16.msra.mxu0 %v6520
        %7131 = vmatprep.subr.bf16.mxu0 %v6529
        %7132 = vmatpush1.bf16.msra.mxu0 %v6528
        %7133 = vmatprep.subr.bf16.mxu0 %v6537
        %7134 = vmatpush1.bf16.msra.mxu0 %v6536
        %7135 = vmatprep.subr.bf16.mxu0 %v6545
        %7136 = vmatpush1.bf16.msra.mxu0 %v6544
        %7137 = vmatprep.subr.bf16.mxu0 %v6553
        %7138 = vmatpush1.bf16.msra.mxu0 %v6552
        %7139 = vmatprep.subr.bf16.mxu0 %v6561
        %7140 = vmatpush1.bf16.msra.mxu0 %v6560
        %7141 = vmatprep.subr.bf16.mxu0 %v6569
        %7142 = vmatpush1.bf16.msra.mxu0 %v6568
        %7143 = vmatprep.subr.bf16.mxu0 %v6577
        %7144 = vmatpush1.bf16.msra.mxu0 %v6576
        %7145 = vmatprep.subr.bf16.mxu0 %v6585
        %7146 = vmatpush1.bf16.msra.mxu0 %v6584
        %7147 = vmatprep.subr.bf16.mxu0 %v6593
        %7148 = vmatpush1.bf16.msra.mxu0 %v6592
        %7149 = vmatprep.subr.bf16.mxu0 %v6601
        %7150 = vmatpush1.bf16.msra.mxu0 %v6600
        %7151 = vmatprep.subr.bf16.mxu0 %v6609
        %7152 = vmatpush1.bf16.msra.mxu0 %v6608
        %7153 = vmatprep.mubr.bf16.mxu0 %v6661
        %7154 = vmatmul.mubr.bf16.gmra.mrb[0].mxu0 %v6659
        %v7155 = vpop.f32.mrb[0].mxu0
        %v7156 = vadd.f32 %v7115, %v7155
        %v7157 = vpop.f32.mrb[0].mxu0
        %v7158 = vadd.f32 %v7117, %v7157
        %v7159 = vpop.f32.mrb[0].mxu0
        %v7160 = vpop.f32.mrb[0].mxu0
        %7161 = vdwg.mxu0
        %7162 = vmatprep.subr.bf16.mxu0 %v6107
        %7163 = vmatpush1.bf16.msra.mxu0 %v6106
        %7164 = vmatprep.subr.bf16.mxu0 %v6115
        %7165 = vmatpush1.bf16.msra.mxu0 %v6114
        %7166 = vmatprep.subr.bf16.mxu0 %v6123
        %7167 = vmatpush1.bf16.msra.mxu0 %v6122
        %7168 = vmatprep.subr.bf16.mxu0 %v6131
        %7169 = vmatpush1.bf16.msra.mxu0 %v6130
        %7170 = vmatprep.subr.bf16.mxu0 %v6139
        %7171 = vmatpush1.bf16.msra.mxu0 %v6138
        %7172 = vmatprep.subr.bf16.mxu0 %v6147
        %7173 = vmatpush1.bf16.msra.mxu0 %v6146
        %7174 = vmatprep.subr.bf16.mxu0 %v6155
        %7175 = vmatpush1.bf16.msra.mxu0 %v6154
        %7176 = vmatprep.subr.bf16.mxu0 %v6163
        %7177 = vmatpush1.bf16.msra.mxu0 %v6162
        %7178 = vmatprep.subr.bf16.mxu0 %v6171
        %7179 = vmatpush1.bf16.msra.mxu0 %v6170
        %7180 = vmatprep.subr.bf16.mxu0 %v6179
        %7181 = vmatpush1.bf16.msra.mxu0 %v6178
        %7182 = vmatprep.subr.bf16.mxu0 %v6187
        %7183 = vmatpush1.bf16.msra.mxu0 %v6186
        %7184 = vmatprep.subr.bf16.mxu0 %v6195
        %7185 = vmatpush1.bf16.msra.mxu0 %v6194
        %7186 = vmatprep.subr.bf16.mxu0 %v6203
        %7187 = vmatpush1.bf16.msra.mxu0 %v6202
        %7188 = vmatprep.subr.bf16.mxu0 %v6211
        %7189 = vmatpush1.bf16.msra.mxu0 %v6210
        %7190 = vmatprep.subr.bf16.mxu0 %v6219
        %7191 = vmatpush1.bf16.msra.mxu0 %v6218
        %7192 = vmatprep.subr.bf16.mxu0 %v6227
        %7193 = vmatpush1.bf16.msra.mxu0 %v6226
        %7194 = vmatprep.mubr.bf16.mxu0 %v6650
        %7195 = vmatmul.mubr.bf16.gmra.mrb[0].mxu0 %v6636
        %v7196 = vpop.f32.mrb[0].mxu0
        %v7197 = vadd.f32 0.0, %v7196
        %v7198 = vpop.f32.mrb[0].mxu0
        %v7199 = vadd.f32 0.0, %v7198
        %v7200 = vpop.f32.mrb[0].mxu0
        %v7201 = vpop.f32.mrb[0].mxu0
        %7202 = vdwg.mxu0
        %7203 = vmatprep.subr.bf16.mxu0 %v6235
        %7204 = vmatpush1.bf16.msra.mxu0 %v6234
        %7205 = vmatprep.subr.bf16.mxu0 %v6243
        %7206 = vmatpush1.bf16.msra.mxu0 %v6242
        %7207 = vmatprep.subr.bf16.mxu0 %v6251
        %7208 = vmatpush1.bf16.msra.mxu0 %v6250
        %7209 = vmatprep.subr.bf16.mxu0 %v6259
        %7210 = vmatpush1.bf16.msra.mxu0 %v6258
        %7211 = vmatprep.subr.bf16.mxu0 %v6267
        %7212 = vmatpush1.bf16.msra.mxu0 %v6266
        %7213 = vmatprep.subr.bf16.mxu0 %v6275
        %7214 = vmatpush1.bf16.msra.mxu0 %v6274
        %7215 = vmatprep.subr.bf16.mxu0 %v6283
        %7216 = vmatpush1.bf16.msra.mxu0 %v6282
        %7217 = vmatprep.subr.bf16.mxu0 %v6291
        %7218 = vmatpush1.bf16.msra.mxu0 %v6290
        %7219 = vmatprep.subr.bf16.mxu0 %v6299
        %7220 = vmatpush1.bf16.msra.mxu0 %v6298
        %7221 = vmatprep.subr.bf16.mxu0 %v6307
        %7222 = vmatpush1.bf16.msra.mxu0 %v6306
        %7223 = vmatprep.subr.bf16.mxu0 %v6315
        %7224 = vmatpush1.bf16.msra.mxu0 %v6314
        %7225 = vmatprep.subr.bf16.mxu0 %v6323
        %7226 = vmatpush1.bf16.msra.mxu0 %v6322
        %7227 = vmatprep.subr.bf16.mxu0 %v6331
        %7228 = vmatpush1.bf16.msra.mxu0 %v6330
        %7229 = vmatprep.subr.bf16.mxu0 %v6339
        %7230 = vmatpush1.bf16.msra.mxu0 %v6338
        %7231 = vmatprep.subr.bf16.mxu0 %v6347
        %7232 = vmatpush1.bf16.msra.mxu0 %v6346
        %7233 = vmatprep.subr.bf16.mxu0 %v6355
        %7234 = vmatpush1.bf16.msra.mxu0 %v6354
        %7235 = vmatprep.mubr.bf16.mxu0 %v6660
        %7236 = vmatmul.mubr.bf16.gmra.mrb[0].mxu0 %v6658
        %v7237 = vpop.f32.mrb[0].mxu0
        %v7238 = vadd.f32 %v7197, %v7237
        %v7239 = vpop.f32.mrb[0].mxu0
        %v7240 = vadd.f32 %v7199, %v7239
        %v7241 = vpop.f32.mrb[0].mxu0
        %v7242 = vpop.f32.mrb[0].mxu0
        %7243 = vdwg.mxu0
        %7244 = vmatprep.subr.bf16.mxu0 %v6363
        %7245 = vmatpush1.bf16.msra.mxu0 %v6362
        %7246 = vmatprep.subr.bf16.mxu0 %v6371
        %7247 = vmatpush1.bf16.msra.mxu0 %v6370
        %7248 = vmatprep.subr.bf16.mxu0 %v6379
        %7249 = vmatpush1.bf16.msra.mxu0 %v6378
        %7250 = vmatprep.subr.bf16.mxu0 %v6387
        %7251 = vmatpush1.bf16.msra.mxu0 %v6386
        %7252 = vmatprep.subr.bf16.mxu0 %v6395
        %7253 = vmatpush1.bf16.msra.mxu0 %v6394
        %7254 = vmatprep.subr.bf16.mxu0 %v6403
        %7255 = vmatpush1.bf16.msra.mxu0 %v6402
        %7256 = vmatprep.subr.bf16.mxu0 %v6411
        %7257 = vmatpush1.bf16.msra.mxu0 %v6410
        %7258 = vmatprep.subr.bf16.mxu0 %v6419
        %7259 = vmatpush1.bf16.msra.mxu0 %v6418
        %7260 = vmatprep.subr.bf16.mxu0 %v6427
        %7261 = vmatpush1.bf16.msra.mxu0 %v6426
        %7262 = vmatprep.subr.bf16.mxu0 %v6435
        %7263 = vmatpush1.bf16.msra.mxu0 %v6434
        %7264 = vmatprep.subr.bf16.mxu0 %v6443
        %7265 = vmatpush1.bf16.msra.mxu0 %v6442
        %7266 = vmatprep.subr.bf16.mxu0 %v6451
        %7267 = vmatpush1.bf16.msra.mxu0 %v6450
        %7268 = vmatprep.subr.bf16.mxu0 %v6459
        %7269 = vmatpush1.bf16.msra.mxu0 %v6458
        %7270 = vmatprep.subr.bf16.mxu0 %v6467
        %7271 = vmatpush1.bf16.msra.mxu0 %v6466
        %7272 = vmatprep.subr.bf16.mxu0 %v6475
        %7273 = vmatpush1.bf16.msra.mxu0 %v6474
        %7274 = vmatprep.subr.bf16.mxu0 %v6483
        %7275 = vmatpush1.bf16.msra.mxu0 %v6482
        %7276 = vmatprep.mubr.bf16.mxu0 %v6657
        %7277 = vmatmul.mubr.bf16.gmra.mrb[0].mxu0 %v6643
        %v7278 = vpop.f32.mrb[0].mxu0
        %v7279 = vadd.f32 %v7238, %v7278
        %v7280 = vpop.f32.mrb[0].mxu0
        %v7281 = vadd.f32 %v7240, %v7280
        %v7282 = vpop.f32.mrb[0].mxu0
        %v7283 = vpop.f32.mrb[0].mxu0
        %7284 = vdwg.mxu0
        %7285 = vmatprep.subr.bf16.mxu0 %v6491
        %7286 = vmatpush1.bf16.msra.mxu0 %v6490
        %7287 = vmatprep.subr.bf16.mxu0 %v6499
        %7288 = vmatpush1.bf16.msra.mxu0 %v6498
        %7289 = vmatprep.subr.bf16.mxu0 %v6507
        %7290 = vmatpush1.bf16.msra.mxu0 %v6506
        %7291 = vmatprep.subr.bf16.mxu0 %v6515
        %7292 = vmatpush1.bf16.msra.mxu0 %v6514
        %7293 = vmatprep.subr.bf16.mxu0 %v6523
        %7294 = vmatpush1.bf16.msra.mxu0 %v6522
        %7295 = vmatprep.subr.bf16.mxu0 %v6531
        %7296 = vmatpush1.bf16.msra.mxu0 %v6530
        %7297 = vmatprep.subr.bf16.mxu0 %v6539
        %7298 = vmatpush1.bf16.msra.mxu0 %v6538
        %7299 = vmatprep.subr.bf16.mxu0 %v6547
        %7300 = vmatpush1.bf16.msra.mxu0 %v6546
        %7301 = vmatprep.subr.bf16.mxu0 %v6555
        %7302 = vmatpush1.bf16.msra.mxu0 %v6554
        %7303 = vmatprep.subr.bf16.mxu0 %v6563
        %7304 = vmatpush1.bf16.msra.mxu0 %v6562
        %7305 = vmatprep.subr.bf16.mxu0 %v6571
        %7306 = vmatpush1.bf16.msra.mxu0 %v6570
        %7307 = vmatprep.subr.bf16.mxu0 %v6579
        %7308 = vmatpush1.bf16.msra.mxu0 %v6578
        %7309 = vmatprep.subr.bf16.mxu0 %v6587
        %7310 = vmatpush1.bf16.msra.mxu0 %v6586
        %7311 = vmatprep.subr.bf16.mxu0 %v6595
        %7312 = vmatpush1.bf16.msra.mxu0 %v6594
        %7313 = vmatprep.subr.bf16.mxu0 %v6603
        %7314 = vmatpush1.bf16.msra.mxu0 %v6602
        %7315 = vmatprep.subr.bf16.mxu0 %v6611
        %7316 = vmatpush1.bf16.msra.mxu0 %v6610
        %7317 = vmatprep.mubr.bf16.mxu0 %v6661
        %7318 = vmatmul.mubr.bf16.gmra.mrb[0].mxu0 %v6659
        %v7319 = vpop.f32.mrb[0].mxu0
        %v7320 = vadd.f32 %v7279, %v7319
        %v7321 = vpop.f32.mrb[0].mxu0
        %v7322 = vadd.f32 %v7281, %v7321
        %v7323 = vpop.f32.mrb[0].mxu0
        %v7324 = vpop.f32.mrb[0].mxu0
        %7325 = vdwg.mxu0
        %v7326 = vld [vmem:[%s487] sm:$0xff]
        %v7328 = vlaneseq
        %v7329 = vshrl.u32 %v7328, 7
        %v7330 = vsub.s32 0, %v7329
        %v7331 = vrot.slane %v7326, %v7330
        %v7332 = vlaneseq
        %v7333 = vshrl.u32 %v7332, 7
        %v7334 = vsub.s32 1, %v7333
        %v7335 = vrot.slane %v7326, %v7334
        %v7336 = vlaneseq
        %v7337 = vshrl.u32 %v7336, 7
        %v7338 = vsub.s32 2, %v7337
        %v7339 = vrot.slane %v7326, %v7338
        %v7340 = vlaneseq
        %v7341 = vshrl.u32 %v7340, 7
        %v7342 = vsub.s32 3, %v7341
        %v7343 = vrot.slane %v7326, %v7342
        %v7344 = vlaneseq
        %v7345 = vshrl.u32 %v7344, 7
        %v7346 = vsub.s32 4, %v7345
        %v7347 = vrot.slane %v7326, %v7346
        %v7348 = vlaneseq
        %v7349 = vshrl.u32 %v7348, 7
        %v7350 = vsub.s32 5, %v7349
        %v7351 = vrot.slane %v7326, %v7350
        %v7352 = vlaneseq
        %v7353 = vshrl.u32 %v7352, 7
        %v7354 = vsub.s32 6, %v7353
        %v7355 = vrot.slane %v7326, %v7354
        %v7356 = vlaneseq
        %v7357 = vshrl.u32 %v7356, 7
        %v7358 = vsub.s32 7, %v7357
        %v7359 = vrot.slane %v7326, %v7358
        %v7368 = vmul.f32 %v6828, %v7331
        %v7369 = vmul.f32 %v6830, %v7335
        %v7370 = vmul.f32 %v6992, %v7339
        %v7371 = vmul.f32 %v6994, %v7343
        %v7372 = vmul.f32 %v7156, %v7347
        %v7373 = vmul.f32 %v7158, %v7351
        %v7374 = vmul.f32 %v7320, %v7355
        %v7375 = vmul.f32 %v7322, %v7359
        %v7376 = vld [vmem:[%s496] sm:$0xff]
        %v7378 = vlaneseq
        %v7379 = vshrl.u32 %v7378, 7
        %v7380 = vsub.s32 0, %v7379
        %v7381 = vrot.slane %v7376, %v7380
        %v7382 = vlaneseq
        %v7383 = vshrl.u32 %v7382, 7
        %v7384 = vsub.s32 1, %v7383
        %v7385 = vrot.slane %v7376, %v7384
        %v7386 = vlaneseq
        %v7387 = vshrl.u32 %v7386, 7
        %v7388 = vsub.s32 2, %v7387
        %v7389 = vrot.slane %v7376, %v7388
        %v7390 = vlaneseq
        %v7391 = vshrl.u32 %v7390, 7
        %v7392 = vsub.s32 3, %v7391
        %v7393 = vrot.slane %v7376, %v7392
        %v7394 = vlaneseq
        %v7395 = vshrl.u32 %v7394, 7
        %v7396 = vsub.s32 4, %v7395
        %v7397 = vrot.slane %v7376, %v7396
        %v7398 = vlaneseq
        %v7399 = vshrl.u32 %v7398, 7
        %v7400 = vsub.s32 5, %v7399
        %v7401 = vrot.slane %v7376, %v7400
        %v7402 = vlaneseq
        %v7403 = vshrl.u32 %v7402, 7
        %v7404 = vsub.s32 6, %v7403
        %v7405 = vrot.slane %v7376, %v7404
        %v7406 = vlaneseq
        %v7407 = vshrl.u32 %v7406, 7
        %v7408 = vsub.s32 7, %v7407
        %v7409 = vrot.slane %v7376, %v7408
        %v7418 = vadd.f32 %v7368, %v7381
        %v7419 = vadd.f32 %v7369, %v7385
        %v7420 = vadd.f32 %v7370, %v7389
        %v7421 = vadd.f32 %v7371, %v7393
        %v7422 = vadd.f32 %v7372, %v7397
        %v7423 = vadd.f32 %v7373, %v7401
        %v7424 = vadd.f32 %v7374, %v7405
        %v7425 = vadd.f32 %v7375, %v7409
        %v7434 = vcombine.low %v7418, %v7419
        %v7435 = vcombine.low %v7420, %v7421
        %v7437 = vunpack.c.l.s4 1983009808
        %v7438 = vunpack.c.0.s8 %v7437
        %v7439 = vlaneseq
        %v7440 = vshrl.u32 %v7439, 7
        %v7441 = vsub.s32 %v7438, %v7440
        %v7442 = vrot.slane %v7434, %v7441
        %v7444 = vunpack.c.l.s4 1983009808
        %v7445 = vunpack.c.0.s8 %v7444
        %v7446 = vlaneseq
        %v7447 = vshrl.u32 %v7446, 7
        %v7448 = vsub.s32 %v7445, %v7447
        %v7449 = vrot.slane %v7435, %v7448
        %v7450 = vcombine.low %v7442, %v7449
        %v7451 = vcombine.low %v7422, %v7423
        %v7452 = vcombine.low %v7424, %v7425
        %v7454 = vunpack.c.l.s4 1983009808
        %v7455 = vunpack.c.0.s8 %v7454
        %v7456 = vlaneseq
        %v7457 = vshrl.u32 %v7456, 7
        %v7458 = vsub.s32 %v7455, %v7457
        %v7459 = vrot.slane %v7451, %v7458
        %v7461 = vunpack.c.l.s4 1983009808
        %v7462 = vunpack.c.0.s8 %v7461
        %v7463 = vlaneseq
        %v7464 = vshrl.u32 %v7463, 7
        %v7465 = vsub.s32 %v7462, %v7464
        %v7466 = vrot.slane %v7452, %v7465
        %v7467 = vcombine.low %v7459, %v7466
        %7470 = vst [vmem:[%s542] sm:$0xff] %v7450
        %7471 = vst [vmem:[%s542 + $0x8] sm:$0xff] %v7467
        %s7472 = sand.u32 %s267, 1
        %s7473 = scalar_lea.sflag [#allocation5], %s7472
        %s7474 = sand.u32 %s267, 1
        %s7475 = smul.addr %s7474, 16
        %s7476 = scalar_lea.vmem [#allocation20], %s7475
        // Predicated region
        $region105: #{tpu_custom_call.1} parent=59 // pred_check
          %p7477 = pneg %p277
        $region106: #{tpu_custom_call.1} parent=59 // pred_check_branch
          %7479 = sbr.rel (%p7477) target = $region108
        $region107: #{tpu_custom_call.1} parent=59 // pred_region
          %s7480 = smul.u32 8, %s34
          %s7482 = ssub.s32 256, 256
          %7483 = vsyncadd %s7473, %s7482
          %s7484 = smul.addr %s7480, 32
          %s7485 = scalar_lea.hbm %s10, %s7484
          %s7487 = sshll.u32 %s7476, 4
          %s7488 = int_to_ptr.vmem [resolvable:$true] %s7487
          %7490 = dma.vmem_to_hbm [thread:$0]  %s7488, 256, %s7485, %s7473
        $region108: #{tpu_custom_call.1} parent=59 // pred_fallthru
          _
      $region60: #{tpu_custom_call.1} parent=5 // pred_fallthru
        _
      %p7491 = scmp.le.s32.totalorder 2, %s29
      // Predicated region
      $region109: #{tpu_custom_call.1} parent=5 // pred_check
        %p7492 = pneg %p7491
      $region110: #{tpu_custom_call.1} parent=5 // pred_check_branch
        %7494 = sbr.rel (%p7492) target = $region112
      $region111: #{tpu_custom_call.1} parent=5 // pred_region
        %s7495 = ssub.s32 %s29, 2
        // Predicated region
        $region113: #{tpu_custom_call.1} parent=111 // pred_check
          %p7496 = pneg %p283
        $region114: #{tpu_custom_call.1} parent=111 // pred_check_branch
          %7498 = sbr.rel (%p7496) target = $region116
        $region115: #{tpu_custom_call.1} parent=111 // pred_region
          %s7499 = sand.u32 %s268, 1
          %s7500 = scalar_lea.sflag [#allocation5], %s7499
          %s7501 = sand.u32 %s268, 1
          %s7502 = smul.addr %s7501, 16
          %s7503 = scalar_lea.vmem [#allocation20], %s7502
          %7504 = dma.done %s7500, 256
        $region116: #{tpu_custom_call.1} parent=111 // pred_fallthru
          _
      $region112: #{tpu_custom_call.1} parent=5 // pred_fallthru
        _
    $region6: #{tpu_custom_call.1} parent=1 // loop_footer
      %s33 = sadd.s32 1, %s29
    $region7: #{tpu_custom_call.1} parent=1 // loop_footer_branch
      %28 = sbr.rel target = $region3
    $region8: #{tpu_custom_call.1} parent=1 // loop_exit
      _
    %7505 = vsyncpa [#allocation4], 1
    %s7506 = scalar_lea.sflag [#allocation4], 1
    %7507 = vsyncpa %s7506, 1
    %7508 = vsyncpa [#allocation7], 1
    %7509 = vsyncpa [#allocation10], 1
    %7510 = vsyncpa [#allocation13], 1
    %7511 = vsyncpa [#allocation16], 1
    %s7512 = scalar_lea.sflag [#allocation16], 1
    %7513 = vsyncpa %s7512, 1
    %7514 = vsyncpa [#allocation19], 1
    %s7515 = scalar_lea.sflag [#allocation19], 1
    %7516 = vsyncpa %s7515, 1
    %7517 = vsyncpa [#allocation5], 1
    %s7518 = scalar_lea.sflag [#allocation5], 1
    %7519 = vsyncpa %s7518, 1

</llo_original>
